<compile_context>
chip_gen: v6e
topology: v6e:2x2x1
jax: 0.10.0
libtpu: 0.0.40
codegen_flags: <defaults>
</compile_context>

<pallas_src>
import math

import jax
import jax.numpy as jnp
from jax.experimental import pallas as pl
from jax.experimental.pallas import tpu as pltpu

H = W = 33
HW = H * W                  # 1089
C = 32                      # conv feature channels
KIM = 9 * C                 # 288 : im2col contraction depth
DELTA = 0.01
SIGMA = 15000.0

BBLK_MAX = 4                          # images per grad_r grid step
VMEM_LIMIT_BYTES = 48 * 1024 * 1024   # sized against v7x's 64 MiB physical VMEM

# tap shift amounts in the flattened row-major 33x33 image, tap index t = di*3 + dj
SHIFTS = tuple((di - 1) * W + (dj - 1) for di in range(3) for dj in range(3))


# ----------------------------------------------------------------------------- #
# In-kernel helpers (traced inside the Pallas kernels)
# ----------------------------------------------------------------------------- #
def _activation(v):
    # eq. (33): smoothed ReLU  (jnp.where form: half the VALU ops of sign(relu(.)))
    smooth = v * v * (1.0 / (4.0 * DELTA)) + 0.5 * v + DELTA / 4.0
    return jnp.where(jnp.abs(v) > DELTA, jnp.maximum(v, 0.0), smooth)


def _activation_der(v):
    smooth = v * (1.0 / (2.0 * DELTA)) + 0.5
    return jnp.where(jnp.abs(v) > DELTA, (v > 0.0).astype(v.dtype), smooth)


def _shift(v, s):
    # v: (N, c); returns w with w[i] = v[(i + s) mod N]; caller masks the wrap / seams.
    if s == 0:
        return v
    return jnp.roll(v, -s, axis=0)


def _im2col_fwd(a, mask_ref):
    # a: (N, c) -> (N, 9*c): tap t occupies lanes [t*c, (t+1)*c), already boundary-masked.
    cols = []
    for t in range(9):
        cols.append(_shift(a, SHIFTS[t]) * mask_ref[t])
    return jnp.concatenate(cols, axis=1)


def _im2col_bwd(a, mask_ref):
    # adjoint (conv_transpose) taps: negated shifts + flipped boundary masks.
    cols = []
    for t in range(9):
        cols.append(_shift(a, -SHIFTS[t]) * mask_ref[8 - t])
    return jnp.concatenate(cols, axis=1)


# ----------------------------------------------------------------------------- #
# grad_r kernel: eq. (10), BBLK images per grid step
# ----------------------------------------------------------------------------- #
def _grad_r_kernel(x_ref, w1f_ref, w2f_ref, w3f_ref, w4f_ref,
                   w4b_ref, w3b_ref, w2b_ref, w1b_ref, mask_ref, soft_ref, out_ref):
    x = x_ref[0]                          # (N, 1), N = Bblk*HW
    soft = soft_ref[0]                    # scalar: soft_thr * gamma
    n = x.shape[0]

    # conv1 forward (1 -> 32): broadcast taps (an im2col matmul here would only be K=9).
    x1 = jnp.zeros((n, C), jnp.float32)
    for t in range(9):
        xs = _shift(x, SHIFTS[t]) * mask_ref[t]          # (N, 1)
        x1 = x1 + xs * w1f_ref[t]                        # (N, 1) * (1, 32) -> (N, 32)

    # conv2..conv4 forward: one K=288 MXU matmul each
    x2 = jnp.dot(_im2col_fwd(_activation(x1), mask_ref), w2f_ref[...],
                 preferred_element_type=jnp.float32)
    x3 = jnp.dot(_im2col_fwd(_activation(x2), mask_ref), w3f_ref[...],
                 preferred_element_type=jnp.float32)
    g = jnp.dot(_im2col_fwd(_activation(x3), mask_ref), w4f_ref[...],
                preferred_element_type=jnp.float32)

    # soft-threshold factor (channel-wise norm)
    norm_g = jnp.sqrt(jnp.sum(g * g, axis=1, keepdims=True))          # (N, 1)
    g_unit = g / jnp.maximum(norm_g, 1e-12)                           # F.normalize
    g_factor = jnp.where(norm_g > soft, g_unit, g / soft)

    # transposed conv chain with activation derivatives (one K=288 matmul each)
    gr = jnp.dot(_im2col_bwd(g_factor, mask_ref), w4b_ref[...],
                 preferred_element_type=jnp.float32) * _activation_der(x3)
    gr = jnp.dot(_im2col_bwd(gr, mask_ref), w3b_ref[...],
                 preferred_element_type=jnp.float32) * _activation_der(x2)
    gr = jnp.dot(_im2col_bwd(gr, mask_ref), w2b_ref[...],
                 preferred_element_type=jnp.float32) * _activation_der(x1)

    # conv_transpose of conv1 (32 -> 1) as a single (N,288)x(288,8) matmul;
    # only output column 0 is real (weight lane-padded), columns 1..7 are zero.
    out_ref[0] = jnp.dot(_im2col_bwd(gr, mask_ref), w1b_ref[...],
                         preferred_element_type=jnp.float32)


@jax.jit
def grad_r_pallas(x_flat, w1f, w2f, w3f, w4f, w4b, w3b, w2b, w1b,
                  base_masks, soft_gamma):
    b = x_flat.shape[0]
    bblk = min(BBLK_MAX, b)
    nb = -(-b // bblk)
    bp = nb * bblk
    n = bblk * HW

    xp = x_flat.astype(jnp.float32)
    if bp != b:
        xp = jnp.pad(xp, ((0, bp - b), (0, 0)))
    x3d = xp.reshape(nb, n, 1)

    # per-tap boundary masks tiled per image in the block (keeps image seams zeroed)
    masks = jnp.tile(base_masks, (1, bblk)).reshape(9, n, 1).astype(jnp.float32)
    soft = jnp.reshape(soft_gamma, (1,)).astype(jnp.float32)

    out = pl.pallas_call(
        _grad_r_kernel,
        out_shape=jax.ShapeDtypeStruct((nb, n, 8), jnp.float32),
        grid=(nb,),
        in_specs=[
            pl.BlockSpec((1, n, 1), lambda i: (i, 0, 0)),          # x block
            pl.BlockSpec((9, 1, C), lambda i: (0, 0, 0)),          # conv1 fwd taps
            pl.BlockSpec((KIM, C), lambda i: (0, 0)),              # conv2 fwd (288,32)
            pl.BlockSpec((KIM, C), lambda i: (0, 0)),              # conv3 fwd
            pl.BlockSpec((KIM, C), lambda i: (0, 0)),              # conv4 fwd
            pl.BlockSpec((KIM, C), lambda i: (0, 0)),              # conv4 adjoint
            pl.BlockSpec((KIM, C), lambda i: (0, 0)),              # conv3 adjoint
            pl.BlockSpec((KIM, C), lambda i: (0, 0)),              # conv2 adjoint
            pl.BlockSpec((KIM, 8), lambda i: (0, 0)),              # conv1 adjoint (padded)
            pl.BlockSpec((9, n, 1), lambda i: (0, 0, 0)),          # masks
            pl.BlockSpec(memory_space=pltpu.MemorySpace.SMEM),     # soft_thr * gamma
        ],
        out_specs=pl.BlockSpec((1, n, 8), lambda i: (i, 0, 0)),
        compiler_params=pltpu.CompilerParams(
            dimension_semantics=("parallel",),
            vmem_limit_bytes=VMEM_LIMIT_BYTES),
    )(x3d, w1f, w2f, w3f, w4f, w4b, w3b, w2b, w1b, masks, soft)

    return out[:, :, 0].reshape(bp, HW)[:b]


# ----------------------------------------------------------------------------- #
# Dense driver kernels (full-block, (8,128)-padded operands)
# ----------------------------------------------------------------------------- #
def _round_up(v, m):
    return (v + m - 1) // m * m


def _matmul_kernel(a_ref, b_ref, o_ref):
    o_ref[...] = jnp.dot(a_ref[...], b_ref[...], preferred_element_type=jnp.float32)


@jax.jit
def pallas_matmul(a, b):
    # Full-block padded matmul; all driver products here are <= ~6 MiB of operands.
    a = a.astype(jnp.float32)
    b = b.astype(jnp.float32)
    m, k = a.shape
    _, n = b.shape
    mp, kp, npad = _round_up(m, 8), _round_up(k, 128), _round_up(n, 128)
    ap = jnp.pad(a, ((0, mp - m), (0, kp - k)))
    bp = jnp.pad(b, ((0, kp - k), (0, npad - n)))
    out = pl.pallas_call(
        _matmul_kernel,
        out_shape=jax.ShapeDtypeStruct((mp, npad), jnp.float32),
        in_specs=[pl.BlockSpec((mp, kp), lambda: (0, 0)),
                  pl.BlockSpec((kp, npad), lambda: (0, 0))],
        out_specs=pl.BlockSpec((mp, npad), lambda: (0, 0)),
        compiler_params=pltpu.CompilerParams(vmem_limit_bytes=VMEM_LIMIT_BYTES),
    )(ap, bp)
    return out[:m, :n]


def _phase_mm_kernel(x_ref, a_ref, c_ref, s_ref, o_ref):
    # out = s0 * x + s1 * (x @ A - c)   (fused matmul + epilogue)
    r = jnp.dot(x_ref[...], a_ref[...], preferred_element_type=jnp.float32) - c_ref[...]
    o_ref[...] = s_ref[0] * x_ref[...] + s_ref[1] * r


@jax.jit
def phase_combine(x, a_pad, c_pad, s):
    """s[0]*x + s[1]*(x @ PhiTPhi - PhiTb), with PhiTPhi/PhiTb pre-padded to 1152."""
    bq, nq = x.shape
    mp = a_pad.shape[0]
    bp = c_pad.shape[0]
    xp = jnp.pad(x.astype(jnp.float32), ((0, bp - bq), (0, mp - nq)))
    out = pl.pallas_call(
        _phase_mm_kernel,
        out_shape=jax.ShapeDtypeStruct((bp, mp), jnp.float32),
        in_specs=[pl.BlockSpec((bp, mp), lambda: (0, 0)),
                  pl.BlockSpec((mp, mp), lambda: (0, 0)),
                  pl.BlockSpec((bp, mp), lambda: (0, 0)),
                  pl.BlockSpec(memory_space=pltpu.MemorySpace.SMEM)],
        out_specs=pl.BlockSpec((bp, mp), lambda: (0, 0)),
        compiler_params=pltpu.CompilerParams(vmem_limit_bytes=VMEM_LIMIT_BYTES),
    )(xp, a_pad, c_pad, jnp.asarray(s, jnp.float32))
    return out[:bq, :nq]


# ----------------------------------------------------------------------------- #
# Parameter / constant setup (plain-JAX glue)
# ----------------------------------------------------------------------------- #
def _make_base_masks():
    # (9, HW): mask[t][p] = 1 iff tap t of position p stays inside the 33x33 image
    idx = jnp.arange(HW)
    rows = idx // W
    cols = idx % W
    taps = []
    for di in range(3):
        for dj in range(3):
            r = rows + (di - 1)
            c = cols + (dj - 1)
            taps.append(((r >= 0) & (r < H) & (c >= 0) & (c < W)).astype(jnp.float32))
    return jnp.stack(taps, axis=0)


def init_params(layer_no, key):
    def xavier_normal(k, shape):              # shape is torch OIHW
        fan_in = shape[1] * shape[2] * shape[3]
        fan_out = shape[0] * shape[2] * shape[3]
        std = math.sqrt(2.0 / (fan_in + fan_out))
        return (std * jax.random.normal(k, shape)).astype(jnp.float32)

    k1, k2, k3, k4 = jax.random.split(key, 4)
    conv1 = xavier_normal(k1, (C, 1, 3, 3))
    conv2 = xavier_normal(k2, (C, C, 3, 3))
    conv3 = xavier_normal(k3, (C, C, 3, 3))
    conv4 = xavier_normal(k4, (C, C, 3, 3))

    # im2col weight layouts: row block t = di*3+dj
    def w_fwd(w):   # OIHW -> (9*I, O) ; row t*I+i = w[o, i, di, dj]
        return jnp.transpose(w, (2, 3, 1, 0)).reshape(9 * w.shape[1], w.shape[0])

    def w_bwd(w):   # OIHW -> (9*O, I) ; row t*O+o = w[o, i, di, dj]
        return jnp.transpose(w, (2, 3, 0, 1)).reshape(9 * w.shape[0], w.shape[1])

    return dict(
        soft_thr=jnp.float32(0.01),
        alphas=0.5 * jnp.ones((layer_no,), jnp.float32),
        betas=0.1 * jnp.ones((layer_no,), jnp.float32),
        w1f=w_fwd(conv1).reshape(9, 1, C),                      # conv1 fwd taps (9,1,32)
        w2f=w_fwd(conv2), w3f=w_fwd(conv3), w4f=w_fwd(conv4),   # (288, 32)
        w2b=w_bwd(conv2), w3b=w_bwd(conv3), w4b=w_bwd(conv4),   # (288, 32)
        w1b=jnp.pad(w_bwd(conv1), ((0, 0), (0, 7))),            # (288, 8) lane-padded
        base_masks=_make_base_masks(),                          # (9, HW)
    )


# ----------------------------------------------------------------------------- #
# LDA forward (default init=True path, as in the PyTorch module constructor)
# ----------------------------------------------------------------------------- #
def lda_forward(Phix, Phi, Qinit, params, phase_no):
    soft_thr = params["soft_thr"]
    alphas = params["alphas"]
    betas = params["betas"]
    B = Phix.shape[0]

    def grad_r(v, soft_gamma):
        return grad_r_pallas(v, params["w1f"], params["w2f"], params["w3f"],
                             params["w4f"], params["w4b"], params["w3b"],
                             params["w2b"], params["w1b"], params["base_masks"],
                             soft_gamma)

    PhiTPhi = pallas_matmul(jnp.transpose(Phi), Phi)       # (1089, 1089)
    PhiTb = pallas_matmul(Phix, Phi)                       # (B, 1089)
    x = pallas_matmul(Phix, jnp.transpose(Qinit))          # (B, 1089)

    # pad once to lane-aligned shapes; these stay fixed across all phases
    NP = _round_up(HW, 128)                                # 1152
    BP = _round_up(B, 8)
    A_pad = jnp.pad(PhiTPhi, ((0, NP - HW), (0, NP - HW)))
    c_pad = jnp.pad(PhiTb, ((0, BP - B), (0, NP - HW)))

    gamma = jnp.float32(1.0)
    for phase in range(phase_no):
        alpha = jnp.abs(alphas[phase])
        beta = jnp.abs(betas[phase])
        soft_gamma = soft_thr * gamma

        # z = x - alpha * (x @ PhiTPhi - PhiTb)
        z = phase_combine(x, A_pad, c_pad, jnp.stack([jnp.float32(1.0), -alpha]))
        grad_r_z = grad_r(z, soft_gamma)
        tau = alpha * beta / (alpha + beta)
        x_next = z - tau * grad_r_z            # init=True branch of phase()
        # TODO(synk): the init=False branch (phi(u)/phi(v) selection via R()) is never
        # exercised by forward() with the module's default init=True and is omitted.

        # step 7-8 of algorithm 1: gamma update
        grad_phi = phase_combine(x_next, A_pad, c_pad,
                                 jnp.stack([jnp.float32(0.0), jnp.float32(1.0)]))
        grad_phi = grad_phi + grad_r(x_next, soft_gamma)
        nrm = jnp.sqrt(jnp.sum(grad_phi * grad_phi, axis=-1, keepdims=True))
        sig_gam_eps = SIGMA * gamma * soft_thr
        gamma = gamma * jnp.where(jnp.mean(nrm) < sig_gam_eps, 0.9, 1.0)
        x = x_next
    return x


# ----------------------------------------------------------------------------- #
if __name__ == "__main__":
    LayerNo = 3
    PhaseNo = 3
    B, M = 2, 32                        # batch, number of measurements; n = 1089 fixed

    key = jax.random.PRNGKey(0)
    kp, kphi, kq, kx = jax.random.split(key, 4)
    params = init_params(LayerNo, kp)

    Phi = jax.random.normal(kphi, (M, HW), jnp.float32) / math.sqrt(HW)
    Qinit = jax.random.normal(kq, (HW, M), jnp.float32) / math.sqrt(HW)
    Phix = jax.random.normal(kx, (B, M), jnp.float32)

    x_final = lda_forward(Phix, Phi, Qinit, params, PhaseNo)
    x_final = jax.block_until_ready(x_final)

    assert x_final.shape == (B, HW)
    assert bool(jnp.all(jnp.isfinite(x_final)))
    print("KERNEL_OK")
</pallas_src>

<mosaic_0001>
module attributes {stable_mosaic.version = 11 : i64} {
  func.func @_matmul_kernel(%arg0: memref<1096x128xf32, #tpu.memory_space<vmem>>, %arg1: memref<128x1152xf32, #tpu.memory_space<vmem>>, %arg2: memref<1096x1152xf32, #tpu.memory_space<vmem>>) attributes {dimension_semantics = [], scalar_prefetch = 0 : i64, scratch_operands = 0 : i64, tpu.core_type = #tpu.core_type<tc>} {
    %c0 = arith.constant 0 : index
    %c0_0 = arith.constant 0 : index
    %0 = vector.load %arg0[%c0, %c0_0] : memref<1096x128xf32, #tpu.memory_space<vmem>>, vector<1096x128xf32>
    %c0_1 = arith.constant 0 : index
    %c0_2 = arith.constant 0 : index
    %1 = vector.load %arg1[%c0_1, %c0_2] : memref<128x1152xf32, #tpu.memory_space<vmem>>, vector<128x1152xf32>
    %cst = arith.constant dense<0.000000e+00> : vector<1096x1152xf32>
    %2 = tpu.matmul %0, %1, %cst {dimension_numbers = #tpu.dot_dimension_numbers<[1], [0], [0], [1], [0, 0, 1, 1], [], []>} : vector<1096x128xf32>, vector<128x1152xf32>, vector<1096x1152xf32> -> vector<1096x1152xf32>
    %c0_3 = arith.constant 0 : index
    %c0_4 = arith.constant 0 : index
    %3 = vector.load %arg2[%c0_3, %c0_4] : memref<1096x1152xf32, #tpu.memory_space<vmem>>, vector<1096x1152xf32>
    tpu.vector_store %arg2[%c0_3, %c0_4], %2 {strides = array<i32>} : memref<1096x1152xf32, #tpu.memory_space<vmem>>, vector<1096x1152xf32>,
    return
  }
}

</mosaic_0001>

<llo_original>
// kernel: pallas_matmul.1
$region0: #{pallas_matmul.1}
  #allocation0 [shape = 'u32[]', space=smem, size = 0x4, offset = 0x4, fixed_abs, tag = 'smem constant byte address 0x4 - core index']
  #allocation1 [shape = 'u32[144,128]{1,0:T(1,128)}', space=vmem, size = 0x12000, scoped, tag = 'internal scratch']
  %s0 = inlined_call_operand.vmem [shape: f32[1096,128], index: 0, kind: input, shape index: {}]
  %s1 = inlined_call_operand.vmem [shape: f32[128,1152], index: 1, kind: input, shape index: {}]
  %s2 = inlined_call_operand.hbm [shape: f32[1096,1152], index: 2, kind: output, shape index: {}]
  %s3 = sld [smem:[#allocation0]]
  $region18: #{pallas_matmul.1} parent=0
    _
  %s5 = ssub.s32 1, %s3
  %s6 = scalar_select 0, %s5, %s3
  $region1: #{pallas_matmul.1} parent=0
    #allocation2 [shape = 'u8[5050368]{0}', space=vmem, size = 0x4d1000, scoped, tag = 'output window, operand 0, single buffered']
    #allocation3 [shape = 's32[1]{0}', space=sflag, size = 0x4, scoped, tag = 'scoped memory for pallas_matmul.1']
    %7 = vsyncpa [#allocation3], 0
    // Predicated region
    $region2: #{pallas_matmul.1} parent=1 // pred_check
      _
    $region3: #{pallas_matmul.1} parent=1 // pred_check_branch
      %9 = sbr.rel (0) target = $region5
    $region4: #{pallas_matmul.1} parent=1 // pred_region
      _
    $region5: #{pallas_matmul.1} parent=1 // pred_fallthru
      _
    // Predicated region
    $region6: #{pallas_matmul.1} parent=1 // pred_check
      _
    $region7: #{pallas_matmul.1} parent=1 // pred_check_branch
      %11 = sbr.rel (0) target = $region9
    $region8: #{pallas_matmul.1} parent=1 // pred_region
      _
    $region9: #{pallas_matmul.1} parent=1 // pred_fallthru
      _
    %v12 = vld [vmem:[%s0] sm:$0xff]
    %v13 = vld [vmem:[%s0 + $0x8] sm:$0xff]
    %v14 = vld [vmem:[%s0 + $0x10] sm:$0xff]
    %v15 = vld [vmem:[%s0 + $0x18] sm:$0xff]
    %v16 = vld [vmem:[%s0 + $0x20] sm:$0xff]
    %v17 = vld [vmem:[%s0 + $0x28] sm:$0xff]
    %v18 = vld [vmem:[%s0 + $0x30] sm:$0xff]
    %v19 = vld [vmem:[%s0 + $0x38] sm:$0xff]
    %v20 = vld [vmem:[%s0 + $0x40] sm:$0xff]
    %v21 = vld [vmem:[%s0 + $0x48] sm:$0xff]
    %v22 = vld [vmem:[%s0 + $0x50] sm:$0xff]
    %v23 = vld [vmem:[%s0 + $0x58] sm:$0xff]
    %v24 = vld [vmem:[%s0 + $0x60] sm:$0xff]
    %v25 = vld [vmem:[%s0 + $0x68] sm:$0xff]
    %v26 = vld [vmem:[%s0 + $0x70] sm:$0xff]
    %v27 = vld [vmem:[%s0 + $0x78] sm:$0xff]
    %v28 = vld [vmem:[%s0 + $0x80] sm:$0xff]
    %v29 = vld [vmem:[%s0 + $0x88] sm:$0xff]
    %v30 = vld [vmem:[%s0 + $0x90] sm:$0xff]
    %v31 = vld [vmem:[%s0 + $0x98] sm:$0xff]
    %v32 = vld [vmem:[%s0 + $0xa0] sm:$0xff]
    %v33 = vld [vmem:[%s0 + $0xa8] sm:$0xff]
    %v34 = vld [vmem:[%s0 + $0xb0] sm:$0xff]
    %v35 = vld [vmem:[%s0 + $0xb8] sm:$0xff]
    %v36 = vld [vmem:[%s0 + $0xc0] sm:$0xff]
    %v37 = vld [vmem:[%s0 + $0xc8] sm:$0xff]
    %v38 = vld [vmem:[%s0 + $0xd0] sm:$0xff]
    %v39 = vld [vmem:[%s0 + $0xd8] sm:$0xff]
    %v40 = vld [vmem:[%s0 + $0xe0] sm:$0xff]
    %v41 = vld [vmem:[%s0 + $0xe8] sm:$0xff]
    %v42 = vld [vmem:[%s0 + $0xf0] sm:$0xff]
    %v43 = vld [vmem:[%s0 + $0xf8] sm:$0xff]
    %v44 = vld [vmem:[%s0 + $0x100] sm:$0xff]
    %v45 = vld [vmem:[%s0 + $0x108] sm:$0xff]
    %v46 = vld [vmem:[%s0 + $0x110] sm:$0xff]
    %v47 = vld [vmem:[%s0 + $0x118] sm:$0xff]
    %v48 = vld [vmem:[%s0 + $0x120] sm:$0xff]
    %v49 = vld [vmem:[%s0 + $0x128] sm:$0xff]
    %v50 = vld [vmem:[%s0 + $0x130] sm:$0xff]
    %v51 = vld [vmem:[%s0 + $0x138] sm:$0xff]
    %v52 = vld [vmem:[%s0 + $0x140] sm:$0xff]
    %v53 = vld [vmem:[%s0 + $0x148] sm:$0xff]
    %v54 = vld [vmem:[%s0 + $0x150] sm:$0xff]
    %v55 = vld [vmem:[%s0 + $0x158] sm:$0xff]
    %v56 = vld [vmem:[%s0 + $0x160] sm:$0xff]
    %v57 = vld [vmem:[%s0 + $0x168] sm:$0xff]
    %v58 = vld [vmem:[%s0 + $0x170] sm:$0xff]
    %v59 = vld [vmem:[%s0 + $0x178] sm:$0xff]
    %v60 = vld [vmem:[%s0 + $0x180] sm:$0xff]
    %v61 = vld [vmem:[%s0 + $0x188] sm:$0xff]
    %v62 = vld [vmem:[%s0 + $0x190] sm:$0xff]
    %v63 = vld [vmem:[%s0 + $0x198] sm:$0xff]
    %v64 = vld [vmem:[%s0 + $0x1a0] sm:$0xff]
    %v65 = vld [vmem:[%s0 + $0x1a8] sm:$0xff]
    %v66 = vld [vmem:[%s0 + $0x1b0] sm:$0xff]
    %v67 = vld [vmem:[%s0 + $0x1b8] sm:$0xff]
    %v68 = vld [vmem:[%s0 + $0x1c0] sm:$0xff]
    %v69 = vld [vmem:[%s0 + $0x1c8] sm:$0xff]
    %v70 = vld [vmem:[%s0 + $0x1d0] sm:$0xff]
    %v71 = vld [vmem:[%s0 + $0x1d8] sm:$0xff]
    %v72 = vld [vmem:[%s0 + $0x1e0] sm:$0xff]
    %v73 = vld [vmem:[%s0 + $0x1e8] sm:$0xff]
    %v74 = vld [vmem:[%s0 + $0x1f0] sm:$0xff]
    %v75 = vld [vmem:[%s0 + $0x1f8] sm:$0xff]
    %v76 = vld [vmem:[%s0 + $0x200] sm:$0xff]
    %v77 = vld [vmem:[%s0 + $0x208] sm:$0xff]
    %v78 = vld [vmem:[%s0 + $0x210] sm:$0xff]
    %v79 = vld [vmem:[%s0 + $0x218] sm:$0xff]
    %v80 = vld [vmem:[%s0 + $0x220] sm:$0xff]
    %v81 = vld [vmem:[%s0 + $0x228] sm:$0xff]
    %v82 = vld [vmem:[%s0 + $0x230] sm:$0xff]
    %v83 = vld [vmem:[%s0 + $0x238] sm:$0xff]
    %v84 = vld [vmem:[%s0 + $0x240] sm:$0xff]
    %v85 = vld [vmem:[%s0 + $0x248] sm:$0xff]
    %v86 = vld [vmem:[%s0 + $0x250] sm:$0xff]
    %v87 = vld [vmem:[%s0 + $0x258] sm:$0xff]
    %v88 = vld [vmem:[%s0 + $0x260] sm:$0xff]
    %v89 = vld [vmem:[%s0 + $0x268] sm:$0xff]
    %v90 = vld [vmem:[%s0 + $0x270] sm:$0xff]
    %v91 = vld [vmem:[%s0 + $0x278] sm:$0xff]
    %v92 = vld [vmem:[%s0 + $0x280] sm:$0xff]
    %v93 = vld [vmem:[%s0 + $0x288] sm:$0xff]
    %v94 = vld [vmem:[%s0 + $0x290] sm:$0xff]
    %v95 = vld [vmem:[%s0 + $0x298] sm:$0xff]
    %v96 = vld [vmem:[%s0 + $0x2a0] sm:$0xff]
    %v97 = vld [vmem:[%s0 + $0x2a8] sm:$0xff]
    %v98 = vld [vmem:[%s0 + $0x2b0] sm:$0xff]
    %v99 = vld [vmem:[%s0 + $0x2b8] sm:$0xff]
    %v100 = vld [vmem:[%s0 + $0x2c0] sm:$0xff]
    %v101 = vld [vmem:[%s0 + $0x2c8] sm:$0xff]
    %v102 = vld [vmem:[%s0 + $0x2d0] sm:$0xff]
    %v103 = vld [vmem:[%s0 + $0x2d8] sm:$0xff]
    %v104 = vld [vmem:[%s0 + $0x2e0] sm:$0xff]
    %v105 = vld [vmem:[%s0 + $0x2e8] sm:$0xff]
    %v106 = vld [vmem:[%s0 + $0x2f0] sm:$0xff]
    %v107 = vld [vmem:[%s0 + $0x2f8] sm:$0xff]
    %v108 = vld [vmem:[%s0 + $0x300] sm:$0xff]
    %v109 = vld [vmem:[%s0 + $0x308] sm:$0xff]
    %v110 = vld [vmem:[%s0 + $0x310] sm:$0xff]
    %v111 = vld [vmem:[%s0 + $0x318] sm:$0xff]
    %v112 = vld [vmem:[%s0 + $0x320] sm:$0xff]
    %v113 = vld [vmem:[%s0 + $0x328] sm:$0xff]
    %v114 = vld [vmem:[%s0 + $0x330] sm:$0xff]
    %v115 = vld [vmem:[%s0 + $0x338] sm:$0xff]
    %v116 = vld [vmem:[%s0 + $0x340] sm:$0xff]
    %v117 = vld [vmem:[%s0 + $0x348] sm:$0xff]
    %v118 = vld [vmem:[%s0 + $0x350] sm:$0xff]
    %v119 = vld [vmem:[%s0 + $0x358] sm:$0xff]
    %v120 = vld [vmem:[%s0 + $0x360] sm:$0xff]
    %v121 = vld [vmem:[%s0 + $0x368] sm:$0xff]
    %v122 = vld [vmem:[%s0 + $0x370] sm:$0xff]
    %v123 = vld [vmem:[%s0 + $0x378] sm:$0xff]
    %v124 = vld [vmem:[%s0 + $0x380] sm:$0xff]
    %v125 = vld [vmem:[%s0 + $0x388] sm:$0xff]
    %v126 = vld [vmem:[%s0 + $0x390] sm:$0xff]
    %v127 = vld [vmem:[%s0 + $0x398] sm:$0xff]
    %v128 = vld [vmem:[%s0 + $0x3a0] sm:$0xff]
    %v129 = vld [vmem:[%s0 + $0x3a8] sm:$0xff]
    %v130 = vld [vmem:[%s0 + $0x3b0] sm:$0xff]
    %v131 = vld [vmem:[%s0 + $0x3b8] sm:$0xff]
    %v132 = vld [vmem:[%s0 + $0x3c0] sm:$0xff]
    %v133 = vld [vmem:[%s0 + $0x3c8] sm:$0xff]
    %v134 = vld [vmem:[%s0 + $0x3d0] sm:$0xff]
    %v135 = vld [vmem:[%s0 + $0x3d8] sm:$0xff]
    %v136 = vld [vmem:[%s0 + $0x3e0] sm:$0xff]
    %v137 = vld [vmem:[%s0 + $0x3e8] sm:$0xff]
    %v138 = vld [vmem:[%s0 + $0x3f0] sm:$0xff]
    %v139 = vld [vmem:[%s0 + $0x3f8] sm:$0xff]
    %v140 = vld [vmem:[%s0 + $0x400] sm:$0xff]
    %v141 = vld [vmem:[%s0 + $0x408] sm:$0xff]
    %v142 = vld [vmem:[%s0 + $0x410] sm:$0xff]
    %v143 = vld [vmem:[%s0 + $0x418] sm:$0xff]
    %v144 = vld [vmem:[%s0 + $0x420] sm:$0xff]
    %v145 = vld [vmem:[%s0 + $0x428] sm:$0xff]
    %v146 = vld [vmem:[%s0 + $0x430] sm:$0xff]
    %v147 = vld [vmem:[%s0 + $0x438] sm:$0xff]
    %v148 = vld [vmem:[%s0 + $0x440] sm:$0xff]
    %v149 = vld [vmem:[%s1] sm:$0xff]
    %v150 = vld [vmem:[%s1 + $0x8] sm:$0xff]
    %v151 = vld [vmem:[%s1 + $0x10] sm:$0xff]
    %v152 = vld [vmem:[%s1 + $0x18] sm:$0xff]
    %v153 = vld [vmem:[%s1 + $0x20] sm:$0xff]
    %v154 = vld [vmem:[%s1 + $0x28] sm:$0xff]
    %v155 = vld [vmem:[%s1 + $0x30] sm:$0xff]
    %v156 = vld [vmem:[%s1 + $0x38] sm:$0xff]
    %v157 = vld [vmem:[%s1 + $0x40] sm:$0xff]
    %v158 = vld [vmem:[%s1 + $0x48] sm:$0xff]
    %v159 = vld [vmem:[%s1 + $0x50] sm:$0xff]
    %v160 = vld [vmem:[%s1 + $0x58] sm:$0xff]
    %v161 = vld [vmem:[%s1 + $0x60] sm:$0xff]
    %v162 = vld [vmem:[%s1 + $0x68] sm:$0xff]
    %v163 = vld [vmem:[%s1 + $0x70] sm:$0xff]
    %v164 = vld [vmem:[%s1 + $0x78] sm:$0xff]
    %v165 = vld [vmem:[%s1 + $0x80] sm:$0xff]
    %v166 = vld [vmem:[%s1 + $0x88] sm:$0xff]
    %v167 = vld [vmem:[%s1 + $0x90] sm:$0xff]
    %v168 = vld [vmem:[%s1 + $0x98] sm:$0xff]
    %v169 = vld [vmem:[%s1 + $0xa0] sm:$0xff]
    %v170 = vld [vmem:[%s1 + $0xa8] sm:$0xff]
    %v171 = vld [vmem:[%s1 + $0xb0] sm:$0xff]
    %v172 = vld [vmem:[%s1 + $0xb8] sm:$0xff]
    %v173 = vld [vmem:[%s1 + $0xc0] sm:$0xff]
    %v174 = vld [vmem:[%s1 + $0xc8] sm:$0xff]
    %v175 = vld [vmem:[%s1 + $0xd0] sm:$0xff]
    %v176 = vld [vmem:[%s1 + $0xd8] sm:$0xff]
    %v177 = vld [vmem:[%s1 + $0xe0] sm:$0xff]
    %v178 = vld [vmem:[%s1 + $0xe8] sm:$0xff]
    %v179 = vld [vmem:[%s1 + $0xf0] sm:$0xff]
    %v180 = vld [vmem:[%s1 + $0xf8] sm:$0xff]
    %v181 = vld [vmem:[%s1 + $0x100] sm:$0xff]
    %v182 = vld [vmem:[%s1 + $0x108] sm:$0xff]
    %v183 = vld [vmem:[%s1 + $0x110] sm:$0xff]
    %v184 = vld [vmem:[%s1 + $0x118] sm:$0xff]
    %v185 = vld [vmem:[%s1 + $0x120] sm:$0xff]
    %v186 = vld [vmem:[%s1 + $0x128] sm:$0xff]
    %v187 = vld [vmem:[%s1 + $0x130] sm:$0xff]
    %v188 = vld [vmem:[%s1 + $0x138] sm:$0xff]
    %v189 = vld [vmem:[%s1 + $0x140] sm:$0xff]
    %v190 = vld [vmem:[%s1 + $0x148] sm:$0xff]
    %v191 = vld [vmem:[%s1 + $0x150] sm:$0xff]
    %v192 = vld [vmem:[%s1 + $0x158] sm:$0xff]
    %v193 = vld [vmem:[%s1 + $0x160] sm:$0xff]
    %v194 = vld [vmem:[%s1 + $0x168] sm:$0xff]
    %v195 = vld [vmem:[%s1 + $0x170] sm:$0xff]
    %v196 = vld [vmem:[%s1 + $0x178] sm:$0xff]
    %v197 = vld [vmem:[%s1 + $0x180] sm:$0xff]
    %v198 = vld [vmem:[%s1 + $0x188] sm:$0xff]
    %v199 = vld [vmem:[%s1 + $0x190] sm:$0xff]
    %v200 = vld [vmem:[%s1 + $0x198] sm:$0xff]
    %v201 = vld [vmem:[%s1 + $0x1a0] sm:$0xff]
    %v202 = vld [vmem:[%s1 + $0x1a8] sm:$0xff]
    %v203 = vld [vmem:[%s1 + $0x1b0] sm:$0xff]
    %v204 = vld [vmem:[%s1 + $0x1b8] sm:$0xff]
    %v205 = vld [vmem:[%s1 + $0x1c0] sm:$0xff]
    %v206 = vld [vmem:[%s1 + $0x1c8] sm:$0xff]
    %v207 = vld [vmem:[%s1 + $0x1d0] sm:$0xff]
    %v208 = vld [vmem:[%s1 + $0x1d8] sm:$0xff]
    %v209 = vld [vmem:[%s1 + $0x1e0] sm:$0xff]
    %v210 = vld [vmem:[%s1 + $0x1e8] sm:$0xff]
    %v211 = vld [vmem:[%s1 + $0x1f0] sm:$0xff]
    %v212 = vld [vmem:[%s1 + $0x1f8] sm:$0xff]
    %v213 = vld [vmem:[%s1 + $0x200] sm:$0xff]
    %v214 = vld [vmem:[%s1 + $0x208] sm:$0xff]
    %v215 = vld [vmem:[%s1 + $0x210] sm:$0xff]
    %v216 = vld [vmem:[%s1 + $0x218] sm:$0xff]
    %v217 = vld [vmem:[%s1 + $0x220] sm:$0xff]
    %v218 = vld [vmem:[%s1 + $0x228] sm:$0xff]
    %v219 = vld [vmem:[%s1 + $0x230] sm:$0xff]
    %v220 = vld [vmem:[%s1 + $0x238] sm:$0xff]
    %v221 = vld [vmem:[%s1 + $0x240] sm:$0xff]
    %v222 = vld [vmem:[%s1 + $0x248] sm:$0xff]
    %v223 = vld [vmem:[%s1 + $0x250] sm:$0xff]
    %v224 = vld [vmem:[%s1 + $0x258] sm:$0xff]
    %v225 = vld [vmem:[%s1 + $0x260] sm:$0xff]
    %v226 = vld [vmem:[%s1 + $0x268] sm:$0xff]
    %v227 = vld [vmem:[%s1 + $0x270] sm:$0xff]
    %v228 = vld [vmem:[%s1 + $0x278] sm:$0xff]
    %v229 = vld [vmem:[%s1 + $0x280] sm:$0xff]
    %v230 = vld [vmem:[%s1 + $0x288] sm:$0xff]
    %v231 = vld [vmem:[%s1 + $0x290] sm:$0xff]
    %v232 = vld [vmem:[%s1 + $0x298] sm:$0xff]
    %v233 = vld [vmem:[%s1 + $0x2a0] sm:$0xff]
    %v234 = vld [vmem:[%s1 + $0x2a8] sm:$0xff]
    %v235 = vld [vmem:[%s1 + $0x2b0] sm:$0xff]
    %v236 = vld [vmem:[%s1 + $0x2b8] sm:$0xff]
    %v237 = vld [vmem:[%s1 + $0x2c0] sm:$0xff]
    %v238 = vld [vmem:[%s1 + $0x2c8] sm:$0xff]
    %v239 = vld [vmem:[%s1 + $0x2d0] sm:$0xff]
    %v240 = vld [vmem:[%s1 + $0x2d8] sm:$0xff]
    %v241 = vld [vmem:[%s1 + $0x2e0] sm:$0xff]
    %v242 = vld [vmem:[%s1 + $0x2e8] sm:$0xff]
    %v243 = vld [vmem:[%s1 + $0x2f0] sm:$0xff]
    %v244 = vld [vmem:[%s1 + $0x2f8] sm:$0xff]
    %v245 = vld [vmem:[%s1 + $0x300] sm:$0xff]
    %v246 = vld [vmem:[%s1 + $0x308] sm:$0xff]
    %v247 = vld [vmem:[%s1 + $0x310] sm:$0xff]
    %v248 = vld [vmem:[%s1 + $0x318] sm:$0xff]
    %v249 = vld [vmem:[%s1 + $0x320] sm:$0xff]
    %v250 = vld [vmem:[%s1 + $0x328] sm:$0xff]
    %v251 = vld [vmem:[%s1 + $0x330] sm:$0xff]
    %v252 = vld [vmem:[%s1 + $0x338] sm:$0xff]
    %v253 = vld [vmem:[%s1 + $0x340] sm:$0xff]
    %v254 = vld [vmem:[%s1 + $0x348] sm:$0xff]
    %v255 = vld [vmem:[%s1 + $0x350] sm:$0xff]
    %v256 = vld [vmem:[%s1 + $0x358] sm:$0xff]
    %v257 = vld [vmem:[%s1 + $0x360] sm:$0xff]
    %v258 = vld [vmem:[%s1 + $0x368] sm:$0xff]
    %v259 = vld [vmem:[%s1 + $0x370] sm:$0xff]
    %v260 = vld [vmem:[%s1 + $0x378] sm:$0xff]
    %v261 = vld [vmem:[%s1 + $0x380] sm:$0xff]
    %v262 = vld [vmem:[%s1 + $0x388] sm:$0xff]
    %v263 = vld [vmem:[%s1 + $0x390] sm:$0xff]
    %v264 = vld [vmem:[%s1 + $0x398] sm:$0xff]
    %v265 = vld [vmem:[%s1 + $0x3a0] sm:$0xff]
    %v266 = vld [vmem:[%s1 + $0x3a8] sm:$0xff]
    %v267 = vld [vmem:[%s1 + $0x3b0] sm:$0xff]
    %v268 = vld [vmem:[%s1 + $0x3b8] sm:$0xff]
    %v269 = vld [vmem:[%s1 + $0x3c0] sm:$0xff]
    %v270 = vld [vmem:[%s1 + $0x3c8] sm:$0xff]
    %v271 = vld [vmem:[%s1 + $0x3d0] sm:$0xff]
    %v272 = vld [vmem:[%s1 + $0x3d8] sm:$0xff]
    %v273 = vld [vmem:[%s1 + $0x3e0] sm:$0xff]
    %v274 = vld [vmem:[%s1 + $0x3e8] sm:$0xff]
    %v275 = vld [vmem:[%s1 + $0x3f0] sm:$0xff]
    %v276 = vld [vmem:[%s1 + $0x3f8] sm:$0xff]
    %v277 = vld [vmem:[%s1 + $0x400] sm:$0xff]
    %v278 = vld [vmem:[%s1 + $0x408] sm:$0xff]
    %v279 = vld [vmem:[%s1 + $0x410] sm:$0xff]
    %v280 = vld [vmem:[%s1 + $0x418] sm:$0xff]
    %v281 = vld [vmem:[%s1 + $0x420] sm:$0xff]
    %v282 = vld [vmem:[%s1 + $0x428] sm:$0xff]
    %v283 = vld [vmem:[%s1 + $0x430] sm:$0xff]
    %v284 = vld [vmem:[%s1 + $0x438] sm:$0xff]
    %v285 = vld [vmem:[%s1 + $0x440] sm:$0xff]
    %v286 = vld [vmem:[%s1 + $0x448] sm:$0xff]
    %v287 = vld [vmem:[%s1 + $0x450] sm:$0xff]
    %v288 = vld [vmem:[%s1 + $0x458] sm:$0xff]
    %v289 = vld [vmem:[%s1 + $0x460] sm:$0xff]
    %v290 = vld [vmem:[%s1 + $0x468] sm:$0xff]
    %v291 = vld [vmem:[%s1 + $0x470] sm:$0xff]
    %v292 = vld [vmem:[%s1 + $0x478] sm:$0xff]
    %293 = vmatprep.subr.mxu0 %v285
    %294 = vmatpush1.msra.mxu0 %v284
    %295 = vmatprep.subr.mxu0 %v276
    %296 = vmatpush1.msra.mxu0 %v275
    %297 = vmatprep.subr.mxu0 %v267
    %298 = vmatpush1.msra.mxu0 %v266
    %299 = vmatprep.subr.mxu0 %v258
    %300 = vmatpush1.msra.mxu0 %v257
    %301 = vmatprep.subr.mxu0 %v249
    %302 = vmatpush1.msra.mxu0 %v248
    %303 = vmatprep.subr.mxu0 %v240
    %304 = vmatpush1.msra.mxu0 %v239
    %305 = vmatprep.subr.mxu0 %v231
    %306 = vmatpush1.msra.mxu0 %v230
    %307 = vmatprep.subr.mxu0 %v222
    %308 = vmatpush1.msra.mxu0 %v221
    %309 = vmatprep.subr.mxu0 %v213
    %310 = vmatpush1.msra.mxu0 %v212
    %311 = vmatprep.subr.mxu0 %v204
    %312 = vmatpush1.msra.mxu0 %v203
    %313 = vmatprep.subr.mxu0 %v195
    %314 = vmatpush1.msra.mxu0 %v194
    %315 = vmatprep.subr.mxu0 %v186
    %316 = vmatpush1.msra.mxu0 %v185
    %317 = vmatprep.subr.mxu0 %v177
    %318 = vmatpush1.msra.mxu0 %v176
    %319 = vmatprep.subr.mxu0 %v168
    %320 = vmatpush1.msra.mxu0 %v167
    %321 = vmatprep.subr.mxu0 %v159
    %322 = vmatpush1.msra.mxu0 %v158
    %323 = vmatprep.subr.mxu0 %v150
    %324 = vmatpush1.msra.mxu0 %v149
    %325 = vmatprep.subr.mxu0 0.0
    %326 = vmatpush2.msra.mxu0 0.0
    %327 = vmatprep.subr.mxu0 0.0
    %328 = vmatpush2.msra.mxu0 0.0
    %329 = vmatprep.subr.mxu0 0.0
    %330 = vmatpush2.msra.mxu0 0.0
    %331 = vmatprep.subr.mxu0 0.0
    %332 = vmatpush2.msra.mxu0 0.0
    %333 = vmatprep.subr.mxu0 0.0
    %334 = vmatpush2.msra.mxu0 0.0
    %335 = vmatprep.subr.mxu0 0.0
    %336 = vmatpush2.msra.mxu0 0.0
    %337 = vmatprep.subr.mxu0 0.0
    %338 = vmatpush2.msra.mxu0 0.0
    %339 = vmatprep.subr.mxu0 0.0
    %340 = vmatpush2.msra.mxu0 0.0
    %341 = vmatprep.subr.mxu0 0.0
    %342 = vmatpush2.msra.mxu0 0.0
    %343 = vmatprep.subr.mxu0 0.0
    %344 = vmatpush2.msra.mxu0 0.0
    %345 = vmatprep.subr.mxu0 0.0
    %346 = vmatpush2.msra.mxu0 0.0
    %347 = vmatprep.subr.mxu0 0.0
    %348 = vmatpush2.msra.mxu0 0.0
    %349 = vmatprep.subr.mxu0 0.0
    %350 = vmatpush2.msra.mxu0 0.0
    %351 = vmatprep.subr.mxu0 0.0
    %352 = vmatpush2.msra.mxu0 0.0
    %353 = vmatprep.subr.mxu0 0.0
    %354 = vmatpush2.msra.mxu0 0.0
    %355 = vmatprep.subr.mxu0 0.0
    %356 = vmatpush2.msra.mxu0 0.0
    %357 = vmatprep.mubr.f32.mxu0 0.0
    %358 = vmatmul.mubr.f32.gmra.mxu0 %v12
    %v359 = vpop.f32.mrf.mxu0
    %v360 = vadd.f32 0.0, %v359
    %v361 = vpop.f32.mrf.mxu0
    %v362 = vadd.f32 0.0, %v361
    %363 = vmatprep.mubr.f32.mxu0 0.0
    %364 = vmatmul.mubr.f32.gmra.mxu0 %v13
    %v365 = vpop.f32.mrf.mxu0
    %v366 = vadd.f32 0.0, %v365
    %v367 = vpop.f32.mrf.mxu0
    %v368 = vadd.f32 0.0, %v367
    %369 = vmatprep.mubr.f32.mxu0 0.0
    %370 = vmatmul.mubr.f32.gmra.mxu0 %v14
    %v371 = vpop.f32.mrf.mxu0
    %v372 = vadd.f32 0.0, %v371
    %v373 = vpop.f32.mrf.mxu0
    %v374 = vadd.f32 0.0, %v373
    %375 = vmatprep.mubr.f32.mxu0 0.0
    %376 = vmatmul.mubr.f32.gmra.mxu0 %v15
    %v377 = vpop.f32.mrf.mxu0
    %v378 = vadd.f32 0.0, %v377
    %v379 = vpop.f32.mrf.mxu0
    %v380 = vadd.f32 0.0, %v379
    %381 = vmatprep.mubr.f32.mxu0 0.0
    %382 = vmatmul.mubr.f32.gmra.mxu0 %v16
    %v383 = vpop.f32.mrf.mxu0
    %v384 = vadd.f32 0.0, %v383
    %v385 = vpop.f32.mrf.mxu0
    %v386 = vadd.f32 0.0, %v385
    %387 = vmatprep.mubr.f32.mxu0 0.0
    %388 = vmatmul.mubr.f32.gmra.mxu0 %v17
    %v389 = vpop.f32.mrf.mxu0
    %v390 = vadd.f32 0.0, %v389
    %v391 = vpop.f32.mrf.mxu0
    %v392 = vadd.f32 0.0, %v391
    %393 = vmatprep.mubr.f32.mxu0 0.0
    %394 = vmatmul.mubr.f32.gmra.mxu0 %v18
    %v395 = vpop.f32.mrf.mxu0
    %v396 = vadd.f32 0.0, %v395
    %v397 = vpop.f32.mrf.mxu0
    %v398 = vadd.f32 0.0, %v397
    %399 = vmatprep.mubr.f32.mxu0 0.0
    %400 = vmatmul.mubr.f32.gmra.mxu0 %v19
    %v401 = vpop.f32.mrf.mxu0
    %v402 = vadd.f32 0.0, %v401
    %v403 = vpop.f32.mrf.mxu0
    %v404 = vadd.f32 0.0, %v403
    %405 = vmatprep.mubr.f32.mxu0 0.0
    %406 = vmatmul.mubr.f32.gmra.mxu0 %v20
    %v407 = vpop.f32.mrf.mxu0
    %v408 = vadd.f32 0.0, %v407
    %v409 = vpop.f32.mrf.mxu0
    %v410 = vadd.f32 0.0, %v409
    %411 = vmatprep.mubr.f32.mxu0 0.0
    %412 = vmatmul.mubr.f32.gmra.mxu0 %v21
    %v413 = vpop.f32.mrf.mxu0
    %v414 = vadd.f32 0.0, %v413
    %v415 = vpop.f32.mrf.mxu0
    %v416 = vadd.f32 0.0, %v415
    %417 = vmatprep.mubr.f32.mxu0 0.0
    %418 = vmatmul.mubr.f32.gmra.mxu0 %v22
    %v419 = vpop.f32.mrf.mxu0
    %v420 = vadd.f32 0.0, %v419
    %v421 = vpop.f32.mrf.mxu0
    %v422 = vadd.f32 0.0, %v421
    %423 = vmatprep.mubr.f32.mxu0 0.0
    %424 = vmatmul.mubr.f32.gmra.mxu0 %v23
    %v425 = vpop.f32.mrf.mxu0
    %v426 = vadd.f32 0.0, %v425
    %v427 = vpop.f32.mrf.mxu0
    %v428 = vadd.f32 0.0, %v427
    %429 = vmatprep.mubr.f32.mxu0 0.0
    %430 = vmatmul.mubr.f32.gmra.mxu0 %v24
    %v431 = vpop.f32.mrf.mxu0
    %v432 = vadd.f32 0.0, %v431
    %v433 = vpop.f32.mrf.mxu0
    %v434 = vadd.f32 0.0, %v433
    %435 = vmatprep.mubr.f32.mxu0 0.0
    %436 = vmatmul.mubr.f32.gmra.mxu0 %v25
    %v437 = vpop.f32.mrf.mxu0
    %v438 = vadd.f32 0.0, %v437
    %v439 = vpop.f32.mrf.mxu0
    %v440 = vadd.f32 0.0, %v439
    %441 = vmatprep.mubr.f32.mxu0 0.0
    %442 = vmatmul.mubr.f32.gmra.mxu0 %v26
    %v443 = vpop.f32.mrf.mxu0
    %v444 = vadd.f32 0.0, %v443
    %v445 = vpop.f32.mrf.mxu0
    %v446 = vadd.f32 0.0, %v445
    %447 = vmatprep.mubr.f32.mxu0 0.0
    %448 = vmatmul.mubr.f32.gmra.mxu0 %v27
    %v449 = vpop.f32.mrf.mxu0
    %v450 = vadd.f32 0.0, %v449
    %v451 = vpop.f32.mrf.mxu0
    %v452 = vadd.f32 0.0, %v451
    %453 = vmatprep.mubr.f32.mxu0 0.0
    %454 = vmatmul.mubr.f32.gmra.mxu0 %v28
    %v455 = vpop.f32.mrf.mxu0
    %v456 = vadd.f32 0.0, %v455
    %v457 = vpop.f32.mrf.mxu0
    %v458 = vadd.f32 0.0, %v457
    %459 = vmatprep.mubr.f32.mxu0 0.0
    %460 = vmatmul.mubr.f32.gmra.mxu0 %v29
    %v461 = vpop.f32.mrf.mxu0
    %v462 = vadd.f32 0.0, %v461
    %v463 = vpop.f32.mrf.mxu0
    %v464 = vadd.f32 0.0, %v463
    %465 = vmatprep.mubr.f32.mxu0 0.0
    %466 = vmatmul.mubr.f32.gmra.mxu0 %v30
    %v467 = vpop.f32.mrf.mxu0
    %v468 = vadd.f32 0.0, %v467
    %v469 = vpop.f32.mrf.mxu0
    %v470 = vadd.f32 0.0, %v469
    %471 = vmatprep.mubr.f32.mxu0 0.0
    %472 = vmatmul.mubr.f32.gmra.mxu0 %v31
    %v473 = vpop.f32.mrf.mxu0
    %v474 = vadd.f32 0.0, %v473
    %v475 = vpop.f32.mrf.mxu0
    %v476 = vadd.f32 0.0, %v475
    %477 = vmatprep.mubr.f32.mxu0 0.0
    %478 = vmatmul.mubr.f32.gmra.mxu0 %v32
    %v479 = vpop.f32.mrf.mxu0
    %v480 = vadd.f32 0.0, %v479
    %v481 = vpop.f32.mrf.mxu0
    %v482 = vadd.f32 0.0, %v481
    %483 = vmatprep.mubr.f32.mxu0 0.0
    %484 = vmatmul.mubr.f32.gmra.mxu0 %v33
    %v485 = vpop.f32.mrf.mxu0
    %v486 = vadd.f32 0.0, %v485
    %v487 = vpop.f32.mrf.mxu0
    %v488 = vadd.f32 0.0, %v487
    %489 = vmatprep.mubr.f32.mxu0 0.0
    %490 = vmatmul.mubr.f32.gmra.mxu0 %v34
    %v491 = vpop.f32.mrf.mxu0
    %v492 = vadd.f32 0.0, %v491
    %v493 = vpop.f32.mrf.mxu0
    %v494 = vadd.f32 0.0, %v493
    %495 = vmatprep.mubr.f32.mxu0 0.0
    %496 = vmatmul.mubr.f32.gmra.mxu0 %v35
    %v497 = vpop.f32.mrf.mxu0
    %v498 = vadd.f32 0.0, %v497
    %v499 = vpop.f32.mrf.mxu0
    %v500 = vadd.f32 0.0, %v499
    %501 = vmatprep.mubr.f32.mxu0 0.0
    %502 = vmatmul.mubr.f32.gmra.mxu0 %v36
    %v503 = vpop.f32.mrf.mxu0
    %v504 = vadd.f32 0.0, %v503
    %v505 = vpop.f32.mrf.mxu0
    %v506 = vadd.f32 0.0, %v505
    %507 = vmatprep.mubr.f32.mxu0 0.0
    %508 = vmatmul.mubr.f32.gmra.mxu0 %v37
    %v509 = vpop.f32.mrf.mxu0
    %v510 = vadd.f32 0.0, %v509
    %v511 = vpop.f32.mrf.mxu0
    %v512 = vadd.f32 0.0, %v511
    %513 = vmatprep.mubr.f32.mxu0 0.0
    %514 = vmatmul.mubr.f32.gmra.mxu0 %v38
    %v515 = vpop.f32.mrf.mxu0
    %v516 = vadd.f32 0.0, %v515
    %v517 = vpop.f32.mrf.mxu0
    %v518 = vadd.f32 0.0, %v517
    %519 = vmatprep.mubr.f32.mxu0 0.0
    %520 = vmatmul.mubr.f32.gmra.mxu0 %v39
    %v521 = vpop.f32.mrf.mxu0
    %v522 = vadd.f32 0.0, %v521
    %v523 = vpop.f32.mrf.mxu0
    %v524 = vadd.f32 0.0, %v523
    %525 = vmatprep.mubr.f32.mxu0 0.0
    %526 = vmatmul.mubr.f32.gmra.mxu0 %v40
    %v527 = vpop.f32.mrf.mxu0
    %v528 = vadd.f32 0.0, %v527
    %v529 = vpop.f32.mrf.mxu0
    %v530 = vadd.f32 0.0, %v529
    %531 = vmatprep.mubr.f32.mxu0 0.0
    %532 = vmatmul.mubr.f32.gmra.mxu0 %v41
    %v533 = vpop.f32.mrf.mxu0
    %v534 = vadd.f32 0.0, %v533
    %v535 = vpop.f32.mrf.mxu0
    %v536 = vadd.f32 0.0, %v535
    %537 = vmatprep.mubr.f32.mxu0 0.0
    %538 = vmatmul.mubr.f32.gmra.mxu0 %v42
    %v539 = vpop.f32.mrf.mxu0
    %v540 = vadd.f32 0.0, %v539
    %v541 = vpop.f32.mrf.mxu0
    %v542 = vadd.f32 0.0, %v541
    %543 = vmatprep.mubr.f32.mxu0 0.0
    %544 = vmatmul.mubr.f32.gmra.mxu0 %v43
    %v545 = vpop.f32.mrf.mxu0
    %v546 = vadd.f32 0.0, %v545
    %v547 = vpop.f32.mrf.mxu0
    %v548 = vadd.f32 0.0, %v547
    %549 = vmatprep.mubr.f32.mxu0 0.0
    %550 = vmatmul.mubr.f32.gmra.mxu0 %v44
    %v551 = vpop.f32.mrf.mxu0
    %v552 = vadd.f32 0.0, %v551
    %v553 = vpop.f32.mrf.mxu0
    %v554 = vadd.f32 0.0, %v553
    %555 = vmatprep.mubr.f32.mxu0 0.0
    %556 = vmatmul.mubr.f32.gmra.mxu0 %v45
    %v557 = vpop.f32.mrf.mxu0
    %v558 = vadd.f32 0.0, %v557
    %v559 = vpop.f32.mrf.mxu0
    %v560 = vadd.f32 0.0, %v559
    %561 = vmatprep.mubr.f32.mxu0 0.0
    %562 = vmatmul.mubr.f32.gmra.mxu0 %v46
    %v563 = vpop.f32.mrf.mxu0
    %v564 = vadd.f32 0.0, %v563
    %v565 = vpop.f32.mrf.mxu0
    %v566 = vadd.f32 0.0, %v565
    %567 = vmatprep.mubr.f32.mxu0 0.0
    %568 = vmatmul.mubr.f32.gmra.mxu0 %v47
    %v569 = vpop.f32.mrf.mxu0
    %v570 = vadd.f32 0.0, %v569
    %v571 = vpop.f32.mrf.mxu0
    %v572 = vadd.f32 0.0, %v571
    %573 = vmatprep.mubr.f32.mxu0 0.0
    %574 = vmatmul.mubr.f32.gmra.mxu0 %v48
    %v575 = vpop.f32.mrf.mxu0
    %v576 = vadd.f32 0.0, %v575
    %v577 = vpop.f32.mrf.mxu0
    %v578 = vadd.f32 0.0, %v577
    %579 = vmatprep.mubr.f32.mxu0 0.0
    %580 = vmatmul.mubr.f32.gmra.mxu0 %v49
    %v581 = vpop.f32.mrf.mxu0
    %v582 = vadd.f32 0.0, %v581
    %v583 = vpop.f32.mrf.mxu0
    %v584 = vadd.f32 0.0, %v583
    %585 = vmatprep.mubr.f32.mxu0 0.0
    %586 = vmatmul.mubr.f32.gmra.mxu0 %v50
    %v587 = vpop.f32.mrf.mxu0
    %v588 = vadd.f32 0.0, %v587
    %v589 = vpop.f32.mrf.mxu0
    %v590 = vadd.f32 0.0, %v589
    %591 = vmatprep.mubr.f32.mxu0 0.0
    %592 = vmatmul.mubr.f32.gmra.mxu0 %v51
    %v593 = vpop.f32.mrf.mxu0
    %v594 = vadd.f32 0.0, %v593
    %v595 = vpop.f32.mrf.mxu0
    %v596 = vadd.f32 0.0, %v595
    %597 = vmatprep.mubr.f32.mxu0 0.0
    %598 = vmatmul.mubr.f32.gmra.mxu0 %v52
    %v599 = vpop.f32.mrf.mxu0
    %v600 = vadd.f32 0.0, %v599
    %v601 = vpop.f32.mrf.mxu0
    %v602 = vadd.f32 0.0, %v601
    %603 = vmatprep.mubr.f32.mxu0 0.0
    %604 = vmatmul.mubr.f32.gmra.mxu0 %v53
    %v605 = vpop.f32.mrf.mxu0
    %v606 = vadd.f32 0.0, %v605
    %v607 = vpop.f32.mrf.mxu0
    %v608 = vadd.f32 0.0, %v607
    %609 = vmatprep.mubr.f32.mxu0 0.0
    %610 = vmatmul.mubr.f32.gmra.mxu0 %v54
    %v611 = vpop.f32.mrf.mxu0
    %v612 = vadd.f32 0.0, %v611
    %v613 = vpop.f32.mrf.mxu0
    %v614 = vadd.f32 0.0, %v613
    %615 = vmatprep.mubr.f32.mxu0 0.0
    %616 = vmatmul.mubr.f32.gmra.mxu0 %v55
    %v617 = vpop.f32.mrf.mxu0
    %v618 = vadd.f32 0.0, %v617
    %v619 = vpop.f32.mrf.mxu0
    %v620 = vadd.f32 0.0, %v619
    %621 = vmatprep.mubr.f32.mxu0 0.0
    %622 = vmatmul.mubr.f32.gmra.mxu0 %v56
    %v623 = vpop.f32.mrf.mxu0
    %v624 = vadd.f32 0.0, %v623
    %v625 = vpop.f32.mrf.mxu0
    %v626 = vadd.f32 0.0, %v625
    %627 = vmatprep.mubr.f32.mxu0 0.0
    %628 = vmatmul.mubr.f32.gmra.mxu0 %v57
    %v629 = vpop.f32.mrf.mxu0
    %v630 = vadd.f32 0.0, %v629
    %v631 = vpop.f32.mrf.mxu0
    %v632 = vadd.f32 0.0, %v631
    %633 = vmatprep.mubr.f32.mxu0 0.0
    %634 = vmatmul.mubr.f32.gmra.mxu0 %v58
    %v635 = vpop.f32.mrf.mxu0
    %v636 = vadd.f32 0.0, %v635
    %v637 = vpop.f32.mrf.mxu0
    %v638 = vadd.f32 0.0, %v637
    %639 = vmatprep.mubr.f32.mxu0 0.0
    %640 = vmatmul.mubr.f32.gmra.mxu0 %v59
    %v641 = vpop.f32.mrf.mxu0
    %v642 = vadd.f32 0.0, %v641
    %v643 = vpop.f32.mrf.mxu0
    %v644 = vadd.f32 0.0, %v643
    %645 = vmatprep.mubr.f32.mxu0 0.0
    %646 = vmatmul.mubr.f32.gmra.mxu0 %v60
    %v647 = vpop.f32.mrf.mxu0
    %v648 = vadd.f32 0.0, %v647
    %v649 = vpop.f32.mrf.mxu0
    %v650 = vadd.f32 0.0, %v649
    %651 = vmatprep.mubr.f32.mxu0 0.0
    %652 = vmatmul.mubr.f32.gmra.mxu0 %v61
    %v653 = vpop.f32.mrf.mxu0
    %v654 = vadd.f32 0.0, %v653
    %v655 = vpop.f32.mrf.mxu0
    %v656 = vadd.f32 0.0, %v655
    %657 = vmatprep.mubr.f32.mxu0 0.0
    %658 = vmatmul.mubr.f32.gmra.mxu0 %v62
    %v659 = vpop.f32.mrf.mxu0
    %v660 = vadd.f32 0.0, %v659
    %v661 = vpop.f32.mrf.mxu0
    %v662 = vadd.f32 0.0, %v661
    %663 = vmatprep.mubr.f32.mxu0 0.0
    %664 = vmatmul.mubr.f32.gmra.mxu0 %v63
    %v665 = vpop.f32.mrf.mxu0
    %v666 = vadd.f32 0.0, %v665
    %v667 = vpop.f32.mrf.mxu0
    %v668 = vadd.f32 0.0, %v667
    %669 = vmatprep.mubr.f32.mxu0 0.0
    %670 = vmatmul.mubr.f32.gmra.mxu0 %v64
    %v671 = vpop.f32.mrf.mxu0
    %v672 = vadd.f32 0.0, %v671
    %v673 = vpop.f32.mrf.mxu0
    %v674 = vadd.f32 0.0, %v673
    %675 = vmatprep.mubr.f32.mxu0 0.0
    %676 = vmatmul.mubr.f32.gmra.mxu0 %v65
    %v677 = vpop.f32.mrf.mxu0
    %v678 = vadd.f32 0.0, %v677
    %v679 = vpop.f32.mrf.mxu0
    %v680 = vadd.f32 0.0, %v679
    %681 = vmatprep.mubr.f32.mxu0 0.0
    %682 = vmatmul.mubr.f32.gmra.mxu0 %v66
    %v683 = vpop.f32.mrf.mxu0
    %v684 = vadd.f32 0.0, %v683
    %v685 = vpop.f32.mrf.mxu0
    %v686 = vadd.f32 0.0, %v685
    %687 = vmatprep.mubr.f32.mxu0 0.0
    %688 = vmatmul.mubr.f32.gmra.mxu0 %v67
    %v689 = vpop.f32.mrf.mxu0
    %v690 = vadd.f32 0.0, %v689
    %v691 = vpop.f32.mrf.mxu0
    %v692 = vadd.f32 0.0, %v691
    %693 = vmatprep.mubr.f32.mxu0 0.0
    %694 = vmatmul.mubr.f32.gmra.mxu0 %v68
    %v695 = vpop.f32.mrf.mxu0
    %v696 = vadd.f32 0.0, %v695
    %v697 = vpop.f32.mrf.mxu0
    %v698 = vadd.f32 0.0, %v697
    %699 = vmatprep.mubr.f32.mxu0 0.0
    %700 = vmatmul.mubr.f32.gmra.mxu0 %v69
    %v701 = vpop.f32.mrf.mxu0
    %v702 = vadd.f32 0.0, %v701
    %v703 = vpop.f32.mrf.mxu0
    %v704 = vadd.f32 0.0, %v703
    %705 = vmatprep.mubr.f32.mxu0 0.0
    %706 = vmatmul.mubr.f32.gmra.mxu0 %v70
    %v707 = vpop.f32.mrf.mxu0
    %v708 = vadd.f32 0.0, %v707
    %v709 = vpop.f32.mrf.mxu0
    %v710 = vadd.f32 0.0, %v709
    %711 = vmatprep.mubr.f32.mxu0 0.0
    %712 = vmatmul.mubr.f32.gmra.mxu0 %v71
    %v713 = vpop.f32.mrf.mxu0
    %v714 = vadd.f32 0.0, %v713
    %v715 = vpop.f32.mrf.mxu0
    %v716 = vadd.f32 0.0, %v715
    %717 = vmatprep.mubr.f32.mxu0 0.0
    %718 = vmatmul.mubr.f32.gmra.mxu0 %v72
    %v719 = vpop.f32.mrf.mxu0
    %v720 = vadd.f32 0.0, %v719
    %v721 = vpop.f32.mrf.mxu0
    %v722 = vadd.f32 0.0, %v721
    %723 = vmatprep.mubr.f32.mxu0 0.0
    %724 = vmatmul.mubr.f32.gmra.mxu0 %v73
    %v725 = vpop.f32.mrf.mxu0
    %v726 = vadd.f32 0.0, %v725
    %v727 = vpop.f32.mrf.mxu0
    %v728 = vadd.f32 0.0, %v727
    %729 = vmatprep.mubr.f32.mxu0 0.0
    %730 = vmatmul.mubr.f32.gmra.mxu0 %v74
    %v731 = vpop.f32.mrf.mxu0
    %v732 = vadd.f32 0.0, %v731
    %v733 = vpop.f32.mrf.mxu0
    %v734 = vadd.f32 0.0, %v733
    %735 = vmatprep.mubr.f32.mxu0 0.0
    %736 = vmatmul.mubr.f32.gmra.mxu0 %v75
    %v737 = vpop.f32.mrf.mxu0
    %v738 = vadd.f32 0.0, %v737
    %v739 = vpop.f32.mrf.mxu0
    %v740 = vadd.f32 0.0, %v739
    %741 = vmatprep.mubr.f32.mxu0 0.0
    %742 = vmatmul.mubr.f32.gmra.mxu0 %v76
    %v743 = vpop.f32.mrf.mxu0
    %v744 = vadd.f32 0.0, %v743
    %v745 = vpop.f32.mrf.mxu0
    %v746 = vadd.f32 0.0, %v745
    %747 = vmatprep.mubr.f32.mxu0 0.0
    %748 = vmatmul.mubr.f32.gmra.mxu0 %v77
    %v749 = vpop.f32.mrf.mxu0
    %v750 = vadd.f32 0.0, %v749
    %v751 = vpop.f32.mrf.mxu0
    %v752 = vadd.f32 0.0, %v751
    %753 = vmatprep.mubr.f32.mxu0 0.0
    %754 = vmatmul.mubr.f32.gmra.mxu0 %v78
    %v755 = vpop.f32.mrf.mxu0
    %v756 = vadd.f32 0.0, %v755
    %v757 = vpop.f32.mrf.mxu0
    %v758 = vadd.f32 0.0, %v757
    %759 = vmatprep.mubr.f32.mxu0 0.0
    %760 = vmatmul.mubr.f32.gmra.mxu0 %v79
    %v761 = vpop.f32.mrf.mxu0
    %v762 = vadd.f32 0.0, %v761
    %v763 = vpop.f32.mrf.mxu0
    %v764 = vadd.f32 0.0, %v763
    %765 = vmatprep.mubr.f32.mxu0 0.0
    %766 = vmatmul.mubr.f32.gmra.mxu0 %v80
    %v767 = vpop.f32.mrf.mxu0
    %v768 = vadd.f32 0.0, %v767
    %v769 = vpop.f32.mrf.mxu0
    %v770 = vadd.f32 0.0, %v769
    %771 = vmatprep.mubr.f32.mxu0 0.0
    %772 = vmatmul.mubr.f32.gmra.mxu0 %v81
    %v773 = vpop.f32.mrf.mxu0
    %v774 = vadd.f32 0.0, %v773
    %v775 = vpop.f32.mrf.mxu0
    %v776 = vadd.f32 0.0, %v775
    %777 = vmatprep.mubr.f32.mxu0 0.0
    %778 = vmatmul.mubr.f32.gmra.mxu0 %v82
    %v779 = vpop.f32.mrf.mxu0
    %v780 = vadd.f32 0.0, %v779
    %v781 = vpop.f32.mrf.mxu0
    %v782 = vadd.f32 0.0, %v781
    %783 = vmatprep.mubr.f32.mxu0 0.0
    %784 = vmatmul.mubr.f32.gmra.mxu0 %v83
    %v785 = vpop.f32.mrf.mxu0
    %v786 = vadd.f32 0.0, %v785
    %v787 = vpop.f32.mrf.mxu0
    %v788 = vadd.f32 0.0, %v787
    %789 = vmatprep.mubr.f32.mxu0 0.0
    %790 = vmatmul.mubr.f32.gmra.mxu0 %v84
    %v791 = vpop.f32.mrf.mxu0
    %v792 = vadd.f32 0.0, %v791
    %v793 = vpop.f32.mrf.mxu0
    %v794 = vadd.f32 0.0, %v793
    %795 = vmatprep.mubr.f32.mxu0 0.0
    %796 = vmatmul.mubr.f32.gmra.mxu0 %v85
    %v797 = vpop.f32.mrf.mxu0
    %v798 = vadd.f32 0.0, %v797
    %v799 = vpop.f32.mrf.mxu0
    %v800 = vadd.f32 0.0, %v799
    %801 = vmatprep.mubr.f32.mxu0 0.0
    %802 = vmatmul.mubr.f32.gmra.mxu0 %v86
    %v803 = vpop.f32.mrf.mxu0
    %v804 = vadd.f32 0.0, %v803
    %v805 = vpop.f32.mrf.mxu0
    %v806 = vadd.f32 0.0, %v805
    %807 = vmatprep.mubr.f32.mxu0 0.0
    %808 = vmatmul.mubr.f32.gmra.mxu0 %v87
    %v809 = vpop.f32.mrf.mxu0
    %v810 = vadd.f32 0.0, %v809
    %v811 = vpop.f32.mrf.mxu0
    %v812 = vadd.f32 0.0, %v811
    %813 = vmatprep.mubr.f32.mxu0 0.0
    %814 = vmatmul.mubr.f32.gmra.mxu0 %v88
    %v815 = vpop.f32.mrf.mxu0
    %v816 = vadd.f32 0.0, %v815
    %v817 = vpop.f32.mrf.mxu0
    %v818 = vadd.f32 0.0, %v817
    %819 = vmatprep.mubr.f32.mxu0 0.0
    %820 = vmatmul.mubr.f32.gmra.mxu0 %v89
    %v821 = vpop.f32.mrf.mxu0
    %v822 = vadd.f32 0.0, %v821
    %v823 = vpop.f32.mrf.mxu0
    %v824 = vadd.f32 0.0, %v823
    %825 = vmatprep.mubr.f32.mxu0 0.0
    %826 = vmatmul.mubr.f32.gmra.mxu0 %v90
    %v827 = vpop.f32.mrf.mxu0
    %v828 = vadd.f32 0.0, %v827
    %v829 = vpop.f32.mrf.mxu0
    %v830 = vadd.f32 0.0, %v829
    %831 = vmatprep.mubr.f32.mxu0 0.0
    %832 = vmatmul.mubr.f32.gmra.mxu0 %v91
    %v833 = vpop.f32.mrf.mxu0
    %v834 = vadd.f32 0.0, %v833
    %v835 = vpop.f32.mrf.mxu0
    %v836 = vadd.f32 0.0, %v835
    %837 = vmatprep.mubr.f32.mxu0 0.0
    %838 = vmatmul.mubr.f32.gmra.mxu0 %v92
    %v839 = vpop.f32.mrf.mxu0
    %v840 = vadd.f32 0.0, %v839
    %v841 = vpop.f32.mrf.mxu0
    %v842 = vadd.f32 0.0, %v841
    %843 = vmatprep.mubr.f32.mxu0 0.0
    %844 = vmatmul.mubr.f32.gmra.mxu0 %v93
    %v845 = vpop.f32.mrf.mxu0
    %v846 = vadd.f32 0.0, %v845
    %v847 = vpop.f32.mrf.mxu0
    %v848 = vadd.f32 0.0, %v847
    %849 = vmatprep.mubr.f32.mxu0 0.0
    %850 = vmatmul.mubr.f32.gmra.mxu0 %v94
    %v851 = vpop.f32.mrf.mxu0
    %v852 = vadd.f32 0.0, %v851
    %v853 = vpop.f32.mrf.mxu0
    %v854 = vadd.f32 0.0, %v853
    %855 = vmatprep.mubr.f32.mxu0 0.0
    %856 = vmatmul.mubr.f32.gmra.mxu0 %v95
    %v857 = vpop.f32.mrf.mxu0
    %v858 = vadd.f32 0.0, %v857
    %v859 = vpop.f32.mrf.mxu0
    %v860 = vadd.f32 0.0, %v859
    %861 = vmatprep.mubr.f32.mxu0 0.0
    %862 = vmatmul.mubr.f32.gmra.mxu0 %v96
    %v863 = vpop.f32.mrf.mxu0
    %v864 = vadd.f32 0.0, %v863
    %v865 = vpop.f32.mrf.mxu0
    %v866 = vadd.f32 0.0, %v865
    %867 = vmatprep.mubr.f32.mxu0 0.0
    %868 = vmatmul.mubr.f32.gmra.mxu0 %v97
    %v869 = vpop.f32.mrf.mxu0
    %v870 = vadd.f32 0.0, %v869
    %v871 = vpop.f32.mrf.mxu0
    %v872 = vadd.f32 0.0, %v871
    %873 = vmatprep.mubr.f32.mxu0 0.0
    %874 = vmatmul.mubr.f32.gmra.mxu0 %v98
    %v875 = vpop.f32.mrf.mxu0
    %v876 = vadd.f32 0.0, %v875
    %v877 = vpop.f32.mrf.mxu0
    %v878 = vadd.f32 0.0, %v877
    %879 = vmatprep.mubr.f32.mxu0 0.0
    %880 = vmatmul.mubr.f32.gmra.mxu0 %v99
    %v881 = vpop.f32.mrf.mxu0
    %v882 = vadd.f32 0.0, %v881
    %v883 = vpop.f32.mrf.mxu0
    %v884 = vadd.f32 0.0, %v883
    %885 = vmatprep.mubr.f32.mxu0 0.0
    %886 = vmatmul.mubr.f32.gmra.mxu0 %v100
    %v887 = vpop.f32.mrf.mxu0
    %v888 = vadd.f32 0.0, %v887
    %v889 = vpop.f32.mrf.mxu0
    %v890 = vadd.f32 0.0, %v889
    %891 = vmatprep.mubr.f32.mxu0 0.0
    %892 = vmatmul.mubr.f32.gmra.mxu0 %v101
    %v893 = vpop.f32.mrf.mxu0
    %v894 = vadd.f32 0.0, %v893
    %v895 = vpop.f32.mrf.mxu0
    %v896 = vadd.f32 0.0, %v895
    %897 = vmatprep.mubr.f32.mxu0 0.0
    %898 = vmatmul.mubr.f32.gmra.mxu0 %v102
    %v899 = vpop.f32.mrf.mxu0
    %v900 = vadd.f32 0.0, %v899
    %v901 = vpop.f32.mrf.mxu0
    %v902 = vadd.f32 0.0, %v901
    %903 = vmatprep.mubr.f32.mxu0 0.0
    %904 = vmatmul.mubr.f32.gmra.mxu0 %v103
    %v905 = vpop.f32.mrf.mxu0
    %v906 = vadd.f32 0.0, %v905
    %v907 = vpop.f32.mrf.mxu0
    %v908 = vadd.f32 0.0, %v907
    %909 = vmatprep.mubr.f32.mxu0 0.0
    %910 = vmatmul.mubr.f32.gmra.mxu0 %v104
    %v911 = vpop.f32.mrf.mxu0
    %v912 = vadd.f32 0.0, %v911
    %v913 = vpop.f32.mrf.mxu0
    %v914 = vadd.f32 0.0, %v913
    %915 = vmatprep.mubr.f32.mxu0 0.0
    %916 = vmatmul.mubr.f32.gmra.mxu0 %v105
    %v917 = vpop.f32.mrf.mxu0
    %v918 = vadd.f32 0.0, %v917
    %v919 = vpop.f32.mrf.mxu0
    %v920 = vadd.f32 0.0, %v919
    %921 = vmatprep.mubr.f32.mxu0 0.0
    %922 = vmatmul.mubr.f32.gmra.mxu0 %v106
    %v923 = vpop.f32.mrf.mxu0
    %v924 = vadd.f32 0.0, %v923
    %v925 = vpop.f32.mrf.mxu0
    %v926 = vadd.f32 0.0, %v925
    %927 = vmatprep.mubr.f32.mxu0 0.0
    %928 = vmatmul.mubr.f32.gmra.mxu0 %v107
    %v929 = vpop.f32.mrf.mxu0
    %v930 = vadd.f32 0.0, %v929
    %v931 = vpop.f32.mrf.mxu0
    %v932 = vadd.f32 0.0, %v931
    %933 = vmatprep.mubr.f32.mxu0 0.0
    %934 = vmatmul.mubr.f32.gmra.mxu0 %v108
    %v935 = vpop.f32.mrf.mxu0
    %v936 = vadd.f32 0.0, %v935
    %v937 = vpop.f32.mrf.mxu0
    %v938 = vadd.f32 0.0, %v937
    %939 = vmatprep.mubr.f32.mxu0 0.0
    %940 = vmatmul.mubr.f32.gmra.mxu0 %v109
    %v941 = vpop.f32.mrf.mxu0
    %v942 = vadd.f32 0.0, %v941
    %v943 = vpop.f32.mrf.mxu0
    %v944 = vadd.f32 0.0, %v943
    %945 = vmatprep.mubr.f32.mxu0 0.0
    %946 = vmatmul.mubr.f32.gmra.mxu0 %v110
    %v947 = vpop.f32.mrf.mxu0
    %v948 = vadd.f32 0.0, %v947
    %v949 = vpop.f32.mrf.mxu0
    %v950 = vadd.f32 0.0, %v949
    %951 = vmatprep.mubr.f32.mxu0 0.0
    %952 = vmatmul.mubr.f32.gmra.mxu0 %v111
    %v953 = vpop.f32.mrf.mxu0
    %v954 = vadd.f32 0.0, %v953
    %v955 = vpop.f32.mrf.mxu0
    %v956 = vadd.f32 0.0, %v955
    %957 = vmatprep.mubr.f32.mxu0 0.0
    %958 = vmatmul.mubr.f32.gmra.mxu0 %v112
    %v959 = vpop.f32.mrf.mxu0
    %v960 = vadd.f32 0.0, %v959
    %v961 = vpop.f32.mrf.mxu0
    %v962 = vadd.f32 0.0, %v961
    %963 = vmatprep.mubr.f32.mxu0 0.0
    %964 = vmatmul.mubr.f32.gmra.mxu0 %v113
    %v965 = vpop.f32.mrf.mxu0
    %v966 = vadd.f32 0.0, %v965
    %v967 = vpop.f32.mrf.mxu0
    %v968 = vadd.f32 0.0, %v967
    %969 = vmatprep.mubr.f32.mxu0 0.0
    %970 = vmatmul.mubr.f32.gmra.mxu0 %v114
    %v971 = vpop.f32.mrf.mxu0
    %v972 = vadd.f32 0.0, %v971
    %v973 = vpop.f32.mrf.mxu0
    %v974 = vadd.f32 0.0, %v973
    %975 = vmatprep.mubr.f32.mxu0 0.0
    %976 = vmatmul.mubr.f32.gmra.mxu0 %v115
    %v977 = vpop.f32.mrf.mxu0
    %v978 = vadd.f32 0.0, %v977
    %v979 = vpop.f32.mrf.mxu0
    %v980 = vadd.f32 0.0, %v979
    %981 = vmatprep.mubr.f32.mxu0 0.0
    %982 = vmatmul.mubr.f32.gmra.mxu0 %v116
    %v983 = vpop.f32.mrf.mxu0
    %v984 = vadd.f32 0.0, %v983
    %v985 = vpop.f32.mrf.mxu0
    %v986 = vadd.f32 0.0, %v985
    %987 = vmatprep.mubr.f32.mxu0 0.0
    %988 = vmatmul.mubr.f32.gmra.mxu0 %v117
    %v989 = vpop.f32.mrf.mxu0
    %v990 = vadd.f32 0.0, %v989
    %v991 = vpop.f32.mrf.mxu0
    %v992 = vadd.f32 0.0, %v991
    %993 = vmatprep.mubr.f32.mxu0 0.0
    %994 = vmatmul.mubr.f32.gmra.mxu0 %v118
    %v995 = vpop.f32.mrf.mxu0
    %v996 = vadd.f32 0.0, %v995
    %v997 = vpop.f32.mrf.mxu0
    %v998 = vadd.f32 0.0, %v997
    %999 = vmatprep.mubr.f32.mxu0 0.0
    %1000 = vmatmul.mubr.f32.gmra.mxu0 %v119
    %v1001 = vpop.f32.mrf.mxu0
    %v1002 = vadd.f32 0.0, %v1001
    %v1003 = vpop.f32.mrf.mxu0
    %v1004 = vadd.f32 0.0, %v1003
    %1005 = vmatprep.mubr.f32.mxu0 0.0
    %1006 = vmatmul.mubr.f32.gmra.mxu0 %v120
    %v1007 = vpop.f32.mrf.mxu0
    %v1008 = vadd.f32 0.0, %v1007
    %v1009 = vpop.f32.mrf.mxu0
    %v1010 = vadd.f32 0.0, %v1009
    %1011 = vmatprep.mubr.f32.mxu0 0.0
    %1012 = vmatmul.mubr.f32.gmra.mxu0 %v121
    %v1013 = vpop.f32.mrf.mxu0
    %v1014 = vadd.f32 0.0, %v1013
    %v1015 = vpop.f32.mrf.mxu0
    %v1016 = vadd.f32 0.0, %v1015
    %1017 = vmatprep.mubr.f32.mxu0 0.0
    %1018 = vmatmul.mubr.f32.gmra.mxu0 %v122
    %v1019 = vpop.f32.mrf.mxu0
    %v1020 = vadd.f32 0.0, %v1019
    %v1021 = vpop.f32.mrf.mxu0
    %v1022 = vadd.f32 0.0, %v1021
    %1023 = vmatprep.mubr.f32.mxu0 0.0
    %1024 = vmatmul.mubr.f32.gmra.mxu0 %v123
    %v1025 = vpop.f32.mrf.mxu0
    %v1026 = vadd.f32 0.0, %v1025
    %v1027 = vpop.f32.mrf.mxu0
    %v1028 = vadd.f32 0.0, %v1027
    %1029 = vmatprep.mubr.f32.mxu0 0.0
    %1030 = vmatmul.mubr.f32.gmra.mxu0 %v124
    %v1031 = vpop.f32.mrf.mxu0
    %v1032 = vadd.f32 0.0, %v1031
    %v1033 = vpop.f32.mrf.mxu0
    %v1034 = vadd.f32 0.0, %v1033
    %1035 = vmatprep.mubr.f32.mxu0 0.0
    %1036 = vmatmul.mubr.f32.gmra.mxu0 %v125
    %v1037 = vpop.f32.mrf.mxu0
    %v1038 = vadd.f32 0.0, %v1037
    %v1039 = vpop.f32.mrf.mxu0
    %v1040 = vadd.f32 0.0, %v1039
    %1041 = vmatprep.mubr.f32.mxu0 0.0
    %1042 = vmatmul.mubr.f32.gmra.mxu0 %v126
    %v1043 = vpop.f32.mrf.mxu0
    %v1044 = vadd.f32 0.0, %v1043
    %v1045 = vpop.f32.mrf.mxu0
    %v1046 = vadd.f32 0.0, %v1045
    %1047 = vmatprep.mubr.f32.mxu0 0.0
    %1048 = vmatmul.mubr.f32.gmra.mxu0 %v127
    %v1049 = vpop.f32.mrf.mxu0
    %v1050 = vadd.f32 0.0, %v1049
    %v1051 = vpop.f32.mrf.mxu0
    %v1052 = vadd.f32 0.0, %v1051
    %1053 = vmatprep.mubr.f32.mxu0 0.0
    %1054 = vmatmul.mubr.f32.gmra.mxu0 %v128
    %v1055 = vpop.f32.mrf.mxu0
    %v1056 = vadd.f32 0.0, %v1055
    %v1057 = vpop.f32.mrf.mxu0
    %v1058 = vadd.f32 0.0, %v1057
    %1059 = vmatprep.mubr.f32.mxu0 0.0
    %1060 = vmatmul.mubr.f32.gmra.mxu0 %v129
    %v1061 = vpop.f32.mrf.mxu0
    %v1062 = vadd.f32 0.0, %v1061
    %v1063 = vpop.f32.mrf.mxu0
    %v1064 = vadd.f32 0.0, %v1063
    %1065 = vmatprep.mubr.f32.mxu0 0.0
    %1066 = vmatmul.mubr.f32.gmra.mxu0 %v130
    %v1067 = vpop.f32.mrf.mxu0
    %v1068 = vadd.f32 0.0, %v1067
    %v1069 = vpop.f32.mrf.mxu0
    %v1070 = vadd.f32 0.0, %v1069
    %1071 = vmatprep.mubr.f32.mxu0 0.0
    %1072 = vmatmul.mubr.f32.gmra.mxu0 %v131
    %v1073 = vpop.f32.mrf.mxu0
    %v1074 = vadd.f32 0.0, %v1073
    %v1075 = vpop.f32.mrf.mxu0
    %v1076 = vadd.f32 0.0, %v1075
    %1077 = vmatprep.mubr.f32.mxu0 0.0
    %1078 = vmatmul.mubr.f32.gmra.mxu0 %v132
    %v1079 = vpop.f32.mrf.mxu0
    %v1080 = vadd.f32 0.0, %v1079
    %v1081 = vpop.f32.mrf.mxu0
    %v1082 = vadd.f32 0.0, %v1081
    %1083 = vmatprep.mubr.f32.mxu0 0.0
    %1084 = vmatmul.mubr.f32.gmra.mxu0 %v133
    %v1085 = vpop.f32.mrf.mxu0
    %v1086 = vadd.f32 0.0, %v1085
    %v1087 = vpop.f32.mrf.mxu0
    %v1088 = vadd.f32 0.0, %v1087
    %1089 = vmatprep.mubr.f32.mxu0 0.0
    %1090 = vmatmul.mubr.f32.gmra.mxu0 %v134
    %v1091 = vpop.f32.mrf.mxu0
    %v1092 = vadd.f32 0.0, %v1091
    %v1093 = vpop.f32.mrf.mxu0
    %v1094 = vadd.f32 0.0, %v1093
    %1095 = vmatprep.mubr.f32.mxu0 0.0
    %1096 = vmatmul.mubr.f32.gmra.mxu0 %v135
    %v1097 = vpop.f32.mrf.mxu0
    %v1098 = vadd.f32 0.0, %v1097
    %v1099 = vpop.f32.mrf.mxu0
    %v1100 = vadd.f32 0.0, %v1099
    %1101 = vmatprep.mubr.f32.mxu0 0.0
    %1102 = vmatmul.mubr.f32.gmra.mxu0 %v136
    %v1103 = vpop.f32.mrf.mxu0
    %v1104 = vadd.f32 0.0, %v1103
    %v1105 = vpop.f32.mrf.mxu0
    %v1106 = vadd.f32 0.0, %v1105
    %1107 = vmatprep.mubr.f32.mxu0 0.0
    %1108 = vmatmul.mubr.f32.gmra.mxu0 %v137
    %v1109 = vpop.f32.mrf.mxu0
    %v1110 = vadd.f32 0.0, %v1109
    %v1111 = vpop.f32.mrf.mxu0
    %v1112 = vadd.f32 0.0, %v1111
    %1113 = vmatprep.mubr.f32.mxu0 0.0
    %1114 = vmatmul.mubr.f32.gmra.mxu0 %v138
    %v1115 = vpop.f32.mrf.mxu0
    %v1116 = vadd.f32 0.0, %v1115
    %v1117 = vpop.f32.mrf.mxu0
    %v1118 = vadd.f32 0.0, %v1117
    %1119 = vmatprep.mubr.f32.mxu0 0.0
    %1120 = vmatmul.mubr.f32.gmra.mxu0 %v139
    %v1121 = vpop.f32.mrf.mxu0
    %v1122 = vadd.f32 0.0, %v1121
    %v1123 = vpop.f32.mrf.mxu0
    %v1124 = vadd.f32 0.0, %v1123
    %1125 = vmatprep.mubr.f32.mxu0 0.0
    %1126 = vmatmul.mubr.f32.gmra.mxu0 %v140
    %v1127 = vpop.f32.mrf.mxu0
    %v1128 = vadd.f32 0.0, %v1127
    %v1129 = vpop.f32.mrf.mxu0
    %v1130 = vadd.f32 0.0, %v1129
    %1131 = vmatprep.mubr.f32.mxu0 0.0
    %1132 = vmatmul.mubr.f32.gmra.mxu0 %v141
    %v1133 = vpop.f32.mrf.mxu0
    %v1134 = vadd.f32 0.0, %v1133
    %v1135 = vpop.f32.mrf.mxu0
    %v1136 = vadd.f32 0.0, %v1135
    %1137 = vmatprep.mubr.f32.mxu0 0.0
    %1138 = vmatmul.mubr.f32.gmra.mxu0 %v142
    %v1139 = vpop.f32.mrf.mxu0
    %v1140 = vadd.f32 0.0, %v1139
    %v1141 = vpop.f32.mrf.mxu0
    %v1142 = vadd.f32 0.0, %v1141
    %1143 = vmatprep.mubr.f32.mxu0 0.0
    %1144 = vmatmul.mubr.f32.gmra.mxu0 %v143
    %v1145 = vpop.f32.mrf.mxu0
    %v1146 = vadd.f32 0.0, %v1145
    %v1147 = vpop.f32.mrf.mxu0
    %v1148 = vadd.f32 0.0, %v1147
    %1149 = vmatprep.mubr.f32.mxu0 0.0
    %1150 = vmatmul.mubr.f32.gmra.mxu0 %v144
    %v1151 = vpop.f32.mrf.mxu0
    %v1152 = vadd.f32 0.0, %v1151
    %v1153 = vpop.f32.mrf.mxu0
    %v1154 = vadd.f32 0.0, %v1153
    %1155 = vmatprep.mubr.f32.mxu0 0.0
    %1156 = vmatmul.mubr.f32.gmra.mxu0 %v145
    %v1157 = vpop.f32.mrf.mxu0
    %v1158 = vadd.f32 0.0, %v1157
    %v1159 = vpop.f32.mrf.mxu0
    %v1160 = vadd.f32 0.0, %v1159
    %1161 = vmatprep.mubr.f32.mxu0 0.0
    %1162 = vmatmul.mubr.f32.gmra.mxu0 %v146
    %v1163 = vpop.f32.mrf.mxu0
    %v1164 = vadd.f32 0.0, %v1163
    %v1165 = vpop.f32.mrf.mxu0
    %v1166 = vadd.f32 0.0, %v1165
    %1167 = vmatprep.mubr.f32.mxu0 0.0
    %1168 = vmatmul.mubr.f32.gmra.mxu0 %v147
    %v1169 = vpop.f32.mrf.mxu0
    %v1170 = vadd.f32 0.0, %v1169
    %v1171 = vpop.f32.mrf.mxu0
    %v1172 = vadd.f32 0.0, %v1171
    %1173 = vmatprep.mubr.f32.mxu0 0.0
    %1174 = vmatmul.mubr.f32.gmra.mxu0 %v148
    %v1175 = vpop.f32.mrf.mxu0
    %v1176 = vadd.f32 0.0, %v1175
    %v1177 = vpop.f32.mrf.mxu0
    %v1178 = vadd.f32 0.0, %v1177
    %1179 = vdwg.mxu0
    %1180 = vmatprep.subr.mxu0 %v287
    %1181 = vmatpush1.msra.mxu0 %v286
    %1182 = vmatprep.subr.mxu0 %v278
    %1183 = vmatpush1.msra.mxu0 %v277
    %1184 = vmatprep.subr.mxu0 %v269
    %1185 = vmatpush1.msra.mxu0 %v268
    %1186 = vmatprep.subr.mxu0 %v260
    %1187 = vmatpush1.msra.mxu0 %v259
    %1188 = vmatprep.subr.mxu0 %v251
    %1189 = vmatpush1.msra.mxu0 %v250
    %1190 = vmatprep.subr.mxu0 %v242
    %1191 = vmatpush1.msra.mxu0 %v241
    %1192 = vmatprep.subr.mxu0 %v233
    %1193 = vmatpush1.msra.mxu0 %v232
    %1194 = vmatprep.subr.mxu0 %v224
    %1195 = vmatpush1.msra.mxu0 %v223
    %1196 = vmatprep.subr.mxu0 %v215
    %1197 = vmatpush1.msra.mxu0 %v214
    %1198 = vmatprep.subr.mxu0 %v206
    %1199 = vmatpush1.msra.mxu0 %v205
    %1200 = vmatprep.subr.mxu0 %v197
    %1201 = vmatpush1.msra.mxu0 %v196
    %1202 = vmatprep.subr.mxu0 %v188
    %1203 = vmatpush1.msra.mxu0 %v187
    %1204 = vmatprep.subr.mxu0 %v179
    %1205 = vmatpush1.msra.mxu0 %v178
    %1206 = vmatprep.subr.mxu0 %v170
    %1207 = vmatpush1.msra.mxu0 %v169
    %1208 = vmatprep.subr.mxu0 %v161
    %1209 = vmatpush1.msra.mxu0 %v160
    %1210 = vmatprep.subr.mxu0 %v152
    %1211 = vmatpush1.msra.mxu0 %v151
    %1212 = vmatprep.subr.mxu0 0.0
    %1213 = vmatpush2.msra.mxu0 0.0
    %1214 = vmatprep.subr.mxu0 0.0
    %1215 = vmatpush2.msra.mxu0 0.0
    %1216 = vmatprep.subr.mxu0 0.0
    %1217 = vmatpush2.msra.mxu0 0.0
    %1218 = vmatprep.subr.mxu0 0.0
    %1219 = vmatpush2.msra.mxu0 0.0
    %1220 = vmatprep.subr.mxu0 0.0
    %1221 = vmatpush2.msra.mxu0 0.0
    %1222 = vmatprep.subr.mxu0 0.0
    %1223 = vmatpush2.msra.mxu0 0.0
    %1224 = vmatprep.subr.mxu0 0.0
    %1225 = vmatpush2.msra.mxu0 0.0
    %1226 = vmatprep.subr.mxu0 0.0
    %1227 = vmatpush2.msra.mxu0 0.0
    %1228 = vmatprep.subr.mxu0 0.0
    %1229 = vmatpush2.msra.mxu0 0.0
    %1230 = vmatprep.subr.mxu0 0.0
    %1231 = vmatpush2.msra.mxu0 0.0
    %1232 = vmatprep.subr.mxu0 0.0
    %1233 = vmatpush2.msra.mxu0 0.0
    %1234 = vmatprep.subr.mxu0 0.0
    %1235 = vmatpush2.msra.mxu0 0.0
    %1236 = vmatprep.subr.mxu0 0.0
    %1237 = vmatpush2.msra.mxu0 0.0
    %1238 = vmatprep.subr.mxu0 0.0
    %1239 = vmatpush2.msra.mxu0 0.0
    %1240 = vmatprep.subr.mxu0 0.0
    %1241 = vmatpush2.msra.mxu0 0.0
    %1242 = vmatprep.subr.mxu0 0.0
    %1243 = vmatpush2.msra.mxu0 0.0
    %1244 = vmatprep.mubr.f32.mxu0 0.0
    %1245 = vmatmul.mubr.f32.gmra.mxu0 %v12
    %v1246 = vpop.f32.mrf.mxu0
    %v1247 = vadd.f32 0.0, %v1246
    %v1248 = vpop.f32.mrf.mxu0
    %v1249 = vadd.f32 0.0, %v1248
    %1250 = vmatprep.mubr.f32.mxu0 0.0
    %1251 = vmatmul.mubr.f32.gmra.mxu0 %v13
    %v1252 = vpop.f32.mrf.mxu0
    %v1253 = vadd.f32 0.0, %v1252
    %v1254 = vpop.f32.mrf.mxu0
    %v1255 = vadd.f32 0.0, %v1254
    %1256 = vmatprep.mubr.f32.mxu0 0.0
    %1257 = vmatmul.mubr.f32.gmra.mxu0 %v14
    %v1258 = vpop.f32.mrf.mxu0
    %v1259 = vadd.f32 0.0, %v1258
    %v1260 = vpop.f32.mrf.mxu0
    %v1261 = vadd.f32 0.0, %v1260
    %1262 = vmatprep.mubr.f32.mxu0 0.0
    %1263 = vmatmul.mubr.f32.gmra.mxu0 %v15
    %v1264 = vpop.f32.mrf.mxu0
    %v1265 = vadd.f32 0.0, %v1264
    %v1266 = vpop.f32.mrf.mxu0
    %v1267 = vadd.f32 0.0, %v1266
    %1268 = vmatprep.mubr.f32.mxu0 0.0
    %1269 = vmatmul.mubr.f32.gmra.mxu0 %v16
    %v1270 = vpop.f32.mrf.mxu0
    %v1271 = vadd.f32 0.0, %v1270
    %v1272 = vpop.f32.mrf.mxu0
    %v1273 = vadd.f32 0.0, %v1272
    %1274 = vmatprep.mubr.f32.mxu0 0.0
    %1275 = vmatmul.mubr.f32.gmra.mxu0 %v17
    %v1276 = vpop.f32.mrf.mxu0
    %v1277 = vadd.f32 0.0, %v1276
    %v1278 = vpop.f32.mrf.mxu0
    %v1279 = vadd.f32 0.0, %v1278
    %1280 = vmatprep.mubr.f32.mxu0 0.0
    %1281 = vmatmul.mubr.f32.gmra.mxu0 %v18
    %v1282 = vpop.f32.mrf.mxu0
    %v1283 = vadd.f32 0.0, %v1282
    %v1284 = vpop.f32.mrf.mxu0
    %v1285 = vadd.f32 0.0, %v1284
    %1286 = vmatprep.mubr.f32.mxu0 0.0
    %1287 = vmatmul.mubr.f32.gmra.mxu0 %v19
    %v1288 = vpop.f32.mrf.mxu0
    %v1289 = vadd.f32 0.0, %v1288
    %v1290 = vpop.f32.mrf.mxu0
    %v1291 = vadd.f32 0.0, %v1290
    %1292 = vmatprep.mubr.f32.mxu0 0.0
    %1293 = vmatmul.mubr.f32.gmra.mxu0 %v20
    %v1294 = vpop.f32.mrf.mxu0
    %v1295 = vadd.f32 0.0, %v1294
    %v1296 = vpop.f32.mrf.mxu0
    %v1297 = vadd.f32 0.0, %v1296
    %1298 = vmatprep.mubr.f32.mxu0 0.0
    %1299 = vmatmul.mubr.f32.gmra.mxu0 %v21
    %v1300 = vpop.f32.mrf.mxu0
    %v1301 = vadd.f32 0.0, %v1300
    %v1302 = vpop.f32.mrf.mxu0
    %v1303 = vadd.f32 0.0, %v1302
    %1304 = vmatprep.mubr.f32.mxu0 0.0
    %1305 = vmatmul.mubr.f32.gmra.mxu0 %v22
    %v1306 = vpop.f32.mrf.mxu0
    %v1307 = vadd.f32 0.0, %v1306
    %v1308 = vpop.f32.mrf.mxu0
    %v1309 = vadd.f32 0.0, %v1308
    %1310 = vmatprep.mubr.f32.mxu0 0.0
    %1311 = vmatmul.mubr.f32.gmra.mxu0 %v23
    %v1312 = vpop.f32.mrf.mxu0
    %v1313 = vadd.f32 0.0, %v1312
    %v1314 = vpop.f32.mrf.mxu0
    %v1315 = vadd.f32 0.0, %v1314
    %1316 = vmatprep.mubr.f32.mxu0 0.0
    %1317 = vmatmul.mubr.f32.gmra.mxu0 %v24
    %v1318 = vpop.f32.mrf.mxu0
    %v1319 = vadd.f32 0.0, %v1318
    %v1320 = vpop.f32.mrf.mxu0
    %v1321 = vadd.f32 0.0, %v1320
    %1322 = vmatprep.mubr.f32.mxu0 0.0
    %1323 = vmatmul.mubr.f32.gmra.mxu0 %v25
    %v1324 = vpop.f32.mrf.mxu0
    %v1325 = vadd.f32 0.0, %v1324
    %v1326 = vpop.f32.mrf.mxu0
    %v1327 = vadd.f32 0.0, %v1326
    %1328 = vmatprep.mubr.f32.mxu0 0.0
    %1329 = vmatmul.mubr.f32.gmra.mxu0 %v26
    %v1330 = vpop.f32.mrf.mxu0
    %v1331 = vadd.f32 0.0, %v1330
    %v1332 = vpop.f32.mrf.mxu0
    %v1333 = vadd.f32 0.0, %v1332
    %1334 = vmatprep.mubr.f32.mxu0 0.0
    %1335 = vmatmul.mubr.f32.gmra.mxu0 %v27
    %v1336 = vpop.f32.mrf.mxu0
    %v1337 = vadd.f32 0.0, %v1336
    %v1338 = vpop.f32.mrf.mxu0
    %v1339 = vadd.f32 0.0, %v1338
    %1340 = vmatprep.mubr.f32.mxu0 0.0
    %1341 = vmatmul.mubr.f32.gmra.mxu0 %v28
    %v1342 = vpop.f32.mrf.mxu0
    %v1343 = vadd.f32 0.0, %v1342
    %v1344 = vpop.f32.mrf.mxu0
    %v1345 = vadd.f32 0.0, %v1344
    %1346 = vmatprep.mubr.f32.mxu0 0.0
    %1347 = vmatmul.mubr.f32.gmra.mxu0 %v29
    %v1348 = vpop.f32.mrf.mxu0
    %v1349 = vadd.f32 0.0, %v1348
    %v1350 = vpop.f32.mrf.mxu0
    %v1351 = vadd.f32 0.0, %v1350
    %1352 = vmatprep.mubr.f32.mxu0 0.0
    %1353 = vmatmul.mubr.f32.gmra.mxu0 %v30
    %v1354 = vpop.f32.mrf.mxu0
    %v1355 = vadd.f32 0.0, %v1354
    %v1356 = vpop.f32.mrf.mxu0
    %v1357 = vadd.f32 0.0, %v1356
    %1358 = vmatprep.mubr.f32.mxu0 0.0
    %1359 = vmatmul.mubr.f32.gmra.mxu0 %v31
    %v1360 = vpop.f32.mrf.mxu0
    %v1361 = vadd.f32 0.0, %v1360
    %v1362 = vpop.f32.mrf.mxu0
    %v1363 = vadd.f32 0.0, %v1362
    %1364 = vmatprep.mubr.f32.mxu0 0.0
    %1365 = vmatmul.mubr.f32.gmra.mxu0 %v32
    %v1366 = vpop.f32.mrf.mxu0
    %v1367 = vadd.f32 0.0, %v1366
    %v1368 = vpop.f32.mrf.mxu0
    %v1369 = vadd.f32 0.0, %v1368
    %1370 = vmatprep.mubr.f32.mxu0 0.0
    %1371 = vmatmul.mubr.f32.gmra.mxu0 %v33
    %v1372 = vpop.f32.mrf.mxu0
    %v1373 = vadd.f32 0.0, %v1372
    %v1374 = vpop.f32.mrf.mxu0
    %v1375 = vadd.f32 0.0, %v1374
    %1376 = vmatprep.mubr.f32.mxu0 0.0
    %1377 = vmatmul.mubr.f32.gmra.mxu0 %v34
    %v1378 = vpop.f32.mrf.mxu0
    %v1379 = vadd.f32 0.0, %v1378
    %v1380 = vpop.f32.mrf.mxu0
    %v1381 = vadd.f32 0.0, %v1380
    %1382 = vmatprep.mubr.f32.mxu0 0.0
    %1383 = vmatmul.mubr.f32.gmra.mxu0 %v35
    %v1384 = vpop.f32.mrf.mxu0
    %v1385 = vadd.f32 0.0, %v1384
    %v1386 = vpop.f32.mrf.mxu0
    %v1387 = vadd.f32 0.0, %v1386
    %1388 = vmatprep.mubr.f32.mxu0 0.0
    %1389 = vmatmul.mubr.f32.gmra.mxu0 %v36
    %v1390 = vpop.f32.mrf.mxu0
    %v1391 = vadd.f32 0.0, %v1390
    %v1392 = vpop.f32.mrf.mxu0
    %v1393 = vadd.f32 0.0, %v1392
    %1394 = vmatprep.mubr.f32.mxu0 0.0
    %1395 = vmatmul.mubr.f32.gmra.mxu0 %v37
    %v1396 = vpop.f32.mrf.mxu0
    %v1397 = vadd.f32 0.0, %v1396
    %v1398 = vpop.f32.mrf.mxu0
    %v1399 = vadd.f32 0.0, %v1398
    %1400 = vmatprep.mubr.f32.mxu0 0.0
    %1401 = vmatmul.mubr.f32.gmra.mxu0 %v38
    %v1402 = vpop.f32.mrf.mxu0
    %v1403 = vadd.f32 0.0, %v1402
    %v1404 = vpop.f32.mrf.mxu0
    %v1405 = vadd.f32 0.0, %v1404
    %1406 = vmatprep.mubr.f32.mxu0 0.0
    %1407 = vmatmul.mubr.f32.gmra.mxu0 %v39
    %v1408 = vpop.f32.mrf.mxu0
    %v1409 = vadd.f32 0.0, %v1408
    %v1410 = vpop.f32.mrf.mxu0
    %v1411 = vadd.f32 0.0, %v1410
    %1412 = vmatprep.mubr.f32.mxu0 0.0
    %1413 = vmatmul.mubr.f32.gmra.mxu0 %v40
    %v1414 = vpop.f32.mrf.mxu0
    %v1415 = vadd.f32 0.0, %v1414
    %v1416 = vpop.f32.mrf.mxu0
    %v1417 = vadd.f32 0.0, %v1416
    %1418 = vmatprep.mubr.f32.mxu0 0.0
    %1419 = vmatmul.mubr.f32.gmra.mxu0 %v41
    %v1420 = vpop.f32.mrf.mxu0
    %v1421 = vadd.f32 0.0, %v1420
    %v1422 = vpop.f32.mrf.mxu0
    %v1423 = vadd.f32 0.0, %v1422
    %1424 = vmatprep.mubr.f32.mxu0 0.0
    %1425 = vmatmul.mubr.f32.gmra.mxu0 %v42
    %v1426 = vpop.f32.mrf.mxu0
    %v1427 = vadd.f32 0.0, %v1426
    %v1428 = vpop.f32.mrf.mxu0
    %v1429 = vadd.f32 0.0, %v1428
    %1430 = vmatprep.mubr.f32.mxu0 0.0
    %1431 = vmatmul.mubr.f32.gmra.mxu0 %v43
    %v1432 = vpop.f32.mrf.mxu0
    %v1433 = vadd.f32 0.0, %v1432
    %v1434 = vpop.f32.mrf.mxu0
    %v1435 = vadd.f32 0.0, %v1434
    %1436 = vmatprep.mubr.f32.mxu0 0.0
    %1437 = vmatmul.mubr.f32.gmra.mxu0 %v44
    %v1438 = vpop.f32.mrf.mxu0
    %v1439 = vadd.f32 0.0, %v1438
    %v1440 = vpop.f32.mrf.mxu0
    %v1441 = vadd.f32 0.0, %v1440
    %1442 = vmatprep.mubr.f32.mxu0 0.0
    %1443 = vmatmul.mubr.f32.gmra.mxu0 %v45
    %v1444 = vpop.f32.mrf.mxu0
    %v1445 = vadd.f32 0.0, %v1444
    %v1446 = vpop.f32.mrf.mxu0
    %v1447 = vadd.f32 0.0, %v1446
    %1448 = vmatprep.mubr.f32.mxu0 0.0
    %1449 = vmatmul.mubr.f32.gmra.mxu0 %v46
    %v1450 = vpop.f32.mrf.mxu0
    %v1451 = vadd.f32 0.0, %v1450
    %v1452 = vpop.f32.mrf.mxu0
    %v1453 = vadd.f32 0.0, %v1452
    %1454 = vmatprep.mubr.f32.mxu0 0.0
    %1455 = vmatmul.mubr.f32.gmra.mxu0 %v47
    %v1456 = vpop.f32.mrf.mxu0
    %v1457 = vadd.f32 0.0, %v1456
    %v1458 = vpop.f32.mrf.mxu0
    %v1459 = vadd.f32 0.0, %v1458
    %1460 = vmatprep.mubr.f32.mxu0 0.0
    %1461 = vmatmul.mubr.f32.gmra.mxu0 %v48
    %v1462 = vpop.f32.mrf.mxu0
    %v1463 = vadd.f32 0.0, %v1462
    %v1464 = vpop.f32.mrf.mxu0
    %v1465 = vadd.f32 0.0, %v1464
    %1466 = vmatprep.mubr.f32.mxu0 0.0
    %1467 = vmatmul.mubr.f32.gmra.mxu0 %v49
    %v1468 = vpop.f32.mrf.mxu0
    %v1469 = vadd.f32 0.0, %v1468
    %v1470 = vpop.f32.mrf.mxu0
    %v1471 = vadd.f32 0.0, %v1470
    %1472 = vmatprep.mubr.f32.mxu0 0.0
    %1473 = vmatmul.mubr.f32.gmra.mxu0 %v50
    %v1474 = vpop.f32.mrf.mxu0
    %v1475 = vadd.f32 0.0, %v1474
    %v1476 = vpop.f32.mrf.mxu0
    %v1477 = vadd.f32 0.0, %v1476
    %1478 = vmatprep.mubr.f32.mxu0 0.0
    %1479 = vmatmul.mubr.f32.gmra.mxu0 %v51
    %v1480 = vpop.f32.mrf.mxu0
    %v1481 = vadd.f32 0.0, %v1480
    %v1482 = vpop.f32.mrf.mxu0
    %v1483 = vadd.f32 0.0, %v1482
    %1484 = vmatprep.mubr.f32.mxu0 0.0
    %1485 = vmatmul.mubr.f32.gmra.mxu0 %v52
    %v1486 = vpop.f32.mrf.mxu0
    %v1487 = vadd.f32 0.0, %v1486
    %v1488 = vpop.f32.mrf.mxu0
    %v1489 = vadd.f32 0.0, %v1488
    %1490 = vmatprep.mubr.f32.mxu0 0.0
    %1491 = vmatmul.mubr.f32.gmra.mxu0 %v53
    %v1492 = vpop.f32.mrf.mxu0
    %v1493 = vadd.f32 0.0, %v1492
    %v1494 = vpop.f32.mrf.mxu0
    %v1495 = vadd.f32 0.0, %v1494
    %1496 = vmatprep.mubr.f32.mxu0 0.0
    %1497 = vmatmul.mubr.f32.gmra.mxu0 %v54
    %v1498 = vpop.f32.mrf.mxu0
    %v1499 = vadd.f32 0.0, %v1498
    %v1500 = vpop.f32.mrf.mxu0
    %v1501 = vadd.f32 0.0, %v1500
    %1502 = vmatprep.mubr.f32.mxu0 0.0
    %1503 = vmatmul.mubr.f32.gmra.mxu0 %v55
    %v1504 = vpop.f32.mrf.mxu0
    %v1505 = vadd.f32 0.0, %v1504
    %v1506 = vpop.f32.mrf.mxu0
    %v1507 = vadd.f32 0.0, %v1506
    %1508 = vmatprep.mubr.f32.mxu0 0.0
    %1509 = vmatmul.mubr.f32.gmra.mxu0 %v56
    %v1510 = vpop.f32.mrf.mxu0
    %v1511 = vadd.f32 0.0, %v1510
    %v1512 = vpop.f32.mrf.mxu0
    %v1513 = vadd.f32 0.0, %v1512
    %1514 = vmatprep.mubr.f32.mxu0 0.0
    %1515 = vmatmul.mubr.f32.gmra.mxu0 %v57
    %v1516 = vpop.f32.mrf.mxu0
    %v1517 = vadd.f32 0.0, %v1516
    %v1518 = vpop.f32.mrf.mxu0
    %v1519 = vadd.f32 0.0, %v1518
    %1520 = vmatprep.mubr.f32.mxu0 0.0
    %1521 = vmatmul.mubr.f32.gmra.mxu0 %v58
    %v1522 = vpop.f32.mrf.mxu0
    %v1523 = vadd.f32 0.0, %v1522
    %v1524 = vpop.f32.mrf.mxu0
    %v1525 = vadd.f32 0.0, %v1524
    %1526 = vmatprep.mubr.f32.mxu0 0.0
    %1527 = vmatmul.mubr.f32.gmra.mxu0 %v59
    %v1528 = vpop.f32.mrf.mxu0
    %v1529 = vadd.f32 0.0, %v1528
    %v1530 = vpop.f32.mrf.mxu0
    %v1531 = vadd.f32 0.0, %v1530
    %1532 = vmatprep.mubr.f32.mxu0 0.0
    %1533 = vmatmul.mubr.f32.gmra.mxu0 %v60
    %v1534 = vpop.f32.mrf.mxu0
    %v1535 = vadd.f32 0.0, %v1534
    %v1536 = vpop.f32.mrf.mxu0
    %v1537 = vadd.f32 0.0, %v1536
    %1538 = vmatprep.mubr.f32.mxu0 0.0
    %1539 = vmatmul.mubr.f32.gmra.mxu0 %v61
    %v1540 = vpop.f32.mrf.mxu0
    %v1541 = vadd.f32 0.0, %v1540
    %v1542 = vpop.f32.mrf.mxu0
    %v1543 = vadd.f32 0.0, %v1542
    %1544 = vmatprep.mubr.f32.mxu0 0.0
    %1545 = vmatmul.mubr.f32.gmra.mxu0 %v62
    %v1546 = vpop.f32.mrf.mxu0
    %v1547 = vadd.f32 0.0, %v1546
    %v1548 = vpop.f32.mrf.mxu0
    %v1549 = vadd.f32 0.0, %v1548
    %1550 = vmatprep.mubr.f32.mxu0 0.0
    %1551 = vmatmul.mubr.f32.gmra.mxu0 %v63
    %v1552 = vpop.f32.mrf.mxu0
    %v1553 = vadd.f32 0.0, %v1552
    %v1554 = vpop.f32.mrf.mxu0
    %v1555 = vadd.f32 0.0, %v1554
    %1556 = vmatprep.mubr.f32.mxu0 0.0
    %1557 = vmatmul.mubr.f32.gmra.mxu0 %v64
    %v1558 = vpop.f32.mrf.mxu0
    %v1559 = vadd.f32 0.0, %v1558
    %v1560 = vpop.f32.mrf.mxu0
    %v1561 = vadd.f32 0.0, %v1560
    %1562 = vmatprep.mubr.f32.mxu0 0.0
    %1563 = vmatmul.mubr.f32.gmra.mxu0 %v65
    %v1564 = vpop.f32.mrf.mxu0
    %v1565 = vadd.f32 0.0, %v1564
    %v1566 = vpop.f32.mrf.mxu0
    %v1567 = vadd.f32 0.0, %v1566
    %1568 = vmatprep.mubr.f32.mxu0 0.0
    %1569 = vmatmul.mubr.f32.gmra.mxu0 %v66
    %v1570 = vpop.f32.mrf.mxu0
    %v1571 = vadd.f32 0.0, %v1570
    %v1572 = vpop.f32.mrf.mxu0
    %v1573 = vadd.f32 0.0, %v1572
    %1574 = vmatprep.mubr.f32.mxu0 0.0
    %1575 = vmatmul.mubr.f32.gmra.mxu0 %v67
    %v1576 = vpop.f32.mrf.mxu0
    %v1577 = vadd.f32 0.0, %v1576
    %v1578 = vpop.f32.mrf.mxu0
    %v1579 = vadd.f32 0.0, %v1578
    %1580 = vmatprep.mubr.f32.mxu0 0.0
    %1581 = vmatmul.mubr.f32.gmra.mxu0 %v68
    %v1582 = vpop.f32.mrf.mxu0
    %v1583 = vadd.f32 0.0, %v1582
    %v1584 = vpop.f32.mrf.mxu0
    %v1585 = vadd.f32 0.0, %v1584
    %1586 = vmatprep.mubr.f32.mxu0 0.0
    %1587 = vmatmul.mubr.f32.gmra.mxu0 %v69
    %v1588 = vpop.f32.mrf.mxu0
    %v1589 = vadd.f32 0.0, %v1588
    %v1590 = vpop.f32.mrf.mxu0
    %v1591 = vadd.f32 0.0, %v1590
    %1592 = vmatprep.mubr.f32.mxu0 0.0
    %1593 = vmatmul.mubr.f32.gmra.mxu0 %v70
    %v1594 = vpop.f32.mrf.mxu0
    %v1595 = vadd.f32 0.0, %v1594
    %v1596 = vpop.f32.mrf.mxu0
    %v1597 = vadd.f32 0.0, %v1596
    %1598 = vmatprep.mubr.f32.mxu0 0.0
    %1599 = vmatmul.mubr.f32.gmra.mxu0 %v71
    %v1600 = vpop.f32.mrf.mxu0
    %v1601 = vadd.f32 0.0, %v1600
    %v1602 = vpop.f32.mrf.mxu0
    %v1603 = vadd.f32 0.0, %v1602
    %1604 = vmatprep.mubr.f32.mxu0 0.0
    %1605 = vmatmul.mubr.f32.gmra.mxu0 %v72
    %v1606 = vpop.f32.mrf.mxu0
    %v1607 = vadd.f32 0.0, %v1606
    %v1608 = vpop.f32.mrf.mxu0
    %v1609 = vadd.f32 0.0, %v1608
    %1610 = vmatprep.mubr.f32.mxu0 0.0
    %1611 = vmatmul.mubr.f32.gmra.mxu0 %v73
    %v1612 = vpop.f32.mrf.mxu0
    %v1613 = vadd.f32 0.0, %v1612
    %v1614 = vpop.f32.mrf.mxu0
    %v1615 = vadd.f32 0.0, %v1614
    %1616 = vmatprep.mubr.f32.mxu0 0.0
    %1617 = vmatmul.mubr.f32.gmra.mxu0 %v74
    %v1618 = vpop.f32.mrf.mxu0
    %v1619 = vadd.f32 0.0, %v1618
    %v1620 = vpop.f32.mrf.mxu0
    %v1621 = vadd.f32 0.0, %v1620
    %1622 = vmatprep.mubr.f32.mxu0 0.0
    %1623 = vmatmul.mubr.f32.gmra.mxu0 %v75
    %v1624 = vpop.f32.mrf.mxu0
    %v1625 = vadd.f32 0.0, %v1624
    %v1626 = vpop.f32.mrf.mxu0
    %v1627 = vadd.f32 0.0, %v1626
    %1628 = vmatprep.mubr.f32.mxu0 0.0
    %1629 = vmatmul.mubr.f32.gmra.mxu0 %v76
    %v1630 = vpop.f32.mrf.mxu0
    %v1631 = vadd.f32 0.0, %v1630
    %v1632 = vpop.f32.mrf.mxu0
    %v1633 = vadd.f32 0.0, %v1632
    %1634 = vmatprep.mubr.f32.mxu0 0.0
    %1635 = vmatmul.mubr.f32.gmra.mxu0 %v77
    %v1636 = vpop.f32.mrf.mxu0
    %v1637 = vadd.f32 0.0, %v1636
    %v1638 = vpop.f32.mrf.mxu0
    %v1639 = vadd.f32 0.0, %v1638
    %1640 = vmatprep.mubr.f32.mxu0 0.0
    %1641 = vmatmul.mubr.f32.gmra.mxu0 %v78
    %v1642 = vpop.f32.mrf.mxu0
    %v1643 = vadd.f32 0.0, %v1642
    %v1644 = vpop.f32.mrf.mxu0
    %v1645 = vadd.f32 0.0, %v1644
    %1646 = vmatprep.mubr.f32.mxu0 0.0
    %1647 = vmatmul.mubr.f32.gmra.mxu0 %v79
    %v1648 = vpop.f32.mrf.mxu0
    %v1649 = vadd.f32 0.0, %v1648
    %v1650 = vpop.f32.mrf.mxu0
    %v1651 = vadd.f32 0.0, %v1650
    %1652 = vmatprep.mubr.f32.mxu0 0.0
    %1653 = vmatmul.mubr.f32.gmra.mxu0 %v80
    %v1654 = vpop.f32.mrf.mxu0
    %v1655 = vadd.f32 0.0, %v1654
    %v1656 = vpop.f32.mrf.mxu0
    %v1657 = vadd.f32 0.0, %v1656
    %1658 = vmatprep.mubr.f32.mxu0 0.0
    %1659 = vmatmul.mubr.f32.gmra.mxu0 %v81
    %v1660 = vpop.f32.mrf.mxu0
    %v1661 = vadd.f32 0.0, %v1660
    %v1662 = vpop.f32.mrf.mxu0
    %v1663 = vadd.f32 0.0, %v1662
    %1664 = vmatprep.mubr.f32.mxu0 0.0
    %1665 = vmatmul.mubr.f32.gmra.mxu0 %v82
    %v1666 = vpop.f32.mrf.mxu0
    %v1667 = vadd.f32 0.0, %v1666
    %v1668 = vpop.f32.mrf.mxu0
    %v1669 = vadd.f32 0.0, %v1668
    %1670 = vmatprep.mubr.f32.mxu0 0.0
    %1671 = vmatmul.mubr.f32.gmra.mxu0 %v83
    %v1672 = vpop.f32.mrf.mxu0
    %v1673 = vadd.f32 0.0, %v1672
    %v1674 = vpop.f32.mrf.mxu0
    %v1675 = vadd.f32 0.0, %v1674
    %1676 = vmatprep.mubr.f32.mxu0 0.0
    %1677 = vmatmul.mubr.f32.gmra.mxu0 %v84
    %v1678 = vpop.f32.mrf.mxu0
    %v1679 = vadd.f32 0.0, %v1678
    %v1680 = vpop.f32.mrf.mxu0
    %v1681 = vadd.f32 0.0, %v1680
    %1682 = vmatprep.mubr.f32.mxu0 0.0
    %1683 = vmatmul.mubr.f32.gmra.mxu0 %v85
    %v1684 = vpop.f32.mrf.mxu0
    %v1685 = vadd.f32 0.0, %v1684
    %v1686 = vpop.f32.mrf.mxu0
    %v1687 = vadd.f32 0.0, %v1686
    %1688 = vmatprep.mubr.f32.mxu0 0.0
    %1689 = vmatmul.mubr.f32.gmra.mxu0 %v86
    %v1690 = vpop.f32.mrf.mxu0
    %v1691 = vadd.f32 0.0, %v1690
    %v1692 = vpop.f32.mrf.mxu0
    %v1693 = vadd.f32 0.0, %v1692
    %1694 = vmatprep.mubr.f32.mxu0 0.0
    %1695 = vmatmul.mubr.f32.gmra.mxu0 %v87
    %v1696 = vpop.f32.mrf.mxu0
    %v1697 = vadd.f32 0.0, %v1696
    %v1698 = vpop.f32.mrf.mxu0
    %v1699 = vadd.f32 0.0, %v1698
    %1700 = vmatprep.mubr.f32.mxu0 0.0
    %1701 = vmatmul.mubr.f32.gmra.mxu0 %v88
    %v1702 = vpop.f32.mrf.mxu0
    %v1703 = vadd.f32 0.0, %v1702
    %v1704 = vpop.f32.mrf.mxu0
    %v1705 = vadd.f32 0.0, %v1704
    %1706 = vmatprep.mubr.f32.mxu0 0.0
    %1707 = vmatmul.mubr.f32.gmra.mxu0 %v89
    %v1708 = vpop.f32.mrf.mxu0
    %v1709 = vadd.f32 0.0, %v1708
    %v1710 = vpop.f32.mrf.mxu0
    %v1711 = vadd.f32 0.0, %v1710
    %1712 = vmatprep.mubr.f32.mxu0 0.0
    %1713 = vmatmul.mubr.f32.gmra.mxu0 %v90
    %v1714 = vpop.f32.mrf.mxu0
    %v1715 = vadd.f32 0.0, %v1714
    %v1716 = vpop.f32.mrf.mxu0
    %v1717 = vadd.f32 0.0, %v1716
    %1718 = vmatprep.mubr.f32.mxu0 0.0
    %1719 = vmatmul.mubr.f32.gmra.mxu0 %v91
    %v1720 = vpop.f32.mrf.mxu0
    %v1721 = vadd.f32 0.0, %v1720
    %v1722 = vpop.f32.mrf.mxu0
    %v1723 = vadd.f32 0.0, %v1722
    %1724 = vmatprep.mubr.f32.mxu0 0.0
    %1725 = vmatmul.mubr.f32.gmra.mxu0 %v92
    %v1726 = vpop.f32.mrf.mxu0
    %v1727 = vadd.f32 0.0, %v1726
    %v1728 = vpop.f32.mrf.mxu0
    %v1729 = vadd.f32 0.0, %v1728
    %1730 = vmatprep.mubr.f32.mxu0 0.0
    %1731 = vmatmul.mubr.f32.gmra.mxu0 %v93
    %v1732 = vpop.f32.mrf.mxu0
    %v1733 = vadd.f32 0.0, %v1732
    %v1734 = vpop.f32.mrf.mxu0
    %v1735 = vadd.f32 0.0, %v1734
    %1736 = vmatprep.mubr.f32.mxu0 0.0
    %1737 = vmatmul.mubr.f32.gmra.mxu0 %v94
    %v1738 = vpop.f32.mrf.mxu0
    %v1739 = vadd.f32 0.0, %v1738
    %v1740 = vpop.f32.mrf.mxu0
    %v1741 = vadd.f32 0.0, %v1740
    %1742 = vmatprep.mubr.f32.mxu0 0.0
    %1743 = vmatmul.mubr.f32.gmra.mxu0 %v95
    %v1744 = vpop.f32.mrf.mxu0
    %v1745 = vadd.f32 0.0, %v1744
    %v1746 = vpop.f32.mrf.mxu0
    %v1747 = vadd.f32 0.0, %v1746
    %1748 = vmatprep.mubr.f32.mxu0 0.0
    %1749 = vmatmul.mubr.f32.gmra.mxu0 %v96
    %v1750 = vpop.f32.mrf.mxu0
    %v1751 = vadd.f32 0.0, %v1750
    %v1752 = vpop.f32.mrf.mxu0
    %v1753 = vadd.f32 0.0, %v1752
    %1754 = vmatprep.mubr.f32.mxu0 0.0
    %1755 = vmatmul.mubr.f32.gmra.mxu0 %v97
    %v1756 = vpop.f32.mrf.mxu0
    %v1757 = vadd.f32 0.0, %v1756
    %v1758 = vpop.f32.mrf.mxu0
    %v1759 = vadd.f32 0.0, %v1758
    %1760 = vmatprep.mubr.f32.mxu0 0.0
    %1761 = vmatmul.mubr.f32.gmra.mxu0 %v98
    %v1762 = vpop.f32.mrf.mxu0
    %v1763 = vadd.f32 0.0, %v1762
    %v1764 = vpop.f32.mrf.mxu0
    %v1765 = vadd.f32 0.0, %v1764
    %1766 = vmatprep.mubr.f32.mxu0 0.0
    %1767 = vmatmul.mubr.f32.gmra.mxu0 %v99
    %v1768 = vpop.f32.mrf.mxu0
    %v1769 = vadd.f32 0.0, %v1768
    %v1770 = vpop.f32.mrf.mxu0
    %v1771 = vadd.f32 0.0, %v1770
    %1772 = vmatprep.mubr.f32.mxu0 0.0
    %1773 = vmatmul.mubr.f32.gmra.mxu0 %v100
    %v1774 = vpop.f32.mrf.mxu0
    %v1775 = vadd.f32 0.0, %v1774
    %v1776 = vpop.f32.mrf.mxu0
    %v1777 = vadd.f32 0.0, %v1776
    %1778 = vmatprep.mubr.f32.mxu0 0.0
    %1779 = vmatmul.mubr.f32.gmra.mxu0 %v101
    %v1780 = vpop.f32.mrf.mxu0
    %v1781 = vadd.f32 0.0, %v1780
    %v1782 = vpop.f32.mrf.mxu0
    %v1783 = vadd.f32 0.0, %v1782
    %1784 = vmatprep.mubr.f32.mxu0 0.0
    %1785 = vmatmul.mubr.f32.gmra.mxu0 %v102
    %v1786 = vpop.f32.mrf.mxu0
    %v1787 = vadd.f32 0.0, %v1786
    %v1788 = vpop.f32.mrf.mxu0
    %v1789 = vadd.f32 0.0, %v1788
    %1790 = vmatprep.mubr.f32.mxu0 0.0
    %1791 = vmatmul.mubr.f32.gmra.mxu0 %v103
    %v1792 = vpop.f32.mrf.mxu0
    %v1793 = vadd.f32 0.0, %v1792
    %v1794 = vpop.f32.mrf.mxu0
    %v1795 = vadd.f32 0.0, %v1794
    %1796 = vmatprep.mubr.f32.mxu0 0.0
    %1797 = vmatmul.mubr.f32.gmra.mxu0 %v104
    %v1798 = vpop.f32.mrf.mxu0
    %v1799 = vadd.f32 0.0, %v1798
    %v1800 = vpop.f32.mrf.mxu0
    %v1801 = vadd.f32 0.0, %v1800
    %1802 = vmatprep.mubr.f32.mxu0 0.0
    %1803 = vmatmul.mubr.f32.gmra.mxu0 %v105
    %v1804 = vpop.f32.mrf.mxu0
    %v1805 = vadd.f32 0.0, %v1804
    %v1806 = vpop.f32.mrf.mxu0
    %v1807 = vadd.f32 0.0, %v1806
    %1808 = vmatprep.mubr.f32.mxu0 0.0
    %1809 = vmatmul.mubr.f32.gmra.mxu0 %v106
    %v1810 = vpop.f32.mrf.mxu0
    %v1811 = vadd.f32 0.0, %v1810
    %v1812 = vpop.f32.mrf.mxu0
    %v1813 = vadd.f32 0.0, %v1812
    %1814 = vmatprep.mubr.f32.mxu0 0.0
    %1815 = vmatmul.mubr.f32.gmra.mxu0 %v107
    %v1816 = vpop.f32.mrf.mxu0
    %v1817 = vadd.f32 0.0, %v1816
    %v1818 = vpop.f32.mrf.mxu0
    %v1819 = vadd.f32 0.0, %v1818
    %1820 = vmatprep.mubr.f32.mxu0 0.0
    %1821 = vmatmul.mubr.f32.gmra.mxu0 %v108
    %v1822 = vpop.f32.mrf.mxu0
    %v1823 = vadd.f32 0.0, %v1822
    %v1824 = vpop.f32.mrf.mxu0
    %v1825 = vadd.f32 0.0, %v1824
    %1826 = vmatprep.mubr.f32.mxu0 0.0
    %1827 = vmatmul.mubr.f32.gmra.mxu0 %v109
    %v1828 = vpop.f32.mrf.mxu0
    %v1829 = vadd.f32 0.0, %v1828
    %v1830 = vpop.f32.mrf.mxu0
    %v1831 = vadd.f32 0.0, %v1830
    %1832 = vmatprep.mubr.f32.mxu0 0.0
    %1833 = vmatmul.mubr.f32.gmra.mxu0 %v110
    %v1834 = vpop.f32.mrf.mxu0
    %v1835 = vadd.f32 0.0, %v1834
    %v1836 = vpop.f32.mrf.mxu0
    %v1837 = vadd.f32 0.0, %v1836
    %1838 = vmatprep.mubr.f32.mxu0 0.0
    %1839 = vmatmul.mubr.f32.gmra.mxu0 %v111
    %v1840 = vpop.f32.mrf.mxu0
    %v1841 = vadd.f32 0.0, %v1840
    %v1842 = vpop.f32.mrf.mxu0
    %v1843 = vadd.f32 0.0, %v1842
    %1844 = vmatprep.mubr.f32.mxu0 0.0
    %1845 = vmatmul.mubr.f32.gmra.mxu0 %v112
    %v1846 = vpop.f32.mrf.mxu0
    %v1847 = vadd.f32 0.0, %v1846
    %v1848 = vpop.f32.mrf.mxu0
    %v1849 = vadd.f32 0.0, %v1848
    %1850 = vmatprep.mubr.f32.mxu0 0.0
    %1851 = vmatmul.mubr.f32.gmra.mxu0 %v113
    %v1852 = vpop.f32.mrf.mxu0
    %v1853 = vadd.f32 0.0, %v1852
    %v1854 = vpop.f32.mrf.mxu0
    %v1855 = vadd.f32 0.0, %v1854
    %1856 = vmatprep.mubr.f32.mxu0 0.0
    %1857 = vmatmul.mubr.f32.gmra.mxu0 %v114
    %v1858 = vpop.f32.mrf.mxu0
    %v1859 = vadd.f32 0.0, %v1858
    %v1860 = vpop.f32.mrf.mxu0
    %v1861 = vadd.f32 0.0, %v1860
    %1862 = vmatprep.mubr.f32.mxu0 0.0
    %1863 = vmatmul.mubr.f32.gmra.mxu0 %v115
    %v1864 = vpop.f32.mrf.mxu0
    %v1865 = vadd.f32 0.0, %v1864
    %v1866 = vpop.f32.mrf.mxu0
    %v1867 = vadd.f32 0.0, %v1866
    %1868 = vmatprep.mubr.f32.mxu0 0.0
    %1869 = vmatmul.mubr.f32.gmra.mxu0 %v116
    %v1870 = vpop.f32.mrf.mxu0
    %v1871 = vadd.f32 0.0, %v1870
    %v1872 = vpop.f32.mrf.mxu0
    %v1873 = vadd.f32 0.0, %v1872
    %1874 = vmatprep.mubr.f32.mxu0 0.0
    %1875 = vmatmul.mubr.f32.gmra.mxu0 %v117
    %v1876 = vpop.f32.mrf.mxu0
    %v1877 = vadd.f32 0.0, %v1876
    %v1878 = vpop.f32.mrf.mxu0
    %v1879 = vadd.f32 0.0, %v1878
    %1880 = vmatprep.mubr.f32.mxu0 0.0
    %1881 = vmatmul.mubr.f32.gmra.mxu0 %v118
    %v1882 = vpop.f32.mrf.mxu0
    %v1883 = vadd.f32 0.0, %v1882
    %v1884 = vpop.f32.mrf.mxu0
    %v1885 = vadd.f32 0.0, %v1884
    %1886 = vmatprep.mubr.f32.mxu0 0.0
    %1887 = vmatmul.mubr.f32.gmra.mxu0 %v119
    %v1888 = vpop.f32.mrf.mxu0
    %v1889 = vadd.f32 0.0, %v1888
    %v1890 = vpop.f32.mrf.mxu0
    %v1891 = vadd.f32 0.0, %v1890
    %1892 = vmatprep.mubr.f32.mxu0 0.0
    %1893 = vmatmul.mubr.f32.gmra.mxu0 %v120
    %v1894 = vpop.f32.mrf.mxu0
    %v1895 = vadd.f32 0.0, %v1894
    %v1896 = vpop.f32.mrf.mxu0
    %v1897 = vadd.f32 0.0, %v1896
    %1898 = vmatprep.mubr.f32.mxu0 0.0
    %1899 = vmatmul.mubr.f32.gmra.mxu0 %v121
    %v1900 = vpop.f32.mrf.mxu0
    %v1901 = vadd.f32 0.0, %v1900
    %v1902 = vpop.f32.mrf.mxu0
    %v1903 = vadd.f32 0.0, %v1902
    %1904 = vmatprep.mubr.f32.mxu0 0.0
    %1905 = vmatmul.mubr.f32.gmra.mxu0 %v122
    %v1906 = vpop.f32.mrf.mxu0
    %v1907 = vadd.f32 0.0, %v1906
    %v1908 = vpop.f32.mrf.mxu0
    %v1909 = vadd.f32 0.0, %v1908
    %1910 = vmatprep.mubr.f32.mxu0 0.0
    %1911 = vmatmul.mubr.f32.gmra.mxu0 %v123
    %v1912 = vpop.f32.mrf.mxu0
    %v1913 = vadd.f32 0.0, %v1912
    %v1914 = vpop.f32.mrf.mxu0
    %v1915 = vadd.f32 0.0, %v1914
    %1916 = vmatprep.mubr.f32.mxu0 0.0
    %1917 = vmatmul.mubr.f32.gmra.mxu0 %v124
    %v1918 = vpop.f32.mrf.mxu0
    %v1919 = vadd.f32 0.0, %v1918
    %v1920 = vpop.f32.mrf.mxu0
    %v1921 = vadd.f32 0.0, %v1920
    %1922 = vmatprep.mubr.f32.mxu0 0.0
    %1923 = vmatmul.mubr.f32.gmra.mxu0 %v125
    %v1924 = vpop.f32.mrf.mxu0
    %v1925 = vadd.f32 0.0, %v1924
    %v1926 = vpop.f32.mrf.mxu0
    %v1927 = vadd.f32 0.0, %v1926
    %1928 = vmatprep.mubr.f32.mxu0 0.0
    %1929 = vmatmul.mubr.f32.gmra.mxu0 %v126
    %v1930 = vpop.f32.mrf.mxu0
    %v1931 = vadd.f32 0.0, %v1930
    %v1932 = vpop.f32.mrf.mxu0
    %v1933 = vadd.f32 0.0, %v1932
    %1934 = vmatprep.mubr.f32.mxu0 0.0
    %1935 = vmatmul.mubr.f32.gmra.mxu0 %v127
    %v1936 = vpop.f32.mrf.mxu0
    %v1937 = vadd.f32 0.0, %v1936
    %v1938 = vpop.f32.mrf.mxu0
    %v1939 = vadd.f32 0.0, %v1938
    %1940 = vmatprep.mubr.f32.mxu0 0.0
    %1941 = vmatmul.mubr.f32.gmra.mxu0 %v128
    %v1942 = vpop.f32.mrf.mxu0
    %v1943 = vadd.f32 0.0, %v1942
    %v1944 = vpop.f32.mrf.mxu0
    %v1945 = vadd.f32 0.0, %v1944
    %1946 = vmatprep.mubr.f32.mxu0 0.0
    %1947 = vmatmul.mubr.f32.gmra.mxu0 %v129
    %v1948 = vpop.f32.mrf.mxu0
    %v1949 = vadd.f32 0.0, %v1948
    %v1950 = vpop.f32.mrf.mxu0
    %v1951 = vadd.f32 0.0, %v1950
    %1952 = vmatprep.mubr.f32.mxu0 0.0
    %1953 = vmatmul.mubr.f32.gmra.mxu0 %v130
    %v1954 = vpop.f32.mrf.mxu0
    %v1955 = vadd.f32 0.0, %v1954
    %v1956 = vpop.f32.mrf.mxu0
    %v1957 = vadd.f32 0.0, %v1956
    %1958 = vmatprep.mubr.f32.mxu0 0.0
    %1959 = vmatmul.mubr.f32.gmra.mxu0 %v131
    %v1960 = vpop.f32.mrf.mxu0
    %v1961 = vadd.f32 0.0, %v1960
    %v1962 = vpop.f32.mrf.mxu0
    %v1963 = vadd.f32 0.0, %v1962
    %1964 = vmatprep.mubr.f32.mxu0 0.0
    %1965 = vmatmul.mubr.f32.gmra.mxu0 %v132
    %v1966 = vpop.f32.mrf.mxu0
    %v1967 = vadd.f32 0.0, %v1966
    %v1968 = vpop.f32.mrf.mxu0
    %v1969 = vadd.f32 0.0, %v1968
    %1970 = vmatprep.mubr.f32.mxu0 0.0
    %1971 = vmatmul.mubr.f32.gmra.mxu0 %v133
    %v1972 = vpop.f32.mrf.mxu0
    %v1973 = vadd.f32 0.0, %v1972
    %v1974 = vpop.f32.mrf.mxu0
    %v1975 = vadd.f32 0.0, %v1974
    %1976 = vmatprep.mubr.f32.mxu0 0.0
    %1977 = vmatmul.mubr.f32.gmra.mxu0 %v134
    %v1978 = vpop.f32.mrf.mxu0
    %v1979 = vadd.f32 0.0, %v1978
    %v1980 = vpop.f32.mrf.mxu0
    %v1981 = vadd.f32 0.0, %v1980
    %1982 = vmatprep.mubr.f32.mxu0 0.0
    %1983 = vmatmul.mubr.f32.gmra.mxu0 %v135
    %v1984 = vpop.f32.mrf.mxu0
    %v1985 = vadd.f32 0.0, %v1984
    %v1986 = vpop.f32.mrf.mxu0
    %v1987 = vadd.f32 0.0, %v1986
    %1988 = vmatprep.mubr.f32.mxu0 0.0
    %1989 = vmatmul.mubr.f32.gmra.mxu0 %v136
    %v1990 = vpop.f32.mrf.mxu0
    %v1991 = vadd.f32 0.0, %v1990
    %v1992 = vpop.f32.mrf.mxu0
    %v1993 = vadd.f32 0.0, %v1992
    %1994 = vmatprep.mubr.f32.mxu0 0.0
    %1995 = vmatmul.mubr.f32.gmra.mxu0 %v137
    %v1996 = vpop.f32.mrf.mxu0
    %v1997 = vadd.f32 0.0, %v1996
    %v1998 = vpop.f32.mrf.mxu0
    %v1999 = vadd.f32 0.0, %v1998
    %2000 = vmatprep.mubr.f32.mxu0 0.0
    %2001 = vmatmul.mubr.f32.gmra.mxu0 %v138
    %v2002 = vpop.f32.mrf.mxu0
    %v2003 = vadd.f32 0.0, %v2002
    %v2004 = vpop.f32.mrf.mxu0
    %v2005 = vadd.f32 0.0, %v2004
    %2006 = vmatprep.mubr.f32.mxu0 0.0
    %2007 = vmatmul.mubr.f32.gmra.mxu0 %v139
    %v2008 = vpop.f32.mrf.mxu0
    %v2009 = vadd.f32 0.0, %v2008
    %v2010 = vpop.f32.mrf.mxu0
    %v2011 = vadd.f32 0.0, %v2010
    %2012 = vmatprep.mubr.f32.mxu0 0.0
    %2013 = vmatmul.mubr.f32.gmra.mxu0 %v140
    %v2014 = vpop.f32.mrf.mxu0
    %v2015 = vadd.f32 0.0, %v2014
    %v2016 = vpop.f32.mrf.mxu0
    %v2017 = vadd.f32 0.0, %v2016
    %2018 = vmatprep.mubr.f32.mxu0 0.0
    %2019 = vmatmul.mubr.f32.gmra.mxu0 %v141
    %v2020 = vpop.f32.mrf.mxu0
    %v2021 = vadd.f32 0.0, %v2020
    %v2022 = vpop.f32.mrf.mxu0
    %v2023 = vadd.f32 0.0, %v2022
    %2024 = vmatprep.mubr.f32.mxu0 0.0
    %2025 = vmatmul.mubr.f32.gmra.mxu0 %v142
    %v2026 = vpop.f32.mrf.mxu0
    %v2027 = vadd.f32 0.0, %v2026
    %v2028 = vpop.f32.mrf.mxu0
    %v2029 = vadd.f32 0.0, %v2028
    %2030 = vmatprep.mubr.f32.mxu0 0.0
    %2031 = vmatmul.mubr.f32.gmra.mxu0 %v143
    %v2032 = vpop.f32.mrf.mxu0
    %v2033 = vadd.f32 0.0, %v2032
    %v2034 = vpop.f32.mrf.mxu0
    %v2035 = vadd.f32 0.0, %v2034
    %2036 = vmatprep.mubr.f32.mxu0 0.0
    %2037 = vmatmul.mubr.f32.gmra.mxu0 %v144
    %v2038 = vpop.f32.mrf.mxu0
    %v2039 = vadd.f32 0.0, %v2038
    %v2040 = vpop.f32.mrf.mxu0
    %v2041 = vadd.f32 0.0, %v2040
    %2042 = vmatprep.mubr.f32.mxu0 0.0
    %2043 = vmatmul.mubr.f32.gmra.mxu0 %v145
    %v2044 = vpop.f32.mrf.mxu0
    %v2045 = vadd.f32 0.0, %v2044
    %v2046 = vpop.f32.mrf.mxu0
    %v2047 = vadd.f32 0.0, %v2046
    %2048 = vmatprep.mubr.f32.mxu0 0.0
    %2049 = vmatmul.mubr.f32.gmra.mxu0 %v146
    %v2050 = vpop.f32.mrf.mxu0
    %v2051 = vadd.f32 0.0, %v2050
    %v2052 = vpop.f32.mrf.mxu0
    %v2053 = vadd.f32 0.0, %v2052
    %2054 = vmatprep.mubr.f32.mxu0 0.0
    %2055 = vmatmul.mubr.f32.gmra.mxu0 %v147
    %v2056 = vpop.f32.mrf.mxu0
    %v2057 = vadd.f32 0.0, %v2056
    %v2058 = vpop.f32.mrf.mxu0
    %v2059 = vadd.f32 0.0, %v2058
    %2060 = vmatprep.mubr.f32.mxu0 0.0
    %2061 = vmatmul.mubr.f32.gmra.mxu0 %v148
    %v2062 = vpop.f32.mrf.mxu0
    %v2063 = vadd.f32 0.0, %v2062
    %v2064 = vpop.f32.mrf.mxu0
    %v2065 = vadd.f32 0.0, %v2064
    %2066 = vdwg.mxu0
    %2067 = vmatprep.subr.mxu0 %v289
    %2068 = vmatpush1.msra.mxu0 %v288
    %2069 = vmatprep.subr.mxu0 %v280
    %2070 = vmatpush1.msra.mxu0 %v279
    %2071 = vmatprep.subr.mxu0 %v271
    %2072 = vmatpush1.msra.mxu0 %v270
    %2073 = vmatprep.subr.mxu0 %v262
    %2074 = vmatpush1.msra.mxu0 %v261
    %2075 = vmatprep.subr.mxu0 %v253
    %2076 = vmatpush1.msra.mxu0 %v252
    %2077 = vmatprep.subr.mxu0 %v244
    %2078 = vmatpush1.msra.mxu0 %v243
    %2079 = vmatprep.subr.mxu0 %v235
    %2080 = vmatpush1.msra.mxu0 %v234
    %2081 = vmatprep.subr.mxu0 %v226
    %2082 = vmatpush1.msra.mxu0 %v225
    %2083 = vmatprep.subr.mxu0 %v217
    %2084 = vmatpush1.msra.mxu0 %v216
    %2085 = vmatprep.subr.mxu0 %v208
    %2086 = vmatpush1.msra.mxu0 %v207
    %2087 = vmatprep.subr.mxu0 %v199
    %2088 = vmatpush1.msra.mxu0 %v198
    %2089 = vmatprep.subr.mxu0 %v190
    %2090 = vmatpush1.msra.mxu0 %v189
    %2091 = vmatprep.subr.mxu0 %v181
    %2092 = vmatpush1.msra.mxu0 %v180
    %2093 = vmatprep.subr.mxu0 %v172
    %2094 = vmatpush1.msra.mxu0 %v171
    %2095 = vmatprep.subr.mxu0 %v163
    %2096 = vmatpush1.msra.mxu0 %v162
    %2097 = vmatprep.subr.mxu0 %v154
    %2098 = vmatpush1.msra.mxu0 %v153
    %2099 = vmatprep.subr.mxu0 0.0
    %2100 = vmatpush2.msra.mxu0 0.0
    %2101 = vmatprep.subr.mxu0 0.0
    %2102 = vmatpush2.msra.mxu0 0.0
    %2103 = vmatprep.subr.mxu0 0.0
    %2104 = vmatpush2.msra.mxu0 0.0
    %2105 = vmatprep.subr.mxu0 0.0
    %2106 = vmatpush2.msra.mxu0 0.0
    %2107 = vmatprep.subr.mxu0 0.0
    %2108 = vmatpush2.msra.mxu0 0.0
    %2109 = vmatprep.subr.mxu0 0.0
    %2110 = vmatpush2.msra.mxu0 0.0
    %2111 = vmatprep.subr.mxu0 0.0
    %2112 = vmatpush2.msra.mxu0 0.0
    %2113 = vmatprep.subr.mxu0 0.0
    %2114 = vmatpush2.msra.mxu0 0.0
    %2115 = vmatprep.subr.mxu0 0.0
    %2116 = vmatpush2.msra.mxu0 0.0
    %2117 = vmatprep.subr.mxu0 0.0
    %2118 = vmatpush2.msra.mxu0 0.0
    %2119 = vmatprep.subr.mxu0 0.0
    %2120 = vmatpush2.msra.mxu0 0.0
    %2121 = vmatprep.subr.mxu0 0.0
    %2122 = vmatpush2.msra.mxu0 0.0
    %2123 = vmatprep.subr.mxu0 0.0
    %2124 = vmatpush2.msra.mxu0 0.0
    %2125 = vmatprep.subr.mxu0 0.0
    %2126 = vmatpush2.msra.mxu0 0.0
    %2127 = vmatprep.subr.mxu0 0.0
    %2128 = vmatpush2.msra.mxu0 0.0
    %2129 = vmatprep.subr.mxu0 0.0
    %2130 = vmatpush2.msra.mxu0 0.0
    %2131 = vmatprep.mubr.f32.mxu0 0.0
    %2132 = vmatmul.mubr.f32.gmra.mxu0 %v12
    %v2133 = vpop.f32.mrf.mxu0
    %v2134 = vadd.f32 0.0, %v2133
    %v2135 = vpop.f32.mrf.mxu0
    %v2136 = vadd.f32 0.0, %v2135
    %2137 = vmatprep.mubr.f32.mxu0 0.0
    %2138 = vmatmul.mubr.f32.gmra.mxu0 %v13
    %v2139 = vpop.f32.mrf.mxu0
    %v2140 = vadd.f32 0.0, %v2139
    %v2141 = vpop.f32.mrf.mxu0
    %v2142 = vadd.f32 0.0, %v2141
    %2143 = vmatprep.mubr.f32.mxu0 0.0
    %2144 = vmatmul.mubr.f32.gmra.mxu0 %v14
    %v2145 = vpop.f32.mrf.mxu0
    %v2146 = vadd.f32 0.0, %v2145
    %v2147 = vpop.f32.mrf.mxu0
    %v2148 = vadd.f32 0.0, %v2147
    %2149 = vmatprep.mubr.f32.mxu0 0.0
    %2150 = vmatmul.mubr.f32.gmra.mxu0 %v15
    %v2151 = vpop.f32.mrf.mxu0
    %v2152 = vadd.f32 0.0, %v2151
    %v2153 = vpop.f32.mrf.mxu0
    %v2154 = vadd.f32 0.0, %v2153
    %2155 = vmatprep.mubr.f32.mxu0 0.0
    %2156 = vmatmul.mubr.f32.gmra.mxu0 %v16
    %v2157 = vpop.f32.mrf.mxu0
    %v2158 = vadd.f32 0.0, %v2157
    %v2159 = vpop.f32.mrf.mxu0
    %v2160 = vadd.f32 0.0, %v2159
    %2161 = vmatprep.mubr.f32.mxu0 0.0
    %2162 = vmatmul.mubr.f32.gmra.mxu0 %v17
    %v2163 = vpop.f32.mrf.mxu0
    %v2164 = vadd.f32 0.0, %v2163
    %v2165 = vpop.f32.mrf.mxu0
    %v2166 = vadd.f32 0.0, %v2165
    %2167 = vmatprep.mubr.f32.mxu0 0.0
    %2168 = vmatmul.mubr.f32.gmra.mxu0 %v18
    %v2169 = vpop.f32.mrf.mxu0
    %v2170 = vadd.f32 0.0, %v2169
    %v2171 = vpop.f32.mrf.mxu0
    %v2172 = vadd.f32 0.0, %v2171
    %2173 = vmatprep.mubr.f32.mxu0 0.0
    %2174 = vmatmul.mubr.f32.gmra.mxu0 %v19
    %v2175 = vpop.f32.mrf.mxu0
    %v2176 = vadd.f32 0.0, %v2175
    %v2177 = vpop.f32.mrf.mxu0
    %v2178 = vadd.f32 0.0, %v2177
    %2179 = vmatprep.mubr.f32.mxu0 0.0
    %2180 = vmatmul.mubr.f32.gmra.mxu0 %v20
    %v2181 = vpop.f32.mrf.mxu0
    %v2182 = vadd.f32 0.0, %v2181
    %v2183 = vpop.f32.mrf.mxu0
    %v2184 = vadd.f32 0.0, %v2183
    %2185 = vmatprep.mubr.f32.mxu0 0.0
    %2186 = vmatmul.mubr.f32.gmra.mxu0 %v21
    %v2187 = vpop.f32.mrf.mxu0
    %v2188 = vadd.f32 0.0, %v2187
    %v2189 = vpop.f32.mrf.mxu0
    %v2190 = vadd.f32 0.0, %v2189
    %2191 = vmatprep.mubr.f32.mxu0 0.0
    %2192 = vmatmul.mubr.f32.gmra.mxu0 %v22
    %v2193 = vpop.f32.mrf.mxu0
    %v2194 = vadd.f32 0.0, %v2193
    %v2195 = vpop.f32.mrf.mxu0
    %v2196 = vadd.f32 0.0, %v2195
    %2197 = vmatprep.mubr.f32.mxu0 0.0
    %2198 = vmatmul.mubr.f32.gmra.mxu0 %v23
    %v2199 = vpop.f32.mrf.mxu0
    %v2200 = vadd.f32 0.0, %v2199
    %v2201 = vpop.f32.mrf.mxu0
    %v2202 = vadd.f32 0.0, %v2201
    %2203 = vmatprep.mubr.f32.mxu0 0.0
    %2204 = vmatmul.mubr.f32.gmra.mxu0 %v24
    %v2205 = vpop.f32.mrf.mxu0
    %v2206 = vadd.f32 0.0, %v2205
    %v2207 = vpop.f32.mrf.mxu0
    %v2208 = vadd.f32 0.0, %v2207
    %2209 = vmatprep.mubr.f32.mxu0 0.0
    %2210 = vmatmul.mubr.f32.gmra.mxu0 %v25
    %v2211 = vpop.f32.mrf.mxu0
    %v2212 = vadd.f32 0.0, %v2211
    %v2213 = vpop.f32.mrf.mxu0
    %v2214 = vadd.f32 0.0, %v2213
    %2215 = vmatprep.mubr.f32.mxu0 0.0
    %2216 = vmatmul.mubr.f32.gmra.mxu0 %v26
    %v2217 = vpop.f32.mrf.mxu0
    %v2218 = vadd.f32 0.0, %v2217
    %v2219 = vpop.f32.mrf.mxu0
    %v2220 = vadd.f32 0.0, %v2219
    %2221 = vmatprep.mubr.f32.mxu0 0.0
    %2222 = vmatmul.mubr.f32.gmra.mxu0 %v27
    %v2223 = vpop.f32.mrf.mxu0
    %v2224 = vadd.f32 0.0, %v2223
    %v2225 = vpop.f32.mrf.mxu0
    %v2226 = vadd.f32 0.0, %v2225
    %2227 = vmatprep.mubr.f32.mxu0 0.0
    %2228 = vmatmul.mubr.f32.gmra.mxu0 %v28
    %v2229 = vpop.f32.mrf.mxu0
    %v2230 = vadd.f32 0.0, %v2229
    %v2231 = vpop.f32.mrf.mxu0
    %v2232 = vadd.f32 0.0, %v2231
    %2233 = vmatprep.mubr.f32.mxu0 0.0
    %2234 = vmatmul.mubr.f32.gmra.mxu0 %v29
    %v2235 = vpop.f32.mrf.mxu0
    %v2236 = vadd.f32 0.0, %v2235
    %v2237 = vpop.f32.mrf.mxu0
    %v2238 = vadd.f32 0.0, %v2237
    %2239 = vmatprep.mubr.f32.mxu0 0.0
    %2240 = vmatmul.mubr.f32.gmra.mxu0 %v30
    %v2241 = vpop.f32.mrf.mxu0
    %v2242 = vadd.f32 0.0, %v2241
    %v2243 = vpop.f32.mrf.mxu0
    %v2244 = vadd.f32 0.0, %v2243
    %2245 = vmatprep.mubr.f32.mxu0 0.0
    %2246 = vmatmul.mubr.f32.gmra.mxu0 %v31
    %v2247 = vpop.f32.mrf.mxu0
    %v2248 = vadd.f32 0.0, %v2247
    %v2249 = vpop.f32.mrf.mxu0
    %v2250 = vadd.f32 0.0, %v2249
    %2251 = vmatprep.mubr.f32.mxu0 0.0
    %2252 = vmatmul.mubr.f32.gmra.mxu0 %v32
    %v2253 = vpop.f32.mrf.mxu0
    %v2254 = vadd.f32 0.0, %v2253
    %v2255 = vpop.f32.mrf.mxu0
    %v2256 = vadd.f32 0.0, %v2255
    %2257 = vmatprep.mubr.f32.mxu0 0.0
    %2258 = vmatmul.mubr.f32.gmra.mxu0 %v33
    %v2259 = vpop.f32.mrf.mxu0
    %v2260 = vadd.f32 0.0, %v2259
    %v2261 = vpop.f32.mrf.mxu0
    %v2262 = vadd.f32 0.0, %v2261
    %2263 = vmatprep.mubr.f32.mxu0 0.0
    %2264 = vmatmul.mubr.f32.gmra.mxu0 %v34
    %v2265 = vpop.f32.mrf.mxu0
    %v2266 = vadd.f32 0.0, %v2265
    %v2267 = vpop.f32.mrf.mxu0
    %v2268 = vadd.f32 0.0, %v2267
    %2269 = vmatprep.mubr.f32.mxu0 0.0
    %2270 = vmatmul.mubr.f32.gmra.mxu0 %v35
    %v2271 = vpop.f32.mrf.mxu0
    %v2272 = vadd.f32 0.0, %v2271
    %v2273 = vpop.f32.mrf.mxu0
    %v2274 = vadd.f32 0.0, %v2273
    %2275 = vmatprep.mubr.f32.mxu0 0.0
    %2276 = vmatmul.mubr.f32.gmra.mxu0 %v36
    %v2277 = vpop.f32.mrf.mxu0
    %v2278 = vadd.f32 0.0, %v2277
    %v2279 = vpop.f32.mrf.mxu0
    %v2280 = vadd.f32 0.0, %v2279
    %2281 = vmatprep.mubr.f32.mxu0 0.0
    %2282 = vmatmul.mubr.f32.gmra.mxu0 %v37
    %v2283 = vpop.f32.mrf.mxu0
    %v2284 = vadd.f32 0.0, %v2283
    %v2285 = vpop.f32.mrf.mxu0
    %v2286 = vadd.f32 0.0, %v2285
    %2287 = vmatprep.mubr.f32.mxu0 0.0
    %2288 = vmatmul.mubr.f32.gmra.mxu0 %v38
    %v2289 = vpop.f32.mrf.mxu0
    %v2290 = vadd.f32 0.0, %v2289
    %v2291 = vpop.f32.mrf.mxu0
    %v2292 = vadd.f32 0.0, %v2291
    %2293 = vmatprep.mubr.f32.mxu0 0.0
    %2294 = vmatmul.mubr.f32.gmra.mxu0 %v39
    %v2295 = vpop.f32.mrf.mxu0
    %v2296 = vadd.f32 0.0, %v2295
    %v2297 = vpop.f32.mrf.mxu0
    %v2298 = vadd.f32 0.0, %v2297
    %2299 = vmatprep.mubr.f32.mxu0 0.0
    %2300 = vmatmul.mubr.f32.gmra.mxu0 %v40
    %v2301 = vpop.f32.mrf.mxu0
    %v2302 = vadd.f32 0.0, %v2301
    %v2303 = vpop.f32.mrf.mxu0
    %v2304 = vadd.f32 0.0, %v2303
    %2305 = vmatprep.mubr.f32.mxu0 0.0
    %2306 = vmatmul.mubr.f32.gmra.mxu0 %v41
    %v2307 = vpop.f32.mrf.mxu0
    %v2308 = vadd.f32 0.0, %v2307
    %v2309 = vpop.f32.mrf.mxu0
    %v2310 = vadd.f32 0.0, %v2309
    %2311 = vmatprep.mubr.f32.mxu0 0.0
    %2312 = vmatmul.mubr.f32.gmra.mxu0 %v42
    %v2313 = vpop.f32.mrf.mxu0
    %v2314 = vadd.f32 0.0, %v2313
    %v2315 = vpop.f32.mrf.mxu0
    %v2316 = vadd.f32 0.0, %v2315
    %2317 = vmatprep.mubr.f32.mxu0 0.0
    %2318 = vmatmul.mubr.f32.gmra.mxu0 %v43
    %v2319 = vpop.f32.mrf.mxu0
    %v2320 = vadd.f32 0.0, %v2319
    %v2321 = vpop.f32.mrf.mxu0
    %v2322 = vadd.f32 0.0, %v2321
    %2323 = vmatprep.mubr.f32.mxu0 0.0
    %2324 = vmatmul.mubr.f32.gmra.mxu0 %v44
    %v2325 = vpop.f32.mrf.mxu0
    %v2326 = vadd.f32 0.0, %v2325
    %v2327 = vpop.f32.mrf.mxu0
    %v2328 = vadd.f32 0.0, %v2327
    %2329 = vmatprep.mubr.f32.mxu0 0.0
    %2330 = vmatmul.mubr.f32.gmra.mxu0 %v45
    %v2331 = vpop.f32.mrf.mxu0
    %v2332 = vadd.f32 0.0, %v2331
    %v2333 = vpop.f32.mrf.mxu0
    %v2334 = vadd.f32 0.0, %v2333
    %2335 = vmatprep.mubr.f32.mxu0 0.0
    %2336 = vmatmul.mubr.f32.gmra.mxu0 %v46
    %v2337 = vpop.f32.mrf.mxu0
    %v2338 = vadd.f32 0.0, %v2337
    %v2339 = vpop.f32.mrf.mxu0
    %v2340 = vadd.f32 0.0, %v2339
    %2341 = vmatprep.mubr.f32.mxu0 0.0
    %2342 = vmatmul.mubr.f32.gmra.mxu0 %v47
    %v2343 = vpop.f32.mrf.mxu0
    %v2344 = vadd.f32 0.0, %v2343
    %v2345 = vpop.f32.mrf.mxu0
    %v2346 = vadd.f32 0.0, %v2345
    %2347 = vmatprep.mubr.f32.mxu0 0.0
    %2348 = vmatmul.mubr.f32.gmra.mxu0 %v48
    %v2349 = vpop.f32.mrf.mxu0
    %v2350 = vadd.f32 0.0, %v2349
    %v2351 = vpop.f32.mrf.mxu0
    %v2352 = vadd.f32 0.0, %v2351
    %2353 = vmatprep.mubr.f32.mxu0 0.0
    %2354 = vmatmul.mubr.f32.gmra.mxu0 %v49
    %v2355 = vpop.f32.mrf.mxu0
    %v2356 = vadd.f32 0.0, %v2355
    %v2357 = vpop.f32.mrf.mxu0
    %v2358 = vadd.f32 0.0, %v2357
    %2359 = vmatprep.mubr.f32.mxu0 0.0
    %2360 = vmatmul.mubr.f32.gmra.mxu0 %v50
    %v2361 = vpop.f32.mrf.mxu0
    %v2362 = vadd.f32 0.0, %v2361
    %v2363 = vpop.f32.mrf.mxu0
    %v2364 = vadd.f32 0.0, %v2363
    %2365 = vmatprep.mubr.f32.mxu0 0.0
    %2366 = vmatmul.mubr.f32.gmra.mxu0 %v51
    %v2367 = vpop.f32.mrf.mxu0
    %v2368 = vadd.f32 0.0, %v2367
    %v2369 = vpop.f32.mrf.mxu0
    %v2370 = vadd.f32 0.0, %v2369
    %2371 = vmatprep.mubr.f32.mxu0 0.0
    %2372 = vmatmul.mubr.f32.gmra.mxu0 %v52
    %v2373 = vpop.f32.mrf.mxu0
    %v2374 = vadd.f32 0.0, %v2373
    %v2375 = vpop.f32.mrf.mxu0
    %v2376 = vadd.f32 0.0, %v2375
    %2377 = vmatprep.mubr.f32.mxu0 0.0
    %2378 = vmatmul.mubr.f32.gmra.mxu0 %v53
    %v2379 = vpop.f32.mrf.mxu0
    %v2380 = vadd.f32 0.0, %v2379
    %v2381 = vpop.f32.mrf.mxu0
    %v2382 = vadd.f32 0.0, %v2381
    %2383 = vmatprep.mubr.f32.mxu0 0.0
    %2384 = vmatmul.mubr.f32.gmra.mxu0 %v54
    %v2385 = vpop.f32.mrf.mxu0
    %v2386 = vadd.f32 0.0, %v2385
    %v2387 = vpop.f32.mrf.mxu0
    %v2388 = vadd.f32 0.0, %v2387
    %2389 = vmatprep.mubr.f32.mxu0 0.0
    %2390 = vmatmul.mubr.f32.gmra.mxu0 %v55
    %v2391 = vpop.f32.mrf.mxu0
    %v2392 = vadd.f32 0.0, %v2391
    %v2393 = vpop.f32.mrf.mxu0
    %v2394 = vadd.f32 0.0, %v2393
    %2395 = vmatprep.mubr.f32.mxu0 0.0
    %2396 = vmatmul.mubr.f32.gmra.mxu0 %v56
    %v2397 = vpop.f32.mrf.mxu0
    %v2398 = vadd.f32 0.0, %v2397
    %v2399 = vpop.f32.mrf.mxu0
    %v2400 = vadd.f32 0.0, %v2399
    %2401 = vmatprep.mubr.f32.mxu0 0.0
    %2402 = vmatmul.mubr.f32.gmra.mxu0 %v57
    %v2403 = vpop.f32.mrf.mxu0
    %v2404 = vadd.f32 0.0, %v2403
    %v2405 = vpop.f32.mrf.mxu0
    %v2406 = vadd.f32 0.0, %v2405
    %2407 = vmatprep.mubr.f32.mxu0 0.0
    %2408 = vmatmul.mubr.f32.gmra.mxu0 %v58
    %v2409 = vpop.f32.mrf.mxu0
    %v2410 = vadd.f32 0.0, %v2409
    %v2411 = vpop.f32.mrf.mxu0
    %v2412 = vadd.f32 0.0, %v2411
    %2413 = vmatprep.mubr.f32.mxu0 0.0
    %2414 = vmatmul.mubr.f32.gmra.mxu0 %v59
    %v2415 = vpop.f32.mrf.mxu0
    %v2416 = vadd.f32 0.0, %v2415
    %v2417 = vpop.f32.mrf.mxu0
    %v2418 = vadd.f32 0.0, %v2417
    %2419 = vmatprep.mubr.f32.mxu0 0.0
    %2420 = vmatmul.mubr.f32.gmra.mxu0 %v60
    %v2421 = vpop.f32.mrf.mxu0
    %v2422 = vadd.f32 0.0, %v2421
    %v2423 = vpop.f32.mrf.mxu0
    %v2424 = vadd.f32 0.0, %v2423
    %2425 = vmatprep.mubr.f32.mxu0 0.0
    %2426 = vmatmul.mubr.f32.gmra.mxu0 %v61
    %v2427 = vpop.f32.mrf.mxu0
    %v2428 = vadd.f32 0.0, %v2427
    %v2429 = vpop.f32.mrf.mxu0
    %v2430 = vadd.f32 0.0, %v2429
    %2431 = vmatprep.mubr.f32.mxu0 0.0
    %2432 = vmatmul.mubr.f32.gmra.mxu0 %v62
    %v2433 = vpop.f32.mrf.mxu0
    %v2434 = vadd.f32 0.0, %v2433
    %v2435 = vpop.f32.mrf.mxu0
    %v2436 = vadd.f32 0.0, %v2435
    %2437 = vmatprep.mubr.f32.mxu0 0.0
    %2438 = vmatmul.mubr.f32.gmra.mxu0 %v63
    %v2439 = vpop.f32.mrf.mxu0
    %v2440 = vadd.f32 0.0, %v2439
    %v2441 = vpop.f32.mrf.mxu0
    %v2442 = vadd.f32 0.0, %v2441
    %2443 = vmatprep.mubr.f32.mxu0 0.0
    %2444 = vmatmul.mubr.f32.gmra.mxu0 %v64
    %v2445 = vpop.f32.mrf.mxu0
    %v2446 = vadd.f32 0.0, %v2445
    %v2447 = vpop.f32.mrf.mxu0
    %v2448 = vadd.f32 0.0, %v2447
    %2449 = vmatprep.mubr.f32.mxu0 0.0
    %2450 = vmatmul.mubr.f32.gmra.mxu0 %v65
    %v2451 = vpop.f32.mrf.mxu0
    %v2452 = vadd.f32 0.0, %v2451
    %v2453 = vpop.f32.mrf.mxu0
    %v2454 = vadd.f32 0.0, %v2453
    %2455 = vmatprep.mubr.f32.mxu0 0.0
    %2456 = vmatmul.mubr.f32.gmra.mxu0 %v66
    %v2457 = vpop.f32.mrf.mxu0
    %v2458 = vadd.f32 0.0, %v2457
    %v2459 = vpop.f32.mrf.mxu0
    %v2460 = vadd.f32 0.0, %v2459
    %2461 = vmatprep.mubr.f32.mxu0 0.0
    %2462 = vmatmul.mubr.f32.gmra.mxu0 %v67
    %v2463 = vpop.f32.mrf.mxu0
    %v2464 = vadd.f32 0.0, %v2463
    %v2465 = vpop.f32.mrf.mxu0
    %v2466 = vadd.f32 0.0, %v2465
    %2467 = vmatprep.mubr.f32.mxu0 0.0
    %2468 = vmatmul.mubr.f32.gmra.mxu0 %v68
    %v2469 = vpop.f32.mrf.mxu0
    %v2470 = vadd.f32 0.0, %v2469
    %v2471 = vpop.f32.mrf.mxu0
    %v2472 = vadd.f32 0.0, %v2471
    %2473 = vmatprep.mubr.f32.mxu0 0.0
    %2474 = vmatmul.mubr.f32.gmra.mxu0 %v69
    %v2475 = vpop.f32.mrf.mxu0
    %v2476 = vadd.f32 0.0, %v2475
    %v2477 = vpop.f32.mrf.mxu0
    %v2478 = vadd.f32 0.0, %v2477
    %2479 = vmatprep.mubr.f32.mxu0 0.0
    %2480 = vmatmul.mubr.f32.gmra.mxu0 %v70
    %v2481 = vpop.f32.mrf.mxu0
    %v2482 = vadd.f32 0.0, %v2481
    %v2483 = vpop.f32.mrf.mxu0
    %v2484 = vadd.f32 0.0, %v2483
    %2485 = vmatprep.mubr.f32.mxu0 0.0
    %2486 = vmatmul.mubr.f32.gmra.mxu0 %v71
    %v2487 = vpop.f32.mrf.mxu0
    %v2488 = vadd.f32 0.0, %v2487
    %v2489 = vpop.f32.mrf.mxu0
    %v2490 = vadd.f32 0.0, %v2489
    %2491 = vmatprep.mubr.f32.mxu0 0.0
    %2492 = vmatmul.mubr.f32.gmra.mxu0 %v72
    %v2493 = vpop.f32.mrf.mxu0
    %v2494 = vadd.f32 0.0, %v2493
    %v2495 = vpop.f32.mrf.mxu0
    %v2496 = vadd.f32 0.0, %v2495
    %2497 = vmatprep.mubr.f32.mxu0 0.0
    %2498 = vmatmul.mubr.f32.gmra.mxu0 %v73
    %v2499 = vpop.f32.mrf.mxu0
    %v2500 = vadd.f32 0.0, %v2499
    %v2501 = vpop.f32.mrf.mxu0
    %v2502 = vadd.f32 0.0, %v2501
    %2503 = vmatprep.mubr.f32.mxu0 0.0
    %2504 = vmatmul.mubr.f32.gmra.mxu0 %v74
    %v2505 = vpop.f32.mrf.mxu0
    %v2506 = vadd.f32 0.0, %v2505
    %v2507 = vpop.f32.mrf.mxu0
    %v2508 = vadd.f32 0.0, %v2507
    %2509 = vmatprep.mubr.f32.mxu0 0.0
    %2510 = vmatmul.mubr.f32.gmra.mxu0 %v75
    %v2511 = vpop.f32.mrf.mxu0
    %v2512 = vadd.f32 0.0, %v2511
    %v2513 = vpop.f32.mrf.mxu0
    %v2514 = vadd.f32 0.0, %v2513
    %2515 = vmatprep.mubr.f32.mxu0 0.0
    %2516 = vmatmul.mubr.f32.gmra.mxu0 %v76
    %v2517 = vpop.f32.mrf.mxu0
    %v2518 = vadd.f32 0.0, %v2517
    %v2519 = vpop.f32.mrf.mxu0
    %v2520 = vadd.f32 0.0, %v2519
    %2521 = vmatprep.mubr.f32.mxu0 0.0
    %2522 = vmatmul.mubr.f32.gmra.mxu0 %v77
    %v2523 = vpop.f32.mrf.mxu0
    %v2524 = vadd.f32 0.0, %v2523
    %v2525 = vpop.f32.mrf.mxu0
    %v2526 = vadd.f32 0.0, %v2525
    %2527 = vmatprep.mubr.f32.mxu0 0.0
    %2528 = vmatmul.mubr.f32.gmra.mxu0 %v78
    %v2529 = vpop.f32.mrf.mxu0
    %v2530 = vadd.f32 0.0, %v2529
    %v2531 = vpop.f32.mrf.mxu0
    %v2532 = vadd.f32 0.0, %v2531
    %2533 = vmatprep.mubr.f32.mxu0 0.0
    %2534 = vmatmul.mubr.f32.gmra.mxu0 %v79
    %v2535 = vpop.f32.mrf.mxu0
    %v2536 = vadd.f32 0.0, %v2535
    %v2537 = vpop.f32.mrf.mxu0
    %v2538 = vadd.f32 0.0, %v2537
    %2539 = vmatprep.mubr.f32.mxu0 0.0
    %2540 = vmatmul.mubr.f32.gmra.mxu0 %v80
    %v2541 = vpop.f32.mrf.mxu0
    %v2542 = vadd.f32 0.0, %v2541
    %v2543 = vpop.f32.mrf.mxu0
    %v2544 = vadd.f32 0.0, %v2543
    %2545 = vmatprep.mubr.f32.mxu0 0.0
    %2546 = vmatmul.mubr.f32.gmra.mxu0 %v81
    %v2547 = vpop.f32.mrf.mxu0
    %v2548 = vadd.f32 0.0, %v2547
    %v2549 = vpop.f32.mrf.mxu0
    %v2550 = vadd.f32 0.0, %v2549
    %2551 = vmatprep.mubr.f32.mxu0 0.0
    %2552 = vmatmul.mubr.f32.gmra.mxu0 %v82
    %v2553 = vpop.f32.mrf.mxu0
    %v2554 = vadd.f32 0.0, %v2553
    %v2555 = vpop.f32.mrf.mxu0
    %v2556 = vadd.f32 0.0, %v2555
    %2557 = vmatprep.mubr.f32.mxu0 0.0
    %2558 = vmatmul.mubr.f32.gmra.mxu0 %v83
    %v2559 = vpop.f32.mrf.mxu0
    %v2560 = vadd.f32 0.0, %v2559
    %v2561 = vpop.f32.mrf.mxu0
    %v2562 = vadd.f32 0.0, %v2561
    %2563 = vmatprep.mubr.f32.mxu0 0.0
    %2564 = vmatmul.mubr.f32.gmra.mxu0 %v84
    %v2565 = vpop.f32.mrf.mxu0
    %v2566 = vadd.f32 0.0, %v2565
    %v2567 = vpop.f32.mrf.mxu0
    %v2568 = vadd.f32 0.0, %v2567
    %2569 = vmatprep.mubr.f32.mxu0 0.0
    %2570 = vmatmul.mubr.f32.gmra.mxu0 %v85
    %v2571 = vpop.f32.mrf.mxu0
    %v2572 = vadd.f32 0.0, %v2571
    %v2573 = vpop.f32.mrf.mxu0
    %v2574 = vadd.f32 0.0, %v2573
    %2575 = vmatprep.mubr.f32.mxu0 0.0
    %2576 = vmatmul.mubr.f32.gmra.mxu0 %v86
    %v2577 = vpop.f32.mrf.mxu0
    %v2578 = vadd.f32 0.0, %v2577
    %v2579 = vpop.f32.mrf.mxu0
    %v2580 = vadd.f32 0.0, %v2579
    %2581 = vmatprep.mubr.f32.mxu0 0.0
    %2582 = vmatmul.mubr.f32.gmra.mxu0 %v87
    %v2583 = vpop.f32.mrf.mxu0
    %v2584 = vadd.f32 0.0, %v2583
    %v2585 = vpop.f32.mrf.mxu0
    %v2586 = vadd.f32 0.0, %v2585
    %2587 = vmatprep.mubr.f32.mxu0 0.0
    %2588 = vmatmul.mubr.f32.gmra.mxu0 %v88
    %v2589 = vpop.f32.mrf.mxu0
    %v2590 = vadd.f32 0.0, %v2589
    %v2591 = vpop.f32.mrf.mxu0
    %v2592 = vadd.f32 0.0, %v2591
    %2593 = vmatprep.mubr.f32.mxu0 0.0
    %2594 = vmatmul.mubr.f32.gmra.mxu0 %v89
    %v2595 = vpop.f32.mrf.mxu0
    %v2596 = vadd.f32 0.0, %v2595
    %v2597 = vpop.f32.mrf.mxu0
    %v2598 = vadd.f32 0.0, %v2597
    %2599 = vmatprep.mubr.f32.mxu0 0.0
    %2600 = vmatmul.mubr.f32.gmra.mxu0 %v90
    %v2601 = vpop.f32.mrf.mxu0
    %v2602 = vadd.f32 0.0, %v2601
    %v2603 = vpop.f32.mrf.mxu0
    %v2604 = vadd.f32 0.0, %v2603
    %2605 = vmatprep.mubr.f32.mxu0 0.0
    %2606 = vmatmul.mubr.f32.gmra.mxu0 %v91
    %v2607 = vpop.f32.mrf.mxu0
    %v2608 = vadd.f32 0.0, %v2607
    %v2609 = vpop.f32.mrf.mxu0
    %v2610 = vadd.f32 0.0, %v2609
    %2611 = vmatprep.mubr.f32.mxu0 0.0
    %2612 = vmatmul.mubr.f32.gmra.mxu0 %v92
    %v2613 = vpop.f32.mrf.mxu0
    %v2614 = vadd.f32 0.0, %v2613
    %v2615 = vpop.f32.mrf.mxu0
    %v2616 = vadd.f32 0.0, %v2615
    %2617 = vmatprep.mubr.f32.mxu0 0.0
    %2618 = vmatmul.mubr.f32.gmra.mxu0 %v93
    %v2619 = vpop.f32.mrf.mxu0
    %v2620 = vadd.f32 0.0, %v2619
    %v2621 = vpop.f32.mrf.mxu0
    %v2622 = vadd.f32 0.0, %v2621
    %2623 = vmatprep.mubr.f32.mxu0 0.0
    %2624 = vmatmul.mubr.f32.gmra.mxu0 %v94
    %v2625 = vpop.f32.mrf.mxu0
    %v2626 = vadd.f32 0.0, %v2625
    %v2627 = vpop.f32.mrf.mxu0
    %v2628 = vadd.f32 0.0, %v2627
    %2629 = vmatprep.mubr.f32.mxu0 0.0
    %2630 = vmatmul.mubr.f32.gmra.mxu0 %v95
    %v2631 = vpop.f32.mrf.mxu0
    %v2632 = vadd.f32 0.0, %v2631
    %v2633 = vpop.f32.mrf.mxu0
    %v2634 = vadd.f32 0.0, %v2633
    %2635 = vmatprep.mubr.f32.mxu0 0.0
    %2636 = vmatmul.mubr.f32.gmra.mxu0 %v96
    %v2637 = vpop.f32.mrf.mxu0
    %v2638 = vadd.f32 0.0, %v2637
    %v2639 = vpop.f32.mrf.mxu0
    %v2640 = vadd.f32 0.0, %v2639
    %2641 = vmatprep.mubr.f32.mxu0 0.0
    %2642 = vmatmul.mubr.f32.gmra.mxu0 %v97
    %v2643 = vpop.f32.mrf.mxu0
    %v2644 = vadd.f32 0.0, %v2643
    %v2645 = vpop.f32.mrf.mxu0
    %v2646 = vadd.f32 0.0, %v2645
    %2647 = vmatprep.mubr.f32.mxu0 0.0
    %2648 = vmatmul.mubr.f32.gmra.mxu0 %v98
    %v2649 = vpop.f32.mrf.mxu0
    %v2650 = vadd.f32 0.0, %v2649
    %v2651 = vpop.f32.mrf.mxu0
    %v2652 = vadd.f32 0.0, %v2651
    %2653 = vmatprep.mubr.f32.mxu0 0.0
    %2654 = vmatmul.mubr.f32.gmra.mxu0 %v99
    %v2655 = vpop.f32.mrf.mxu0
    %v2656 = vadd.f32 0.0, %v2655
    %v2657 = vpop.f32.mrf.mxu0
    %v2658 = vadd.f32 0.0, %v2657
    %2659 = vmatprep.mubr.f32.mxu0 0.0
    %2660 = vmatmul.mubr.f32.gmra.mxu0 %v100
    %v2661 = vpop.f32.mrf.mxu0
    %v2662 = vadd.f32 0.0, %v2661
    %v2663 = vpop.f32.mrf.mxu0
    %v2664 = vadd.f32 0.0, %v2663
    %2665 = vmatprep.mubr.f32.mxu0 0.0
    %2666 = vmatmul.mubr.f32.gmra.mxu0 %v101
    %v2667 = vpop.f32.mrf.mxu0
    %v2668 = vadd.f32 0.0, %v2667
    %v2669 = vpop.f32.mrf.mxu0
    %v2670 = vadd.f32 0.0, %v2669
    %2671 = vmatprep.mubr.f32.mxu0 0.0
    %2672 = vmatmul.mubr.f32.gmra.mxu0 %v102
    %v2673 = vpop.f32.mrf.mxu0
    %v2674 = vadd.f32 0.0, %v2673
    %v2675 = vpop.f32.mrf.mxu0
    %v2676 = vadd.f32 0.0, %v2675
    %2677 = vmatprep.mubr.f32.mxu0 0.0
    %2678 = vmatmul.mubr.f32.gmra.mxu0 %v103
    %v2679 = vpop.f32.mrf.mxu0
    %v2680 = vadd.f32 0.0, %v2679
    %v2681 = vpop.f32.mrf.mxu0
    %v2682 = vadd.f32 0.0, %v2681
    %2683 = vmatprep.mubr.f32.mxu0 0.0
    %2684 = vmatmul.mubr.f32.gmra.mxu0 %v104
    %v2685 = vpop.f32.mrf.mxu0
    %v2686 = vadd.f32 0.0, %v2685
    %v2687 = vpop.f32.mrf.mxu0
    %v2688 = vadd.f32 0.0, %v2687
    %2689 = vmatprep.mubr.f32.mxu0 0.0
    %2690 = vmatmul.mubr.f32.gmra.mxu0 %v105
    %v2691 = vpop.f32.mrf.mxu0
    %v2692 = vadd.f32 0.0, %v2691
    %v2693 = vpop.f32.mrf.mxu0
    %v2694 = vadd.f32 0.0, %v2693
    %2695 = vmatprep.mubr.f32.mxu0 0.0
    %2696 = vmatmul.mubr.f32.gmra.mxu0 %v106
    %v2697 = vpop.f32.mrf.mxu0
    %v2698 = vadd.f32 0.0, %v2697
    %v2699 = vpop.f32.mrf.mxu0
    %v2700 = vadd.f32 0.0, %v2699
    %2701 = vmatprep.mubr.f32.mxu0 0.0
    %2702 = vmatmul.mubr.f32.gmra.mxu0 %v107
    %v2703 = vpop.f32.mrf.mxu0
    %v2704 = vadd.f32 0.0, %v2703
    %v2705 = vpop.f32.mrf.mxu0
    %v2706 = vadd.f32 0.0, %v2705
    %2707 = vmatprep.mubr.f32.mxu0 0.0
    %2708 = vmatmul.mubr.f32.gmra.mxu0 %v108
    %v2709 = vpop.f32.mrf.mxu0
    %v2710 = vadd.f32 0.0, %v2709
    %v2711 = vpop.f32.mrf.mxu0
    %v2712 = vadd.f32 0.0, %v2711
    %2713 = vmatprep.mubr.f32.mxu0 0.0
    %2714 = vmatmul.mubr.f32.gmra.mxu0 %v109
    %v2715 = vpop.f32.mrf.mxu0
    %v2716 = vadd.f32 0.0, %v2715
    %v2717 = vpop.f32.mrf.mxu0
    %v2718 = vadd.f32 0.0, %v2717
    %2719 = vmatprep.mubr.f32.mxu0 0.0
    %2720 = vmatmul.mubr.f32.gmra.mxu0 %v110
    %v2721 = vpop.f32.mrf.mxu0
    %v2722 = vadd.f32 0.0, %v2721
    %v2723 = vpop.f32.mrf.mxu0
    %v2724 = vadd.f32 0.0, %v2723
    %2725 = vmatprep.mubr.f32.mxu0 0.0
    %2726 = vmatmul.mubr.f32.gmra.mxu0 %v111
    %v2727 = vpop.f32.mrf.mxu0
    %v2728 = vadd.f32 0.0, %v2727
    %v2729 = vpop.f32.mrf.mxu0
    %v2730 = vadd.f32 0.0, %v2729
    %2731 = vmatprep.mubr.f32.mxu0 0.0
    %2732 = vmatmul.mubr.f32.gmra.mxu0 %v112
    %v2733 = vpop.f32.mrf.mxu0
    %v2734 = vadd.f32 0.0, %v2733
    %v2735 = vpop.f32.mrf.mxu0
    %v2736 = vadd.f32 0.0, %v2735
    %2737 = vmatprep.mubr.f32.mxu0 0.0
    %2738 = vmatmul.mubr.f32.gmra.mxu0 %v113
    %v2739 = vpop.f32.mrf.mxu0
    %v2740 = vadd.f32 0.0, %v2739
    %v2741 = vpop.f32.mrf.mxu0
    %v2742 = vadd.f32 0.0, %v2741
    %2743 = vmatprep.mubr.f32.mxu0 0.0
    %2744 = vmatmul.mubr.f32.gmra.mxu0 %v114
    %v2745 = vpop.f32.mrf.mxu0
    %v2746 = vadd.f32 0.0, %v2745
    %v2747 = vpop.f32.mrf.mxu0
    %v2748 = vadd.f32 0.0, %v2747
    %2749 = vmatprep.mubr.f32.mxu0 0.0
    %2750 = vmatmul.mubr.f32.gmra.mxu0 %v115
    %v2751 = vpop.f32.mrf.mxu0
    %v2752 = vadd.f32 0.0, %v2751
    %v2753 = vpop.f32.mrf.mxu0
    %v2754 = vadd.f32 0.0, %v2753
    %2755 = vmatprep.mubr.f32.mxu0 0.0
    %2756 = vmatmul.mubr.f32.gmra.mxu0 %v116
    %v2757 = vpop.f32.mrf.mxu0
    %v2758 = vadd.f32 0.0, %v2757
    %v2759 = vpop.f32.mrf.mxu0
    %v2760 = vadd.f32 0.0, %v2759
    %2761 = vmatprep.mubr.f32.mxu0 0.0
    %2762 = vmatmul.mubr.f32.gmra.mxu0 %v117
    %v2763 = vpop.f32.mrf.mxu0
    %v2764 = vadd.f32 0.0, %v2763
    %v2765 = vpop.f32.mrf.mxu0
    %v2766 = vadd.f32 0.0, %v2765
    %2767 = vmatprep.mubr.f32.mxu0 0.0
    %2768 = vmatmul.mubr.f32.gmra.mxu0 %v118
    %v2769 = vpop.f32.mrf.mxu0
    %v2770 = vadd.f32 0.0, %v2769
    %v2771 = vpop.f32.mrf.mxu0
    %v2772 = vadd.f32 0.0, %v2771
    %2773 = vmatprep.mubr.f32.mxu0 0.0
    %2774 = vmatmul.mubr.f32.gmra.mxu0 %v119
    %v2775 = vpop.f32.mrf.mxu0
    %v2776 = vadd.f32 0.0, %v2775
    %v2777 = vpop.f32.mrf.mxu0
    %v2778 = vadd.f32 0.0, %v2777
    %2779 = vmatprep.mubr.f32.mxu0 0.0
    %2780 = vmatmul.mubr.f32.gmra.mxu0 %v120
    %v2781 = vpop.f32.mrf.mxu0
    %v2782 = vadd.f32 0.0, %v2781
    %v2783 = vpop.f32.mrf.mxu0
    %v2784 = vadd.f32 0.0, %v2783
    %2785 = vmatprep.mubr.f32.mxu0 0.0
    %2786 = vmatmul.mubr.f32.gmra.mxu0 %v121
    %v2787 = vpop.f32.mrf.mxu0
    %v2788 = vadd.f32 0.0, %v2787
    %v2789 = vpop.f32.mrf.mxu0
    %v2790 = vadd.f32 0.0, %v2789
    %2791 = vmatprep.mubr.f32.mxu0 0.0
    %2792 = vmatmul.mubr.f32.gmra.mxu0 %v122
    %v2793 = vpop.f32.mrf.mxu0
    %v2794 = vadd.f32 0.0, %v2793
    %v2795 = vpop.f32.mrf.mxu0
    %v2796 = vadd.f32 0.0, %v2795
    %2797 = vmatprep.mubr.f32.mxu0 0.0
    %2798 = vmatmul.mubr.f32.gmra.mxu0 %v123
    %v2799 = vpop.f32.mrf.mxu0
    %v2800 = vadd.f32 0.0, %v2799
    %v2801 = vpop.f32.mrf.mxu0
    %v2802 = vadd.f32 0.0, %v2801
    %2803 = vmatprep.mubr.f32.mxu0 0.0
    %2804 = vmatmul.mubr.f32.gmra.mxu0 %v124
    %v2805 = vpop.f32.mrf.mxu0
    %v2806 = vadd.f32 0.0, %v2805
    %v2807 = vpop.f32.mrf.mxu0
    %v2808 = vadd.f32 0.0, %v2807
    %2809 = vmatprep.mubr.f32.mxu0 0.0
    %2810 = vmatmul.mubr.f32.gmra.mxu0 %v125
    %v2811 = vpop.f32.mrf.mxu0
    %v2812 = vadd.f32 0.0, %v2811
    %v2813 = vpop.f32.mrf.mxu0
    %v2814 = vadd.f32 0.0, %v2813
    %2815 = vmatprep.mubr.f32.mxu0 0.0
    %2816 = vmatmul.mubr.f32.gmra.mxu0 %v126
    %v2817 = vpop.f32.mrf.mxu0
    %v2818 = vadd.f32 0.0, %v2817
    %v2819 = vpop.f32.mrf.mxu0
    %v2820 = vadd.f32 0.0, %v2819
    %2821 = vmatprep.mubr.f32.mxu0 0.0
    %2822 = vmatmul.mubr.f32.gmra.mxu0 %v127
    %v2823 = vpop.f32.mrf.mxu0
    %v2824 = vadd.f32 0.0, %v2823
    %v2825 = vpop.f32.mrf.mxu0
    %v2826 = vadd.f32 0.0, %v2825
    %2827 = vmatprep.mubr.f32.mxu0 0.0
    %2828 = vmatmul.mubr.f32.gmra.mxu0 %v128
    %v2829 = vpop.f32.mrf.mxu0
    %v2830 = vadd.f32 0.0, %v2829
    %v2831 = vpop.f32.mrf.mxu0
    %v2832 = vadd.f32 0.0, %v2831
    %2833 = vmatprep.mubr.f32.mxu0 0.0
    %2834 = vmatmul.mubr.f32.gmra.mxu0 %v129
    %v2835 = vpop.f32.mrf.mxu0
    %v2836 = vadd.f32 0.0, %v2835
    %v2837 = vpop.f32.mrf.mxu0
    %v2838 = vadd.f32 0.0, %v2837
    %2839 = vmatprep.mubr.f32.mxu0 0.0
    %2840 = vmatmul.mubr.f32.gmra.mxu0 %v130
    %v2841 = vpop.f32.mrf.mxu0
    %v2842 = vadd.f32 0.0, %v2841
    %v2843 = vpop.f32.mrf.mxu0
    %v2844 = vadd.f32 0.0, %v2843
    %2845 = vmatprep.mubr.f32.mxu0 0.0
    %2846 = vmatmul.mubr.f32.gmra.mxu0 %v131
    %v2847 = vpop.f32.mrf.mxu0
    %v2848 = vadd.f32 0.0, %v2847
    %v2849 = vpop.f32.mrf.mxu0
    %v2850 = vadd.f32 0.0, %v2849
    %2851 = vmatprep.mubr.f32.mxu0 0.0
    %2852 = vmatmul.mubr.f32.gmra.mxu0 %v132
    %v2853 = vpop.f32.mrf.mxu0
    %v2854 = vadd.f32 0.0, %v2853
    %v2855 = vpop.f32.mrf.mxu0
    %v2856 = vadd.f32 0.0, %v2855
    %2857 = vmatprep.mubr.f32.mxu0 0.0
    %2858 = vmatmul.mubr.f32.gmra.mxu0 %v133
    %v2859 = vpop.f32.mrf.mxu0
    %v2860 = vadd.f32 0.0, %v2859
    %v2861 = vpop.f32.mrf.mxu0
    %v2862 = vadd.f32 0.0, %v2861
    %2863 = vmatprep.mubr.f32.mxu0 0.0
    %2864 = vmatmul.mubr.f32.gmra.mxu0 %v134
    %v2865 = vpop.f32.mrf.mxu0
    %v2866 = vadd.f32 0.0, %v2865
    %v2867 = vpop.f32.mrf.mxu0
    %v2868 = vadd.f32 0.0, %v2867
    %2869 = vmatprep.mubr.f32.mxu0 0.0
    %2870 = vmatmul.mubr.f32.gmra.mxu0 %v135
    %v2871 = vpop.f32.mrf.mxu0
    %v2872 = vadd.f32 0.0, %v2871
    %v2873 = vpop.f32.mrf.mxu0
    %v2874 = vadd.f32 0.0, %v2873
    %2875 = vmatprep.mubr.f32.mxu0 0.0
    %2876 = vmatmul.mubr.f32.gmra.mxu0 %v136
    %v2877 = vpop.f32.mrf.mxu0
    %v2878 = vadd.f32 0.0, %v2877
    %v2879 = vpop.f32.mrf.mxu0
    %v2880 = vadd.f32 0.0, %v2879
    %2881 = vmatprep.mubr.f32.mxu0 0.0
    %2882 = vmatmul.mubr.f32.gmra.mxu0 %v137
    %v2883 = vpop.f32.mrf.mxu0
    %v2884 = vadd.f32 0.0, %v2883
    %v2885 = vpop.f32.mrf.mxu0
    %v2886 = vadd.f32 0.0, %v2885
    %2887 = vmatprep.mubr.f32.mxu0 0.0
    %2888 = vmatmul.mubr.f32.gmra.mxu0 %v138
    %v2889 = vpop.f32.mrf.mxu0
    %v2890 = vadd.f32 0.0, %v2889
    %v2891 = vpop.f32.mrf.mxu0
    %v2892 = vadd.f32 0.0, %v2891
    %2893 = vmatprep.mubr.f32.mxu0 0.0
    %2894 = vmatmul.mubr.f32.gmra.mxu0 %v139
    %v2895 = vpop.f32.mrf.mxu0
    %v2896 = vadd.f32 0.0, %v2895
    %v2897 = vpop.f32.mrf.mxu0
    %v2898 = vadd.f32 0.0, %v2897
    %2899 = vmatprep.mubr.f32.mxu0 0.0
    %2900 = vmatmul.mubr.f32.gmra.mxu0 %v140
    %v2901 = vpop.f32.mrf.mxu0
    %v2902 = vadd.f32 0.0, %v2901
    %v2903 = vpop.f32.mrf.mxu0
    %v2904 = vadd.f32 0.0, %v2903
    %2905 = vmatprep.mubr.f32.mxu0 0.0
    %2906 = vmatmul.mubr.f32.gmra.mxu0 %v141
    %v2907 = vpop.f32.mrf.mxu0
    %v2908 = vadd.f32 0.0, %v2907
    %v2909 = vpop.f32.mrf.mxu0
    %v2910 = vadd.f32 0.0, %v2909
    %2911 = vmatprep.mubr.f32.mxu0 0.0
    %2912 = vmatmul.mubr.f32.gmra.mxu0 %v142
    %v2913 = vpop.f32.mrf.mxu0
    %v2914 = vadd.f32 0.0, %v2913
    %v2915 = vpop.f32.mrf.mxu0
    %v2916 = vadd.f32 0.0, %v2915
    %2917 = vmatprep.mubr.f32.mxu0 0.0
    %2918 = vmatmul.mubr.f32.gmra.mxu0 %v143
    %v2919 = vpop.f32.mrf.mxu0
    %v2920 = vadd.f32 0.0, %v2919
    %v2921 = vpop.f32.mrf.mxu0
    %v2922 = vadd.f32 0.0, %v2921
    %2923 = vmatprep.mubr.f32.mxu0 0.0
    %2924 = vmatmul.mubr.f32.gmra.mxu0 %v144
    %v2925 = vpop.f32.mrf.mxu0
    %v2926 = vadd.f32 0.0, %v2925
    %v2927 = vpop.f32.mrf.mxu0
    %v2928 = vadd.f32 0.0, %v2927
    %2929 = vmatprep.mubr.f32.mxu0 0.0
    %2930 = vmatmul.mubr.f32.gmra.mxu0 %v145
    %v2931 = vpop.f32.mrf.mxu0
    %v2932 = vadd.f32 0.0, %v2931
    %v2933 = vpop.f32.mrf.mxu0
    %v2934 = vadd.f32 0.0, %v2933
    %2935 = vmatprep.mubr.f32.mxu0 0.0
    %2936 = vmatmul.mubr.f32.gmra.mxu0 %v146
    %v2937 = vpop.f32.mrf.mxu0
    %v2938 = vadd.f32 0.0, %v2937
    %v2939 = vpop.f32.mrf.mxu0
    %v2940 = vadd.f32 0.0, %v2939
    %2941 = vmatprep.mubr.f32.mxu0 0.0
    %2942 = vmatmul.mubr.f32.gmra.mxu0 %v147
    %v2943 = vpop.f32.mrf.mxu0
    %v2944 = vadd.f32 0.0, %v2943
    %v2945 = vpop.f32.mrf.mxu0
    %v2946 = vadd.f32 0.0, %v2945
    %2947 = vmatprep.mubr.f32.mxu0 0.0
    %2948 = vmatmul.mubr.f32.gmra.mxu0 %v148
    %v2949 = vpop.f32.mrf.mxu0
    %v2950 = vadd.f32 0.0, %v2949
    %v2951 = vpop.f32.mrf.mxu0
    %v2952 = vadd.f32 0.0, %v2951
    %2953 = vdwg.mxu0
    %2954 = vmatprep.subr.mxu0 %v291
    %2955 = vmatpush1.msra.mxu0 %v290
    %2956 = vmatprep.subr.mxu0 %v282
    %2957 = vmatpush1.msra.mxu0 %v281
    %2958 = vmatprep.subr.mxu0 %v273
    %2959 = vmatpush1.msra.mxu0 %v272
    %2960 = vmatprep.subr.mxu0 %v264
    %2961 = vmatpush1.msra.mxu0 %v263
    %2962 = vmatprep.subr.mxu0 %v255
    %2963 = vmatpush1.msra.mxu0 %v254
    %2964 = vmatprep.subr.mxu0 %v246
    %2965 = vmatpush1.msra.mxu0 %v245
    %2966 = vmatprep.subr.mxu0 %v237
    %2967 = vmatpush1.msra.mxu0 %v236
    %2968 = vmatprep.subr.mxu0 %v228
    %2969 = vmatpush1.msra.mxu0 %v227
    %2970 = vmatprep.subr.mxu0 %v219
    %2971 = vmatpush1.msra.mxu0 %v218
    %2972 = vmatprep.subr.mxu0 %v210
    %2973 = vmatpush1.msra.mxu0 %v209
    %2974 = vmatprep.subr.mxu0 %v201
    %2975 = vmatpush1.msra.mxu0 %v200
    %2976 = vmatprep.subr.mxu0 %v192
    %2977 = vmatpush1.msra.mxu0 %v191
    %2978 = vmatprep.subr.mxu0 %v183
    %2979 = vmatpush1.msra.mxu0 %v182
    %2980 = vmatprep.subr.mxu0 %v174
    %2981 = vmatpush1.msra.mxu0 %v173
    %2982 = vmatprep.subr.mxu0 %v165
    %2983 = vmatpush1.msra.mxu0 %v164
    %2984 = vmatprep.subr.mxu0 %v156
    %2985 = vmatpush1.msra.mxu0 %v155
    %2986 = vmatprep.subr.mxu0 0.0
    %2987 = vmatpush2.msra.mxu0 0.0
    %2988 = vmatprep.subr.mxu0 0.0
    %2989 = vmatpush2.msra.mxu0 0.0
    %2990 = vmatprep.subr.mxu0 0.0
    %2991 = vmatpush2.msra.mxu0 0.0
    %2992 = vmatprep.subr.mxu0 0.0
    %2993 = vmatpush2.msra.mxu0 0.0
    %2994 = vmatprep.subr.mxu0 0.0
    %2995 = vmatpush2.msra.mxu0 0.0
    %2996 = vmatprep.subr.mxu0 0.0
    %2997 = vmatpush2.msra.mxu0 0.0
    %2998 = vmatprep.subr.mxu0 0.0
    %2999 = vmatpush2.msra.mxu0 0.0
    %3000 = vmatprep.subr.mxu0 0.0
    %3001 = vmatpush2.msra.mxu0 0.0
    %3002 = vmatprep.subr.mxu0 0.0
    %3003 = vmatpush2.msra.mxu0 0.0
    %3004 = vmatprep.subr.mxu0 0.0
    %3005 = vmatpush2.msra.mxu0 0.0
    %3006 = vmatprep.subr.mxu0 0.0
    %3007 = vmatpush2.msra.mxu0 0.0
    %3008 = vmatprep.subr.mxu0 0.0
    %3009 = vmatpush2.msra.mxu0 0.0
    %3010 = vmatprep.subr.mxu0 0.0
    %3011 = vmatpush2.msra.mxu0 0.0
    %3012 = vmatprep.subr.mxu0 0.0
    %3013 = vmatpush2.msra.mxu0 0.0
    %3014 = vmatprep.subr.mxu0 0.0
    %3015 = vmatpush2.msra.mxu0 0.0
    %3016 = vmatprep.subr.mxu0 0.0
    %3017 = vmatpush2.msra.mxu0 0.0
    %3018 = vmatprep.mubr.f32.mxu0 0.0
    %3019 = vmatmul.mubr.f32.gmra.mxu0 %v12
    %v3020 = vpop.f32.mrf.mxu0
    %v3021 = vadd.f32 0.0, %v3020
    %v3022 = vpop.f32.mrf.mxu0
    %v3023 = vadd.f32 0.0, %v3022
    %3024 = vmatprep.mubr.f32.mxu0 0.0
    %3025 = vmatmul.mubr.f32.gmra.mxu0 %v13
    %v3026 = vpop.f32.mrf.mxu0
    %v3027 = vadd.f32 0.0, %v3026
    %v3028 = vpop.f32.mrf.mxu0
    %v3029 = vadd.f32 0.0, %v3028
    %3030 = vmatprep.mubr.f32.mxu0 0.0
    %3031 = vmatmul.mubr.f32.gmra.mxu0 %v14
    %v3032 = vpop.f32.mrf.mxu0
    %v3033 = vadd.f32 0.0, %v3032
    %v3034 = vpop.f32.mrf.mxu0
    %v3035 = vadd.f32 0.0, %v3034
    %3036 = vmatprep.mubr.f32.mxu0 0.0
    %3037 = vmatmul.mubr.f32.gmra.mxu0 %v15
    %v3038 = vpop.f32.mrf.mxu0
    %v3039 = vadd.f32 0.0, %v3038
    %v3040 = vpop.f32.mrf.mxu0
    %v3041 = vadd.f32 0.0, %v3040
    %3042 = vmatprep.mubr.f32.mxu0 0.0
    %3043 = vmatmul.mubr.f32.gmra.mxu0 %v16
    %v3044 = vpop.f32.mrf.mxu0
    %v3045 = vadd.f32 0.0, %v3044
    %v3046 = vpop.f32.mrf.mxu0
    %v3047 = vadd.f32 0.0, %v3046
    %3048 = vmatprep.mubr.f32.mxu0 0.0
    %3049 = vmatmul.mubr.f32.gmra.mxu0 %v17
    %v3050 = vpop.f32.mrf.mxu0
    %v3051 = vadd.f32 0.0, %v3050
    %v3052 = vpop.f32.mrf.mxu0
    %v3053 = vadd.f32 0.0, %v3052
    %3054 = vmatprep.mubr.f32.mxu0 0.0
    %3055 = vmatmul.mubr.f32.gmra.mxu0 %v18
    %v3056 = vpop.f32.mrf.mxu0
    %v3057 = vadd.f32 0.0, %v3056
    %v3058 = vpop.f32.mrf.mxu0
    %v3059 = vadd.f32 0.0, %v3058
    %3060 = vmatprep.mubr.f32.mxu0 0.0
    %3061 = vmatmul.mubr.f32.gmra.mxu0 %v19
    %v3062 = vpop.f32.mrf.mxu0
    %v3063 = vadd.f32 0.0, %v3062
    %v3064 = vpop.f32.mrf.mxu0
    %v3065 = vadd.f32 0.0, %v3064
    %3066 = vmatprep.mubr.f32.mxu0 0.0
    %3067 = vmatmul.mubr.f32.gmra.mxu0 %v20
    %v3068 = vpop.f32.mrf.mxu0
    %v3069 = vadd.f32 0.0, %v3068
    %v3070 = vpop.f32.mrf.mxu0
    %v3071 = vadd.f32 0.0, %v3070
    %3072 = vmatprep.mubr.f32.mxu0 0.0
    %3073 = vmatmul.mubr.f32.gmra.mxu0 %v21
    %v3074 = vpop.f32.mrf.mxu0
    %v3075 = vadd.f32 0.0, %v3074
    %v3076 = vpop.f32.mrf.mxu0
    %v3077 = vadd.f32 0.0, %v3076
    %3078 = vmatprep.mubr.f32.mxu0 0.0
    %3079 = vmatmul.mubr.f32.gmra.mxu0 %v22
    %v3080 = vpop.f32.mrf.mxu0
    %v3081 = vadd.f32 0.0, %v3080
    %v3082 = vpop.f32.mrf.mxu0
    %v3083 = vadd.f32 0.0, %v3082
    %3084 = vmatprep.mubr.f32.mxu0 0.0
    %3085 = vmatmul.mubr.f32.gmra.mxu0 %v23
    %v3086 = vpop.f32.mrf.mxu0
    %v3087 = vadd.f32 0.0, %v3086
    %v3088 = vpop.f32.mrf.mxu0
    %v3089 = vadd.f32 0.0, %v3088
    %3090 = vmatprep.mubr.f32.mxu0 0.0
    %3091 = vmatmul.mubr.f32.gmra.mxu0 %v24
    %v3092 = vpop.f32.mrf.mxu0
    %v3093 = vadd.f32 0.0, %v3092
    %v3094 = vpop.f32.mrf.mxu0
    %v3095 = vadd.f32 0.0, %v3094
    %3096 = vmatprep.mubr.f32.mxu0 0.0
    %3097 = vmatmul.mubr.f32.gmra.mxu0 %v25
    %v3098 = vpop.f32.mrf.mxu0
    %v3099 = vadd.f32 0.0, %v3098
    %v3100 = vpop.f32.mrf.mxu0
    %v3101 = vadd.f32 0.0, %v3100
    %3102 = vmatprep.mubr.f32.mxu0 0.0
    %3103 = vmatmul.mubr.f32.gmra.mxu0 %v26
    %v3104 = vpop.f32.mrf.mxu0
    %v3105 = vadd.f32 0.0, %v3104
    %v3106 = vpop.f32.mrf.mxu0
    %v3107 = vadd.f32 0.0, %v3106
    %3108 = vmatprep.mubr.f32.mxu0 0.0
    %3109 = vmatmul.mubr.f32.gmra.mxu0 %v27
    %v3110 = vpop.f32.mrf.mxu0
    %v3111 = vadd.f32 0.0, %v3110
    %v3112 = vpop.f32.mrf.mxu0
    %v3113 = vadd.f32 0.0, %v3112
    %3114 = vmatprep.mubr.f32.mxu0 0.0
    %3115 = vmatmul.mubr.f32.gmra.mxu0 %v28
    %v3116 = vpop.f32.mrf.mxu0
    %v3117 = vadd.f32 0.0, %v3116
    %v3118 = vpop.f32.mrf.mxu0
    %v3119 = vadd.f32 0.0, %v3118
    %3120 = vmatprep.mubr.f32.mxu0 0.0
    %3121 = vmatmul.mubr.f32.gmra.mxu0 %v29
    %v3122 = vpop.f32.mrf.mxu0
    %v3123 = vadd.f32 0.0, %v3122
    %v3124 = vpop.f32.mrf.mxu0
    %v3125 = vadd.f32 0.0, %v3124
    %3126 = vmatprep.mubr.f32.mxu0 0.0
    %3127 = vmatmul.mubr.f32.gmra.mxu0 %v30
    %v3128 = vpop.f32.mrf.mxu0
    %v3129 = vadd.f32 0.0, %v3128
    %v3130 = vpop.f32.mrf.mxu0
    %v3131 = vadd.f32 0.0, %v3130
    %3132 = vmatprep.mubr.f32.mxu0 0.0
    %3133 = vmatmul.mubr.f32.gmra.mxu0 %v31
    %v3134 = vpop.f32.mrf.mxu0
    %v3135 = vadd.f32 0.0, %v3134
    %v3136 = vpop.f32.mrf.mxu0
    %v3137 = vadd.f32 0.0, %v3136
    %3138 = vmatprep.mubr.f32.mxu0 0.0
    %3139 = vmatmul.mubr.f32.gmra.mxu0 %v32
    %v3140 = vpop.f32.mrf.mxu0
    %v3141 = vadd.f32 0.0, %v3140
    %v3142 = vpop.f32.mrf.mxu0
    %v3143 = vadd.f32 0.0, %v3142
    %3144 = vmatprep.mubr.f32.mxu0 0.0
    %3145 = vmatmul.mubr.f32.gmra.mxu0 %v33
    %v3146 = vpop.f32.mrf.mxu0
    %v3147 = vadd.f32 0.0, %v3146
    %v3148 = vpop.f32.mrf.mxu0
    %v3149 = vadd.f32 0.0, %v3148
    %3150 = vmatprep.mubr.f32.mxu0 0.0
    %3151 = vmatmul.mubr.f32.gmra.mxu0 %v34
    %v3152 = vpop.f32.mrf.mxu0
    %v3153 = vadd.f32 0.0, %v3152
    %v3154 = vpop.f32.mrf.mxu0
    %v3155 = vadd.f32 0.0, %v3154
    %3156 = vmatprep.mubr.f32.mxu0 0.0
    %3157 = vmatmul.mubr.f32.gmra.mxu0 %v35
    %v3158 = vpop.f32.mrf.mxu0
    %v3159 = vadd.f32 0.0, %v3158
    %v3160 = vpop.f32.mrf.mxu0
    %v3161 = vadd.f32 0.0, %v3160
    %3162 = vmatprep.mubr.f32.mxu0 0.0
    %3163 = vmatmul.mubr.f32.gmra.mxu0 %v36
    %v3164 = vpop.f32.mrf.mxu0
    %v3165 = vadd.f32 0.0, %v3164
    %v3166 = vpop.f32.mrf.mxu0
    %v3167 = vadd.f32 0.0, %v3166
    %3168 = vmatprep.mubr.f32.mxu0 0.0
    %3169 = vmatmul.mubr.f32.gmra.mxu0 %v37
    %v3170 = vpop.f32.mrf.mxu0
    %v3171 = vadd.f32 0.0, %v3170
    %v3172 = vpop.f32.mrf.mxu0
    %v3173 = vadd.f32 0.0, %v3172
    %3174 = vmatprep.mubr.f32.mxu0 0.0
    %3175 = vmatmul.mubr.f32.gmra.mxu0 %v38
    %v3176 = vpop.f32.mrf.mxu0
    %v3177 = vadd.f32 0.0, %v3176
    %v3178 = vpop.f32.mrf.mxu0
    %v3179 = vadd.f32 0.0, %v3178
    %3180 = vmatprep.mubr.f32.mxu0 0.0
    %3181 = vmatmul.mubr.f32.gmra.mxu0 %v39
    %v3182 = vpop.f32.mrf.mxu0
    %v3183 = vadd.f32 0.0, %v3182
    %v3184 = vpop.f32.mrf.mxu0
    %v3185 = vadd.f32 0.0, %v3184
    %3186 = vmatprep.mubr.f32.mxu0 0.0
    %3187 = vmatmul.mubr.f32.gmra.mxu0 %v40
    %v3188 = vpop.f32.mrf.mxu0
    %v3189 = vadd.f32 0.0, %v3188
    %v3190 = vpop.f32.mrf.mxu0
    %v3191 = vadd.f32 0.0, %v3190
    %3192 = vmatprep.mubr.f32.mxu0 0.0
    %3193 = vmatmul.mubr.f32.gmra.mxu0 %v41
    %v3194 = vpop.f32.mrf.mxu0
    %v3195 = vadd.f32 0.0, %v3194
    %v3196 = vpop.f32.mrf.mxu0
    %v3197 = vadd.f32 0.0, %v3196
    %3198 = vmatprep.mubr.f32.mxu0 0.0
    %3199 = vmatmul.mubr.f32.gmra.mxu0 %v42
    %v3200 = vpop.f32.mrf.mxu0
    %v3201 = vadd.f32 0.0, %v3200
    %v3202 = vpop.f32.mrf.mxu0
    %v3203 = vadd.f32 0.0, %v3202
    %3204 = vmatprep.mubr.f32.mxu0 0.0
    %3205 = vmatmul.mubr.f32.gmra.mxu0 %v43
    %v3206 = vpop.f32.mrf.mxu0
    %v3207 = vadd.f32 0.0, %v3206
    %v3208 = vpop.f32.mrf.mxu0
    %v3209 = vadd.f32 0.0, %v3208
    %3210 = vmatprep.mubr.f32.mxu0 0.0
    %3211 = vmatmul.mubr.f32.gmra.mxu0 %v44
    %v3212 = vpop.f32.mrf.mxu0
    %v3213 = vadd.f32 0.0, %v3212
    %v3214 = vpop.f32.mrf.mxu0
    %v3215 = vadd.f32 0.0, %v3214
    %3216 = vmatprep.mubr.f32.mxu0 0.0
    %3217 = vmatmul.mubr.f32.gmra.mxu0 %v45
    %v3218 = vpop.f32.mrf.mxu0
    %v3219 = vadd.f32 0.0, %v3218
    %v3220 = vpop.f32.mrf.mxu0
    %v3221 = vadd.f32 0.0, %v3220
    %3222 = vmatprep.mubr.f32.mxu0 0.0
    %3223 = vmatmul.mubr.f32.gmra.mxu0 %v46
    %v3224 = vpop.f32.mrf.mxu0
    %v3225 = vadd.f32 0.0, %v3224
    %v3226 = vpop.f32.mrf.mxu0
    %v3227 = vadd.f32 0.0, %v3226
    %3228 = vmatprep.mubr.f32.mxu0 0.0
    %3229 = vmatmul.mubr.f32.gmra.mxu0 %v47
    %v3230 = vpop.f32.mrf.mxu0
    %v3231 = vadd.f32 0.0, %v3230
    %v3232 = vpop.f32.mrf.mxu0
    %v3233 = vadd.f32 0.0, %v3232
    %3234 = vmatprep.mubr.f32.mxu0 0.0
    %3235 = vmatmul.mubr.f32.gmra.mxu0 %v48
    %v3236 = vpop.f32.mrf.mxu0
    %v3237 = vadd.f32 0.0, %v3236
    %v3238 = vpop.f32.mrf.mxu0
    %v3239 = vadd.f32 0.0, %v3238
    %3240 = vmatprep.mubr.f32.mxu0 0.0
    %3241 = vmatmul.mubr.f32.gmra.mxu0 %v49
    %v3242 = vpop.f32.mrf.mxu0
    %v3243 = vadd.f32 0.0, %v3242
    %v3244 = vpop.f32.mrf.mxu0
    %v3245 = vadd.f32 0.0, %v3244
    %3246 = vmatprep.mubr.f32.mxu0 0.0
    %3247 = vmatmul.mubr.f32.gmra.mxu0 %v50
    %v3248 = vpop.f32.mrf.mxu0
    %v3249 = vadd.f32 0.0, %v3248
    %v3250 = vpop.f32.mrf.mxu0
    %v3251 = vadd.f32 0.0, %v3250
    %3252 = vmatprep.mubr.f32.mxu0 0.0
    %3253 = vmatmul.mubr.f32.gmra.mxu0 %v51
    %v3254 = vpop.f32.mrf.mxu0
    %v3255 = vadd.f32 0.0, %v3254
    %v3256 = vpop.f32.mrf.mxu0
    %v3257 = vadd.f32 0.0, %v3256
    %3258 = vmatprep.mubr.f32.mxu0 0.0
    %3259 = vmatmul.mubr.f32.gmra.mxu0 %v52
    %v3260 = vpop.f32.mrf.mxu0
    %v3261 = vadd.f32 0.0, %v3260
    %v3262 = vpop.f32.mrf.mxu0
    %v3263 = vadd.f32 0.0, %v3262
    %3264 = vmatprep.mubr.f32.mxu0 0.0
    %3265 = vmatmul.mubr.f32.gmra.mxu0 %v53
    %v3266 = vpop.f32.mrf.mxu0
    %v3267 = vadd.f32 0.0, %v3266
    %v3268 = vpop.f32.mrf.mxu0
    %v3269 = vadd.f32 0.0, %v3268
    %3270 = vmatprep.mubr.f32.mxu0 0.0
    %3271 = vmatmul.mubr.f32.gmra.mxu0 %v54
    %v3272 = vpop.f32.mrf.mxu0
    %v3273 = vadd.f32 0.0, %v3272
    %v3274 = vpop.f32.mrf.mxu0
    %v3275 = vadd.f32 0.0, %v3274
    %3276 = vmatprep.mubr.f32.mxu0 0.0
    %3277 = vmatmul.mubr.f32.gmra.mxu0 %v55
    %v3278 = vpop.f32.mrf.mxu0
    %v3279 = vadd.f32 0.0, %v3278
    %v3280 = vpop.f32.mrf.mxu0
    %v3281 = vadd.f32 0.0, %v3280
    %3282 = vmatprep.mubr.f32.mxu0 0.0
    %3283 = vmatmul.mubr.f32.gmra.mxu0 %v56
    %v3284 = vpop.f32.mrf.mxu0
    %v3285 = vadd.f32 0.0, %v3284
    %v3286 = vpop.f32.mrf.mxu0
    %v3287 = vadd.f32 0.0, %v3286
    %3288 = vmatprep.mubr.f32.mxu0 0.0
    %3289 = vmatmul.mubr.f32.gmra.mxu0 %v57
    %v3290 = vpop.f32.mrf.mxu0
    %v3291 = vadd.f32 0.0, %v3290
    %v3292 = vpop.f32.mrf.mxu0
    %v3293 = vadd.f32 0.0, %v3292
    %3294 = vmatprep.mubr.f32.mxu0 0.0
    %3295 = vmatmul.mubr.f32.gmra.mxu0 %v58
    %v3296 = vpop.f32.mrf.mxu0
    %v3297 = vadd.f32 0.0, %v3296
    %v3298 = vpop.f32.mrf.mxu0
    %v3299 = vadd.f32 0.0, %v3298
    %3300 = vmatprep.mubr.f32.mxu0 0.0
    %3301 = vmatmul.mubr.f32.gmra.mxu0 %v59
    %v3302 = vpop.f32.mrf.mxu0
    %v3303 = vadd.f32 0.0, %v3302
    %v3304 = vpop.f32.mrf.mxu0
    %v3305 = vadd.f32 0.0, %v3304
    %3306 = vmatprep.mubr.f32.mxu0 0.0
    %3307 = vmatmul.mubr.f32.gmra.mxu0 %v60
    %v3308 = vpop.f32.mrf.mxu0
    %v3309 = vadd.f32 0.0, %v3308
    %v3310 = vpop.f32.mrf.mxu0
    %v3311 = vadd.f32 0.0, %v3310
    %3312 = vmatprep.mubr.f32.mxu0 0.0
    %3313 = vmatmul.mubr.f32.gmra.mxu0 %v61
    %v3314 = vpop.f32.mrf.mxu0
    %v3315 = vadd.f32 0.0, %v3314
    %v3316 = vpop.f32.mrf.mxu0
    %v3317 = vadd.f32 0.0, %v3316
    %3318 = vmatprep.mubr.f32.mxu0 0.0
    %3319 = vmatmul.mubr.f32.gmra.mxu0 %v62
    %v3320 = vpop.f32.mrf.mxu0
    %v3321 = vadd.f32 0.0, %v3320
    %v3322 = vpop.f32.mrf.mxu0
    %v3323 = vadd.f32 0.0, %v3322
    %3324 = vmatprep.mubr.f32.mxu0 0.0
    %3325 = vmatmul.mubr.f32.gmra.mxu0 %v63
    %v3326 = vpop.f32.mrf.mxu0
    %v3327 = vadd.f32 0.0, %v3326
    %v3328 = vpop.f32.mrf.mxu0
    %v3329 = vadd.f32 0.0, %v3328
    %3330 = vmatprep.mubr.f32.mxu0 0.0
    %3331 = vmatmul.mubr.f32.gmra.mxu0 %v64
    %v3332 = vpop.f32.mrf.mxu0
    %v3333 = vadd.f32 0.0, %v3332
    %v3334 = vpop.f32.mrf.mxu0
    %v3335 = vadd.f32 0.0, %v3334
    %3336 = vmatprep.mubr.f32.mxu0 0.0
    %3337 = vmatmul.mubr.f32.gmra.mxu0 %v65
    %v3338 = vpop.f32.mrf.mxu0
    %v3339 = vadd.f32 0.0, %v3338
    %v3340 = vpop.f32.mrf.mxu0
    %v3341 = vadd.f32 0.0, %v3340
    %3342 = vmatprep.mubr.f32.mxu0 0.0
    %3343 = vmatmul.mubr.f32.gmra.mxu0 %v66
    %v3344 = vpop.f32.mrf.mxu0
    %v3345 = vadd.f32 0.0, %v3344
    %v3346 = vpop.f32.mrf.mxu0
    %v3347 = vadd.f32 0.0, %v3346
    %3348 = vmatprep.mubr.f32.mxu0 0.0
    %3349 = vmatmul.mubr.f32.gmra.mxu0 %v67
    %v3350 = vpop.f32.mrf.mxu0
    %v3351 = vadd.f32 0.0, %v3350
    %v3352 = vpop.f32.mrf.mxu0
    %v3353 = vadd.f32 0.0, %v3352
    %3354 = vmatprep.mubr.f32.mxu0 0.0
    %3355 = vmatmul.mubr.f32.gmra.mxu0 %v68
    %v3356 = vpop.f32.mrf.mxu0
    %v3357 = vadd.f32 0.0, %v3356
    %v3358 = vpop.f32.mrf.mxu0
    %v3359 = vadd.f32 0.0, %v3358
    %3360 = vmatprep.mubr.f32.mxu0 0.0
    %3361 = vmatmul.mubr.f32.gmra.mxu0 %v69
    %v3362 = vpop.f32.mrf.mxu0
    %v3363 = vadd.f32 0.0, %v3362
    %v3364 = vpop.f32.mrf.mxu0
    %v3365 = vadd.f32 0.0, %v3364
    %3366 = vmatprep.mubr.f32.mxu0 0.0
    %3367 = vmatmul.mubr.f32.gmra.mxu0 %v70
    %v3368 = vpop.f32.mrf.mxu0
    %v3369 = vadd.f32 0.0, %v3368
    %v3370 = vpop.f32.mrf.mxu0
    %v3371 = vadd.f32 0.0, %v3370
    %3372 = vmatprep.mubr.f32.mxu0 0.0
    %3373 = vmatmul.mubr.f32.gmra.mxu0 %v71
    %v3374 = vpop.f32.mrf.mxu0
    %v3375 = vadd.f32 0.0, %v3374
    %v3376 = vpop.f32.mrf.mxu0
    %v3377 = vadd.f32 0.0, %v3376
    %3378 = vmatprep.mubr.f32.mxu0 0.0
    %3379 = vmatmul.mubr.f32.gmra.mxu0 %v72
    %v3380 = vpop.f32.mrf.mxu0
    %v3381 = vadd.f32 0.0, %v3380
    %v3382 = vpop.f32.mrf.mxu0
    %v3383 = vadd.f32 0.0, %v3382
    %3384 = vmatprep.mubr.f32.mxu0 0.0
    %3385 = vmatmul.mubr.f32.gmra.mxu0 %v73
    %v3386 = vpop.f32.mrf.mxu0
    %v3387 = vadd.f32 0.0, %v3386
    %v3388 = vpop.f32.mrf.mxu0
    %v3389 = vadd.f32 0.0, %v3388
    %3390 = vmatprep.mubr.f32.mxu0 0.0
    %3391 = vmatmul.mubr.f32.gmra.mxu0 %v74
    %v3392 = vpop.f32.mrf.mxu0
    %v3393 = vadd.f32 0.0, %v3392
    %v3394 = vpop.f32.mrf.mxu0
    %v3395 = vadd.f32 0.0, %v3394
    %3396 = vmatprep.mubr.f32.mxu0 0.0
    %3397 = vmatmul.mubr.f32.gmra.mxu0 %v75
    %v3398 = vpop.f32.mrf.mxu0
    %v3399 = vadd.f32 0.0, %v3398
    %v3400 = vpop.f32.mrf.mxu0
    %v3401 = vadd.f32 0.0, %v3400
    %3402 = vmatprep.mubr.f32.mxu0 0.0
    %3403 = vmatmul.mubr.f32.gmra.mxu0 %v76
    %v3404 = vpop.f32.mrf.mxu0
    %v3405 = vadd.f32 0.0, %v3404
    %v3406 = vpop.f32.mrf.mxu0
    %v3407 = vadd.f32 0.0, %v3406
    %3408 = vmatprep.mubr.f32.mxu0 0.0
    %3409 = vmatmul.mubr.f32.gmra.mxu0 %v77
    %v3410 = vpop.f32.mrf.mxu0
    %v3411 = vadd.f32 0.0, %v3410
    %v3412 = vpop.f32.mrf.mxu0
    %v3413 = vadd.f32 0.0, %v3412
    %3414 = vmatprep.mubr.f32.mxu0 0.0
    %3415 = vmatmul.mubr.f32.gmra.mxu0 %v78
    %v3416 = vpop.f32.mrf.mxu0
    %v3417 = vadd.f32 0.0, %v3416
    %v3418 = vpop.f32.mrf.mxu0
    %v3419 = vadd.f32 0.0, %v3418
    %3420 = vmatprep.mubr.f32.mxu0 0.0
    %3421 = vmatmul.mubr.f32.gmra.mxu0 %v79
    %v3422 = vpop.f32.mrf.mxu0
    %v3423 = vadd.f32 0.0, %v3422
    %v3424 = vpop.f32.mrf.mxu0
    %v3425 = vadd.f32 0.0, %v3424
    %3426 = vmatprep.mubr.f32.mxu0 0.0
    %3427 = vmatmul.mubr.f32.gmra.mxu0 %v80
    %v3428 = vpop.f32.mrf.mxu0
    %v3429 = vadd.f32 0.0, %v3428
    %v3430 = vpop.f32.mrf.mxu0
    %v3431 = vadd.f32 0.0, %v3430
    %3432 = vmatprep.mubr.f32.mxu0 0.0
    %3433 = vmatmul.mubr.f32.gmra.mxu0 %v81
    %v3434 = vpop.f32.mrf.mxu0
    %v3435 = vadd.f32 0.0, %v3434
    %v3436 = vpop.f32.mrf.mxu0
    %v3437 = vadd.f32 0.0, %v3436
    %3438 = vmatprep.mubr.f32.mxu0 0.0
    %3439 = vmatmul.mubr.f32.gmra.mxu0 %v82
    %v3440 = vpop.f32.mrf.mxu0
    %v3441 = vadd.f32 0.0, %v3440
    %v3442 = vpop.f32.mrf.mxu0
    %v3443 = vadd.f32 0.0, %v3442
    %3444 = vmatprep.mubr.f32.mxu0 0.0
    %3445 = vmatmul.mubr.f32.gmra.mxu0 %v83
    %v3446 = vpop.f32.mrf.mxu0
    %v3447 = vadd.f32 0.0, %v3446
    %v3448 = vpop.f32.mrf.mxu0
    %v3449 = vadd.f32 0.0, %v3448
    %3450 = vmatprep.mubr.f32.mxu0 0.0
    %3451 = vmatmul.mubr.f32.gmra.mxu0 %v84
    %v3452 = vpop.f32.mrf.mxu0
    %v3453 = vadd.f32 0.0, %v3452
    %v3454 = vpop.f32.mrf.mxu0
    %v3455 = vadd.f32 0.0, %v3454
    %3456 = vmatprep.mubr.f32.mxu0 0.0
    %3457 = vmatmul.mubr.f32.gmra.mxu0 %v85
    %v3458 = vpop.f32.mrf.mxu0
    %v3459 = vadd.f32 0.0, %v3458
    %v3460 = vpop.f32.mrf.mxu0
    %v3461 = vadd.f32 0.0, %v3460
    %3462 = vmatprep.mubr.f32.mxu0 0.0
    %3463 = vmatmul.mubr.f32.gmra.mxu0 %v86
    %v3464 = vpop.f32.mrf.mxu0
    %v3465 = vadd.f32 0.0, %v3464
    %v3466 = vpop.f32.mrf.mxu0
    %v3467 = vadd.f32 0.0, %v3466
    %3468 = vmatprep.mubr.f32.mxu0 0.0
    %3469 = vmatmul.mubr.f32.gmra.mxu0 %v87
    %v3470 = vpop.f32.mrf.mxu0
    %v3471 = vadd.f32 0.0, %v3470
    %v3472 = vpop.f32.mrf.mxu0
    %v3473 = vadd.f32 0.0, %v3472
    %3474 = vmatprep.mubr.f32.mxu0 0.0
    %3475 = vmatmul.mubr.f32.gmra.mxu0 %v88
    %v3476 = vpop.f32.mrf.mxu0
    %v3477 = vadd.f32 0.0, %v3476
    %v3478 = vpop.f32.mrf.mxu0
    %v3479 = vadd.f32 0.0, %v3478
    %3480 = vmatprep.mubr.f32.mxu0 0.0
    %3481 = vmatmul.mubr.f32.gmra.mxu0 %v89
    %v3482 = vpop.f32.mrf.mxu0
    %v3483 = vadd.f32 0.0, %v3482
    %v3484 = vpop.f32.mrf.mxu0
    %v3485 = vadd.f32 0.0, %v3484
    %3486 = vmatprep.mubr.f32.mxu0 0.0
    %3487 = vmatmul.mubr.f32.gmra.mxu0 %v90
    %v3488 = vpop.f32.mrf.mxu0
    %v3489 = vadd.f32 0.0, %v3488
    %v3490 = vpop.f32.mrf.mxu0
    %v3491 = vadd.f32 0.0, %v3490
    %3492 = vmatprep.mubr.f32.mxu0 0.0
    %3493 = vmatmul.mubr.f32.gmra.mxu0 %v91
    %v3494 = vpop.f32.mrf.mxu0
    %v3495 = vadd.f32 0.0, %v3494
    %v3496 = vpop.f32.mrf.mxu0
    %v3497 = vadd.f32 0.0, %v3496
    %3498 = vmatprep.mubr.f32.mxu0 0.0
    %3499 = vmatmul.mubr.f32.gmra.mxu0 %v92
    %v3500 = vpop.f32.mrf.mxu0
    %v3501 = vadd.f32 0.0, %v3500
    %v3502 = vpop.f32.mrf.mxu0
    %v3503 = vadd.f32 0.0, %v3502
    %3504 = vmatprep.mubr.f32.mxu0 0.0
    %3505 = vmatmul.mubr.f32.gmra.mxu0 %v93
    %v3506 = vpop.f32.mrf.mxu0
    %v3507 = vadd.f32 0.0, %v3506
    %v3508 = vpop.f32.mrf.mxu0
    %v3509 = vadd.f32 0.0, %v3508
    %3510 = vmatprep.mubr.f32.mxu0 0.0
    %3511 = vmatmul.mubr.f32.gmra.mxu0 %v94
    %v3512 = vpop.f32.mrf.mxu0
    %v3513 = vadd.f32 0.0, %v3512
    %v3514 = vpop.f32.mrf.mxu0
    %v3515 = vadd.f32 0.0, %v3514
    %3516 = vmatprep.mubr.f32.mxu0 0.0
    %3517 = vmatmul.mubr.f32.gmra.mxu0 %v95
    %v3518 = vpop.f32.mrf.mxu0
    %v3519 = vadd.f32 0.0, %v3518
    %v3520 = vpop.f32.mrf.mxu0
    %v3521 = vadd.f32 0.0, %v3520
    %3522 = vmatprep.mubr.f32.mxu0 0.0
    %3523 = vmatmul.mubr.f32.gmra.mxu0 %v96
    %v3524 = vpop.f32.mrf.mxu0
    %v3525 = vadd.f32 0.0, %v3524
    %v3526 = vpop.f32.mrf.mxu0
    %v3527 = vadd.f32 0.0, %v3526
    %3528 = vmatprep.mubr.f32.mxu0 0.0
    %3529 = vmatmul.mubr.f32.gmra.mxu0 %v97
    %v3530 = vpop.f32.mrf.mxu0
    %v3531 = vadd.f32 0.0, %v3530
    %v3532 = vpop.f32.mrf.mxu0
    %v3533 = vadd.f32 0.0, %v3532
    %3534 = vmatprep.mubr.f32.mxu0 0.0
    %3535 = vmatmul.mubr.f32.gmra.mxu0 %v98
    %v3536 = vpop.f32.mrf.mxu0
    %v3537 = vadd.f32 0.0, %v3536
    %v3538 = vpop.f32.mrf.mxu0
    %v3539 = vadd.f32 0.0, %v3538
    %3540 = vmatprep.mubr.f32.mxu0 0.0
    %3541 = vmatmul.mubr.f32.gmra.mxu0 %v99
    %v3542 = vpop.f32.mrf.mxu0
    %v3543 = vadd.f32 0.0, %v3542
    %v3544 = vpop.f32.mrf.mxu0
    %v3545 = vadd.f32 0.0, %v3544
    %3546 = vmatprep.mubr.f32.mxu0 0.0
    %3547 = vmatmul.mubr.f32.gmra.mxu0 %v100
    %v3548 = vpop.f32.mrf.mxu0
    %v3549 = vadd.f32 0.0, %v3548
    %v3550 = vpop.f32.mrf.mxu0
    %v3551 = vadd.f32 0.0, %v3550
    %3552 = vmatprep.mubr.f32.mxu0 0.0
    %3553 = vmatmul.mubr.f32.gmra.mxu0 %v101
    %v3554 = vpop.f32.mrf.mxu0
    %v3555 = vadd.f32 0.0, %v3554
    %v3556 = vpop.f32.mrf.mxu0
    %v3557 = vadd.f32 0.0, %v3556
    %3558 = vmatprep.mubr.f32.mxu0 0.0
    %3559 = vmatmul.mubr.f32.gmra.mxu0 %v102
    %v3560 = vpop.f32.mrf.mxu0
    %v3561 = vadd.f32 0.0, %v3560
    %v3562 = vpop.f32.mrf.mxu0
    %v3563 = vadd.f32 0.0, %v3562
    %3564 = vmatprep.mubr.f32.mxu0 0.0
    %3565 = vmatmul.mubr.f32.gmra.mxu0 %v103
    %v3566 = vpop.f32.mrf.mxu0
    %v3567 = vadd.f32 0.0, %v3566
    %v3568 = vpop.f32.mrf.mxu0
    %v3569 = vadd.f32 0.0, %v3568
    %3570 = vmatprep.mubr.f32.mxu0 0.0
    %3571 = vmatmul.mubr.f32.gmra.mxu0 %v104
    %v3572 = vpop.f32.mrf.mxu0
    %v3573 = vadd.f32 0.0, %v3572
    %v3574 = vpop.f32.mrf.mxu0
    %v3575 = vadd.f32 0.0, %v3574
    %3576 = vmatprep.mubr.f32.mxu0 0.0
    %3577 = vmatmul.mubr.f32.gmra.mxu0 %v105
    %v3578 = vpop.f32.mrf.mxu0
    %v3579 = vadd.f32 0.0, %v3578
    %v3580 = vpop.f32.mrf.mxu0
    %v3581 = vadd.f32 0.0, %v3580
    %3582 = vmatprep.mubr.f32.mxu0 0.0
    %3583 = vmatmul.mubr.f32.gmra.mxu0 %v106
    %v3584 = vpop.f32.mrf.mxu0
    %v3585 = vadd.f32 0.0, %v3584
    %v3586 = vpop.f32.mrf.mxu0
    %v3587 = vadd.f32 0.0, %v3586
    %3588 = vmatprep.mubr.f32.mxu0 0.0
    %3589 = vmatmul.mubr.f32.gmra.mxu0 %v107
    %v3590 = vpop.f32.mrf.mxu0
    %v3591 = vadd.f32 0.0, %v3590
    %v3592 = vpop.f32.mrf.mxu0
    %v3593 = vadd.f32 0.0, %v3592
    %3594 = vmatprep.mubr.f32.mxu0 0.0
    %3595 = vmatmul.mubr.f32.gmra.mxu0 %v108
    %v3596 = vpop.f32.mrf.mxu0
    %v3597 = vadd.f32 0.0, %v3596
    %v3598 = vpop.f32.mrf.mxu0
    %v3599 = vadd.f32 0.0, %v3598
    %3600 = vmatprep.mubr.f32.mxu0 0.0
    %3601 = vmatmul.mubr.f32.gmra.mxu0 %v109
    %v3602 = vpop.f32.mrf.mxu0
    %v3603 = vadd.f32 0.0, %v3602
    %v3604 = vpop.f32.mrf.mxu0
    %v3605 = vadd.f32 0.0, %v3604
    %3606 = vmatprep.mubr.f32.mxu0 0.0
    %3607 = vmatmul.mubr.f32.gmra.mxu0 %v110
    %v3608 = vpop.f32.mrf.mxu0
    %v3609 = vadd.f32 0.0, %v3608
    %v3610 = vpop.f32.mrf.mxu0
    %v3611 = vadd.f32 0.0, %v3610
    %3612 = vmatprep.mubr.f32.mxu0 0.0
    %3613 = vmatmul.mubr.f32.gmra.mxu0 %v111
    %v3614 = vpop.f32.mrf.mxu0
    %v3615 = vadd.f32 0.0, %v3614
    %v3616 = vpop.f32.mrf.mxu0
    %v3617 = vadd.f32 0.0, %v3616
    %3618 = vmatprep.mubr.f32.mxu0 0.0
    %3619 = vmatmul.mubr.f32.gmra.mxu0 %v112
    %v3620 = vpop.f32.mrf.mxu0
    %v3621 = vadd.f32 0.0, %v3620
    %v3622 = vpop.f32.mrf.mxu0
    %v3623 = vadd.f32 0.0, %v3622
    %3624 = vmatprep.mubr.f32.mxu0 0.0
    %3625 = vmatmul.mubr.f32.gmra.mxu0 %v113
    %v3626 = vpop.f32.mrf.mxu0
    %v3627 = vadd.f32 0.0, %v3626
    %v3628 = vpop.f32.mrf.mxu0
    %v3629 = vadd.f32 0.0, %v3628
    %3630 = vmatprep.mubr.f32.mxu0 0.0
    %3631 = vmatmul.mubr.f32.gmra.mxu0 %v114
    %v3632 = vpop.f32.mrf.mxu0
    %v3633 = vadd.f32 0.0, %v3632
    %v3634 = vpop.f32.mrf.mxu0
    %v3635 = vadd.f32 0.0, %v3634
    %3636 = vmatprep.mubr.f32.mxu0 0.0
    %3637 = vmatmul.mubr.f32.gmra.mxu0 %v115
    %v3638 = vpop.f32.mrf.mxu0
    %v3639 = vadd.f32 0.0, %v3638
    %v3640 = vpop.f32.mrf.mxu0
    %v3641 = vadd.f32 0.0, %v3640
    %3642 = vmatprep.mubr.f32.mxu0 0.0
    %3643 = vmatmul.mubr.f32.gmra.mxu0 %v116
    %v3644 = vpop.f32.mrf.mxu0
    %v3645 = vadd.f32 0.0, %v3644
    %v3646 = vpop.f32.mrf.mxu0
    %v3647 = vadd.f32 0.0, %v3646
    %3648 = vmatprep.mubr.f32.mxu0 0.0
    %3649 = vmatmul.mubr.f32.gmra.mxu0 %v117
    %v3650 = vpop.f32.mrf.mxu0
    %v3651 = vadd.f32 0.0, %v3650
    %v3652 = vpop.f32.mrf.mxu0
    %v3653 = vadd.f32 0.0, %v3652
    %3654 = vmatprep.mubr.f32.mxu0 0.0
    %3655 = vmatmul.mubr.f32.gmra.mxu0 %v118
    %v3656 = vpop.f32.mrf.mxu0
    %v3657 = vadd.f32 0.0, %v3656
    %v3658 = vpop.f32.mrf.mxu0
    %v3659 = vadd.f32 0.0, %v3658
    %3660 = vmatprep.mubr.f32.mxu0 0.0
    %3661 = vmatmul.mubr.f32.gmra.mxu0 %v119
    %v3662 = vpop.f32.mrf.mxu0
    %v3663 = vadd.f32 0.0, %v3662
    %v3664 = vpop.f32.mrf.mxu0
    %v3665 = vadd.f32 0.0, %v3664
    %3666 = vmatprep.mubr.f32.mxu0 0.0
    %3667 = vmatmul.mubr.f32.gmra.mxu0 %v120
    %v3668 = vpop.f32.mrf.mxu0
    %v3669 = vadd.f32 0.0, %v3668
    %v3670 = vpop.f32.mrf.mxu0
    %v3671 = vadd.f32 0.0, %v3670
    %3672 = vmatprep.mubr.f32.mxu0 0.0
    %3673 = vmatmul.mubr.f32.gmra.mxu0 %v121
    %v3674 = vpop.f32.mrf.mxu0
    %v3675 = vadd.f32 0.0, %v3674
    %v3676 = vpop.f32.mrf.mxu0
    %v3677 = vadd.f32 0.0, %v3676
    %3678 = vmatprep.mubr.f32.mxu0 0.0
    %3679 = vmatmul.mubr.f32.gmra.mxu0 %v122
    %v3680 = vpop.f32.mrf.mxu0
    %v3681 = vadd.f32 0.0, %v3680
    %v3682 = vpop.f32.mrf.mxu0
    %v3683 = vadd.f32 0.0, %v3682
    %3684 = vmatprep.mubr.f32.mxu0 0.0
    %3685 = vmatmul.mubr.f32.gmra.mxu0 %v123
    %v3686 = vpop.f32.mrf.mxu0
    %v3687 = vadd.f32 0.0, %v3686
    %v3688 = vpop.f32.mrf.mxu0
    %v3689 = vadd.f32 0.0, %v3688
    %3690 = vmatprep.mubr.f32.mxu0 0.0
    %3691 = vmatmul.mubr.f32.gmra.mxu0 %v124
    %v3692 = vpop.f32.mrf.mxu0
    %v3693 = vadd.f32 0.0, %v3692
    %v3694 = vpop.f32.mrf.mxu0
    %v3695 = vadd.f32 0.0, %v3694
    %3696 = vmatprep.mubr.f32.mxu0 0.0
    %3697 = vmatmul.mubr.f32.gmra.mxu0 %v125
    %v3698 = vpop.f32.mrf.mxu0
    %v3699 = vadd.f32 0.0, %v3698
    %v3700 = vpop.f32.mrf.mxu0
    %v3701 = vadd.f32 0.0, %v3700
    %3702 = vmatprep.mubr.f32.mxu0 0.0
    %3703 = vmatmul.mubr.f32.gmra.mxu0 %v126
    %v3704 = vpop.f32.mrf.mxu0
    %v3705 = vadd.f32 0.0, %v3704
    %v3706 = vpop.f32.mrf.mxu0
    %v3707 = vadd.f32 0.0, %v3706
    %3708 = vmatprep.mubr.f32.mxu0 0.0
    %3709 = vmatmul.mubr.f32.gmra.mxu0 %v127
    %v3710 = vpop.f32.mrf.mxu0
    %v3711 = vadd.f32 0.0, %v3710
    %v3712 = vpop.f32.mrf.mxu0
    %v3713 = vadd.f32 0.0, %v3712
    %3714 = vmatprep.mubr.f32.mxu0 0.0
    %3715 = vmatmul.mubr.f32.gmra.mxu0 %v128
    %v3716 = vpop.f32.mrf.mxu0
    %v3717 = vadd.f32 0.0, %v3716
    %v3718 = vpop.f32.mrf.mxu0
    %v3719 = vadd.f32 0.0, %v3718
    %3720 = vmatprep.mubr.f32.mxu0 0.0
    %3721 = vmatmul.mubr.f32.gmra.mxu0 %v129
    %v3722 = vpop.f32.mrf.mxu0
    %v3723 = vadd.f32 0.0, %v3722
    %v3724 = vpop.f32.mrf.mxu0
    %v3725 = vadd.f32 0.0, %v3724
    %3726 = vmatprep.mubr.f32.mxu0 0.0
    %3727 = vmatmul.mubr.f32.gmra.mxu0 %v130
    %v3728 = vpop.f32.mrf.mxu0
    %v3729 = vadd.f32 0.0, %v3728
    %v3730 = vpop.f32.mrf.mxu0
    %v3731 = vadd.f32 0.0, %v3730
    %3732 = vmatprep.mubr.f32.mxu0 0.0
    %3733 = vmatmul.mubr.f32.gmra.mxu0 %v131
    %v3734 = vpop.f32.mrf.mxu0
    %v3735 = vadd.f32 0.0, %v3734
    %v3736 = vpop.f32.mrf.mxu0
    %v3737 = vadd.f32 0.0, %v3736
    %3738 = vmatprep.mubr.f32.mxu0 0.0
    %3739 = vmatmul.mubr.f32.gmra.mxu0 %v132
    %v3740 = vpop.f32.mrf.mxu0
    %v3741 = vadd.f32 0.0, %v3740
    %v3742 = vpop.f32.mrf.mxu0
    %v3743 = vadd.f32 0.0, %v3742
    %3744 = vmatprep.mubr.f32.mxu0 0.0
    %3745 = vmatmul.mubr.f32.gmra.mxu0 %v133
    %v3746 = vpop.f32.mrf.mxu0
    %v3747 = vadd.f32 0.0, %v3746
    %v3748 = vpop.f32.mrf.mxu0
    %v3749 = vadd.f32 0.0, %v3748
    %3750 = vmatprep.mubr.f32.mxu0 0.0
    %3751 = vmatmul.mubr.f32.gmra.mxu0 %v134
    %v3752 = vpop.f32.mrf.mxu0
    %v3753 = vadd.f32 0.0, %v3752
    %v3754 = vpop.f32.mrf.mxu0
    %v3755 = vadd.f32 0.0, %v3754
    %3756 = vmatprep.mubr.f32.mxu0 0.0
    %3757 = vmatmul.mubr.f32.gmra.mxu0 %v135
    %v3758 = vpop.f32.mrf.mxu0
    %v3759 = vadd.f32 0.0, %v3758
    %v3760 = vpop.f32.mrf.mxu0
    %v3761 = vadd.f32 0.0, %v3760
    %3762 = vmatprep.mubr.f32.mxu0 0.0
    %3763 = vmatmul.mubr.f32.gmra.mxu0 %v136
    %v3764 = vpop.f32.mrf.mxu0
    %v3765 = vadd.f32 0.0, %v3764
    %v3766 = vpop.f32.mrf.mxu0
    %v3767 = vadd.f32 0.0, %v3766
    %3768 = vmatprep.mubr.f32.mxu0 0.0
    %3769 = vmatmul.mubr.f32.gmra.mxu0 %v137
    %v3770 = vpop.f32.mrf.mxu0
    %v3771 = vadd.f32 0.0, %v3770
    %v3772 = vpop.f32.mrf.mxu0
    %v3773 = vadd.f32 0.0, %v3772
    %3774 = vmatprep.mubr.f32.mxu0 0.0
    %3775 = vmatmul.mubr.f32.gmra.mxu0 %v138
    %v3776 = vpop.f32.mrf.mxu0
    %v3777 = vadd.f32 0.0, %v3776
    %v3778 = vpop.f32.mrf.mxu0
    %v3779 = vadd.f32 0.0, %v3778
    %3780 = vmatprep.mubr.f32.mxu0 0.0
    %3781 = vmatmul.mubr.f32.gmra.mxu0 %v139
    %v3782 = vpop.f32.mrf.mxu0
    %v3783 = vadd.f32 0.0, %v3782
    %v3784 = vpop.f32.mrf.mxu0
    %v3785 = vadd.f32 0.0, %v3784
    %3786 = vmatprep.mubr.f32.mxu0 0.0
    %3787 = vmatmul.mubr.f32.gmra.mxu0 %v140
    %v3788 = vpop.f32.mrf.mxu0
    %v3789 = vadd.f32 0.0, %v3788
    %v3790 = vpop.f32.mrf.mxu0
    %v3791 = vadd.f32 0.0, %v3790
    %3792 = vmatprep.mubr.f32.mxu0 0.0
    %3793 = vmatmul.mubr.f32.gmra.mxu0 %v141
    %v3794 = vpop.f32.mrf.mxu0
    %v3795 = vadd.f32 0.0, %v3794
    %v3796 = vpop.f32.mrf.mxu0
    %v3797 = vadd.f32 0.0, %v3796
    %3798 = vmatprep.mubr.f32.mxu0 0.0
    %3799 = vmatmul.mubr.f32.gmra.mxu0 %v142
    %v3800 = vpop.f32.mrf.mxu0
    %v3801 = vadd.f32 0.0, %v3800
    %v3802 = vpop.f32.mrf.mxu0
    %v3803 = vadd.f32 0.0, %v3802
    %3804 = vmatprep.mubr.f32.mxu0 0.0
    %3805 = vmatmul.mubr.f32.gmra.mxu0 %v143
    %v3806 = vpop.f32.mrf.mxu0
    %v3807 = vadd.f32 0.0, %v3806
    %v3808 = vpop.f32.mrf.mxu0
    %v3809 = vadd.f32 0.0, %v3808
    %3810 = vmatprep.mubr.f32.mxu0 0.0
    %3811 = vmatmul.mubr.f32.gmra.mxu0 %v144
    %v3812 = vpop.f32.mrf.mxu0
    %v3813 = vadd.f32 0.0, %v3812
    %v3814 = vpop.f32.mrf.mxu0
    %v3815 = vadd.f32 0.0, %v3814
    %3816 = vmatprep.mubr.f32.mxu0 0.0
    %3817 = vmatmul.mubr.f32.gmra.mxu0 %v145
    %v3818 = vpop.f32.mrf.mxu0
    %v3819 = vadd.f32 0.0, %v3818
    %v3820 = vpop.f32.mrf.mxu0
    %v3821 = vadd.f32 0.0, %v3820
    %3822 = vmatprep.mubr.f32.mxu0 0.0
    %3823 = vmatmul.mubr.f32.gmra.mxu0 %v146
    %v3824 = vpop.f32.mrf.mxu0
    %v3825 = vadd.f32 0.0, %v3824
    %v3826 = vpop.f32.mrf.mxu0
    %v3827 = vadd.f32 0.0, %v3826
    %3828 = vmatprep.mubr.f32.mxu0 0.0
    %3829 = vmatmul.mubr.f32.gmra.mxu0 %v147
    %v3830 = vpop.f32.mrf.mxu0
    %v3831 = vadd.f32 0.0, %v3830
    %v3832 = vpop.f32.mrf.mxu0
    %v3833 = vadd.f32 0.0, %v3832
    %3834 = vmatprep.mubr.f32.mxu0 0.0
    %3835 = vmatmul.mubr.f32.gmra.mxu0 %v148
    %v3836 = vpop.f32.mrf.mxu0
    %v3837 = vadd.f32 0.0, %v3836
    %v3838 = vpop.f32.mrf.mxu0
    %v3839 = vadd.f32 0.0, %v3838
    %3840 = vdwg.mxu0
    %3841 = vmatprep.subr.mxu0 0.0
    %3842 = vmatpush1.msra.mxu0 %v292
    %3843 = vmatprep.subr.mxu0 0.0
    %3844 = vmatpush1.msra.mxu0 %v283
    %3845 = vmatprep.subr.mxu0 0.0
    %3846 = vmatpush1.msra.mxu0 %v274
    %3847 = vmatprep.subr.mxu0 0.0
    %3848 = vmatpush1.msra.mxu0 %v265
    %3849 = vmatprep.subr.mxu0 0.0
    %3850 = vmatpush1.msra.mxu0 %v256
    %3851 = vmatprep.subr.mxu0 0.0
    %3852 = vmatpush1.msra.mxu0 %v247
    %3853 = vmatprep.subr.mxu0 0.0
    %3854 = vmatpush1.msra.mxu0 %v238
    %3855 = vmatprep.subr.mxu0 0.0
    %3856 = vmatpush1.msra.mxu0 %v229
    %3857 = vmatprep.subr.mxu0 0.0
    %3858 = vmatpush1.msra.mxu0 %v220
    %3859 = vmatprep.subr.mxu0 0.0
    %3860 = vmatpush1.msra.mxu0 %v211
    %3861 = vmatprep.subr.mxu0 0.0
    %3862 = vmatpush1.msra.mxu0 %v202
    %3863 = vmatprep.subr.mxu0 0.0
    %3864 = vmatpush1.msra.mxu0 %v193
    %3865 = vmatprep.subr.mxu0 0.0
    %3866 = vmatpush1.msra.mxu0 %v184
    %3867 = vmatprep.subr.mxu0 0.0
    %3868 = vmatpush1.msra.mxu0 %v175
    %3869 = vmatprep.subr.mxu0 0.0
    %3870 = vmatpush1.msra.mxu0 %v166
    %3871 = vmatprep.subr.mxu0 0.0
    %3872 = vmatpush1.msra.mxu0 %v157
    %3873 = vmatprep.subr.mxu0 0.0
    %3874 = vmatpush2.msra.mxu0 0.0
    %3875 = vmatprep.subr.mxu0 0.0
    %3876 = vmatpush2.msra.mxu0 0.0
    %3877 = vmatprep.subr.mxu0 0.0
    %3878 = vmatpush2.msra.mxu0 0.0
    %3879 = vmatprep.subr.mxu0 0.0
    %3880 = vmatpush2.msra.mxu0 0.0
    %3881 = vmatprep.subr.mxu0 0.0
    %3882 = vmatpush2.msra.mxu0 0.0
    %3883 = vmatprep.subr.mxu0 0.0
    %3884 = vmatpush2.msra.mxu0 0.0
    %3885 = vmatprep.subr.mxu0 0.0
    %3886 = vmatpush2.msra.mxu0 0.0
    %3887 = vmatprep.subr.mxu0 0.0
    %3888 = vmatpush2.msra.mxu0 0.0
    %3889 = vmatprep.subr.mxu0 0.0
    %3890 = vmatpush2.msra.mxu0 0.0
    %3891 = vmatprep.subr.mxu0 0.0
    %3892 = vmatpush2.msra.mxu0 0.0
    %3893 = vmatprep.subr.mxu0 0.0
    %3894 = vmatpush2.msra.mxu0 0.0
    %3895 = vmatprep.subr.mxu0 0.0
    %3896 = vmatpush2.msra.mxu0 0.0
    %3897 = vmatprep.subr.mxu0 0.0
    %3898 = vmatpush2.msra.mxu0 0.0
    %3899 = vmatprep.subr.mxu0 0.0
    %3900 = vmatpush2.msra.mxu0 0.0
    %3901 = vmatprep.subr.mxu0 0.0
    %3902 = vmatpush2.msra.mxu0 0.0
    %3903 = vmatprep.subr.mxu0 0.0
    %3904 = vmatpush2.msra.mxu0 0.0
    %3905 = vmatprep.mubr.f32.mxu0 0.0
    %3906 = vmatmul.mubr.f32.gmra.mxu0 %v12
    %v3907 = vpop.f32.mrf.mxu0
    %v3908 = vadd.f32 0.0, %v3907
    %v3909 = vpop.f32.mrf.mxu0
    %3910 = vmatprep.mubr.f32.mxu0 0.0
    %3911 = vmatmul.mubr.f32.gmra.mxu0 %v13
    %v3912 = vpop.f32.mrf.mxu0
    %v3913 = vadd.f32 0.0, %v3912
    %v3914 = vpop.f32.mrf.mxu0
    %3915 = vmatprep.mubr.f32.mxu0 0.0
    %3916 = vmatmul.mubr.f32.gmra.mxu0 %v14
    %v3917 = vpop.f32.mrf.mxu0
    %v3918 = vadd.f32 0.0, %v3917
    %v3919 = vpop.f32.mrf.mxu0
    %3920 = vmatprep.mubr.f32.mxu0 0.0
    %3921 = vmatmul.mubr.f32.gmra.mxu0 %v15
    %v3922 = vpop.f32.mrf.mxu0
    %v3923 = vadd.f32 0.0, %v3922
    %v3924 = vpop.f32.mrf.mxu0
    %3925 = vmatprep.mubr.f32.mxu0 0.0
    %3926 = vmatmul.mubr.f32.gmra.mxu0 %v16
    %v3927 = vpop.f32.mrf.mxu0
    %v3928 = vadd.f32 0.0, %v3927
    %v3929 = vpop.f32.mrf.mxu0
    %3930 = vmatprep.mubr.f32.mxu0 0.0
    %3931 = vmatmul.mubr.f32.gmra.mxu0 %v17
    %v3932 = vpop.f32.mrf.mxu0
    %v3933 = vadd.f32 0.0, %v3932
    %v3934 = vpop.f32.mrf.mxu0
    %3935 = vmatprep.mubr.f32.mxu0 0.0
    %3936 = vmatmul.mubr.f32.gmra.mxu0 %v18
    %v3937 = vpop.f32.mrf.mxu0
    %v3938 = vadd.f32 0.0, %v3937
    %v3939 = vpop.f32.mrf.mxu0
    %3940 = vmatprep.mubr.f32.mxu0 0.0
    %3941 = vmatmul.mubr.f32.gmra.mxu0 %v19
    %v3942 = vpop.f32.mrf.mxu0
    %v3943 = vadd.f32 0.0, %v3942
    %v3944 = vpop.f32.mrf.mxu0
    %3945 = vmatprep.mubr.f32.mxu0 0.0
    %3946 = vmatmul.mubr.f32.gmra.mxu0 %v20
    %v3947 = vpop.f32.mrf.mxu0
    %v3948 = vadd.f32 0.0, %v3947
    %v3949 = vpop.f32.mrf.mxu0
    %3950 = vmatprep.mubr.f32.mxu0 0.0
    %3951 = vmatmul.mubr.f32.gmra.mxu0 %v21
    %v3952 = vpop.f32.mrf.mxu0
    %v3953 = vadd.f32 0.0, %v3952
    %v3954 = vpop.f32.mrf.mxu0
    %3955 = vmatprep.mubr.f32.mxu0 0.0
    %3956 = vmatmul.mubr.f32.gmra.mxu0 %v22
    %v3957 = vpop.f32.mrf.mxu0
    %v3958 = vadd.f32 0.0, %v3957
    %v3959 = vpop.f32.mrf.mxu0
    %3960 = vmatprep.mubr.f32.mxu0 0.0
    %3961 = vmatmul.mubr.f32.gmra.mxu0 %v23
    %v3962 = vpop.f32.mrf.mxu0
    %v3963 = vadd.f32 0.0, %v3962
    %v3964 = vpop.f32.mrf.mxu0
    %3965 = vmatprep.mubr.f32.mxu0 0.0
    %3966 = vmatmul.mubr.f32.gmra.mxu0 %v24
    %v3967 = vpop.f32.mrf.mxu0
    %v3968 = vadd.f32 0.0, %v3967
    %v3969 = vpop.f32.mrf.mxu0
    %3970 = vmatprep.mubr.f32.mxu0 0.0
    %3971 = vmatmul.mubr.f32.gmra.mxu0 %v25
    %v3972 = vpop.f32.mrf.mxu0
    %v3973 = vadd.f32 0.0, %v3972
    %v3974 = vpop.f32.mrf.mxu0
    %3975 = vmatprep.mubr.f32.mxu0 0.0
    %3976 = vmatmul.mubr.f32.gmra.mxu0 %v26
    %v3977 = vpop.f32.mrf.mxu0
    %v3978 = vadd.f32 0.0, %v3977
    %v3979 = vpop.f32.mrf.mxu0
    %3980 = vmatprep.mubr.f32.mxu0 0.0
    %3981 = vmatmul.mubr.f32.gmra.mxu0 %v27
    %v3982 = vpop.f32.mrf.mxu0
    %v3983 = vadd.f32 0.0, %v3982
    %v3984 = vpop.f32.mrf.mxu0
    %3985 = vmatprep.mubr.f32.mxu0 0.0
    %3986 = vmatmul.mubr.f32.gmra.mxu0 %v28
    %v3987 = vpop.f32.mrf.mxu0
    %v3988 = vadd.f32 0.0, %v3987
    %v3989 = vpop.f32.mrf.mxu0
    %3990 = vmatprep.mubr.f32.mxu0 0.0
    %3991 = vmatmul.mubr.f32.gmra.mxu0 %v29
    %v3992 = vpop.f32.mrf.mxu0
    %v3993 = vadd.f32 0.0, %v3992
    %v3994 = vpop.f32.mrf.mxu0
    %3995 = vmatprep.mubr.f32.mxu0 0.0
    %3996 = vmatmul.mubr.f32.gmra.mxu0 %v30
    %v3997 = vpop.f32.mrf.mxu0
    %v3998 = vadd.f32 0.0, %v3997
    %v3999 = vpop.f32.mrf.mxu0
    %4000 = vmatprep.mubr.f32.mxu0 0.0
    %4001 = vmatmul.mubr.f32.gmra.mxu0 %v31
    %v4002 = vpop.f32.mrf.mxu0
    %v4003 = vadd.f32 0.0, %v4002
    %v4004 = vpop.f32.mrf.mxu0
    %4005 = vmatprep.mubr.f32.mxu0 0.0
    %4006 = vmatmul.mubr.f32.gmra.mxu0 %v32
    %v4007 = vpop.f32.mrf.mxu0
    %v4008 = vadd.f32 0.0, %v4007
    %v4009 = vpop.f32.mrf.mxu0
    %4010 = vmatprep.mubr.f32.mxu0 0.0
    %4011 = vmatmul.mubr.f32.gmra.mxu0 %v33
    %v4012 = vpop.f32.mrf.mxu0
    %v4013 = vadd.f32 0.0, %v4012
    %v4014 = vpop.f32.mrf.mxu0
    %4015 = vmatprep.mubr.f32.mxu0 0.0
    %4016 = vmatmul.mubr.f32.gmra.mxu0 %v34
    %v4017 = vpop.f32.mrf.mxu0
    %v4018 = vadd.f32 0.0, %v4017
    %v4019 = vpop.f32.mrf.mxu0
    %4020 = vmatprep.mubr.f32.mxu0 0.0
    %4021 = vmatmul.mubr.f32.gmra.mxu0 %v35
    %v4022 = vpop.f32.mrf.mxu0
    %v4023 = vadd.f32 0.0, %v4022
    %v4024 = vpop.f32.mrf.mxu0
    %4025 = vmatprep.mubr.f32.mxu0 0.0
    %4026 = vmatmul.mubr.f32.gmra.mxu0 %v36
    %v4027 = vpop.f32.mrf.mxu0
    %v4028 = vadd.f32 0.0, %v4027
    %v4029 = vpop.f32.mrf.mxu0
    %4030 = vmatprep.mubr.f32.mxu0 0.0
    %4031 = vmatmul.mubr.f32.gmra.mxu0 %v37
    %v4032 = vpop.f32.mrf.mxu0
    %v4033 = vadd.f32 0.0, %v4032
    %v4034 = vpop.f32.mrf.mxu0
    %4035 = vmatprep.mubr.f32.mxu0 0.0
    %4036 = vmatmul.mubr.f32.gmra.mxu0 %v38
    %v4037 = vpop.f32.mrf.mxu0
    %v4038 = vadd.f32 0.0, %v4037
    %v4039 = vpop.f32.mrf.mxu0
    %4040 = vmatprep.mubr.f32.mxu0 0.0
    %4041 = vmatmul.mubr.f32.gmra.mxu0 %v39
    %v4042 = vpop.f32.mrf.mxu0
    %v4043 = vadd.f32 0.0, %v4042
    %v4044 = vpop.f32.mrf.mxu0
    %4045 = vmatprep.mubr.f32.mxu0 0.0
    %4046 = vmatmul.mubr.f32.gmra.mxu0 %v40
    %v4047 = vpop.f32.mrf.mxu0
    %v4048 = vadd.f32 0.0, %v4047
    %v4049 = vpop.f32.mrf.mxu0
    %4050 = vmatprep.mubr.f32.mxu0 0.0
    %4051 = vmatmul.mubr.f32.gmra.mxu0 %v41
    %v4052 = vpop.f32.mrf.mxu0
    %v4053 = vadd.f32 0.0, %v4052
    %v4054 = vpop.f32.mrf.mxu0
    %4055 = vmatprep.mubr.f32.mxu0 0.0
    %4056 = vmatmul.mubr.f32.gmra.mxu0 %v42
    %v4057 = vpop.f32.mrf.mxu0
    %v4058 = vadd.f32 0.0, %v4057
    %v4059 = vpop.f32.mrf.mxu0
    %4060 = vmatprep.mubr.f32.mxu0 0.0
    %4061 = vmatmul.mubr.f32.gmra.mxu0 %v43
    %v4062 = vpop.f32.mrf.mxu0
    %v4063 = vadd.f32 0.0, %v4062
    %v4064 = vpop.f32.mrf.mxu0
    %4065 = vmatprep.mubr.f32.mxu0 0.0
    %4066 = vmatmul.mubr.f32.gmra.mxu0 %v44
    %v4067 = vpop.f32.mrf.mxu0
    %v4068 = vadd.f32 0.0, %v4067
    %v4069 = vpop.f32.mrf.mxu0
    %4070 = vmatprep.mubr.f32.mxu0 0.0
    %4071 = vmatmul.mubr.f32.gmra.mxu0 %v45
    %v4072 = vpop.f32.mrf.mxu0
    %v4073 = vadd.f32 0.0, %v4072
    %v4074 = vpop.f32.mrf.mxu0
    %4075 = vmatprep.mubr.f32.mxu0 0.0
    %4076 = vmatmul.mubr.f32.gmra.mxu0 %v46
    %v4077 = vpop.f32.mrf.mxu0
    %v4078 = vadd.f32 0.0, %v4077
    %v4079 = vpop.f32.mrf.mxu0
    %4080 = vmatprep.mubr.f32.mxu0 0.0
    %4081 = vmatmul.mubr.f32.gmra.mxu0 %v47
    %v4082 = vpop.f32.mrf.mxu0
    %v4083 = vadd.f32 0.0, %v4082
    %v4084 = vpop.f32.mrf.mxu0
    %4085 = vmatprep.mubr.f32.mxu0 0.0
    %4086 = vmatmul.mubr.f32.gmra.mxu0 %v48
    %v4087 = vpop.f32.mrf.mxu0
    %v4088 = vadd.f32 0.0, %v4087
    %v4089 = vpop.f32.mrf.mxu0
    %4090 = vmatprep.mubr.f32.mxu0 0.0
    %4091 = vmatmul.mubr.f32.gmra.mxu0 %v49
    %v4092 = vpop.f32.mrf.mxu0
    %v4093 = vadd.f32 0.0, %v4092
    %v4094 = vpop.f32.mrf.mxu0
    %4095 = vmatprep.mubr.f32.mxu0 0.0
    %4096 = vmatmul.mubr.f32.gmra.mxu0 %v50
    %v4097 = vpop.f32.mrf.mxu0
    %v4098 = vadd.f32 0.0, %v4097
    %v4099 = vpop.f32.mrf.mxu0
    %4100 = vmatprep.mubr.f32.mxu0 0.0
    %4101 = vmatmul.mubr.f32.gmra.mxu0 %v51
    %v4102 = vpop.f32.mrf.mxu0
    %v4103 = vadd.f32 0.0, %v4102
    %v4104 = vpop.f32.mrf.mxu0
    %4105 = vmatprep.mubr.f32.mxu0 0.0
    %4106 = vmatmul.mubr.f32.gmra.mxu0 %v52
    %v4107 = vpop.f32.mrf.mxu0
    %v4108 = vadd.f32 0.0, %v4107
    %v4109 = vpop.f32.mrf.mxu0
    %4110 = vmatprep.mubr.f32.mxu0 0.0
    %4111 = vmatmul.mubr.f32.gmra.mxu0 %v53
    %v4112 = vpop.f32.mrf.mxu0
    %v4113 = vadd.f32 0.0, %v4112
    %v4114 = vpop.f32.mrf.mxu0
    %4115 = vmatprep.mubr.f32.mxu0 0.0
    %4116 = vmatmul.mubr.f32.gmra.mxu0 %v54
    %v4117 = vpop.f32.mrf.mxu0
    %v4118 = vadd.f32 0.0, %v4117
    %v4119 = vpop.f32.mrf.mxu0
    %4120 = vmatprep.mubr.f32.mxu0 0.0
    %4121 = vmatmul.mubr.f32.gmra.mxu0 %v55
    %v4122 = vpop.f32.mrf.mxu0
    %v4123 = vadd.f32 0.0, %v4122
    %v4124 = vpop.f32.mrf.mxu0
    %4125 = vmatprep.mubr.f32.mxu0 0.0
    %4126 = vmatmul.mubr.f32.gmra.mxu0 %v56
    %v4127 = vpop.f32.mrf.mxu0
    %v4128 = vadd.f32 0.0, %v4127
    %v4129 = vpop.f32.mrf.mxu0
    %4130 = vmatprep.mubr.f32.mxu0 0.0
    %4131 = vmatmul.mubr.f32.gmra.mxu0 %v57
    %v4132 = vpop.f32.mrf.mxu0
    %v4133 = vadd.f32 0.0, %v4132
    %v4134 = vpop.f32.mrf.mxu0
    %4135 = vmatprep.mubr.f32.mxu0 0.0
    %4136 = vmatmul.mubr.f32.gmra.mxu0 %v58
    %v4137 = vpop.f32.mrf.mxu0
    %v4138 = vadd.f32 0.0, %v4137
    %v4139 = vpop.f32.mrf.mxu0
    %4140 = vmatprep.mubr.f32.mxu0 0.0
    %4141 = vmatmul.mubr.f32.gmra.mxu0 %v59
    %v4142 = vpop.f32.mrf.mxu0
    %v4143 = vadd.f32 0.0, %v4142
    %v4144 = vpop.f32.mrf.mxu0
    %4145 = vmatprep.mubr.f32.mxu0 0.0
    %4146 = vmatmul.mubr.f32.gmra.mxu0 %v60
    %v4147 = vpop.f32.mrf.mxu0
    %v4148 = vadd.f32 0.0, %v4147
    %v4149 = vpop.f32.mrf.mxu0
    %4150 = vmatprep.mubr.f32.mxu0 0.0
    %4151 = vmatmul.mubr.f32.gmra.mxu0 %v61
    %v4152 = vpop.f32.mrf.mxu0
    %v4153 = vadd.f32 0.0, %v4152
    %v4154 = vpop.f32.mrf.mxu0
    %4155 = vmatprep.mubr.f32.mxu0 0.0
    %4156 = vmatmul.mubr.f32.gmra.mxu0 %v62
    %v4157 = vpop.f32.mrf.mxu0
    %v4158 = vadd.f32 0.0, %v4157
    %v4159 = vpop.f32.mrf.mxu0
    %4160 = vmatprep.mubr.f32.mxu0 0.0
    %4161 = vmatmul.mubr.f32.gmra.mxu0 %v63
    %v4162 = vpop.f32.mrf.mxu0
    %v4163 = vadd.f32 0.0, %v4162
    %v4164 = vpop.f32.mrf.mxu0
    %4165 = vmatprep.mubr.f32.mxu0 0.0
    %4166 = vmatmul.mubr.f32.gmra.mxu0 %v64
    %v4167 = vpop.f32.mrf.mxu0
    %v4168 = vadd.f32 0.0, %v4167
    %v4169 = vpop.f32.mrf.mxu0
    %4170 = vmatprep.mubr.f32.mxu0 0.0
    %4171 = vmatmul.mubr.f32.gmra.mxu0 %v65
    %v4172 = vpop.f32.mrf.mxu0
    %v4173 = vadd.f32 0.0, %v4172
    %v4174 = vpop.f32.mrf.mxu0
    %4175 = vmatprep.mubr.f32.mxu0 0.0
    %4176 = vmatmul.mubr.f32.gmra.mxu0 %v66
    %v4177 = vpop.f32.mrf.mxu0
    %v4178 = vadd.f32 0.0, %v4177
    %v4179 = vpop.f32.mrf.mxu0
    %4180 = vmatprep.mubr.f32.mxu0 0.0
    %4181 = vmatmul.mubr.f32.gmra.mxu0 %v67
    %v4182 = vpop.f32.mrf.mxu0
    %v4183 = vadd.f32 0.0, %v4182
    %v4184 = vpop.f32.mrf.mxu0
    %4185 = vmatprep.mubr.f32.mxu0 0.0
    %4186 = vmatmul.mubr.f32.gmra.mxu0 %v68
    %v4187 = vpop.f32.mrf.mxu0
    %v4188 = vadd.f32 0.0, %v4187
    %v4189 = vpop.f32.mrf.mxu0
    %4190 = vmatprep.mubr.f32.mxu0 0.0
    %4191 = vmatmul.mubr.f32.gmra.mxu0 %v69
    %v4192 = vpop.f32.mrf.mxu0
    %v4193 = vadd.f32 0.0, %v4192
    %v4194 = vpop.f32.mrf.mxu0
    %4195 = vmatprep.mubr.f32.mxu0 0.0
    %4196 = vmatmul.mubr.f32.gmra.mxu0 %v70
    %v4197 = vpop.f32.mrf.mxu0
    %v4198 = vadd.f32 0.0, %v4197
    %v4199 = vpop.f32.mrf.mxu0
    %4200 = vmatprep.mubr.f32.mxu0 0.0
    %4201 = vmatmul.mubr.f32.gmra.mxu0 %v71
    %v4202 = vpop.f32.mrf.mxu0
    %v4203 = vadd.f32 0.0, %v4202
    %v4204 = vpop.f32.mrf.mxu0
    %4205 = vmatprep.mubr.f32.mxu0 0.0
    %4206 = vmatmul.mubr.f32.gmra.mxu0 %v72
    %v4207 = vpop.f32.mrf.mxu0
    %v4208 = vadd.f32 0.0, %v4207
    %v4209 = vpop.f32.mrf.mxu0
    %4210 = vmatprep.mubr.f32.mxu0 0.0
    %4211 = vmatmul.mubr.f32.gmra.mxu0 %v73
    %v4212 = vpop.f32.mrf.mxu0
    %v4213 = vadd.f32 0.0, %v4212
    %v4214 = vpop.f32.mrf.mxu0
    %4215 = vmatprep.mubr.f32.mxu0 0.0
    %4216 = vmatmul.mubr.f32.gmra.mxu0 %v74
    %v4217 = vpop.f32.mrf.mxu0
    %v4218 = vadd.f32 0.0, %v4217
    %v4219 = vpop.f32.mrf.mxu0
    %4220 = vmatprep.mubr.f32.mxu0 0.0
    %4221 = vmatmul.mubr.f32.gmra.mxu0 %v75
    %v4222 = vpop.f32.mrf.mxu0
    %v4223 = vadd.f32 0.0, %v4222
    %v4224 = vpop.f32.mrf.mxu0
    %4225 = vmatprep.mubr.f32.mxu0 0.0
    %4226 = vmatmul.mubr.f32.gmra.mxu0 %v76
    %v4227 = vpop.f32.mrf.mxu0
    %v4228 = vadd.f32 0.0, %v4227
    %v4229 = vpop.f32.mrf.mxu0
    %4230 = vmatprep.mubr.f32.mxu0 0.0
    %4231 = vmatmul.mubr.f32.gmra.mxu0 %v77
    %v4232 = vpop.f32.mrf.mxu0
    %v4233 = vadd.f32 0.0, %v4232
    %v4234 = vpop.f32.mrf.mxu0
    %4235 = vmatprep.mubr.f32.mxu0 0.0
    %4236 = vmatmul.mubr.f32.gmra.mxu0 %v78
    %v4237 = vpop.f32.mrf.mxu0
    %v4238 = vadd.f32 0.0, %v4237
    %v4239 = vpop.f32.mrf.mxu0
    %4240 = vmatprep.mubr.f32.mxu0 0.0
    %4241 = vmatmul.mubr.f32.gmra.mxu0 %v79
    %v4242 = vpop.f32.mrf.mxu0
    %v4243 = vadd.f32 0.0, %v4242
    %v4244 = vpop.f32.mrf.mxu0
    %4245 = vmatprep.mubr.f32.mxu0 0.0
    %4246 = vmatmul.mubr.f32.gmra.mxu0 %v80
    %v4247 = vpop.f32.mrf.mxu0
    %v4248 = vadd.f32 0.0, %v4247
    %v4249 = vpop.f32.mrf.mxu0
    %4250 = vmatprep.mubr.f32.mxu0 0.0
    %4251 = vmatmul.mubr.f32.gmra.mxu0 %v81
    %v4252 = vpop.f32.mrf.mxu0
    %v4253 = vadd.f32 0.0, %v4252
    %v4254 = vpop.f32.mrf.mxu0
    %4255 = vmatprep.mubr.f32.mxu0 0.0
    %4256 = vmatmul.mubr.f32.gmra.mxu0 %v82
    %v4257 = vpop.f32.mrf.mxu0
    %v4258 = vadd.f32 0.0, %v4257
    %v4259 = vpop.f32.mrf.mxu0
    %4260 = vmatprep.mubr.f32.mxu0 0.0
    %4261 = vmatmul.mubr.f32.gmra.mxu0 %v83
    %v4262 = vpop.f32.mrf.mxu0
    %v4263 = vadd.f32 0.0, %v4262
    %v4264 = vpop.f32.mrf.mxu0
    %4265 = vmatprep.mubr.f32.mxu0 0.0
    %4266 = vmatmul.mubr.f32.gmra.mxu0 %v84
    %v4267 = vpop.f32.mrf.mxu0
    %v4268 = vadd.f32 0.0, %v4267
    %v4269 = vpop.f32.mrf.mxu0
    %4270 = vmatprep.mubr.f32.mxu0 0.0
    %4271 = vmatmul.mubr.f32.gmra.mxu0 %v85
    %v4272 = vpop.f32.mrf.mxu0
    %v4273 = vadd.f32 0.0, %v4272
    %v4274 = vpop.f32.mrf.mxu0
    %4275 = vmatprep.mubr.f32.mxu0 0.0
    %4276 = vmatmul.mubr.f32.gmra.mxu0 %v86
    %v4277 = vpop.f32.mrf.mxu0
    %v4278 = vadd.f32 0.0, %v4277
    %v4279 = vpop.f32.mrf.mxu0
    %4280 = vmatprep.mubr.f32.mxu0 0.0
    %4281 = vmatmul.mubr.f32.gmra.mxu0 %v87
    %v4282 = vpop.f32.mrf.mxu0
    %v4283 = vadd.f32 0.0, %v4282
    %v4284 = vpop.f32.mrf.mxu0
    %4285 = vmatprep.mubr.f32.mxu0 0.0
    %4286 = vmatmul.mubr.f32.gmra.mxu0 %v88
    %v4287 = vpop.f32.mrf.mxu0
    %v4288 = vadd.f32 0.0, %v4287
    %v4289 = vpop.f32.mrf.mxu0
    %4290 = vmatprep.mubr.f32.mxu0 0.0
    %4291 = vmatmul.mubr.f32.gmra.mxu0 %v89
    %v4292 = vpop.f32.mrf.mxu0
    %v4293 = vadd.f32 0.0, %v4292
    %v4294 = vpop.f32.mrf.mxu0
    %4295 = vmatprep.mubr.f32.mxu0 0.0
    %4296 = vmatmul.mubr.f32.gmra.mxu0 %v90
    %v4297 = vpop.f32.mrf.mxu0
    %v4298 = vadd.f32 0.0, %v4297
    %v4299 = vpop.f32.mrf.mxu0
    %4300 = vmatprep.mubr.f32.mxu0 0.0
    %4301 = vmatmul.mubr.f32.gmra.mxu0 %v91
    %v4302 = vpop.f32.mrf.mxu0
    %v4303 = vadd.f32 0.0, %v4302
    %v4304 = vpop.f32.mrf.mxu0
    %4305 = vmatprep.mubr.f32.mxu0 0.0
    %4306 = vmatmul.mubr.f32.gmra.mxu0 %v92
    %v4307 = vpop.f32.mrf.mxu0
    %v4308 = vadd.f32 0.0, %v4307
    %v4309 = vpop.f32.mrf.mxu0
    %4310 = vmatprep.mubr.f32.mxu0 0.0
    %4311 = vmatmul.mubr.f32.gmra.mxu0 %v93
    %v4312 = vpop.f32.mrf.mxu0
    %v4313 = vadd.f32 0.0, %v4312
    %v4314 = vpop.f32.mrf.mxu0
    %4315 = vmatprep.mubr.f32.mxu0 0.0
    %4316 = vmatmul.mubr.f32.gmra.mxu0 %v94
    %v4317 = vpop.f32.mrf.mxu0
    %v4318 = vadd.f32 0.0, %v4317
    %v4319 = vpop.f32.mrf.mxu0
    %4320 = vmatprep.mubr.f32.mxu0 0.0
    %4321 = vmatmul.mubr.f32.gmra.mxu0 %v95
    %v4322 = vpop.f32.mrf.mxu0
    %v4323 = vadd.f32 0.0, %v4322
    %v4324 = vpop.f32.mrf.mxu0
    %4325 = vmatprep.mubr.f32.mxu0 0.0
    %4326 = vmatmul.mubr.f32.gmra.mxu0 %v96
    %v4327 = vpop.f32.mrf.mxu0
    %v4328 = vadd.f32 0.0, %v4327
    %v4329 = vpop.f32.mrf.mxu0
    %4330 = vmatprep.mubr.f32.mxu0 0.0
    %4331 = vmatmul.mubr.f32.gmra.mxu0 %v97
    %v4332 = vpop.f32.mrf.mxu0
    %v4333 = vadd.f32 0.0, %v4332
    %v4334 = vpop.f32.mrf.mxu0
    %4335 = vmatprep.mubr.f32.mxu0 0.0
    %4336 = vmatmul.mubr.f32.gmra.mxu0 %v98
    %v4337 = vpop.f32.mrf.mxu0
    %v4338 = vadd.f32 0.0, %v4337
    %v4339 = vpop.f32.mrf.mxu0
    %4340 = vmatprep.mubr.f32.mxu0 0.0
    %4341 = vmatmul.mubr.f32.gmra.mxu0 %v99
    %v4342 = vpop.f32.mrf.mxu0
    %v4343 = vadd.f32 0.0, %v4342
    %v4344 = vpop.f32.mrf.mxu0
    %4345 = vmatprep.mubr.f32.mxu0 0.0
    %4346 = vmatmul.mubr.f32.gmra.mxu0 %v100
    %v4347 = vpop.f32.mrf.mxu0
    %v4348 = vadd.f32 0.0, %v4347
    %v4349 = vpop.f32.mrf.mxu0
    %4350 = vmatprep.mubr.f32.mxu0 0.0
    %4351 = vmatmul.mubr.f32.gmra.mxu0 %v101
    %v4352 = vpop.f32.mrf.mxu0
    %v4353 = vadd.f32 0.0, %v4352
    %v4354 = vpop.f32.mrf.mxu0
    %4355 = vmatprep.mubr.f32.mxu0 0.0
    %4356 = vmatmul.mubr.f32.gmra.mxu0 %v102
    %v4357 = vpop.f32.mrf.mxu0
    %v4358 = vadd.f32 0.0, %v4357
    %v4359 = vpop.f32.mrf.mxu0
    %4360 = vmatprep.mubr.f32.mxu0 0.0
    %4361 = vmatmul.mubr.f32.gmra.mxu0 %v103
    %v4362 = vpop.f32.mrf.mxu0
    %v4363 = vadd.f32 0.0, %v4362
    %v4364 = vpop.f32.mrf.mxu0
    %4365 = vmatprep.mubr.f32.mxu0 0.0
    %4366 = vmatmul.mubr.f32.gmra.mxu0 %v104
    %v4367 = vpop.f32.mrf.mxu0
    %v4368 = vadd.f32 0.0, %v4367
    %v4369 = vpop.f32.mrf.mxu0
    %4370 = vmatprep.mubr.f32.mxu0 0.0
    %4371 = vmatmul.mubr.f32.gmra.mxu0 %v105
    %v4372 = vpop.f32.mrf.mxu0
    %v4373 = vadd.f32 0.0, %v4372
    %v4374 = vpop.f32.mrf.mxu0
    %4375 = vmatprep.mubr.f32.mxu0 0.0
    %4376 = vmatmul.mubr.f32.gmra.mxu0 %v106
    %v4377 = vpop.f32.mrf.mxu0
    %v4378 = vadd.f32 0.0, %v4377
    %v4379 = vpop.f32.mrf.mxu0
    %4380 = vmatprep.mubr.f32.mxu0 0.0
    %4381 = vmatmul.mubr.f32.gmra.mxu0 %v107
    %v4382 = vpop.f32.mrf.mxu0
    %v4383 = vadd.f32 0.0, %v4382
    %v4384 = vpop.f32.mrf.mxu0
    %4385 = vmatprep.mubr.f32.mxu0 0.0
    %4386 = vmatmul.mubr.f32.gmra.mxu0 %v108
    %v4387 = vpop.f32.mrf.mxu0
    %v4388 = vadd.f32 0.0, %v4387
    %v4389 = vpop.f32.mrf.mxu0
    %4390 = vmatprep.mubr.f32.mxu0 0.0
    %4391 = vmatmul.mubr.f32.gmra.mxu0 %v109
    %v4392 = vpop.f32.mrf.mxu0
    %v4393 = vadd.f32 0.0, %v4392
    %v4394 = vpop.f32.mrf.mxu0
    %4395 = vmatprep.mubr.f32.mxu0 0.0
    %4396 = vmatmul.mubr.f32.gmra.mxu0 %v110
    %v4397 = vpop.f32.mrf.mxu0
    %v4398 = vadd.f32 0.0, %v4397
    %v4399 = vpop.f32.mrf.mxu0
    %4400 = vmatprep.mubr.f32.mxu0 0.0
    %4401 = vmatmul.mubr.f32.gmra.mxu0 %v111
    %v4402 = vpop.f32.mrf.mxu0
    %v4403 = vadd.f32 0.0, %v4402
    %v4404 = vpop.f32.mrf.mxu0
    %4405 = vmatprep.mubr.f32.mxu0 0.0
    %4406 = vmatmul.mubr.f32.gmra.mxu0 %v112
    %v4407 = vpop.f32.mrf.mxu0
    %v4408 = vadd.f32 0.0, %v4407
    %v4409 = vpop.f32.mrf.mxu0
    %4410 = vmatprep.mubr.f32.mxu0 0.0
    %4411 = vmatmul.mubr.f32.gmra.mxu0 %v113
    %v4412 = vpop.f32.mrf.mxu0
    %v4413 = vadd.f32 0.0, %v4412
    %v4414 = vpop.f32.mrf.mxu0
    %4415 = vmatprep.mubr.f32.mxu0 0.0
    %4416 = vmatmul.mubr.f32.gmra.mxu0 %v114
    %v4417 = vpop.f32.mrf.mxu0
    %v4418 = vadd.f32 0.0, %v4417
    %v4419 = vpop.f32.mrf.mxu0
    %4420 = vmatprep.mubr.f32.mxu0 0.0
    %4421 = vmatmul.mubr.f32.gmra.mxu0 %v115
    %v4422 = vpop.f32.mrf.mxu0
    %v4423 = vadd.f32 0.0, %v4422
    %v4424 = vpop.f32.mrf.mxu0
    %4425 = vmatprep.mubr.f32.mxu0 0.0
    %4426 = vmatmul.mubr.f32.gmra.mxu0 %v116
    %v4427 = vpop.f32.mrf.mxu0
    %v4428 = vadd.f32 0.0, %v4427
    %v4429 = vpop.f32.mrf.mxu0
    %4430 = vmatprep.mubr.f32.mxu0 0.0
    %4431 = vmatmul.mubr.f32.gmra.mxu0 %v117
    %v4432 = vpop.f32.mrf.mxu0
    %v4433 = vadd.f32 0.0, %v4432
    %v4434 = vpop.f32.mrf.mxu0
    %4435 = vmatprep.mubr.f32.mxu0 0.0
    %4436 = vmatmul.mubr.f32.gmra.mxu0 %v118
    %v4437 = vpop.f32.mrf.mxu0
    %v4438 = vadd.f32 0.0, %v4437
    %v4439 = vpop.f32.mrf.mxu0
    %4440 = vmatprep.mubr.f32.mxu0 0.0
    %4441 = vmatmul.mubr.f32.gmra.mxu0 %v119
    %v4442 = vpop.f32.mrf.mxu0
    %v4443 = vadd.f32 0.0, %v4442
    %v4444 = vpop.f32.mrf.mxu0
    %4445 = vmatprep.mubr.f32.mxu0 0.0
    %4446 = vmatmul.mubr.f32.gmra.mxu0 %v120
    %v4447 = vpop.f32.mrf.mxu0
    %v4448 = vadd.f32 0.0, %v4447
    %v4449 = vpop.f32.mrf.mxu0
    %4450 = vmatprep.mubr.f32.mxu0 0.0
    %4451 = vmatmul.mubr.f32.gmra.mxu0 %v121
    %v4452 = vpop.f32.mrf.mxu0
    %v4453 = vadd.f32 0.0, %v4452
    %v4454 = vpop.f32.mrf.mxu0
    %4455 = vmatprep.mubr.f32.mxu0 0.0
    %4456 = vmatmul.mubr.f32.gmra.mxu0 %v122
    %v4457 = vpop.f32.mrf.mxu0
    %v4458 = vadd.f32 0.0, %v4457
    %v4459 = vpop.f32.mrf.mxu0
    %4460 = vmatprep.mubr.f32.mxu0 0.0
    %4461 = vmatmul.mubr.f32.gmra.mxu0 %v123
    %v4462 = vpop.f32.mrf.mxu0
    %v4463 = vadd.f32 0.0, %v4462
    %v4464 = vpop.f32.mrf.mxu0
    %4465 = vmatprep.mubr.f32.mxu0 0.0
    %4466 = vmatmul.mubr.f32.gmra.mxu0 %v124
    %v4467 = vpop.f32.mrf.mxu0
    %v4468 = vadd.f32 0.0, %v4467
    %v4469 = vpop.f32.mrf.mxu0
    %4470 = vmatprep.mubr.f32.mxu0 0.0
    %4471 = vmatmul.mubr.f32.gmra.mxu0 %v125
    %v4472 = vpop.f32.mrf.mxu0
    %v4473 = vadd.f32 0.0, %v4472
    %v4474 = vpop.f32.mrf.mxu0
    %4475 = vmatprep.mubr.f32.mxu0 0.0
    %4476 = vmatmul.mubr.f32.gmra.mxu0 %v126
    %v4477 = vpop.f32.mrf.mxu0
    %v4478 = vadd.f32 0.0, %v4477
    %v4479 = vpop.f32.mrf.mxu0
    %4480 = vmatprep.mubr.f32.mxu0 0.0
    %4481 = vmatmul.mubr.f32.gmra.mxu0 %v127
    %v4482 = vpop.f32.mrf.mxu0
    %v4483 = vadd.f32 0.0, %v4482
    %v4484 = vpop.f32.mrf.mxu0
    %4485 = vmatprep.mubr.f32.mxu0 0.0
    %4486 = vmatmul.mubr.f32.gmra.mxu0 %v128
    %v4487 = vpop.f32.mrf.mxu0
    %v4488 = vadd.f32 0.0, %v4487
    %v4489 = vpop.f32.mrf.mxu0
    %4490 = vmatprep.mubr.f32.mxu0 0.0
    %4491 = vmatmul.mubr.f32.gmra.mxu0 %v129
    %v4492 = vpop.f32.mrf.mxu0
    %v4493 = vadd.f32 0.0, %v4492
    %v4494 = vpop.f32.mrf.mxu0
    %4495 = vmatprep.mubr.f32.mxu0 0.0
    %4496 = vmatmul.mubr.f32.gmra.mxu0 %v130
    %v4497 = vpop.f32.mrf.mxu0
    %v4498 = vadd.f32 0.0, %v4497
    %v4499 = vpop.f32.mrf.mxu0
    %4500 = vmatprep.mubr.f32.mxu0 0.0
    %4501 = vmatmul.mubr.f32.gmra.mxu0 %v131
    %v4502 = vpop.f32.mrf.mxu0
    %v4503 = vadd.f32 0.0, %v4502
    %v4504 = vpop.f32.mrf.mxu0
    %4505 = vmatprep.mubr.f32.mxu0 0.0
    %4506 = vmatmul.mubr.f32.gmra.mxu0 %v132
    %v4507 = vpop.f32.mrf.mxu0
    %v4508 = vadd.f32 0.0, %v4507
    %v4509 = vpop.f32.mrf.mxu0
    %4510 = vmatprep.mubr.f32.mxu0 0.0
    %4511 = vmatmul.mubr.f32.gmra.mxu0 %v133
    %v4512 = vpop.f32.mrf.mxu0
    %v4513 = vadd.f32 0.0, %v4512
    %v4514 = vpop.f32.mrf.mxu0
    %4515 = vmatprep.mubr.f32.mxu0 0.0
    %4516 = vmatmul.mubr.f32.gmra.mxu0 %v134
    %v4517 = vpop.f32.mrf.mxu0
    %v4518 = vadd.f32 0.0, %v4517
    %v4519 = vpop.f32.mrf.mxu0
    %4520 = vmatprep.mubr.f32.mxu0 0.0
    %4521 = vmatmul.mubr.f32.gmra.mxu0 %v135
    %v4522 = vpop.f32.mrf.mxu0
    %v4523 = vadd.f32 0.0, %v4522
    %v4524 = vpop.f32.mrf.mxu0
    %4525 = vmatprep.mubr.f32.mxu0 0.0
    %4526 = vmatmul.mubr.f32.gmra.mxu0 %v136
    %v4527 = vpop.f32.mrf.mxu0
    %v4528 = vadd.f32 0.0, %v4527
    %v4529 = vpop.f32.mrf.mxu0
    %4530 = vmatprep.mubr.f32.mxu0 0.0
    %4531 = vmatmul.mubr.f32.gmra.mxu0 %v137
    %v4532 = vpop.f32.mrf.mxu0
    %v4533 = vadd.f32 0.0, %v4532
    %v4534 = vpop.f32.mrf.mxu0
    %4535 = vmatprep.mubr.f32.mxu0 0.0
    %4536 = vmatmul.mubr.f32.gmra.mxu0 %v138
    %v4537 = vpop.f32.mrf.mxu0
    %v4538 = vadd.f32 0.0, %v4537
    %v4539 = vpop.f32.mrf.mxu0
    %4540 = vmatprep.mubr.f32.mxu0 0.0
    %4541 = vmatmul.mubr.f32.gmra.mxu0 %v139
    %v4542 = vpop.f32.mrf.mxu0
    %v4543 = vadd.f32 0.0, %v4542
    %v4544 = vpop.f32.mrf.mxu0
    %4545 = vmatprep.mubr.f32.mxu0 0.0
    %4546 = vmatmul.mubr.f32.gmra.mxu0 %v140
    %v4547 = vpop.f32.mrf.mxu0
    %v4548 = vadd.f32 0.0, %v4547
    %v4549 = vpop.f32.mrf.mxu0
    %4550 = vmatprep.mubr.f32.mxu0 0.0
    %4551 = vmatmul.mubr.f32.gmra.mxu0 %v141
    %v4552 = vpop.f32.mrf.mxu0
    %v4553 = vadd.f32 0.0, %v4552
    %v4554 = vpop.f32.mrf.mxu0
    %4555 = vmatprep.mubr.f32.mxu0 0.0
    %4556 = vmatmul.mubr.f32.gmra.mxu0 %v142
    %v4557 = vpop.f32.mrf.mxu0
    %v4558 = vadd.f32 0.0, %v4557
    %v4559 = vpop.f32.mrf.mxu0
    %4560 = vmatprep.mubr.f32.mxu0 0.0
    %4561 = vmatmul.mubr.f32.gmra.mxu0 %v143
    %v4562 = vpop.f32.mrf.mxu0
    %v4563 = vadd.f32 0.0, %v4562
    %v4564 = vpop.f32.mrf.mxu0
    %4565 = vmatprep.mubr.f32.mxu0 0.0
    %4566 = vmatmul.mubr.f32.gmra.mxu0 %v144
    %v4567 = vpop.f32.mrf.mxu0
    %v4568 = vadd.f32 0.0, %v4567
    %v4569 = vpop.f32.mrf.mxu0
    %4570 = vmatprep.mubr.f32.mxu0 0.0
    %4571 = vmatmul.mubr.f32.gmra.mxu0 %v145
    %v4572 = vpop.f32.mrf.mxu0
    %v4573 = vadd.f32 0.0, %v4572
    %v4574 = vpop.f32.mrf.mxu0
    %4575 = vmatprep.mubr.f32.mxu0 0.0
    %4576 = vmatmul.mubr.f32.gmra.mxu0 %v146
    %v4577 = vpop.f32.mrf.mxu0
    %v4578 = vadd.f32 0.0, %v4577
    %v4579 = vpop.f32.mrf.mxu0
    %4580 = vmatprep.mubr.f32.mxu0 0.0
    %4581 = vmatmul.mubr.f32.gmra.mxu0 %v147
    %v4582 = vpop.f32.mrf.mxu0
    %v4583 = vadd.f32 0.0, %v4582
    %v4584 = vpop.f32.mrf.mxu0
    %4585 = vmatprep.mubr.f32.mxu0 0.0
    %4586 = vmatmul.mubr.f32.gmra.mxu0 %v148
    %v4587 = vpop.f32.mrf.mxu0
    %v4588 = vadd.f32 0.0, %v4587
    %v4589 = vpop.f32.mrf.mxu0
    %4590 = vdwg.mxu0
    %4591 = vst [vmem:[#allocation2] sm:$0xff] %v360
    %4592 = vst [vmem:[#allocation2 + $0x8] sm:$0xff] %v362
    %4593 = vst [vmem:[#allocation2 + $0x10] sm:$0xff] %v1247
    %4594 = vst [vmem:[#allocation2 + $0x18] sm:$0xff] %v1249
    %4595 = vst [vmem:[#allocation2 + $0x20] sm:$0xff] %v2134
    %4596 = vst [vmem:[#allocation2 + $0x28] sm:$0xff] %v2136
    %4597 = vst [vmem:[#allocation2 + $0x30] sm:$0xff] %v3021
    %4598 = vst [vmem:[#allocation2 + $0x38] sm:$0xff] %v3023
    %4599 = vst [vmem:[#allocation2 + $0x40] sm:$0xff] %v3908
    %4600 = vst [vmem:[#allocation2 + $0x48] sm:$0xff] %v366
    %4601 = vst [vmem:[#allocation2 + $0x50] sm:$0xff] %v368
    %4602 = vst [vmem:[#allocation2 + $0x58] sm:$0xff] %v1253
    %4603 = vst [vmem:[#allocation2 + $0x60] sm:$0xff] %v1255
    %4604 = vst [vmem:[#allocation2 + $0x68] sm:$0xff] %v2140
    %4605 = vst [vmem:[#allocation2 + $0x70] sm:$0xff] %v2142
    %4606 = vst [vmem:[#allocation2 + $0x78] sm:$0xff] %v3027
    %4607 = vst [vmem:[#allocation2 + $0x80] sm:$0xff] %v3029
    %4608 = vst [vmem:[#allocation2 + $0x88] sm:$0xff] %v3913
    %4609 = vst [vmem:[#allocation2 + $0x90] sm:$0xff] %v372
    %4610 = vst [vmem:[#allocation2 + $0x98] sm:$0xff] %v374
    %4611 = vst [vmem:[#allocation2 + $0xa0] sm:$0xff] %v1259
    %4612 = vst [vmem:[#allocation2 + $0xa8] sm:$0xff] %v1261
    %4613 = vst [vmem:[#allocation2 + $0xb0] sm:$0xff] %v2146
    %4614 = vst [vmem:[#allocation2 + $0xb8] sm:$0xff] %v2148
    %4615 = vst [vmem:[#allocation2 + $0xc0] sm:$0xff] %v3033
    %4616 = vst [vmem:[#allocation2 + $0xc8] sm:$0xff] %v3035
    %4617 = vst [vmem:[#allocation2 + $0xd0] sm:$0xff] %v3918
    %4618 = vst [vmem:[#allocation2 + $0xd8] sm:$0xff] %v378
    %4619 = vst [vmem:[#allocation2 + $0xe0] sm:$0xff] %v380
    %4620 = vst [vmem:[#allocation2 + $0xe8] sm:$0xff] %v1265
    %4621 = vst [vmem:[#allocation2 + $0xf0] sm:$0xff] %v1267
    %4622 = vst [vmem:[#allocation2 + $0xf8] sm:$0xff] %v2152
    %4623 = vst [vmem:[#allocation2 + $0x100] sm:$0xff] %v2154
    %4624 = vst [vmem:[#allocation2 + $0x108] sm:$0xff] %v3039
    %4625 = vst [vmem:[#allocation2 + $0x110] sm:$0xff] %v3041
    %4626 = vst [vmem:[#allocation2 + $0x118] sm:$0xff] %v3923
    %4627 = vst [vmem:[#allocation2 + $0x120] sm:$0xff] %v384
    %4628 = vst [vmem:[#allocation2 + $0x128] sm:$0xff] %v386
    %4629 = vst [vmem:[#allocation2 + $0x130] sm:$0xff] %v1271
    %4630 = vst [vmem:[#allocation2 + $0x138] sm:$0xff] %v1273
    %4631 = vst [vmem:[#allocation2 + $0x140] sm:$0xff] %v2158
    %4632 = vst [vmem:[#allocation2 + $0x148] sm:$0xff] %v2160
    %4633 = vst [vmem:[#allocation2 + $0x150] sm:$0xff] %v3045
    %4634 = vst [vmem:[#allocation2 + $0x158] sm:$0xff] %v3047
    %4635 = vst [vmem:[#allocation2 + $0x160] sm:$0xff] %v3928
    %4636 = vst [vmem:[#allocation2 + $0x168] sm:$0xff] %v390
    %4637 = vst [vmem:[#allocation2 + $0x170] sm:$0xff] %v392
    %4638 = vst [vmem:[#allocation2 + $0x178] sm:$0xff] %v1277
    %4639 = vst [vmem:[#allocation2 + $0x180] sm:$0xff] %v1279
    %4640 = vst [vmem:[#allocation2 + $0x188] sm:$0xff] %v2164
    %4641 = vst [vmem:[#allocation2 + $0x190] sm:$0xff] %v2166
    %4642 = vst [vmem:[#allocation2 + $0x198] sm:$0xff] %v3051
    %4643 = vst [vmem:[#allocation2 + $0x1a0] sm:$0xff] %v3053
    %4644 = vst [vmem:[#allocation2 + $0x1a8] sm:$0xff] %v3933
    %4645 = vst [vmem:[#allocation2 + $0x1b0] sm:$0xff] %v396
    %4646 = vst [vmem:[#allocation2 + $0x1b8] sm:$0xff] %v398
    %4647 = vst [vmem:[#allocation2 + $0x1c0] sm:$0xff] %v1283
    %4648 = vst [vmem:[#allocation2 + $0x1c8] sm:$0xff] %v1285
    %4649 = vst [vmem:[#allocation2 + $0x1d0] sm:$0xff] %v2170
    %4650 = vst [vmem:[#allocation2 + $0x1d8] sm:$0xff] %v2172
    %4651 = vst [vmem:[#allocation2 + $0x1e0] sm:$0xff] %v3057
    %4652 = vst [vmem:[#allocation2 + $0x1e8] sm:$0xff] %v3059
    %4653 = vst [vmem:[#allocation2 + $0x1f0] sm:$0xff] %v3938
    %4654 = vst [vmem:[#allocation2 + $0x1f8] sm:$0xff] %v402
    %4655 = vst [vmem:[#allocation2 + $0x200] sm:$0xff] %v404
    %4656 = vst [vmem:[#allocation2 + $0x208] sm:$0xff] %v1289
    %4657 = vst [vmem:[#allocation2 + $0x210] sm:$0xff] %v1291
    %4658 = vst [vmem:[#allocation2 + $0x218] sm:$0xff] %v2176
    %4659 = vst [vmem:[#allocation2 + $0x220] sm:$0xff] %v2178
    %4660 = vst [vmem:[#allocation2 + $0x228] sm:$0xff] %v3063
    %4661 = vst [vmem:[#allocation2 + $0x230] sm:$0xff] %v3065
    %4662 = vst [vmem:[#allocation2 + $0x238] sm:$0xff] %v3943
    %4663 = vst [vmem:[#allocation2 + $0x240] sm:$0xff] %v408
    %4664 = vst [vmem:[#allocation2 + $0x248] sm:$0xff] %v410
    %4665 = vst [vmem:[#allocation2 + $0x250] sm:$0xff] %v1295
    %4666 = vst [vmem:[#allocation2 + $0x258] sm:$0xff] %v1297
    %4667 = vst [vmem:[#allocation2 + $0x260] sm:$0xff] %v2182
    %4668 = vst [vmem:[#allocation2 + $0x268] sm:$0xff] %v2184
    %4669 = vst [vmem:[#allocation2 + $0x270] sm:$0xff] %v3069
    %4670 = vst [vmem:[#allocation2 + $0x278] sm:$0xff] %v3071
    %4671 = vst [vmem:[#allocation2 + $0x280] sm:$0xff] %v3948
    %4672 = vst [vmem:[#allocation2 + $0x288] sm:$0xff] %v414
    %4673 = vst [vmem:[#allocation2 + $0x290] sm:$0xff] %v416
    %4674 = vst [vmem:[#allocation2 + $0x298] sm:$0xff] %v1301
    %4675 = vst [vmem:[#allocation2 + $0x2a0] sm:$0xff] %v1303
    %4676 = vst [vmem:[#allocation2 + $0x2a8] sm:$0xff] %v2188
    %4677 = vst [vmem:[#allocation2 + $0x2b0] sm:$0xff] %v2190
    %4678 = vst [vmem:[#allocation2 + $0x2b8] sm:$0xff] %v3075
    %4679 = vst [vmem:[#allocation2 + $0x2c0] sm:$0xff] %v3077
    %4680 = vst [vmem:[#allocation2 + $0x2c8] sm:$0xff] %v3953
    %4681 = vst [vmem:[#allocation2 + $0x2d0] sm:$0xff] %v420
    %4682 = vst [vmem:[#allocation2 + $0x2d8] sm:$0xff] %v422
    %4683 = vst [vmem:[#allocation2 + $0x2e0] sm:$0xff] %v1307
    %4684 = vst [vmem:[#allocation2 + $0x2e8] sm:$0xff] %v1309
    %4685 = vst [vmem:[#allocation2 + $0x2f0] sm:$0xff] %v2194
    %4686 = vst [vmem:[#allocation2 + $0x2f8] sm:$0xff] %v2196
    %4687 = vst [vmem:[#allocation2 + $0x300] sm:$0xff] %v3081
    %4688 = vst [vmem:[#allocation2 + $0x308] sm:$0xff] %v3083
    %4689 = vst [vmem:[#allocation2 + $0x310] sm:$0xff] %v3958
    %4690 = vst [vmem:[#allocation2 + $0x318] sm:$0xff] %v426
    %4691 = vst [vmem:[#allocation2 + $0x320] sm:$0xff] %v428
    %4692 = vst [vmem:[#allocation2 + $0x328] sm:$0xff] %v1313
    %4693 = vst [vmem:[#allocation2 + $0x330] sm:$0xff] %v1315
    %4694 = vst [vmem:[#allocation2 + $0x338] sm:$0xff] %v2200
    %4695 = vst [vmem:[#allocation2 + $0x340] sm:$0xff] %v2202
    %4696 = vst [vmem:[#allocation2 + $0x348] sm:$0xff] %v3087
    %4697 = vst [vmem:[#allocation2 + $0x350] sm:$0xff] %v3089
    %4698 = vst [vmem:[#allocation2 + $0x358] sm:$0xff] %v3963
    %4699 = vst [vmem:[#allocation2 + $0x360] sm:$0xff] %v432
    %4700 = vst [vmem:[#allocation2 + $0x368] sm:$0xff] %v434
    %4701 = vst [vmem:[#allocation2 + $0x370] sm:$0xff] %v1319
    %4702 = vst [vmem:[#allocation2 + $0x378] sm:$0xff] %v1321
    %4703 = vst [vmem:[#allocation2 + $0x380] sm:$0xff] %v2206
    %4704 = vst [vmem:[#allocation2 + $0x388] sm:$0xff] %v2208
    %4705 = vst [vmem:[#allocation2 + $0x390] sm:$0xff] %v3093
    %4706 = vst [vmem:[#allocation2 + $0x398] sm:$0xff] %v3095
    %4707 = vst [vmem:[#allocation2 + $0x3a0] sm:$0xff] %v3968
    %4708 = vst [vmem:[#allocation2 + $0x3a8] sm:$0xff] %v438
    %4709 = vst [vmem:[#allocation2 + $0x3b0] sm:$0xff] %v440
    %4710 = vst [vmem:[#allocation2 + $0x3b8] sm:$0xff] %v1325
    %4711 = vst [vmem:[#allocation2 + $0x3c0] sm:$0xff] %v1327
    %4712 = vst [vmem:[#allocation2 + $0x3c8] sm:$0xff] %v2212
    %4713 = vst [vmem:[#allocation2 + $0x3d0] sm:$0xff] %v2214
    %4714 = vst [vmem:[#allocation2 + $0x3d8] sm:$0xff] %v3099
    %4715 = vst [vmem:[#allocation2 + $0x3e0] sm:$0xff] %v3101
    %4716 = vst [vmem:[#allocation2 + $0x3e8] sm:$0xff] %v3973
    %4717 = vst [vmem:[#allocation2 + $0x3f0] sm:$0xff] %v444
    %4718 = vst [vmem:[#allocation2 + $0x3f8] sm:$0xff] %v446
    %4719 = vst [vmem:[#allocation2 + $0x400] sm:$0xff] %v1331
    %4720 = vst [vmem:[#allocation2 + $0x408] sm:$0xff] %v1333
    %4721 = vst [vmem:[#allocation2 + $0x410] sm:$0xff] %v2218
    %4722 = vst [vmem:[#allocation2 + $0x418] sm:$0xff] %v2220
    %4723 = vst [vmem:[#allocation2 + $0x420] sm:$0xff] %v3105
    %4724 = vst [vmem:[#allocation2 + $0x428] sm:$0xff] %v3107
    %4725 = vst [vmem:[#allocation2 + $0x430] sm:$0xff] %v3978
    %4726 = vst [vmem:[#allocation2 + $0x438] sm:$0xff] %v450
    %4727 = vst [vmem:[#allocation2 + $0x440] sm:$0xff] %v452
    %4728 = vst [vmem:[#allocation2 + $0x448] sm:$0xff] %v1337
    %4729 = vst [vmem:[#allocation2 + $0x450] sm:$0xff] %v1339
    %4730 = vst [vmem:[#allocation2 + $0x458] sm:$0xff] %v2224
    %4731 = vst [vmem:[#allocation2 + $0x460] sm:$0xff] %v2226
    %4732 = vst [vmem:[#allocation2 + $0x468] sm:$0xff] %v3111
    %4733 = vst [vmem:[#allocation2 + $0x470] sm:$0xff] %v3113
    %4734 = vst [vmem:[#allocation2 + $0x478] sm:$0xff] %v3983
    %4735 = vst [vmem:[#allocation2 + $0x480] sm:$0xff] %v456
    %4736 = vst [vmem:[#allocation2 + $0x488] sm:$0xff] %v458
    %4737 = vst [vmem:[#allocation2 + $0x490] sm:$0xff] %v1343
    %4738 = vst [vmem:[#allocation2 + $0x498] sm:$0xff] %v1345
    %4739 = vst [vmem:[#allocation2 + $0x4a0] sm:$0xff] %v2230
    %4740 = vst [vmem:[#allocation2 + $0x4a8] sm:$0xff] %v2232
    %4741 = vst [vmem:[#allocation2 + $0x4b0] sm:$0xff] %v3117
    %4742 = vst [vmem:[#allocation2 + $0x4b8] sm:$0xff] %v3119
    %4743 = vst [vmem:[#allocation2 + $0x4c0] sm:$0xff] %v3988
    %4744 = vst [vmem:[#allocation2 + $0x4c8] sm:$0xff] %v462
    %4745 = vst [vmem:[#allocation2 + $0x4d0] sm:$0xff] %v464
    %4746 = vst [vmem:[#allocation2 + $0x4d8] sm:$0xff] %v1349
    %4747 = vst [vmem:[#allocation2 + $0x4e0] sm:$0xff] %v1351
    %4748 = vst [vmem:[#allocation2 + $0x4e8] sm:$0xff] %v2236
    %4749 = vst [vmem:[#allocation2 + $0x4f0] sm:$0xff] %v2238
    %4750 = vst [vmem:[#allocation2 + $0x4f8] sm:$0xff] %v3123
    %4751 = vst [vmem:[#allocation2 + $0x500] sm:$0xff] %v3125
    %4752 = vst [vmem:[#allocation2 + $0x508] sm:$0xff] %v3993
    %4753 = vst [vmem:[#allocation2 + $0x510] sm:$0xff] %v468
    %4754 = vst [vmem:[#allocation2 + $0x518] sm:$0xff] %v470
    %4755 = vst [vmem:[#allocation2 + $0x520] sm:$0xff] %v1355
    %4756 = vst [vmem:[#allocation2 + $0x528] sm:$0xff] %v1357
    %4757 = vst [vmem:[#allocation2 + $0x530] sm:$0xff] %v2242
    %4758 = vst [vmem:[#allocation2 + $0x538] sm:$0xff] %v2244
    %4759 = vst [vmem:[#allocation2 + $0x540] sm:$0xff] %v3129
    %4760 = vst [vmem:[#allocation2 + $0x548] sm:$0xff] %v3131
    %4761 = vst [vmem:[#allocation2 + $0x550] sm:$0xff] %v3998
    %4762 = vst [vmem:[#allocation2 + $0x558] sm:$0xff] %v474
    %4763 = vst [vmem:[#allocation2 + $0x560] sm:$0xff] %v476
    %4764 = vst [vmem:[#allocation2 + $0x568] sm:$0xff] %v1361
    %4765 = vst [vmem:[#allocation2 + $0x570] sm:$0xff] %v1363
    %4766 = vst [vmem:[#allocation2 + $0x578] sm:$0xff] %v2248
    %4767 = vst [vmem:[#allocation2 + $0x580] sm:$0xff] %v2250
    %4768 = vst [vmem:[#allocation2 + $0x588] sm:$0xff] %v3135
    %4769 = vst [vmem:[#allocation2 + $0x590] sm:$0xff] %v3137
    %4770 = vst [vmem:[#allocation2 + $0x598] sm:$0xff] %v4003
    %4771 = vst [vmem:[#allocation2 + $0x5a0] sm:$0xff] %v480
    %4772 = vst [vmem:[#allocation2 + $0x5a8] sm:$0xff] %v482
    %4773 = vst [vmem:[#allocation2 + $0x5b0] sm:$0xff] %v1367
    %4774 = vst [vmem:[#allocation2 + $0x5b8] sm:$0xff] %v1369
    %4775 = vst [vmem:[#allocation2 + $0x5c0] sm:$0xff] %v2254
    %4776 = vst [vmem:[#allocation2 + $0x5c8] sm:$0xff] %v2256
    %4777 = vst [vmem:[#allocation2 + $0x5d0] sm:$0xff] %v3141
    %4778 = vst [vmem:[#allocation2 + $0x5d8] sm:$0xff] %v3143
    %4779 = vst [vmem:[#allocation2 + $0x5e0] sm:$0xff] %v4008
    %4780 = vst [vmem:[#allocation2 + $0x5e8] sm:$0xff] %v486
    %4781 = vst [vmem:[#allocation2 + $0x5f0] sm:$0xff] %v488
    %4782 = vst [vmem:[#allocation2 + $0x5f8] sm:$0xff] %v1373
    %4783 = vst [vmem:[#allocation2 + $0x600] sm:$0xff] %v1375
    %4784 = vst [vmem:[#allocation2 + $0x608] sm:$0xff] %v2260
    %4785 = vst [vmem:[#allocation2 + $0x610] sm:$0xff] %v2262
    %4786 = vst [vmem:[#allocation2 + $0x618] sm:$0xff] %v3147
    %4787 = vst [vmem:[#allocation2 + $0x620] sm:$0xff] %v3149
    %4788 = vst [vmem:[#allocation2 + $0x628] sm:$0xff] %v4013
    %4789 = vst [vmem:[#allocation2 + $0x630] sm:$0xff] %v492
    %4790 = vst [vmem:[#allocation2 + $0x638] sm:$0xff] %v494
    %4791 = vst [vmem:[#allocation2 + $0x640] sm:$0xff] %v1379
    %4792 = vst [vmem:[#allocation2 + $0x648] sm:$0xff] %v1381
    %4793 = vst [vmem:[#allocation2 + $0x650] sm:$0xff] %v2266
    %4794 = vst [vmem:[#allocation2 + $0x658] sm:$0xff] %v2268
    %4795 = vst [vmem:[#allocation2 + $0x660] sm:$0xff] %v3153
    %4796 = vst [vmem:[#allocation2 + $0x668] sm:$0xff] %v3155
    %4797 = vst [vmem:[#allocation2 + $0x670] sm:$0xff] %v4018
    %4798 = vst [vmem:[#allocation2 + $0x678] sm:$0xff] %v498
    %4799 = vst [vmem:[#allocation2 + $0x680] sm:$0xff] %v500
    %4800 = vst [vmem:[#allocation2 + $0x688] sm:$0xff] %v1385
    %4801 = vst [vmem:[#allocation2 + $0x690] sm:$0xff] %v1387
    %4802 = vst [vmem:[#allocation2 + $0x698] sm:$0xff] %v2272
    %4803 = vst [vmem:[#allocation2 + $0x6a0] sm:$0xff] %v2274
    %4804 = vst [vmem:[#allocation2 + $0x6a8] sm:$0xff] %v3159
    %4805 = vst [vmem:[#allocation2 + $0x6b0] sm:$0xff] %v3161
    %4806 = vst [vmem:[#allocation2 + $0x6b8] sm:$0xff] %v4023
    %4807 = vst [vmem:[#allocation2 + $0x6c0] sm:$0xff] %v504
    %4808 = vst [vmem:[#allocation2 + $0x6c8] sm:$0xff] %v506
    %4809 = vst [vmem:[#allocation2 + $0x6d0] sm:$0xff] %v1391
    %4810 = vst [vmem:[#allocation2 + $0x6d8] sm:$0xff] %v1393
    %4811 = vst [vmem:[#allocation2 + $0x6e0] sm:$0xff] %v2278
    %4812 = vst [vmem:[#allocation2 + $0x6e8] sm:$0xff] %v2280
    %4813 = vst [vmem:[#allocation2 + $0x6f0] sm:$0xff] %v3165
    %4814 = vst [vmem:[#allocation2 + $0x6f8] sm:$0xff] %v3167
    %4815 = vst [vmem:[#allocation2 + $0x700] sm:$0xff] %v4028
    %4816 = vst [vmem:[#allocation2 + $0x708] sm:$0xff] %v510
    %4817 = vst [vmem:[#allocation2 + $0x710] sm:$0xff] %v512
    %4818 = vst [vmem:[#allocation2 + $0x718] sm:$0xff] %v1397
    %4819 = vst [vmem:[#allocation2 + $0x720] sm:$0xff] %v1399
    %4820 = vst [vmem:[#allocation2 + $0x728] sm:$0xff] %v2284
    %4821 = vst [vmem:[#allocation2 + $0x730] sm:$0xff] %v2286
    %4822 = vst [vmem:[#allocation2 + $0x738] sm:$0xff] %v3171
    %4823 = vst [vmem:[#allocation2 + $0x740] sm:$0xff] %v3173
    %4824 = vst [vmem:[#allocation2 + $0x748] sm:$0xff] %v4033
    %4825 = vst [vmem:[#allocation2 + $0x750] sm:$0xff] %v516
    %4826 = vst [vmem:[#allocation2 + $0x758] sm:$0xff] %v518
    %4827 = vst [vmem:[#allocation2 + $0x760] sm:$0xff] %v1403
    %4828 = vst [vmem:[#allocation2 + $0x768] sm:$0xff] %v1405
    %4829 = vst [vmem:[#allocation2 + $0x770] sm:$0xff] %v2290
    %4830 = vst [vmem:[#allocation2 + $0x778] sm:$0xff] %v2292
    %4831 = vst [vmem:[#allocation2 + $0x780] sm:$0xff] %v3177
    %4832 = vst [vmem:[#allocation2 + $0x788] sm:$0xff] %v3179
    %4833 = vst [vmem:[#allocation2 + $0x790] sm:$0xff] %v4038
    %4834 = vst [vmem:[#allocation2 + $0x798] sm:$0xff] %v522
    %4835 = vst [vmem:[#allocation2 + $0x7a0] sm:$0xff] %v524
    %4836 = vst [vmem:[#allocation2 + $0x7a8] sm:$0xff] %v1409
    %4837 = vst [vmem:[#allocation2 + $0x7b0] sm:$0xff] %v1411
    %4838 = vst [vmem:[#allocation2 + $0x7b8] sm:$0xff] %v2296
    %4839 = vst [vmem:[#allocation2 + $0x7c0] sm:$0xff] %v2298
    %4840 = vst [vmem:[#allocation2 + $0x7c8] sm:$0xff] %v3183
    %4841 = vst [vmem:[#allocation2 + $0x7d0] sm:$0xff] %v3185
    %4842 = vst [vmem:[#allocation2 + $0x7d8] sm:$0xff] %v4043
    %4843 = vst [vmem:[#allocation2 + $0x7e0] sm:$0xff] %v528
    %4844 = vst [vmem:[#allocation2 + $0x7e8] sm:$0xff] %v530
    %4845 = vst [vmem:[#allocation2 + $0x7f0] sm:$0xff] %v1415
    %4846 = vst [vmem:[#allocation2 + $0x7f8] sm:$0xff] %v1417
    %4847 = vst [vmem:[#allocation2 + $0x800] sm:$0xff] %v2302
    %4848 = vst [vmem:[#allocation2 + $0x808] sm:$0xff] %v2304
    %4849 = vst [vmem:[#allocation2 + $0x810] sm:$0xff] %v3189
    %4850 = vst [vmem:[#allocation2 + $0x818] sm:$0xff] %v3191
    %4851 = vst [vmem:[#allocation2 + $0x820] sm:$0xff] %v4048
    %4852 = vst [vmem:[#allocation2 + $0x828] sm:$0xff] %v534
    %4853 = vst [vmem:[#allocation2 + $0x830] sm:$0xff] %v536
    %4854 = vst [vmem:[#allocation2 + $0x838] sm:$0xff] %v1421
    %4855 = vst [vmem:[#allocation2 + $0x840] sm:$0xff] %v1423
    %4856 = vst [vmem:[#allocation2 + $0x848] sm:$0xff] %v2308
    %4857 = vst [vmem:[#allocation2 + $0x850] sm:$0xff] %v2310
    %4858 = vst [vmem:[#allocation2 + $0x858] sm:$0xff] %v3195
    %4859 = vst [vmem:[#allocation2 + $0x860] sm:$0xff] %v3197
    %4860 = vst [vmem:[#allocation2 + $0x868] sm:$0xff] %v4053
    %4861 = vst [vmem:[#allocation2 + $0x870] sm:$0xff] %v540
    %4862 = vst [vmem:[#allocation2 + $0x878] sm:$0xff] %v542
    %4863 = vst [vmem:[#allocation2 + $0x880] sm:$0xff] %v1427
    %4864 = vst [vmem:[#allocation2 + $0x888] sm:$0xff] %v1429
    %4865 = vst [vmem:[#allocation2 + $0x890] sm:$0xff] %v2314
    %4866 = vst [vmem:[#allocation2 + $0x898] sm:$0xff] %v2316
    %4867 = vst [vmem:[#allocation2 + $0x8a0] sm:$0xff] %v3201
    %4868 = vst [vmem:[#allocation2 + $0x8a8] sm:$0xff] %v3203
    %4869 = vst [vmem:[#allocation2 + $0x8b0] sm:$0xff] %v4058
    %4870 = vst [vmem:[#allocation2 + $0x8b8] sm:$0xff] %v546
    %4871 = vst [vmem:[#allocation2 + $0x8c0] sm:$0xff] %v548
    %4872 = vst [vmem:[#allocation2 + $0x8c8] sm:$0xff] %v1433
    %4873 = vst [vmem:[#allocation2 + $0x8d0] sm:$0xff] %v1435
    %4874 = vst [vmem:[#allocation2 + $0x8d8] sm:$0xff] %v2320
    %4875 = vst [vmem:[#allocation2 + $0x8e0] sm:$0xff] %v2322
    %4876 = vst [vmem:[#allocation2 + $0x8e8] sm:$0xff] %v3207
    %4877 = vst [vmem:[#allocation2 + $0x8f0] sm:$0xff] %v3209
    %4878 = vst [vmem:[#allocation2 + $0x8f8] sm:$0xff] %v4063
    %4879 = vst [vmem:[#allocation2 + $0x900] sm:$0xff] %v552
    %4880 = vst [vmem:[#allocation2 + $0x908] sm:$0xff] %v554
    %4881 = vst [vmem:[#allocation2 + $0x910] sm:$0xff] %v1439
    %4882 = vst [vmem:[#allocation2 + $0x918] sm:$0xff] %v1441
    %4883 = vst [vmem:[#allocation2 + $0x920] sm:$0xff] %v2326
    %4884 = vst [vmem:[#allocation2 + $0x928] sm:$0xff] %v2328
    %4885 = vst [vmem:[#allocation2 + $0x930] sm:$0xff] %v3213
    %4886 = vst [vmem:[#allocation2 + $0x938] sm:$0xff] %v3215
    %4887 = vst [vmem:[#allocation2 + $0x940] sm:$0xff] %v4068
    %4888 = vst [vmem:[#allocation2 + $0x948] sm:$0xff] %v558
    %4889 = vst [vmem:[#allocation2 + $0x950] sm:$0xff] %v560
    %4890 = vst [vmem:[#allocation2 + $0x958] sm:$0xff] %v1445
    %4891 = vst [vmem:[#allocation2 + $0x960] sm:$0xff] %v1447
    %4892 = vst [vmem:[#allocation2 + $0x968] sm:$0xff] %v2332
    %4893 = vst [vmem:[#allocation2 + $0x970] sm:$0xff] %v2334
    %4894 = vst [vmem:[#allocation2 + $0x978] sm:$0xff] %v3219
    %4895 = vst [vmem:[#allocation2 + $0x980] sm:$0xff] %v3221
    %4896 = vst [vmem:[#allocation2 + $0x988] sm:$0xff] %v4073
    %4897 = vst [vmem:[#allocation2 + $0x990] sm:$0xff] %v564
    %4898 = vst [vmem:[#allocation2 + $0x998] sm:$0xff] %v566
    %4899 = vst [vmem:[#allocation2 + $0x9a0] sm:$0xff] %v1451
    %4900 = vst [vmem:[#allocation2 + $0x9a8] sm:$0xff] %v1453
    %4901 = vst [vmem:[#allocation2 + $0x9b0] sm:$0xff] %v2338
    %4902 = vst [vmem:[#allocation2 + $0x9b8] sm:$0xff] %v2340
    %4903 = vst [vmem:[#allocation2 + $0x9c0] sm:$0xff] %v3225
    %4904 = vst [vmem:[#allocation2 + $0x9c8] sm:$0xff] %v3227
    %4905 = vst [vmem:[#allocation2 + $0x9d0] sm:$0xff] %v4078
    %4906 = vst [vmem:[#allocation2 + $0x9d8] sm:$0xff] %v570
    %4907 = vst [vmem:[#allocation2 + $0x9e0] sm:$0xff] %v572
    %4908 = vst [vmem:[#allocation2 + $0x9e8] sm:$0xff] %v1457
    %4909 = vst [vmem:[#allocation2 + $0x9f0] sm:$0xff] %v1459
    %4910 = vst [vmem:[#allocation2 + $0x9f8] sm:$0xff] %v2344
    %4911 = vst [vmem:[#allocation2 + $0xa00] sm:$0xff] %v2346
    %4912 = vst [vmem:[#allocation2 + $0xa08] sm:$0xff] %v3231
    %4913 = vst [vmem:[#allocation2 + $0xa10] sm:$0xff] %v3233
    %4914 = vst [vmem:[#allocation2 + $0xa18] sm:$0xff] %v4083
    %4915 = vst [vmem:[#allocation2 + $0xa20] sm:$0xff] %v576
    %4916 = vst [vmem:[#allocation2 + $0xa28] sm:$0xff] %v578
    %4917 = vst [vmem:[#allocation2 + $0xa30] sm:$0xff] %v1463
    %4918 = vst [vmem:[#allocation2 + $0xa38] sm:$0xff] %v1465
    %4919 = vst [vmem:[#allocation2 + $0xa40] sm:$0xff] %v2350
    %4920 = vst [vmem:[#allocation2 + $0xa48] sm:$0xff] %v2352
    %4921 = vst [vmem:[#allocation2 + $0xa50] sm:$0xff] %v3237
    %4922 = vst [vmem:[#allocation2 + $0xa58] sm:$0xff] %v3239
    %4923 = vst [vmem:[#allocation2 + $0xa60] sm:$0xff] %v4088
    %4924 = vst [vmem:[#allocation2 + $0xa68] sm:$0xff] %v582
    %4925 = vst [vmem:[#allocation2 + $0xa70] sm:$0xff] %v584
    %4926 = vst [vmem:[#allocation2 + $0xa78] sm:$0xff] %v1469
    %4927 = vst [vmem:[#allocation2 + $0xa80] sm:$0xff] %v1471
    %4928 = vst [vmem:[#allocation2 + $0xa88] sm:$0xff] %v2356
    %4929 = vst [vmem:[#allocation2 + $0xa90] sm:$0xff] %v2358
    %4930 = vst [vmem:[#allocation2 + $0xa98] sm:$0xff] %v3243
    %4931 = vst [vmem:[#allocation2 + $0xaa0] sm:$0xff] %v3245
    %4932 = vst [vmem:[#allocation2 + $0xaa8] sm:$0xff] %v4093
    %4933 = vst [vmem:[#allocation2 + $0xab0] sm:$0xff] %v588
    %4934 = vst [vmem:[#allocation2 + $0xab8] sm:$0xff] %v590
    %4935 = vst [vmem:[#allocation2 + $0xac0] sm:$0xff] %v1475
    %4936 = vst [vmem:[#allocation2 + $0xac8] sm:$0xff] %v1477
    %4937 = vst [vmem:[#allocation2 + $0xad0] sm:$0xff] %v2362
    %4938 = vst [vmem:[#allocation2 + $0xad8] sm:$0xff] %v2364
    %4939 = vst [vmem:[#allocation2 + $0xae0] sm:$0xff] %v3249
    %4940 = vst [vmem:[#allocation2 + $0xae8] sm:$0xff] %v3251
    %4941 = vst [vmem:[#allocation2 + $0xaf0] sm:$0xff] %v4098
    %4942 = vst [vmem:[#allocation2 + $0xaf8] sm:$0xff] %v594
    %4943 = vst [vmem:[#allocation2 + $0xb00] sm:$0xff] %v596
    %4944 = vst [vmem:[#allocation2 + $0xb08] sm:$0xff] %v1481
    %4945 = vst [vmem:[#allocation2 + $0xb10] sm:$0xff] %v1483
    %4946 = vst [vmem:[#allocation2 + $0xb18] sm:$0xff] %v2368
    %4947 = vst [vmem:[#allocation2 + $0xb20] sm:$0xff] %v2370
    %4948 = vst [vmem:[#allocation2 + $0xb28] sm:$0xff] %v3255
    %4949 = vst [vmem:[#allocation2 + $0xb30] sm:$0xff] %v3257
    %4950 = vst [vmem:[#allocation2 + $0xb38] sm:$0xff] %v4103
    %4951 = vst [vmem:[#allocation2 + $0xb40] sm:$0xff] %v600
    %4952 = vst [vmem:[#allocation2 + $0xb48] sm:$0xff] %v602
    %4953 = vst [vmem:[#allocation2 + $0xb50] sm:$0xff] %v1487
    %4954 = vst [vmem:[#allocation2 + $0xb58] sm:$0xff] %v1489
    %4955 = vst [vmem:[#allocation2 + $0xb60] sm:$0xff] %v2374
    %4956 = vst [vmem:[#allocation2 + $0xb68] sm:$0xff] %v2376
    %4957 = vst [vmem:[#allocation2 + $0xb70] sm:$0xff] %v3261
    %4958 = vst [vmem:[#allocation2 + $0xb78] sm:$0xff] %v3263
    %4959 = vst [vmem:[#allocation2 + $0xb80] sm:$0xff] %v4108
    %4960 = vst [vmem:[#allocation2 + $0xb88] sm:$0xff] %v606
    %4961 = vst [vmem:[#allocation2 + $0xb90] sm:$0xff] %v608
    %4962 = vst [vmem:[#allocation2 + $0xb98] sm:$0xff] %v1493
    %4963 = vst [vmem:[#allocation2 + $0xba0] sm:$0xff] %v1495
    %4964 = vst [vmem:[#allocation2 + $0xba8] sm:$0xff] %v2380
    %4965 = vst [vmem:[#allocation2 + $0xbb0] sm:$0xff] %v2382
    %4966 = vst [vmem:[#allocation2 + $0xbb8] sm:$0xff] %v3267
    %4967 = vst [vmem:[#allocation2 + $0xbc0] sm:$0xff] %v3269
    %4968 = vst [vmem:[#allocation2 + $0xbc8] sm:$0xff] %v4113
    %4969 = vst [vmem:[#allocation2 + $0xbd0] sm:$0xff] %v612
    %4970 = vst [vmem:[#allocation2 + $0xbd8] sm:$0xff] %v614
    %4971 = vst [vmem:[#allocation2 + $0xbe0] sm:$0xff] %v1499
    %4972 = vst [vmem:[#allocation2 + $0xbe8] sm:$0xff] %v1501
    %4973 = vst [vmem:[#allocation2 + $0xbf0] sm:$0xff] %v2386
    %4974 = vst [vmem:[#allocation2 + $0xbf8] sm:$0xff] %v2388
    %4975 = vst [vmem:[#allocation2 + $0xc00] sm:$0xff] %v3273
    %4976 = vst [vmem:[#allocation2 + $0xc08] sm:$0xff] %v3275
    %4977 = vst [vmem:[#allocation2 + $0xc10] sm:$0xff] %v4118
    %4978 = vst [vmem:[#allocation2 + $0xc18] sm:$0xff] %v618
    %4979 = vst [vmem:[#allocation2 + $0xc20] sm:$0xff] %v620
    %4980 = vst [vmem:[#allocation2 + $0xc28] sm:$0xff] %v1505
    %4981 = vst [vmem:[#allocation2 + $0xc30] sm:$0xff] %v1507
    %4982 = vst [vmem:[#allocation2 + $0xc38] sm:$0xff] %v2392
    %4983 = vst [vmem:[#allocation2 + $0xc40] sm:$0xff] %v2394
    %4984 = vst [vmem:[#allocation2 + $0xc48] sm:$0xff] %v3279
    %4985 = vst [vmem:[#allocation2 + $0xc50] sm:$0xff] %v3281
    %4986 = vst [vmem:[#allocation2 + $0xc58] sm:$0xff] %v4123
    %4987 = vst [vmem:[#allocation2 + $0xc60] sm:$0xff] %v624
    %4988 = vst [vmem:[#allocation2 + $0xc68] sm:$0xff] %v626
    %4989 = vst [vmem:[#allocation2 + $0xc70] sm:$0xff] %v1511
    %4990 = vst [vmem:[#allocation2 + $0xc78] sm:$0xff] %v1513
    %4991 = vst [vmem:[#allocation2 + $0xc80] sm:$0xff] %v2398
    %4992 = vst [vmem:[#allocation2 + $0xc88] sm:$0xff] %v2400
    %4993 = vst [vmem:[#allocation2 + $0xc90] sm:$0xff] %v3285
    %4994 = vst [vmem:[#allocation2 + $0xc98] sm:$0xff] %v3287
    %4995 = vst [vmem:[#allocation2 + $0xca0] sm:$0xff] %v4128
    %4996 = vst [vmem:[#allocation2 + $0xca8] sm:$0xff] %v630
    %4997 = vst [vmem:[#allocation2 + $0xcb0] sm:$0xff] %v632
    %4998 = vst [vmem:[#allocation2 + $0xcb8] sm:$0xff] %v1517
    %4999 = vst [vmem:[#allocation2 + $0xcc0] sm:$0xff] %v1519
    %5000 = vst [vmem:[#allocation2 + $0xcc8] sm:$0xff] %v2404
    %5001 = vst [vmem:[#allocation2 + $0xcd0] sm:$0xff] %v2406
    %5002 = vst [vmem:[#allocation2 + $0xcd8] sm:$0xff] %v3291
    %5003 = vst [vmem:[#allocation2 + $0xce0] sm:$0xff] %v3293
    %5004 = vst [vmem:[#allocation2 + $0xce8] sm:$0xff] %v4133
    %5005 = vst [vmem:[#allocation2 + $0xcf0] sm:$0xff] %v636
    %5006 = vst [vmem:[#allocation2 + $0xcf8] sm:$0xff] %v638
    %5007 = vst [vmem:[#allocation2 + $0xd00] sm:$0xff] %v1523
    %5008 = vst [vmem:[#allocation2 + $0xd08] sm:$0xff] %v1525
    %5009 = vst [vmem:[#allocation2 + $0xd10] sm:$0xff] %v2410
    %5010 = vst [vmem:[#allocation2 + $0xd18] sm:$0xff] %v2412
    %5011 = vst [vmem:[#allocation2 + $0xd20] sm:$0xff] %v3297
    %5012 = vst [vmem:[#allocation2 + $0xd28] sm:$0xff] %v3299
    %5013 = vst [vmem:[#allocation2 + $0xd30] sm:$0xff] %v4138
    %5014 = vst [vmem:[#allocation2 + $0xd38] sm:$0xff] %v642
    %5015 = vst [vmem:[#allocation2 + $0xd40] sm:$0xff] %v644
    %5016 = vst [vmem:[#allocation2 + $0xd48] sm:$0xff] %v1529
    %5017 = vst [vmem:[#allocation2 + $0xd50] sm:$0xff] %v1531
    %5018 = vst [vmem:[#allocation2 + $0xd58] sm:$0xff] %v2416
    %5019 = vst [vmem:[#allocation2 + $0xd60] sm:$0xff] %v2418
    %5020 = vst [vmem:[#allocation2 + $0xd68] sm:$0xff] %v3303
    %5021 = vst [vmem:[#allocation2 + $0xd70] sm:$0xff] %v3305
    %5022 = vst [vmem:[#allocation2 + $0xd78] sm:$0xff] %v4143
    %5023 = vst [vmem:[#allocation2 + $0xd80] sm:$0xff] %v648
    %5024 = vst [vmem:[#allocation2 + $0xd88] sm:$0xff] %v650
    %5025 = vst [vmem:[#allocation2 + $0xd90] sm:$0xff] %v1535
    %5026 = vst [vmem:[#allocation2 + $0xd98] sm:$0xff] %v1537
    %5027 = vst [vmem:[#allocation2 + $0xda0] sm:$0xff] %v2422
    %5028 = vst [vmem:[#allocation2 + $0xda8] sm:$0xff] %v2424
    %5029 = vst [vmem:[#allocation2 + $0xdb0] sm:$0xff] %v3309
    %5030 = vst [vmem:[#allocation2 + $0xdb8] sm:$0xff] %v3311
    %5031 = vst [vmem:[#allocation2 + $0xdc0] sm:$0xff] %v4148
    %5032 = vst [vmem:[#allocation2 + $0xdc8] sm:$0xff] %v654
    %5033 = vst [vmem:[#allocation2 + $0xdd0] sm:$0xff] %v656
    %5034 = vst [vmem:[#allocation2 + $0xdd8] sm:$0xff] %v1541
    %5035 = vst [vmem:[#allocation2 + $0xde0] sm:$0xff] %v1543
    %5036 = vst [vmem:[#allocation2 + $0xde8] sm:$0xff] %v2428
    %5037 = vst [vmem:[#allocation2 + $0xdf0] sm:$0xff] %v2430
    %5038 = vst [vmem:[#allocation2 + $0xdf8] sm:$0xff] %v3315
    %5039 = vst [vmem:[#allocation2 + $0xe00] sm:$0xff] %v3317
    %5040 = vst [vmem:[#allocation2 + $0xe08] sm:$0xff] %v4153
    %5041 = vst [vmem:[#allocation2 + $0xe10] sm:$0xff] %v660
    %5042 = vst [vmem:[#allocation2 + $0xe18] sm:$0xff] %v662
    %5043 = vst [vmem:[#allocation2 + $0xe20] sm:$0xff] %v1547
    %5044 = vst [vmem:[#allocation2 + $0xe28] sm:$0xff] %v1549
    %5045 = vst [vmem:[#allocation2 + $0xe30] sm:$0xff] %v2434
    %5046 = vst [vmem:[#allocation2 + $0xe38] sm:$0xff] %v2436
    %5047 = vst [vmem:[#allocation2 + $0xe40] sm:$0xff] %v3321
    %5048 = vst [vmem:[#allocation2 + $0xe48] sm:$0xff] %v3323
    %5049 = vst [vmem:[#allocation2 + $0xe50] sm:$0xff] %v4158
    %5050 = vst [vmem:[#allocation2 + $0xe58] sm:$0xff] %v666
    %5051 = vst [vmem:[#allocation2 + $0xe60] sm:$0xff] %v668
    %5052 = vst [vmem:[#allocation2 + $0xe68] sm:$0xff] %v1553
    %5053 = vst [vmem:[#allocation2 + $0xe70] sm:$0xff] %v1555
    %5054 = vst [vmem:[#allocation2 + $0xe78] sm:$0xff] %v2440
    %5055 = vst [vmem:[#allocation2 + $0xe80] sm:$0xff] %v2442
    %5056 = vst [vmem:[#allocation2 + $0xe88] sm:$0xff] %v3327
    %5057 = vst [vmem:[#allocation2 + $0xe90] sm:$0xff] %v3329
    %5058 = vst [vmem:[#allocation2 + $0xe98] sm:$0xff] %v4163
    %5059 = vst [vmem:[#allocation2 + $0xea0] sm:$0xff] %v672
    %5060 = vst [vmem:[#allocation2 + $0xea8] sm:$0xff] %v674
    %5061 = vst [vmem:[#allocation2 + $0xeb0] sm:$0xff] %v1559
    %5062 = vst [vmem:[#allocation2 + $0xeb8] sm:$0xff] %v1561
    %5063 = vst [vmem:[#allocation2 + $0xec0] sm:$0xff] %v2446
    %5064 = vst [vmem:[#allocation2 + $0xec8] sm:$0xff] %v2448
    %5065 = vst [vmem:[#allocation2 + $0xed0] sm:$0xff] %v3333
    %5066 = vst [vmem:[#allocation2 + $0xed8] sm:$0xff] %v3335
    %5067 = vst [vmem:[#allocation2 + $0xee0] sm:$0xff] %v4168
    %5068 = vst [vmem:[#allocation2 + $0xee8] sm:$0xff] %v678
    %5069 = vst [vmem:[#allocation2 + $0xef0] sm:$0xff] %v680
    %5070 = vst [vmem:[#allocation2 + $0xef8] sm:$0xff] %v1565
    %5071 = vst [vmem:[#allocation2 + $0xf00] sm:$0xff] %v1567
    %5072 = vst [vmem:[#allocation2 + $0xf08] sm:$0xff] %v2452
    %5073 = vst [vmem:[#allocation2 + $0xf10] sm:$0xff] %v2454
    %5074 = vst [vmem:[#allocation2 + $0xf18] sm:$0xff] %v3339
    %5075 = vst [vmem:[#allocation2 + $0xf20] sm:$0xff] %v3341
    %5076 = vst [vmem:[#allocation2 + $0xf28] sm:$0xff] %v4173
    %5077 = vst [vmem:[#allocation2 + $0xf30] sm:$0xff] %v684
    %5078 = vst [vmem:[#allocation2 + $0xf38] sm:$0xff] %v686
    %5079 = vst [vmem:[#allocation2 + $0xf40] sm:$0xff] %v1571
    %5080 = vst [vmem:[#allocation2 + $0xf48] sm:$0xff] %v1573
    %5081 = vst [vmem:[#allocation2 + $0xf50] sm:$0xff] %v2458
    %5082 = vst [vmem:[#allocation2 + $0xf58] sm:$0xff] %v2460
    %5083 = vst [vmem:[#allocation2 + $0xf60] sm:$0xff] %v3345
    %5084 = vst [vmem:[#allocation2 + $0xf68] sm:$0xff] %v3347
    %5085 = vst [vmem:[#allocation2 + $0xf70] sm:$0xff] %v4178
    %5086 = vst [vmem:[#allocation2 + $0xf78] sm:$0xff] %v690
    %5087 = vst [vmem:[#allocation2 + $0xf80] sm:$0xff] %v692
    %5088 = vst [vmem:[#allocation2 + $0xf88] sm:$0xff] %v1577
    %5089 = vst [vmem:[#allocation2 + $0xf90] sm:$0xff] %v1579
    %5090 = vst [vmem:[#allocation2 + $0xf98] sm:$0xff] %v2464
    %5091 = vst [vmem:[#allocation2 + $0xfa0] sm:$0xff] %v2466
    %5092 = vst [vmem:[#allocation2 + $0xfa8] sm:$0xff] %v3351
    %5093 = vst [vmem:[#allocation2 + $0xfb0] sm:$0xff] %v3353
    %5094 = vst [vmem:[#allocation2 + $0xfb8] sm:$0xff] %v4183
    %5095 = vst [vmem:[#allocation2 + $0xfc0] sm:$0xff] %v696
    %5096 = vst [vmem:[#allocation2 + $0xfc8] sm:$0xff] %v698
    %5097 = vst [vmem:[#allocation2 + $0xfd0] sm:$0xff] %v1583
    %5098 = vst [vmem:[#allocation2 + $0xfd8] sm:$0xff] %v1585
    %5099 = vst [vmem:[#allocation2 + $0xfe0] sm:$0xff] %v2470
    %5100 = vst [vmem:[#allocation2 + $0xfe8] sm:$0xff] %v2472
    %5101 = vst [vmem:[#allocation2 + $0xff0] sm:$0xff] %v3357
    %5102 = vst [vmem:[#allocation2 + $0xff8] sm:$0xff] %v3359
    %5103 = vst [vmem:[#allocation2 + $0x1000] sm:$0xff] %v4188
    %5104 = vst [vmem:[#allocation2 + $0x1008] sm:$0xff] %v702
    %5105 = vst [vmem:[#allocation2 + $0x1010] sm:$0xff] %v704
    %5106 = vst [vmem:[#allocation2 + $0x1018] sm:$0xff] %v1589
    %5107 = vst [vmem:[#allocation2 + $0x1020] sm:$0xff] %v1591
    %5108 = vst [vmem:[#allocation2 + $0x1028] sm:$0xff] %v2476
    %5109 = vst [vmem:[#allocation2 + $0x1030] sm:$0xff] %v2478
    %5110 = vst [vmem:[#allocation2 + $0x1038] sm:$0xff] %v3363
    %5111 = vst [vmem:[#allocation2 + $0x1040] sm:$0xff] %v3365
    %5112 = vst [vmem:[#allocation2 + $0x1048] sm:$0xff] %v4193
    %5113 = vst [vmem:[#allocation2 + $0x1050] sm:$0xff] %v708
    %5114 = vst [vmem:[#allocation2 + $0x1058] sm:$0xff] %v710
    %5115 = vst [vmem:[#allocation2 + $0x1060] sm:$0xff] %v1595
    %5116 = vst [vmem:[#allocation2 + $0x1068] sm:$0xff] %v1597
    %5117 = vst [vmem:[#allocation2 + $0x1070] sm:$0xff] %v2482
    %5118 = vst [vmem:[#allocation2 + $0x1078] sm:$0xff] %v2484
    %5119 = vst [vmem:[#allocation2 + $0x1080] sm:$0xff] %v3369
    %5120 = vst [vmem:[#allocation2 + $0x1088] sm:$0xff] %v3371
    %5121 = vst [vmem:[#allocation2 + $0x1090] sm:$0xff] %v4198
    %5122 = vst [vmem:[#allocation2 + $0x1098] sm:$0xff] %v714
    %5123 = vst [vmem:[#allocation2 + $0x10a0] sm:$0xff] %v716
    %5124 = vst [vmem:[#allocation2 + $0x10a8] sm:$0xff] %v1601
    %5125 = vst [vmem:[#allocation2 + $0x10b0] sm:$0xff] %v1603
    %5126 = vst [vmem:[#allocation2 + $0x10b8] sm:$0xff] %v2488
    %5127 = vst [vmem:[#allocation2 + $0x10c0] sm:$0xff] %v2490
    %5128 = vst [vmem:[#allocation2 + $0x10c8] sm:$0xff] %v3375
    %5129 = vst [vmem:[#allocation2 + $0x10d0] sm:$0xff] %v3377
    %5130 = vst [vmem:[#allocation2 + $0x10d8] sm:$0xff] %v4203
    %5131 = vst [vmem:[#allocation2 + $0x10e0] sm:$0xff] %v720
    %5132 = vst [vmem:[#allocation2 + $0x10e8] sm:$0xff] %v722
    %5133 = vst [vmem:[#allocation2 + $0x10f0] sm:$0xff] %v1607
    %5134 = vst [vmem:[#allocation2 + $0x10f8] sm:$0xff] %v1609
    %5135 = vst [vmem:[#allocation2 + $0x1100] sm:$0xff] %v2494
    %5136 = vst [vmem:[#allocation2 + $0x1108] sm:$0xff] %v2496
    %5137 = vst [vmem:[#allocation2 + $0x1110] sm:$0xff] %v3381
    %5138 = vst [vmem:[#allocation2 + $0x1118] sm:$0xff] %v3383
    %5139 = vst [vmem:[#allocation2 + $0x1120] sm:$0xff] %v4208
    %5140 = vst [vmem:[#allocation2 + $0x1128] sm:$0xff] %v726
    %5141 = vst [vmem:[#allocation2 + $0x1130] sm:$0xff] %v728
    %5142 = vst [vmem:[#allocation2 + $0x1138] sm:$0xff] %v1613
    %5143 = vst [vmem:[#allocation2 + $0x1140] sm:$0xff] %v1615
    %5144 = vst [vmem:[#allocation2 + $0x1148] sm:$0xff] %v2500
    %5145 = vst [vmem:[#allocation2 + $0x1150] sm:$0xff] %v2502
    %5146 = vst [vmem:[#allocation2 + $0x1158] sm:$0xff] %v3387
    %5147 = vst [vmem:[#allocation2 + $0x1160] sm:$0xff] %v3389
    %5148 = vst [vmem:[#allocation2 + $0x1168] sm:$0xff] %v4213
    %5149 = vst [vmem:[#allocation2 + $0x1170] sm:$0xff] %v732
    %5150 = vst [vmem:[#allocation2 + $0x1178] sm:$0xff] %v734
    %5151 = vst [vmem:[#allocation2 + $0x1180] sm:$0xff] %v1619
    %5152 = vst [vmem:[#allocation2 + $0x1188] sm:$0xff] %v1621
    %5153 = vst [vmem:[#allocation2 + $0x1190] sm:$0xff] %v2506
    %5154 = vst [vmem:[#allocation2 + $0x1198] sm:$0xff] %v2508
    %5155 = vst [vmem:[#allocation2 + $0x11a0] sm:$0xff] %v3393
    %5156 = vst [vmem:[#allocation2 + $0x11a8] sm:$0xff] %v3395
    %5157 = vst [vmem:[#allocation2 + $0x11b0] sm:$0xff] %v4218
    %5158 = vst [vmem:[#allocation2 + $0x11b8] sm:$0xff] %v738
    %5159 = vst [vmem:[#allocation2 + $0x11c0] sm:$0xff] %v740
    %5160 = vst [vmem:[#allocation2 + $0x11c8] sm:$0xff] %v1625
    %5161 = vst [vmem:[#allocation2 + $0x11d0] sm:$0xff] %v1627
    %5162 = vst [vmem:[#allocation2 + $0x11d8] sm:$0xff] %v2512
    %5163 = vst [vmem:[#allocation2 + $0x11e0] sm:$0xff] %v2514
    %5164 = vst [vmem:[#allocation2 + $0x11e8] sm:$0xff] %v3399
    %5165 = vst [vmem:[#allocation2 + $0x11f0] sm:$0xff] %v3401
    %5166 = vst [vmem:[#allocation2 + $0x11f8] sm:$0xff] %v4223
    %5167 = vst [vmem:[#allocation2 + $0x1200] sm:$0xff] %v744
    %5168 = vst [vmem:[#allocation2 + $0x1208] sm:$0xff] %v746
    %5169 = vst [vmem:[#allocation2 + $0x1210] sm:$0xff] %v1631
    %5170 = vst [vmem:[#allocation2 + $0x1218] sm:$0xff] %v1633
    %5171 = vst [vmem:[#allocation2 + $0x1220] sm:$0xff] %v2518
    %5172 = vst [vmem:[#allocation2 + $0x1228] sm:$0xff] %v2520
    %5173 = vst [vmem:[#allocation2 + $0x1230] sm:$0xff] %v3405
    %5174 = vst [vmem:[#allocation2 + $0x1238] sm:$0xff] %v3407
    %5175 = vst [vmem:[#allocation2 + $0x1240] sm:$0xff] %v4228
    %5176 = vst [vmem:[#allocation2 + $0x1248] sm:$0xff] %v750
    %5177 = vst [vmem:[#allocation2 + $0x1250] sm:$0xff] %v752
    %5178 = vst [vmem:[#allocation2 + $0x1258] sm:$0xff] %v1637
    %5179 = vst [vmem:[#allocation2 + $0x1260] sm:$0xff] %v1639
    %5180 = vst [vmem:[#allocation2 + $0x1268] sm:$0xff] %v2524
    %5181 = vst [vmem:[#allocation2 + $0x1270] sm:$0xff] %v2526
    %5182 = vst [vmem:[#allocation2 + $0x1278] sm:$0xff] %v3411
    %5183 = vst [vmem:[#allocation2 + $0x1280] sm:$0xff] %v3413
    %5184 = vst [vmem:[#allocation2 + $0x1288] sm:$0xff] %v4233
    %5185 = vst [vmem:[#allocation2 + $0x1290] sm:$0xff] %v756
    %5186 = vst [vmem:[#allocation2 + $0x1298] sm:$0xff] %v758
    %5187 = vst [vmem:[#allocation2 + $0x12a0] sm:$0xff] %v1643
    %5188 = vst [vmem:[#allocation2 + $0x12a8] sm:$0xff] %v1645
    %5189 = vst [vmem:[#allocation2 + $0x12b0] sm:$0xff] %v2530
    %5190 = vst [vmem:[#allocation2 + $0x12b8] sm:$0xff] %v2532
    %5191 = vst [vmem:[#allocation2 + $0x12c0] sm:$0xff] %v3417
    %5192 = vst [vmem:[#allocation2 + $0x12c8] sm:$0xff] %v3419
    %5193 = vst [vmem:[#allocation2 + $0x12d0] sm:$0xff] %v4238
    %5194 = vst [vmem:[#allocation2 + $0x12d8] sm:$0xff] %v762
    %5195 = vst [vmem:[#allocation2 + $0x12e0] sm:$0xff] %v764
    %5196 = vst [vmem:[#allocation2 + $0x12e8] sm:$0xff] %v1649
    %5197 = vst [vmem:[#allocation2 + $0x12f0] sm:$0xff] %v1651
    %5198 = vst [vmem:[#allocation2 + $0x12f8] sm:$0xff] %v2536
    %5199 = vst [vmem:[#allocation2 + $0x1300] sm:$0xff] %v2538
    %5200 = vst [vmem:[#allocation2 + $0x1308] sm:$0xff] %v3423
    %5201 = vst [vmem:[#allocation2 + $0x1310] sm:$0xff] %v3425
    %5202 = vst [vmem:[#allocation2 + $0x1318] sm:$0xff] %v4243
    %5203 = vst [vmem:[#allocation2 + $0x1320] sm:$0xff] %v768
    %5204 = vst [vmem:[#allocation2 + $0x1328] sm:$0xff] %v770
    %5205 = vst [vmem:[#allocation2 + $0x1330] sm:$0xff] %v1655
    %5206 = vst [vmem:[#allocation2 + $0x1338] sm:$0xff] %v1657
    %5207 = vst [vmem:[#allocation2 + $0x1340] sm:$0xff] %v2542
    %5208 = vst [vmem:[#allocation2 + $0x1348] sm:$0xff] %v2544
    %5209 = vst [vmem:[#allocation2 + $0x1350] sm:$0xff] %v3429
    %5210 = vst [vmem:[#allocation2 + $0x1358] sm:$0xff] %v3431
    %5211 = vst [vmem:[#allocation2 + $0x1360] sm:$0xff] %v4248
    %5212 = vst [vmem:[#allocation2 + $0x1368] sm:$0xff] %v774
    %5213 = vst [vmem:[#allocation2 + $0x1370] sm:$0xff] %v776
    %5214 = vst [vmem:[#allocation2 + $0x1378] sm:$0xff] %v1661
    %5215 = vst [vmem:[#allocation2 + $0x1380] sm:$0xff] %v1663
    %5216 = vst [vmem:[#allocation2 + $0x1388] sm:$0xff] %v2548
    %5217 = vst [vmem:[#allocation2 + $0x1390] sm:$0xff] %v2550
    %5218 = vst [vmem:[#allocation2 + $0x1398] sm:$0xff] %v3435
    %5219 = vst [vmem:[#allocation2 + $0x13a0] sm:$0xff] %v3437
    %5220 = vst [vmem:[#allocation2 + $0x13a8] sm:$0xff] %v4253
    %5221 = vst [vmem:[#allocation2 + $0x13b0] sm:$0xff] %v780
    %5222 = vst [vmem:[#allocation2 + $0x13b8] sm:$0xff] %v782
    %5223 = vst [vmem:[#allocation2 + $0x13c0] sm:$0xff] %v1667
    %5224 = vst [vmem:[#allocation2 + $0x13c8] sm:$0xff] %v1669
    %5225 = vst [vmem:[#allocation2 + $0x13d0] sm:$0xff] %v2554
    %5226 = vst [vmem:[#allocation2 + $0x13d8] sm:$0xff] %v2556
    %5227 = vst [vmem:[#allocation2 + $0x13e0] sm:$0xff] %v3441
    %5228 = vst [vmem:[#allocation2 + $0x13e8] sm:$0xff] %v3443
    %5229 = vst [vmem:[#allocation2 + $0x13f0] sm:$0xff] %v4258
    %5230 = vst [vmem:[#allocation2 + $0x13f8] sm:$0xff] %v786
    %5231 = vst [vmem:[#allocation2 + $0x1400] sm:$0xff] %v788
    %5232 = vst [vmem:[#allocation2 + $0x1408] sm:$0xff] %v1673
    %5233 = vst [vmem:[#allocation2 + $0x1410] sm:$0xff] %v1675
    %5234 = vst [vmem:[#allocation2 + $0x1418] sm:$0xff] %v2560
    %5235 = vst [vmem:[#allocation2 + $0x1420] sm:$0xff] %v2562
    %5236 = vst [vmem:[#allocation2 + $0x1428] sm:$0xff] %v3447
    %5237 = vst [vmem:[#allocation2 + $0x1430] sm:$0xff] %v3449
    %5238 = vst [vmem:[#allocation2 + $0x1438] sm:$0xff] %v4263
    %5239 = vst [vmem:[#allocation2 + $0x1440] sm:$0xff] %v792
    %5240 = vst [vmem:[#allocation2 + $0x1448] sm:$0xff] %v794
    %5241 = vst [vmem:[#allocation2 + $0x1450] sm:$0xff] %v1679
    %5242 = vst [vmem:[#allocation2 + $0x1458] sm:$0xff] %v1681
    %5243 = vst [vmem:[#allocation2 + $0x1460] sm:$0xff] %v2566
    %5244 = vst [vmem:[#allocation2 + $0x1468] sm:$0xff] %v2568
    %5245 = vst [vmem:[#allocation2 + $0x1470] sm:$0xff] %v3453
    %5246 = vst [vmem:[#allocation2 + $0x1478] sm:$0xff] %v3455
    %5247 = vst [vmem:[#allocation2 + $0x1480] sm:$0xff] %v4268
    %5248 = vst [vmem:[#allocation2 + $0x1488] sm:$0xff] %v798
    %5249 = vst [vmem:[#allocation2 + $0x1490] sm:$0xff] %v800
    %5250 = vst [vmem:[#allocation2 + $0x1498] sm:$0xff] %v1685
    %5251 = vst [vmem:[#allocation2 + $0x14a0] sm:$0xff] %v1687
    %5252 = vst [vmem:[#allocation2 + $0x14a8] sm:$0xff] %v2572
    %5253 = vst [vmem:[#allocation2 + $0x14b0] sm:$0xff] %v2574
    %5254 = vst [vmem:[#allocation2 + $0x14b8] sm:$0xff] %v3459
    %5255 = vst [vmem:[#allocation2 + $0x14c0] sm:$0xff] %v3461
    %5256 = vst [vmem:[#allocation2 + $0x14c8] sm:$0xff] %v4273
    %5257 = vst [vmem:[#allocation2 + $0x14d0] sm:$0xff] %v804
    %5258 = vst [vmem:[#allocation2 + $0x14d8] sm:$0xff] %v806
    %5259 = vst [vmem:[#allocation2 + $0x14e0] sm:$0xff] %v1691
    %5260 = vst [vmem:[#allocation2 + $0x14e8] sm:$0xff] %v1693
    %5261 = vst [vmem:[#allocation2 + $0x14f0] sm:$0xff] %v2578
    %5262 = vst [vmem:[#allocation2 + $0x14f8] sm:$0xff] %v2580
    %5263 = vst [vmem:[#allocation2 + $0x1500] sm:$0xff] %v3465
    %5264 = vst [vmem:[#allocation2 + $0x1508] sm:$0xff] %v3467
    %5265 = vst [vmem:[#allocation2 + $0x1510] sm:$0xff] %v4278
    %5266 = vst [vmem:[#allocation2 + $0x1518] sm:$0xff] %v810
    %5267 = vst [vmem:[#allocation2 + $0x1520] sm:$0xff] %v812
    %5268 = vst [vmem:[#allocation2 + $0x1528] sm:$0xff] %v1697
    %5269 = vst [vmem:[#allocation2 + $0x1530] sm:$0xff] %v1699
    %5270 = vst [vmem:[#allocation2 + $0x1538] sm:$0xff] %v2584
    %5271 = vst [vmem:[#allocation2 + $0x1540] sm:$0xff] %v2586
    %5272 = vst [vmem:[#allocation2 + $0x1548] sm:$0xff] %v3471
    %5273 = vst [vmem:[#allocation2 + $0x1550] sm:$0xff] %v3473
    %5274 = vst [vmem:[#allocation2 + $0x1558] sm:$0xff] %v4283
    %5275 = vst [vmem:[#allocation2 + $0x1560] sm:$0xff] %v816
    %5276 = vst [vmem:[#allocation2 + $0x1568] sm:$0xff] %v818
    %5277 = vst [vmem:[#allocation2 + $0x1570] sm:$0xff] %v1703
    %5278 = vst [vmem:[#allocation2 + $0x1578] sm:$0xff] %v1705
    %5279 = vst [vmem:[#allocation2 + $0x1580] sm:$0xff] %v2590
    %5280 = vst [vmem:[#allocation2 + $0x1588] sm:$0xff] %v2592
    %5281 = vst [vmem:[#allocation2 + $0x1590] sm:$0xff] %v3477
    %5282 = vst [vmem:[#allocation2 + $0x1598] sm:$0xff] %v3479
    %5283 = vst [vmem:[#allocation2 + $0x15a0] sm:$0xff] %v4288
    %5284 = vst [vmem:[#allocation2 + $0x15a8] sm:$0xff] %v822
    %5285 = vst [vmem:[#allocation2 + $0x15b0] sm:$0xff] %v824
    %5286 = vst [vmem:[#allocation2 + $0x15b8] sm:$0xff] %v1709
    %5287 = vst [vmem:[#allocation2 + $0x15c0] sm:$0xff] %v1711
    %5288 = vst [vmem:[#allocation2 + $0x15c8] sm:$0xff] %v2596
    %5289 = vst [vmem:[#allocation2 + $0x15d0] sm:$0xff] %v2598
    %5290 = vst [vmem:[#allocation2 + $0x15d8] sm:$0xff] %v3483
    %5291 = vst [vmem:[#allocation2 + $0x15e0] sm:$0xff] %v3485
    %5292 = vst [vmem:[#allocation2 + $0x15e8] sm:$0xff] %v4293
    %5293 = vst [vmem:[#allocation2 + $0x15f0] sm:$0xff] %v828
    %5294 = vst [vmem:[#allocation2 + $0x15f8] sm:$0xff] %v830
    %5295 = vst [vmem:[#allocation2 + $0x1600] sm:$0xff] %v1715
    %5296 = vst [vmem:[#allocation2 + $0x1608] sm:$0xff] %v1717
    %5297 = vst [vmem:[#allocation2 + $0x1610] sm:$0xff] %v2602
    %5298 = vst [vmem:[#allocation2 + $0x1618] sm:$0xff] %v2604
    %5299 = vst [vmem:[#allocation2 + $0x1620] sm:$0xff] %v3489
    %5300 = vst [vmem:[#allocation2 + $0x1628] sm:$0xff] %v3491
    %5301 = vst [vmem:[#allocation2 + $0x1630] sm:$0xff] %v4298
    %5302 = vst [vmem:[#allocation2 + $0x1638] sm:$0xff] %v834
    %5303 = vst [vmem:[#allocation2 + $0x1640] sm:$0xff] %v836
    %5304 = vst [vmem:[#allocation2 + $0x1648] sm:$0xff] %v1721
    %5305 = vst [vmem:[#allocation2 + $0x1650] sm:$0xff] %v1723
    %5306 = vst [vmem:[#allocation2 + $0x1658] sm:$0xff] %v2608
    %5307 = vst [vmem:[#allocation2 + $0x1660] sm:$0xff] %v2610
    %5308 = vst [vmem:[#allocation2 + $0x1668] sm:$0xff] %v3495
    %5309 = vst [vmem:[#allocation2 + $0x1670] sm:$0xff] %v3497
    %5310 = vst [vmem:[#allocation2 + $0x1678] sm:$0xff] %v4303
    %5311 = vst [vmem:[#allocation2 + $0x1680] sm:$0xff] %v840
    %5312 = vst [vmem:[#allocation2 + $0x1688] sm:$0xff] %v842
    %5313 = vst [vmem:[#allocation2 + $0x1690] sm:$0xff] %v1727
    %5314 = vst [vmem:[#allocation2 + $0x1698] sm:$0xff] %v1729
    %5315 = vst [vmem:[#allocation2 + $0x16a0] sm:$0xff] %v2614
    %5316 = vst [vmem:[#allocation2 + $0x16a8] sm:$0xff] %v2616
    %5317 = vst [vmem:[#allocation2 + $0x16b0] sm:$0xff] %v3501
    %5318 = vst [vmem:[#allocation2 + $0x16b8] sm:$0xff] %v3503
    %5319 = vst [vmem:[#allocation2 + $0x16c0] sm:$0xff] %v4308
    %5320 = vst [vmem:[#allocation2 + $0x16c8] sm:$0xff] %v846
    %5321 = vst [vmem:[#allocation2 + $0x16d0] sm:$0xff] %v848
    %5322 = vst [vmem:[#allocation2 + $0x16d8] sm:$0xff] %v1733
    %5323 = vst [vmem:[#allocation2 + $0x16e0] sm:$0xff] %v1735
    %5324 = vst [vmem:[#allocation2 + $0x16e8] sm:$0xff] %v2620
    %5325 = vst [vmem:[#allocation2 + $0x16f0] sm:$0xff] %v2622
    %5326 = vst [vmem:[#allocation2 + $0x16f8] sm:$0xff] %v3507
    %5327 = vst [vmem:[#allocation2 + $0x1700] sm:$0xff] %v3509
    %5328 = vst [vmem:[#allocation2 + $0x1708] sm:$0xff] %v4313
    %5329 = vst [vmem:[#allocation2 + $0x1710] sm:$0xff] %v852
    %5330 = vst [vmem:[#allocation2 + $0x1718] sm:$0xff] %v854
    %5331 = vst [vmem:[#allocation2 + $0x1720] sm:$0xff] %v1739
    %5332 = vst [vmem:[#allocation2 + $0x1728] sm:$0xff] %v1741
    %5333 = vst [vmem:[#allocation2 + $0x1730] sm:$0xff] %v2626
    %5334 = vst [vmem:[#allocation2 + $0x1738] sm:$0xff] %v2628
    %5335 = vst [vmem:[#allocation2 + $0x1740] sm:$0xff] %v3513
    %5336 = vst [vmem:[#allocation2 + $0x1748] sm:$0xff] %v3515
    %5337 = vst [vmem:[#allocation2 + $0x1750] sm:$0xff] %v4318
    %5338 = vst [vmem:[#allocation2 + $0x1758] sm:$0xff] %v858
    %5339 = vst [vmem:[#allocation2 + $0x1760] sm:$0xff] %v860
    %5340 = vst [vmem:[#allocation2 + $0x1768] sm:$0xff] %v1745
    %5341 = vst [vmem:[#allocation2 + $0x1770] sm:$0xff] %v1747
    %5342 = vst [vmem:[#allocation2 + $0x1778] sm:$0xff] %v2632
    %5343 = vst [vmem:[#allocation2 + $0x1780] sm:$0xff] %v2634
    %5344 = vst [vmem:[#allocation2 + $0x1788] sm:$0xff] %v3519
    %5345 = vst [vmem:[#allocation2 + $0x1790] sm:$0xff] %v3521
    %5346 = vst [vmem:[#allocation2 + $0x1798] sm:$0xff] %v4323
    %5347 = vst [vmem:[#allocation2 + $0x17a0] sm:$0xff] %v864
    %5348 = vst [vmem:[#allocation2 + $0x17a8] sm:$0xff] %v866
    %5349 = vst [vmem:[#allocation2 + $0x17b0] sm:$0xff] %v1751
    %5350 = vst [vmem:[#allocation2 + $0x17b8] sm:$0xff] %v1753
    %5351 = vst [vmem:[#allocation2 + $0x17c0] sm:$0xff] %v2638
    %5352 = vst [vmem:[#allocation2 + $0x17c8] sm:$0xff] %v2640
    %5353 = vst [vmem:[#allocation2 + $0x17d0] sm:$0xff] %v3525
    %5354 = vst [vmem:[#allocation2 + $0x17d8] sm:$0xff] %v3527
    %5355 = vst [vmem:[#allocation2 + $0x17e0] sm:$0xff] %v4328
    %5356 = vst [vmem:[#allocation2 + $0x17e8] sm:$0xff] %v870
    %5357 = vst [vmem:[#allocation2 + $0x17f0] sm:$0xff] %v872
    %5358 = vst [vmem:[#allocation2 + $0x17f8] sm:$0xff] %v1757
    %5359 = vst [vmem:[#allocation2 + $0x1800] sm:$0xff] %v1759
    %5360 = vst [vmem:[#allocation2 + $0x1808] sm:$0xff] %v2644
    %5361 = vst [vmem:[#allocation2 + $0x1810] sm:$0xff] %v2646
    %5362 = vst [vmem:[#allocation2 + $0x1818] sm:$0xff] %v3531
    %5363 = vst [vmem:[#allocation2 + $0x1820] sm:$0xff] %v3533
    %5364 = vst [vmem:[#allocation2 + $0x1828] sm:$0xff] %v4333
    %5365 = vst [vmem:[#allocation2 + $0x1830] sm:$0xff] %v876
    %5366 = vst [vmem:[#allocation2 + $0x1838] sm:$0xff] %v878
    %5367 = vst [vmem:[#allocation2 + $0x1840] sm:$0xff] %v1763
    %5368 = vst [vmem:[#allocation2 + $0x1848] sm:$0xff] %v1765
    %5369 = vst [vmem:[#allocation2 + $0x1850] sm:$0xff] %v2650
    %5370 = vst [vmem:[#allocation2 + $0x1858] sm:$0xff] %v2652
    %5371 = vst [vmem:[#allocation2 + $0x1860] sm:$0xff] %v3537
    %5372 = vst [vmem:[#allocation2 + $0x1868] sm:$0xff] %v3539
    %5373 = vst [vmem:[#allocation2 + $0x1870] sm:$0xff] %v4338
    %5374 = vst [vmem:[#allocation2 + $0x1878] sm:$0xff] %v882
    %5375 = vst [vmem:[#allocation2 + $0x1880] sm:$0xff] %v884
    %5376 = vst [vmem:[#allocation2 + $0x1888] sm:$0xff] %v1769
    %5377 = vst [vmem:[#allocation2 + $0x1890] sm:$0xff] %v1771
    %5378 = vst [vmem:[#allocation2 + $0x1898] sm:$0xff] %v2656
    %5379 = vst [vmem:[#allocation2 + $0x18a0] sm:$0xff] %v2658
    %5380 = vst [vmem:[#allocation2 + $0x18a8] sm:$0xff] %v3543
    %5381 = vst [vmem:[#allocation2 + $0x18b0] sm:$0xff] %v3545
    %5382 = vst [vmem:[#allocation2 + $0x18b8] sm:$0xff] %v4343
    %5383 = vst [vmem:[#allocation2 + $0x18c0] sm:$0xff] %v888
    %5384 = vst [vmem:[#allocation2 + $0x18c8] sm:$0xff] %v890
    %5385 = vst [vmem:[#allocation2 + $0x18d0] sm:$0xff] %v1775
    %5386 = vst [vmem:[#allocation2 + $0x18d8] sm:$0xff] %v1777
    %5387 = vst [vmem:[#allocation2 + $0x18e0] sm:$0xff] %v2662
    %5388 = vst [vmem:[#allocation2 + $0x18e8] sm:$0xff] %v2664
    %5389 = vst [vmem:[#allocation2 + $0x18f0] sm:$0xff] %v3549
    %5390 = vst [vmem:[#allocation2 + $0x18f8] sm:$0xff] %v3551
    %5391 = vst [vmem:[#allocation2 + $0x1900] sm:$0xff] %v4348
    %5392 = vst [vmem:[#allocation2 + $0x1908] sm:$0xff] %v894
    %5393 = vst [vmem:[#allocation2 + $0x1910] sm:$0xff] %v896
    %5394 = vst [vmem:[#allocation2 + $0x1918] sm:$0xff] %v1781
    %5395 = vst [vmem:[#allocation2 + $0x1920] sm:$0xff] %v1783
    %5396 = vst [vmem:[#allocation2 + $0x1928] sm:$0xff] %v2668
    %5397 = vst [vmem:[#allocation2 + $0x1930] sm:$0xff] %v2670
    %5398 = vst [vmem:[#allocation2 + $0x1938] sm:$0xff] %v3555
    %5399 = vst [vmem:[#allocation2 + $0x1940] sm:$0xff] %v3557
    %5400 = vst [vmem:[#allocation2 + $0x1948] sm:$0xff] %v4353
    %5401 = vst [vmem:[#allocation2 + $0x1950] sm:$0xff] %v900
    %5402 = vst [vmem:[#allocation2 + $0x1958] sm:$0xff] %v902
    %5403 = vst [vmem:[#allocation2 + $0x1960] sm:$0xff] %v1787
    %5404 = vst [vmem:[#allocation2 + $0x1968] sm:$0xff] %v1789
    %5405 = vst [vmem:[#allocation2 + $0x1970] sm:$0xff] %v2674
    %5406 = vst [vmem:[#allocation2 + $0x1978] sm:$0xff] %v2676
    %5407 = vst [vmem:[#allocation2 + $0x1980] sm:$0xff] %v3561
    %5408 = vst [vmem:[#allocation2 + $0x1988] sm:$0xff] %v3563
    %5409 = vst [vmem:[#allocation2 + $0x1990] sm:$0xff] %v4358
    %5410 = vst [vmem:[#allocation2 + $0x1998] sm:$0xff] %v906
    %5411 = vst [vmem:[#allocation2 + $0x19a0] sm:$0xff] %v908
    %5412 = vst [vmem:[#allocation2 + $0x19a8] sm:$0xff] %v1793
    %5413 = vst [vmem:[#allocation2 + $0x19b0] sm:$0xff] %v1795
    %5414 = vst [vmem:[#allocation2 + $0x19b8] sm:$0xff] %v2680
    %5415 = vst [vmem:[#allocation2 + $0x19c0] sm:$0xff] %v2682
    %5416 = vst [vmem:[#allocation2 + $0x19c8] sm:$0xff] %v3567
    %5417 = vst [vmem:[#allocation2 + $0x19d0] sm:$0xff] %v3569
    %5418 = vst [vmem:[#allocation2 + $0x19d8] sm:$0xff] %v4363
    %5419 = vst [vmem:[#allocation2 + $0x19e0] sm:$0xff] %v912
    %5420 = vst [vmem:[#allocation2 + $0x19e8] sm:$0xff] %v914
    %5421 = vst [vmem:[#allocation2 + $0x19f0] sm:$0xff] %v1799
    %5422 = vst [vmem:[#allocation2 + $0x19f8] sm:$0xff] %v1801
    %5423 = vst [vmem:[#allocation2 + $0x1a00] sm:$0xff] %v2686
    %5424 = vst [vmem:[#allocation2 + $0x1a08] sm:$0xff] %v2688
    %5425 = vst [vmem:[#allocation2 + $0x1a10] sm:$0xff] %v3573
    %5426 = vst [vmem:[#allocation2 + $0x1a18] sm:$0xff] %v3575
    %5427 = vst [vmem:[#allocation2 + $0x1a20] sm:$0xff] %v4368
    %5428 = vst [vmem:[#allocation2 + $0x1a28] sm:$0xff] %v918
    %5429 = vst [vmem:[#allocation2 + $0x1a30] sm:$0xff] %v920
    %5430 = vst [vmem:[#allocation2 + $0x1a38] sm:$0xff] %v1805
    %5431 = vst [vmem:[#allocation2 + $0x1a40] sm:$0xff] %v1807
    %5432 = vst [vmem:[#allocation2 + $0x1a48] sm:$0xff] %v2692
    %5433 = vst [vmem:[#allocation2 + $0x1a50] sm:$0xff] %v2694
    %5434 = vst [vmem:[#allocation2 + $0x1a58] sm:$0xff] %v3579
    %5435 = vst [vmem:[#allocation2 + $0x1a60] sm:$0xff] %v3581
    %5436 = vst [vmem:[#allocation2 + $0x1a68] sm:$0xff] %v4373
    %5437 = vst [vmem:[#allocation2 + $0x1a70] sm:$0xff] %v924
    %5438 = vst [vmem:[#allocation2 + $0x1a78] sm:$0xff] %v926
    %5439 = vst [vmem:[#allocation2 + $0x1a80] sm:$0xff] %v1811
    %5440 = vst [vmem:[#allocation2 + $0x1a88] sm:$0xff] %v1813
    %5441 = vst [vmem:[#allocation2 + $0x1a90] sm:$0xff] %v2698
    %5442 = vst [vmem:[#allocation2 + $0x1a98] sm:$0xff] %v2700
    %5443 = vst [vmem:[#allocation2 + $0x1aa0] sm:$0xff] %v3585
    %5444 = vst [vmem:[#allocation2 + $0x1aa8] sm:$0xff] %v3587
    %5445 = vst [vmem:[#allocation2 + $0x1ab0] sm:$0xff] %v4378
    %5446 = vst [vmem:[#allocation2 + $0x1ab8] sm:$0xff] %v930
    %5447 = vst [vmem:[#allocation2 + $0x1ac0] sm:$0xff] %v932
    %5448 = vst [vmem:[#allocation2 + $0x1ac8] sm:$0xff] %v1817
    %5449 = vst [vmem:[#allocation2 + $0x1ad0] sm:$0xff] %v1819
    %5450 = vst [vmem:[#allocation2 + $0x1ad8] sm:$0xff] %v2704
    %5451 = vst [vmem:[#allocation2 + $0x1ae0] sm:$0xff] %v2706
    %5452 = vst [vmem:[#allocation2 + $0x1ae8] sm:$0xff] %v3591
    %5453 = vst [vmem:[#allocation2 + $0x1af0] sm:$0xff] %v3593
    %5454 = vst [vmem:[#allocation2 + $0x1af8] sm:$0xff] %v4383
    %5455 = vst [vmem:[#allocation2 + $0x1b00] sm:$0xff] %v936
    %5456 = vst [vmem:[#allocation2 + $0x1b08] sm:$0xff] %v938
    %5457 = vst [vmem:[#allocation2 + $0x1b10] sm:$0xff] %v1823
    %5458 = vst [vmem:[#allocation2 + $0x1b18] sm:$0xff] %v1825
    %5459 = vst [vmem:[#allocation2 + $0x1b20] sm:$0xff] %v2710
    %5460 = vst [vmem:[#allocation2 + $0x1b28] sm:$0xff] %v2712
    %5461 = vst [vmem:[#allocation2 + $0x1b30] sm:$0xff] %v3597
    %5462 = vst [vmem:[#allocation2 + $0x1b38] sm:$0xff] %v3599
    %5463 = vst [vmem:[#allocation2 + $0x1b40] sm:$0xff] %v4388
    %5464 = vst [vmem:[#allocation2 + $0x1b48] sm:$0xff] %v942
    %5465 = vst [vmem:[#allocation2 + $0x1b50] sm:$0xff] %v944
    %5466 = vst [vmem:[#allocation2 + $0x1b58] sm:$0xff] %v1829
    %5467 = vst [vmem:[#allocation2 + $0x1b60] sm:$0xff] %v1831
    %5468 = vst [vmem:[#allocation2 + $0x1b68] sm:$0xff] %v2716
    %5469 = vst [vmem:[#allocation2 + $0x1b70] sm:$0xff] %v2718
    %5470 = vst [vmem:[#allocation2 + $0x1b78] sm:$0xff] %v3603
    %5471 = vst [vmem:[#allocation2 + $0x1b80] sm:$0xff] %v3605
    %5472 = vst [vmem:[#allocation2 + $0x1b88] sm:$0xff] %v4393
    %5473 = vst [vmem:[#allocation2 + $0x1b90] sm:$0xff] %v948
    %5474 = vst [vmem:[#allocation2 + $0x1b98] sm:$0xff] %v950
    %5475 = vst [vmem:[#allocation2 + $0x1ba0] sm:$0xff] %v1835
    %5476 = vst [vmem:[#allocation2 + $0x1ba8] sm:$0xff] %v1837
    %5477 = vst [vmem:[#allocation2 + $0x1bb0] sm:$0xff] %v2722
    %5478 = vst [vmem:[#allocation2 + $0x1bb8] sm:$0xff] %v2724
    %5479 = vst [vmem:[#allocation2 + $0x1bc0] sm:$0xff] %v3609
    %5480 = vst [vmem:[#allocation2 + $0x1bc8] sm:$0xff] %v3611
    %5481 = vst [vmem:[#allocation2 + $0x1bd0] sm:$0xff] %v4398
    %5482 = vst [vmem:[#allocation2 + $0x1bd8] sm:$0xff] %v954
    %5483 = vst [vmem:[#allocation2 + $0x1be0] sm:$0xff] %v956
    %5484 = vst [vmem:[#allocation2 + $0x1be8] sm:$0xff] %v1841
    %5485 = vst [vmem:[#allocation2 + $0x1bf0] sm:$0xff] %v1843
    %5486 = vst [vmem:[#allocation2 + $0x1bf8] sm:$0xff] %v2728
    %5487 = vst [vmem:[#allocation2 + $0x1c00] sm:$0xff] %v2730
    %5488 = vst [vmem:[#allocation2 + $0x1c08] sm:$0xff] %v3615
    %5489 = vst [vmem:[#allocation2 + $0x1c10] sm:$0xff] %v3617
    %5490 = vst [vmem:[#allocation2 + $0x1c18] sm:$0xff] %v4403
    %5491 = vst [vmem:[#allocation2 + $0x1c20] sm:$0xff] %v960
    %5492 = vst [vmem:[#allocation2 + $0x1c28] sm:$0xff] %v962
    %5493 = vst [vmem:[#allocation2 + $0x1c30] sm:$0xff] %v1847
    %5494 = vst [vmem:[#allocation2 + $0x1c38] sm:$0xff] %v1849
    %5495 = vst [vmem:[#allocation2 + $0x1c40] sm:$0xff] %v2734
    %5496 = vst [vmem:[#allocation2 + $0x1c48] sm:$0xff] %v2736
    %5497 = vst [vmem:[#allocation2 + $0x1c50] sm:$0xff] %v3621
    %5498 = vst [vmem:[#allocation2 + $0x1c58] sm:$0xff] %v3623
    %5499 = vst [vmem:[#allocation2 + $0x1c60] sm:$0xff] %v4408
    %5500 = vst [vmem:[#allocation2 + $0x1c68] sm:$0xff] %v966
    %5501 = vst [vmem:[#allocation2 + $0x1c70] sm:$0xff] %v968
    %5502 = vst [vmem:[#allocation2 + $0x1c78] sm:$0xff] %v1853
    %5503 = vst [vmem:[#allocation2 + $0x1c80] sm:$0xff] %v1855
    %5504 = vst [vmem:[#allocation2 + $0x1c88] sm:$0xff] %v2740
    %5505 = vst [vmem:[#allocation2 + $0x1c90] sm:$0xff] %v2742
    %5506 = vst [vmem:[#allocation2 + $0x1c98] sm:$0xff] %v3627
    %5507 = vst [vmem:[#allocation2 + $0x1ca0] sm:$0xff] %v3629
    %5508 = vst [vmem:[#allocation2 + $0x1ca8] sm:$0xff] %v4413
    %5509 = vst [vmem:[#allocation2 + $0x1cb0] sm:$0xff] %v972
    %5510 = vst [vmem:[#allocation2 + $0x1cb8] sm:$0xff] %v974
    %5511 = vst [vmem:[#allocation2 + $0x1cc0] sm:$0xff] %v1859
    %5512 = vst [vmem:[#allocation2 + $0x1cc8] sm:$0xff] %v1861
    %5513 = vst [vmem:[#allocation2 + $0x1cd0] sm:$0xff] %v2746
    %5514 = vst [vmem:[#allocation2 + $0x1cd8] sm:$0xff] %v2748
    %5515 = vst [vmem:[#allocation2 + $0x1ce0] sm:$0xff] %v3633
    %5516 = vst [vmem:[#allocation2 + $0x1ce8] sm:$0xff] %v3635
    %5517 = vst [vmem:[#allocation2 + $0x1cf0] sm:$0xff] %v4418
    %5518 = vst [vmem:[#allocation2 + $0x1cf8] sm:$0xff] %v978
    %5519 = vst [vmem:[#allocation2 + $0x1d00] sm:$0xff] %v980
    %5520 = vst [vmem:[#allocation2 + $0x1d08] sm:$0xff] %v1865
    %5521 = vst [vmem:[#allocation2 + $0x1d10] sm:$0xff] %v1867
    %5522 = vst [vmem:[#allocation2 + $0x1d18] sm:$0xff] %v2752
    %5523 = vst [vmem:[#allocation2 + $0x1d20] sm:$0xff] %v2754
    %5524 = vst [vmem:[#allocation2 + $0x1d28] sm:$0xff] %v3639
    %5525 = vst [vmem:[#allocation2 + $0x1d30] sm:$0xff] %v3641
    %5526 = vst [vmem:[#allocation2 + $0x1d38] sm:$0xff] %v4423
    %5527 = vst [vmem:[#allocation2 + $0x1d40] sm:$0xff] %v984
    %5528 = vst [vmem:[#allocation2 + $0x1d48] sm:$0xff] %v986
    %5529 = vst [vmem:[#allocation2 + $0x1d50] sm:$0xff] %v1871
    %5530 = vst [vmem:[#allocation2 + $0x1d58] sm:$0xff] %v1873
    %5531 = vst [vmem:[#allocation2 + $0x1d60] sm:$0xff] %v2758
    %5532 = vst [vmem:[#allocation2 + $0x1d68] sm:$0xff] %v2760
    %5533 = vst [vmem:[#allocation2 + $0x1d70] sm:$0xff] %v3645
    %5534 = vst [vmem:[#allocation2 + $0x1d78] sm:$0xff] %v3647
    %5535 = vst [vmem:[#allocation2 + $0x1d80] sm:$0xff] %v4428
    %5536 = vst [vmem:[#allocation2 + $0x1d88] sm:$0xff] %v990
    %5537 = vst [vmem:[#allocation2 + $0x1d90] sm:$0xff] %v992
    %5538 = vst [vmem:[#allocation2 + $0x1d98] sm:$0xff] %v1877
    %5539 = vst [vmem:[#allocation2 + $0x1da0] sm:$0xff] %v1879
    %5540 = vst [vmem:[#allocation2 + $0x1da8] sm:$0xff] %v2764
    %5541 = vst [vmem:[#allocation2 + $0x1db0] sm:$0xff] %v2766
    %5542 = vst [vmem:[#allocation2 + $0x1db8] sm:$0xff] %v3651
    %5543 = vst [vmem:[#allocation2 + $0x1dc0] sm:$0xff] %v3653
    %5544 = vst [vmem:[#allocation2 + $0x1dc8] sm:$0xff] %v4433
    %5545 = vst [vmem:[#allocation2 + $0x1dd0] sm:$0xff] %v996
    %5546 = vst [vmem:[#allocation2 + $0x1dd8] sm:$0xff] %v998
    %5547 = vst [vmem:[#allocation2 + $0x1de0] sm:$0xff] %v1883
    %5548 = vst [vmem:[#allocation2 + $0x1de8] sm:$0xff] %v1885
    %5549 = vst [vmem:[#allocation2 + $0x1df0] sm:$0xff] %v2770
    %5550 = vst [vmem:[#allocation2 + $0x1df8] sm:$0xff] %v2772
    %5551 = vst [vmem:[#allocation2 + $0x1e00] sm:$0xff] %v3657
    %5552 = vst [vmem:[#allocation2 + $0x1e08] sm:$0xff] %v3659
    %5553 = vst [vmem:[#allocation2 + $0x1e10] sm:$0xff] %v4438
    %5554 = vst [vmem:[#allocation2 + $0x1e18] sm:$0xff] %v1002
    %5555 = vst [vmem:[#allocation2 + $0x1e20] sm:$0xff] %v1004
    %5556 = vst [vmem:[#allocation2 + $0x1e28] sm:$0xff] %v1889
    %5557 = vst [vmem:[#allocation2 + $0x1e30] sm:$0xff] %v1891
    %5558 = vst [vmem:[#allocation2 + $0x1e38] sm:$0xff] %v2776
    %5559 = vst [vmem:[#allocation2 + $0x1e40] sm:$0xff] %v2778
    %5560 = vst [vmem:[#allocation2 + $0x1e48] sm:$0xff] %v3663
    %5561 = vst [vmem:[#allocation2 + $0x1e50] sm:$0xff] %v3665
    %5562 = vst [vmem:[#allocation2 + $0x1e58] sm:$0xff] %v4443
    %5563 = vst [vmem:[#allocation2 + $0x1e60] sm:$0xff] %v1008
    %5564 = vst [vmem:[#allocation2 + $0x1e68] sm:$0xff] %v1010
    %5565 = vst [vmem:[#allocation2 + $0x1e70] sm:$0xff] %v1895
    %5566 = vst [vmem:[#allocation2 + $0x1e78] sm:$0xff] %v1897
    %5567 = vst [vmem:[#allocation2 + $0x1e80] sm:$0xff] %v2782
    %5568 = vst [vmem:[#allocation2 + $0x1e88] sm:$0xff] %v2784
    %5569 = vst [vmem:[#allocation2 + $0x1e90] sm:$0xff] %v3669
    %5570 = vst [vmem:[#allocation2 + $0x1e98] sm:$0xff] %v3671
    %5571 = vst [vmem:[#allocation2 + $0x1ea0] sm:$0xff] %v4448
    %5572 = vst [vmem:[#allocation2 + $0x1ea8] sm:$0xff] %v1014
    %5573 = vst [vmem:[#allocation2 + $0x1eb0] sm:$0xff] %v1016
    %5574 = vst [vmem:[#allocation2 + $0x1eb8] sm:$0xff] %v1901
    %5575 = vst [vmem:[#allocation2 + $0x1ec0] sm:$0xff] %v1903
    %5576 = vst [vmem:[#allocation2 + $0x1ec8] sm:$0xff] %v2788
    %5577 = vst [vmem:[#allocation2 + $0x1ed0] sm:$0xff] %v2790
    %5578 = vst [vmem:[#allocation2 + $0x1ed8] sm:$0xff] %v3675
    %5579 = vst [vmem:[#allocation2 + $0x1ee0] sm:$0xff] %v3677
    %5580 = vst [vmem:[#allocation2 + $0x1ee8] sm:$0xff] %v4453
    %5581 = vst [vmem:[#allocation2 + $0x1ef0] sm:$0xff] %v1020
    %5582 = vst [vmem:[#allocation2 + $0x1ef8] sm:$0xff] %v1022
    %5583 = vst [vmem:[#allocation2 + $0x1f00] sm:$0xff] %v1907
    %5584 = vst [vmem:[#allocation2 + $0x1f08] sm:$0xff] %v1909
    %5585 = vst [vmem:[#allocation2 + $0x1f10] sm:$0xff] %v2794
    %5586 = vst [vmem:[#allocation2 + $0x1f18] sm:$0xff] %v2796
    %5587 = vst [vmem:[#allocation2 + $0x1f20] sm:$0xff] %v3681
    %5588 = vst [vmem:[#allocation2 + $0x1f28] sm:$0xff] %v3683
    %5589 = vst [vmem:[#allocation2 + $0x1f30] sm:$0xff] %v4458
    %5590 = vst [vmem:[#allocation2 + $0x1f38] sm:$0xff] %v1026
    %5591 = vst [vmem:[#allocation2 + $0x1f40] sm:$0xff] %v1028
    %5592 = vst [vmem:[#allocation2 + $0x1f48] sm:$0xff] %v1913
    %5593 = vst [vmem:[#allocation2 + $0x1f50] sm:$0xff] %v1915
    %5594 = vst [vmem:[#allocation2 + $0x1f58] sm:$0xff] %v2800
    %5595 = vst [vmem:[#allocation2 + $0x1f60] sm:$0xff] %v2802
    %5596 = vst [vmem:[#allocation2 + $0x1f68] sm:$0xff] %v3687
    %5597 = vst [vmem:[#allocation2 + $0x1f70] sm:$0xff] %v3689
    %5598 = vst [vmem:[#allocation2 + $0x1f78] sm:$0xff] %v4463
    %5599 = vst [vmem:[#allocation2 + $0x1f80] sm:$0xff] %v1032
    %5600 = vst [vmem:[#allocation2 + $0x1f88] sm:$0xff] %v1034
    %5601 = vst [vmem:[#allocation2 + $0x1f90] sm:$0xff] %v1919
    %5602 = vst [vmem:[#allocation2 + $0x1f98] sm:$0xff] %v1921
    %5603 = vst [vmem:[#allocation2 + $0x1fa0] sm:$0xff] %v2806
    %5604 = vst [vmem:[#allocation2 + $0x1fa8] sm:$0xff] %v2808
    %5605 = vst [vmem:[#allocation2 + $0x1fb0] sm:$0xff] %v3693
    %5606 = vst [vmem:[#allocation2 + $0x1fb8] sm:$0xff] %v3695
    %5607 = vst [vmem:[#allocation2 + $0x1fc0] sm:$0xff] %v4468
    %5608 = vst [vmem:[#allocation2 + $0x1fc8] sm:$0xff] %v1038
    %5609 = vst [vmem:[#allocation2 + $0x1fd0] sm:$0xff] %v1040
    %5610 = vst [vmem:[#allocation2 + $0x1fd8] sm:$0xff] %v1925
    %5611 = vst [vmem:[#allocation2 + $0x1fe0] sm:$0xff] %v1927
    %5612 = vst [vmem:[#allocation2 + $0x1fe8] sm:$0xff] %v2812
    %5613 = vst [vmem:[#allocation2 + $0x1ff0] sm:$0xff] %v2814
    %5614 = vst [vmem:[#allocation2 + $0x1ff8] sm:$0xff] %v3699
    %5615 = vst [vmem:[#allocation2 + $0x2000] sm:$0xff] %v3701
    %5616 = vst [vmem:[#allocation2 + $0x2008] sm:$0xff] %v4473
    %5617 = vst [vmem:[#allocation2 + $0x2010] sm:$0xff] %v1044
    %5618 = vst [vmem:[#allocation2 + $0x2018] sm:$0xff] %v1046
    %5619 = vst [vmem:[#allocation2 + $0x2020] sm:$0xff] %v1931
    %5620 = vst [vmem:[#allocation2 + $0x2028] sm:$0xff] %v1933
    %5621 = vst [vmem:[#allocation2 + $0x2030] sm:$0xff] %v2818
    %5622 = vst [vmem:[#allocation2 + $0x2038] sm:$0xff] %v2820
    %5623 = vst [vmem:[#allocation2 + $0x2040] sm:$0xff] %v3705
    %5624 = vst [vmem:[#allocation2 + $0x2048] sm:$0xff] %v3707
    %5625 = vst [vmem:[#allocation2 + $0x2050] sm:$0xff] %v4478
    %5626 = vst [vmem:[#allocation2 + $0x2058] sm:$0xff] %v1050
    %5627 = vst [vmem:[#allocation2 + $0x2060] sm:$0xff] %v1052
    %5628 = vst [vmem:[#allocation2 + $0x2068] sm:$0xff] %v1937
    %5629 = vst [vmem:[#allocation2 + $0x2070] sm:$0xff] %v1939
    %5630 = vst [vmem:[#allocation2 + $0x2078] sm:$0xff] %v2824
    %5631 = vst [vmem:[#allocation2 + $0x2080] sm:$0xff] %v2826
    %5632 = vst [vmem:[#allocation2 + $0x2088] sm:$0xff] %v3711
    %5633 = vst [vmem:[#allocation2 + $0x2090] sm:$0xff] %v3713
    %5634 = vst [vmem:[#allocation2 + $0x2098] sm:$0xff] %v4483
    %5635 = vst [vmem:[#allocation2 + $0x20a0] sm:$0xff] %v1056
    %5636 = vst [vmem:[#allocation2 + $0x20a8] sm:$0xff] %v1058
    %5637 = vst [vmem:[#allocation2 + $0x20b0] sm:$0xff] %v1943
    %5638 = vst [vmem:[#allocation2 + $0x20b8] sm:$0xff] %v1945
    %5639 = vst [vmem:[#allocation2 + $0x20c0] sm:$0xff] %v2830
    %5640 = vst [vmem:[#allocation2 + $0x20c8] sm:$0xff] %v2832
    %5641 = vst [vmem:[#allocation2 + $0x20d0] sm:$0xff] %v3717
    %5642 = vst [vmem:[#allocation2 + $0x20d8] sm:$0xff] %v3719
    %5643 = vst [vmem:[#allocation2 + $0x20e0] sm:$0xff] %v4488
    %5644 = vst [vmem:[#allocation2 + $0x20e8] sm:$0xff] %v1062
    %5645 = vst [vmem:[#allocation2 + $0x20f0] sm:$0xff] %v1064
    %5646 = vst [vmem:[#allocation2 + $0x20f8] sm:$0xff] %v1949
    %5647 = vst [vmem:[#allocation2 + $0x2100] sm:$0xff] %v1951
    %5648 = vst [vmem:[#allocation2 + $0x2108] sm:$0xff] %v2836
    %5649 = vst [vmem:[#allocation2 + $0x2110] sm:$0xff] %v2838
    %5650 = vst [vmem:[#allocation2 + $0x2118] sm:$0xff] %v3723
    %5651 = vst [vmem:[#allocation2 + $0x2120] sm:$0xff] %v3725
    %5652 = vst [vmem:[#allocation2 + $0x2128] sm:$0xff] %v4493
    %5653 = vst [vmem:[#allocation2 + $0x2130] sm:$0xff] %v1068
    %5654 = vst [vmem:[#allocation2 + $0x2138] sm:$0xff] %v1070
    %5655 = vst [vmem:[#allocation2 + $0x2140] sm:$0xff] %v1955
    %5656 = vst [vmem:[#allocation2 + $0x2148] sm:$0xff] %v1957
    %5657 = vst [vmem:[#allocation2 + $0x2150] sm:$0xff] %v2842
    %5658 = vst [vmem:[#allocation2 + $0x2158] sm:$0xff] %v2844
    %5659 = vst [vmem:[#allocation2 + $0x2160] sm:$0xff] %v3729
    %5660 = vst [vmem:[#allocation2 + $0x2168] sm:$0xff] %v3731
    %5661 = vst [vmem:[#allocation2 + $0x2170] sm:$0xff] %v4498
    %5662 = vst [vmem:[#allocation2 + $0x2178] sm:$0xff] %v1074
    %5663 = vst [vmem:[#allocation2 + $0x2180] sm:$0xff] %v1076
    %5664 = vst [vmem:[#allocation2 + $0x2188] sm:$0xff] %v1961
    %5665 = vst [vmem:[#allocation2 + $0x2190] sm:$0xff] %v1963
    %5666 = vst [vmem:[#allocation2 + $0x2198] sm:$0xff] %v2848
    %5667 = vst [vmem:[#allocation2 + $0x21a0] sm:$0xff] %v2850
    %5668 = vst [vmem:[#allocation2 + $0x21a8] sm:$0xff] %v3735
    %5669 = vst [vmem:[#allocation2 + $0x21b0] sm:$0xff] %v3737
    %5670 = vst [vmem:[#allocation2 + $0x21b8] sm:$0xff] %v4503
    %5671 = vst [vmem:[#allocation2 + $0x21c0] sm:$0xff] %v1080
    %5672 = vst [vmem:[#allocation2 + $0x21c8] sm:$0xff] %v1082
    %5673 = vst [vmem:[#allocation2 + $0x21d0] sm:$0xff] %v1967
    %5674 = vst [vmem:[#allocation2 + $0x21d8] sm:$0xff] %v1969
    %5675 = vst [vmem:[#allocation2 + $0x21e0] sm:$0xff] %v2854
    %5676 = vst [vmem:[#allocation2 + $0x21e8] sm:$0xff] %v2856
    %5677 = vst [vmem:[#allocation2 + $0x21f0] sm:$0xff] %v3741
    %5678 = vst [vmem:[#allocation2 + $0x21f8] sm:$0xff] %v3743
    %5679 = vst [vmem:[#allocation2 + $0x2200] sm:$0xff] %v4508
    %5680 = vst [vmem:[#allocation2 + $0x2208] sm:$0xff] %v1086
    %5681 = vst [vmem:[#allocation2 + $0x2210] sm:$0xff] %v1088
    %5682 = vst [vmem:[#allocation2 + $0x2218] sm:$0xff] %v1973
    %5683 = vst [vmem:[#allocation2 + $0x2220] sm:$0xff] %v1975
    %5684 = vst [vmem:[#allocation2 + $0x2228] sm:$0xff] %v2860
    %5685 = vst [vmem:[#allocation2 + $0x2230] sm:$0xff] %v2862
    %5686 = vst [vmem:[#allocation2 + $0x2238] sm:$0xff] %v3747
    %5687 = vst [vmem:[#allocation2 + $0x2240] sm:$0xff] %v3749
    %5688 = vst [vmem:[#allocation2 + $0x2248] sm:$0xff] %v4513
    %5689 = vst [vmem:[#allocation2 + $0x2250] sm:$0xff] %v1092
    %5690 = vst [vmem:[#allocation2 + $0x2258] sm:$0xff] %v1094
    %5691 = vst [vmem:[#allocation2 + $0x2260] sm:$0xff] %v1979
    %5692 = vst [vmem:[#allocation2 + $0x2268] sm:$0xff] %v1981
    %5693 = vst [vmem:[#allocation2 + $0x2270] sm:$0xff] %v2866
    %5694 = vst [vmem:[#allocation2 + $0x2278] sm:$0xff] %v2868
    %5695 = vst [vmem:[#allocation2 + $0x2280] sm:$0xff] %v3753
    %5696 = vst [vmem:[#allocation2 + $0x2288] sm:$0xff] %v3755
    %5697 = vst [vmem:[#allocation2 + $0x2290] sm:$0xff] %v4518
    %5698 = vst [vmem:[#allocation2 + $0x2298] sm:$0xff] %v1098
    %5699 = vst [vmem:[#allocation2 + $0x22a0] sm:$0xff] %v1100
    %5700 = vst [vmem:[#allocation2 + $0x22a8] sm:$0xff] %v1985
    %5701 = vst [vmem:[#allocation2 + $0x22b0] sm:$0xff] %v1987
    %5702 = vst [vmem:[#allocation2 + $0x22b8] sm:$0xff] %v2872
    %5703 = vst [vmem:[#allocation2 + $0x22c0] sm:$0xff] %v2874
    %5704 = vst [vmem:[#allocation2 + $0x22c8] sm:$0xff] %v3759
    %5705 = vst [vmem:[#allocation2 + $0x22d0] sm:$0xff] %v3761
    %5706 = vst [vmem:[#allocation2 + $0x22d8] sm:$0xff] %v4523
    %5707 = vst [vmem:[#allocation2 + $0x22e0] sm:$0xff] %v1104
    %5708 = vst [vmem:[#allocation2 + $0x22e8] sm:$0xff] %v1106
    %5709 = vst [vmem:[#allocation2 + $0x22f0] sm:$0xff] %v1991
    %5710 = vst [vmem:[#allocation2 + $0x22f8] sm:$0xff] %v1993
    %5711 = vst [vmem:[#allocation2 + $0x2300] sm:$0xff] %v2878
    %5712 = vst [vmem:[#allocation2 + $0x2308] sm:$0xff] %v2880
    %5713 = vst [vmem:[#allocation2 + $0x2310] sm:$0xff] %v3765
    %5714 = vst [vmem:[#allocation2 + $0x2318] sm:$0xff] %v3767
    %5715 = vst [vmem:[#allocation2 + $0x2320] sm:$0xff] %v4528
    %5716 = vst [vmem:[#allocation2 + $0x2328] sm:$0xff] %v1110
    %5717 = vst [vmem:[#allocation2 + $0x2330] sm:$0xff] %v1112
    %5718 = vst [vmem:[#allocation2 + $0x2338] sm:$0xff] %v1997
    %5719 = vst [vmem:[#allocation2 + $0x2340] sm:$0xff] %v1999
    %5720 = vst [vmem:[#allocation2 + $0x2348] sm:$0xff] %v2884
    %5721 = vst [vmem:[#allocation2 + $0x2350] sm:$0xff] %v2886
    %5722 = vst [vmem:[#allocation2 + $0x2358] sm:$0xff] %v3771
    %5723 = vst [vmem:[#allocation2 + $0x2360] sm:$0xff] %v3773
    %5724 = vst [vmem:[#allocation2 + $0x2368] sm:$0xff] %v4533
    %5725 = vst [vmem:[#allocation2 + $0x2370] sm:$0xff] %v1116
    %5726 = vst [vmem:[#allocation2 + $0x2378] sm:$0xff] %v1118
    %5727 = vst [vmem:[#allocation2 + $0x2380] sm:$0xff] %v2003
    %5728 = vst [vmem:[#allocation2 + $0x2388] sm:$0xff] %v2005
    %5729 = vst [vmem:[#allocation2 + $0x2390] sm:$0xff] %v2890
    %5730 = vst [vmem:[#allocation2 + $0x2398] sm:$0xff] %v2892
    %5731 = vst [vmem:[#allocation2 + $0x23a0] sm:$0xff] %v3777
    %5732 = vst [vmem:[#allocation2 + $0x23a8] sm:$0xff] %v3779
    %5733 = vst [vmem:[#allocation2 + $0x23b0] sm:$0xff] %v4538
    %5734 = vst [vmem:[#allocation2 + $0x23b8] sm:$0xff] %v1122
    %5735 = vst [vmem:[#allocation2 + $0x23c0] sm:$0xff] %v1124
    %5736 = vst [vmem:[#allocation2 + $0x23c8] sm:$0xff] %v2009
    %5737 = vst [vmem:[#allocation2 + $0x23d0] sm:$0xff] %v2011
    %5738 = vst [vmem:[#allocation2 + $0x23d8] sm:$0xff] %v2896
    %5739 = vst [vmem:[#allocation2 + $0x23e0] sm:$0xff] %v2898
    %5740 = vst [vmem:[#allocation2 + $0x23e8] sm:$0xff] %v3783
    %5741 = vst [vmem:[#allocation2 + $0x23f0] sm:$0xff] %v3785
    %5742 = vst [vmem:[#allocation2 + $0x23f8] sm:$0xff] %v4543
    %5743 = vst [vmem:[#allocation2 + $0x2400] sm:$0xff] %v1128
    %5744 = vst [vmem:[#allocation2 + $0x2408] sm:$0xff] %v1130
    %5745 = vst [vmem:[#allocation2 + $0x2410] sm:$0xff] %v2015
    %5746 = vst [vmem:[#allocation2 + $0x2418] sm:$0xff] %v2017
    %5747 = vst [vmem:[#allocation2 + $0x2420] sm:$0xff] %v2902
    %5748 = vst [vmem:[#allocation2 + $0x2428] sm:$0xff] %v2904
    %5749 = vst [vmem:[#allocation2 + $0x2430] sm:$0xff] %v3789
    %5750 = vst [vmem:[#allocation2 + $0x2438] sm:$0xff] %v3791
    %5751 = vst [vmem:[#allocation2 + $0x2440] sm:$0xff] %v4548
    %5752 = vst [vmem:[#allocation2 + $0x2448] sm:$0xff] %v1134
    %5753 = vst [vmem:[#allocation2 + $0x2450] sm:$0xff] %v1136
    %5754 = vst [vmem:[#allocation2 + $0x2458] sm:$0xff] %v2021
    %5755 = vst [vmem:[#allocation2 + $0x2460] sm:$0xff] %v2023
    %5756 = vst [vmem:[#allocation2 + $0x2468] sm:$0xff] %v2908
    %5757 = vst [vmem:[#allocation2 + $0x2470] sm:$0xff] %v2910
    %5758 = vst [vmem:[#allocation2 + $0x2478] sm:$0xff] %v3795
    %5759 = vst [vmem:[#allocation2 + $0x2480] sm:$0xff] %v3797
    %5760 = vst [vmem:[#allocation2 + $0x2488] sm:$0xff] %v4553
    %5761 = vst [vmem:[#allocation2 + $0x2490] sm:$0xff] %v1140
    %5762 = vst [vmem:[#allocation2 + $0x2498] sm:$0xff] %v1142
    %5763 = vst [vmem:[#allocation2 + $0x24a0] sm:$0xff] %v2027
    %5764 = vst [vmem:[#allocation2 + $0x24a8] sm:$0xff] %v2029
    %5765 = vst [vmem:[#allocation2 + $0x24b0] sm:$0xff] %v2914
    %5766 = vst [vmem:[#allocation2 + $0x24b8] sm:$0xff] %v2916
    %5767 = vst [vmem:[#allocation2 + $0x24c0] sm:$0xff] %v3801
    %5768 = vst [vmem:[#allocation2 + $0x24c8] sm:$0xff] %v3803
    %5769 = vst [vmem:[#allocation2 + $0x24d0] sm:$0xff] %v4558
    %5770 = vst [vmem:[#allocation2 + $0x24d8] sm:$0xff] %v1146
    %5771 = vst [vmem:[#allocation2 + $0x24e0] sm:$0xff] %v1148
    %5772 = vst [vmem:[#allocation2 + $0x24e8] sm:$0xff] %v2033
    %5773 = vst [vmem:[#allocation2 + $0x24f0] sm:$0xff] %v2035
    %5774 = vst [vmem:[#allocation2 + $0x24f8] sm:$0xff] %v2920
    %5775 = vst [vmem:[#allocation2 + $0x2500] sm:$0xff] %v2922
    %5776 = vst [vmem:[#allocation2 + $0x2508] sm:$0xff] %v3807
    %5777 = vst [vmem:[#allocation2 + $0x2510] sm:$0xff] %v3809
    %5778 = vst [vmem:[#allocation2 + $0x2518] sm:$0xff] %v4563
    %5779 = vst [vmem:[#allocation2 + $0x2520] sm:$0xff] %v1152
    %5780 = vst [vmem:[#allocation2 + $0x2528] sm:$0xff] %v1154
    %5781 = vst [vmem:[#allocation2 + $0x2530] sm:$0xff] %v2039
    %5782 = vst [vmem:[#allocation2 + $0x2538] sm:$0xff] %v2041
    %5783 = vst [vmem:[#allocation2 + $0x2540] sm:$0xff] %v2926
    %5784 = vst [vmem:[#allocation2 + $0x2548] sm:$0xff] %v2928
    %5785 = vst [vmem:[#allocation2 + $0x2550] sm:$0xff] %v3813
    %5786 = vst [vmem:[#allocation2 + $0x2558] sm:$0xff] %v3815
    %5787 = vst [vmem:[#allocation2 + $0x2560] sm:$0xff] %v4568
    %5788 = vst [vmem:[#allocation2 + $0x2568] sm:$0xff] %v1158
    %5789 = vst [vmem:[#allocation2 + $0x2570] sm:$0xff] %v1160
    %5790 = vst [vmem:[#allocation2 + $0x2578] sm:$0xff] %v2045
    %5791 = vst [vmem:[#allocation2 + $0x2580] sm:$0xff] %v2047
    %5792 = vst [vmem:[#allocation2 + $0x2588] sm:$0xff] %v2932
    %5793 = vst [vmem:[#allocation2 + $0x2590] sm:$0xff] %v2934
    %5794 = vst [vmem:[#allocation2 + $0x2598] sm:$0xff] %v3819
    %5795 = vst [vmem:[#allocation2 + $0x25a0] sm:$0xff] %v3821
    %5796 = vst [vmem:[#allocation2 + $0x25a8] sm:$0xff] %v4573
    %5797 = vst [vmem:[#allocation2 + $0x25b0] sm:$0xff] %v1164
    %5798 = vst [vmem:[#allocation2 + $0x25b8] sm:$0xff] %v1166
    %5799 = vst [vmem:[#allocation2 + $0x25c0] sm:$0xff] %v2051
    %5800 = vst [vmem:[#allocation2 + $0x25c8] sm:$0xff] %v2053
    %5801 = vst [vmem:[#allocation2 + $0x25d0] sm:$0xff] %v2938
    %5802 = vst [vmem:[#allocation2 + $0x25d8] sm:$0xff] %v2940
    %5803 = vst [vmem:[#allocation2 + $0x25e0] sm:$0xff] %v3825
    %5804 = vst [vmem:[#allocation2 + $0x25e8] sm:$0xff] %v3827
    %5805 = vst [vmem:[#allocation2 + $0x25f0] sm:$0xff] %v4578
    %5806 = vst [vmem:[#allocation2 + $0x25f8] sm:$0xff] %v1170
    %5807 = vst [vmem:[#allocation2 + $0x2600] sm:$0xff] %v1172
    %5808 = vst [vmem:[#allocation2 + $0x2608] sm:$0xff] %v2057
    %5809 = vst [vmem:[#allocation2 + $0x2610] sm:$0xff] %v2059
    %5810 = vst [vmem:[#allocation2 + $0x2618] sm:$0xff] %v2944
    %5811 = vst [vmem:[#allocation2 + $0x2620] sm:$0xff] %v2946
    %5812 = vst [vmem:[#allocation2 + $0x2628] sm:$0xff] %v3831
    %5813 = vst [vmem:[#allocation2 + $0x2630] sm:$0xff] %v3833
    %5814 = vst [vmem:[#allocation2 + $0x2638] sm:$0xff] %v4583
    %5815 = vst [vmem:[#allocation2 + $0x2640] sm:$0xff] %v1176
    %5816 = vst [vmem:[#allocation2 + $0x2648] sm:$0xff] %v1178
    %5817 = vst [vmem:[#allocation2 + $0x2650] sm:$0xff] %v2063
    %5818 = vst [vmem:[#allocation2 + $0x2658] sm:$0xff] %v2065
    %5819 = vst [vmem:[#allocation2 + $0x2660] sm:$0xff] %v2950
    %5820 = vst [vmem:[#allocation2 + $0x2668] sm:$0xff] %v2952
    %5821 = vst [vmem:[#allocation2 + $0x2670] sm:$0xff] %v3837
    %5822 = vst [vmem:[#allocation2 + $0x2678] sm:$0xff] %v3839
    %5823 = vst [vmem:[#allocation2 + $0x2680] sm:$0xff] %v4588
    // Predicated region
    $region10: #{pallas_matmul.1} parent=1 // pred_check
      _
    $region11: #{pallas_matmul.1} parent=1 // pred_check_branch
      %5825 = sbr.rel (0) target = $region13
    $region12: #{pallas_matmul.1} parent=1 // pred_region
      %s5827 = ssub.s32 157824, 157824
      %5828 = vsyncadd [#allocation3], %s5827
      %s5829 = sshll.u32 [#allocation2], 4
      %s5830 = int_to_ptr.vmem [resolvable:$true] %s5829
      %5835 = dma.vmem_to_hbm [thread:$0]  %s5830, 157824, %s2, [#allocation3], 1152, 1152, 72
    $region13: #{pallas_matmul.1} parent=1 // pred_fallthru
      _
    // Predicated region
    $region14: #{pallas_matmul.1} parent=1 // pred_check
      _
    $region15: #{pallas_matmul.1} parent=1 // pred_check_branch
      %5837 = sbr.rel (0) target = $region17
    $region16: #{pallas_matmul.1} parent=1 // pred_region
      %5838 = dma.done [#allocation3], 157824
    $region17: #{pallas_matmul.1} parent=1 // pred_fallthru
      _
    %5839 = vsyncpa [#allocation3], 1

</llo_original>
